<compile_context>
chip_gen: v7x
topology: tpu7x:2x2x1
jax: 0.10.0
libtpu: 0.0.40
codegen_flags: <defaults>
</compile_context>

<pallas_src>
import numpy as np
import jax
import jax.numpy as jnp
from jax.experimental import pallas as pl
from jax.experimental.pallas import tpu as pltpu

# ---- module hyper-parameters (defaults of Transformer4L / TransformerEncoderLayer) ----
HIDDEN = 128          # d_model
NHEAD = 8
NLAYERS = 4
FFN = 2048            # nn.TransformerEncoderLayer default dim_feedforward
HEAD_DIM = HIDDEN // NHEAD
LN_EPS = 1e-5

# ---- problem sizes (2048-game-like: 4x4 board flattened, 4 actions) ----
INPUT_SIZE = 16
NUM_ACTIONS = 4
SEQ = 8
BATCH = 2
BS = BATCH * SEQ
DEC_PAD = 128         # lane-dense padded decoder width (real logits in cols [0, NUM_ACTIONS))

SQRT_A = np.float32(np.sqrt(NUM_ACTIONS))
INV_SQRT_HD = np.float32(1.0 / np.sqrt(HEAD_DIM))
NEG_INF = np.float32(-1e30)

_SEQ_SHIFT = int(np.log2(SEQ))
assert (1 << _SEQ_SHIFT) == SEQ, "SEQ must be a power of two for the batch mask"


# ----------------------------------------------------------------------------------
# Pallas kernel: grid=(NLAYERS,), one transformer layer per grid step.
# All activations are 2D (B*S, feature); per-layer weights stream in via BlockSpecs.
# ----------------------------------------------------------------------------------
def transformer4l_kernel(
    src_ref, pe_ref, enc_w_ref, enc_b_ref, dec_w_ref, dec_b_ref,
    wqkv_ref, bqkv_ref, wo_ref, bo_ref,
    w1_ref, b1_ref, w2_ref, b2_ref,
    ln1w_ref, ln1b_ref, ln2w_ref, ln2b_ref,
    out_ref,
    x_scratch,
):
    l = pl.program_id(0)
    E = HIDDEN
    hd = HEAD_DIM

    def f32(v):
        return v.astype(jnp.float32)

    def layer_norm(x, w, b):
        mu = jnp.mean(x, axis=-1, keepdims=True)
        var = jnp.mean((x - mu) ** 2, axis=-1, keepdims=True)
        return (x - mu) * jax.lax.rsqrt(var + LN_EPS) * w + b

    # ---------- first grid step: encoder linear, * sqrt(num_actions), + PE ----------
    @pl.when(l == 0)
    def _encode():
        h = jnp.dot(src_ref[...], f32(enc_w_ref[...]),
                    preferred_element_type=jnp.float32) + enc_b_ref[...]
        x_scratch[...] = h * SQRT_A + pe_ref[...]

    x = x_scratch[...]                                           # (BS, E) f32

    # ---------- fused QKV projection: one matmul for all heads & both batches ----------
    wqkv = f32(wqkv_ref[0])                                      # (E, 3E)
    qkv = jnp.dot(x, wqkv, preferred_element_type=jnp.float32) + bqkv_ref[0]   # (BS, 3E)

    # block-diagonal batch mask: both batches share one (BS, BS) score matmul per head
    row_b = jax.lax.shift_right_logical(
        jax.lax.broadcasted_iota(jnp.int32, (BS, BS), 0), _SEQ_SHIFT)
    col_b = jax.lax.shift_right_logical(
        jax.lax.broadcasted_iota(jnp.int32, (BS, BS), 1), _SEQ_SHIFT)
    same_batch = row_b == col_b

    wo = f32(wo_ref[0])                                          # (E, E) fused out-proj
    attn = jnp.zeros((BS, E), dtype=jnp.float32)
    for h in range(NHEAD):
        q = qkv[:, h * hd:(h + 1) * hd]                          # (BS, hd)
        k = qkv[:, E + h * hd:E + (h + 1) * hd]
        v = qkv[:, 2 * E + h * hd:2 * E + (h + 1) * hd]
        s = jax.lax.dot_general(q, k, (((1,), (1,)), ((), ())),
                                preferred_element_type=jnp.float32) * INV_SQRT_HD
        s = jnp.where(same_batch, s, NEG_INF)
        s = s - jnp.max(s, axis=-1, keepdims=True)
        p = jnp.exp(s)
        p = p * pl.reciprocal(jnp.sum(p, axis=-1, keepdims=True), approx=True)
        ctx = jnp.dot(p, v, preferred_element_type=jnp.float32)  # (BS, hd)
        # per-head slab of the single fused output-projection weight (row slice, 8-aligned)
        attn = attn + jnp.dot(ctx, wo[h * hd:(h + 1) * hd, :],
                              preferred_element_type=jnp.float32)
    attn = attn + bo_ref[0]

    x = layer_norm(x + attn, ln1w_ref[0], ln1b_ref[0])

    # ---------- feed-forward: linear(128->2048) -> relu -> linear(2048->128) ----------
    hidden = jnp.dot(x, f32(w1_ref[0]), preferred_element_type=jnp.float32) + b1_ref[0]
    hidden = jnp.maximum(hidden, 0.0)
    ff = jnp.dot(hidden, f32(w2_ref[0]), preferred_element_type=jnp.float32) + b2_ref[0]
    x = layer_norm(x + ff, ln2w_ref[0], ln2b_ref[0])

    x_scratch[...] = x

    # ---------- last grid step: decoder linear + masked softmax (lane-dense 128 cols) ----
    @pl.when(l == NLAYERS - 1)
    def _decode():
        logits = jnp.dot(x, f32(dec_w_ref[...]),
                         preferred_element_type=jnp.float32) + dec_b_ref[...]
        lane = jax.lax.broadcasted_iota(jnp.int32, (BS, DEC_PAD), 1)
        logits = jnp.where(lane < NUM_ACTIONS, logits, NEG_INF)
        logits = logits - jnp.max(logits, axis=-1, keepdims=True)
        p = jnp.exp(logits)
        out_ref[...] = p / jnp.sum(p, axis=-1, keepdims=True)


# ----------------------------------------------------------------------------------
# Parameter construction (deterministic, synthetic). Weights stored bf16, biases/LN f32.
# ----------------------------------------------------------------------------------
def positional_encoding(seq_len, d_model):
    pos = np.arange(seq_len, dtype=np.float32)[:, None]
    div = np.exp(np.arange(0, d_model, 2, dtype=np.float32) * -(np.log(10000.0) / d_model))
    pe = np.zeros((seq_len, d_model), np.float32)
    pe[:, 0::2] = np.sin(pos * div)
    pe[:, 1::2] = np.cos(pos * div)
    return jnp.asarray(pe)


def init_params(key):
    ks = jax.random.split(key, 12)

    def u(k, shape, scale):
        return jax.random.uniform(k, shape, jnp.float32, -scale, scale)

    L, E, F, A = NLAYERS, HIDDEN, FFN, NUM_ACTIONS

    # encoder / decoder (init_weights: uniform(-0.1, 0.1), decoder bias zero)
    enc_w = u(ks[0], (E, INPUT_SIZE), 0.1)                 # torch Linear weight (out, in)
    enc_b = u(ks[1], (1, E), 0.1)
    dec_w = u(ks[2], (A, E), 0.1)
    dec_b = jnp.zeros((1, A), jnp.float32)

    # per-layer attention / FFN params (torch default layout: weight = (out, in))
    in_proj_w = u(ks[3], (L, 3 * E, E), 0.05)
    in_proj_b = u(ks[4], (L, 3 * E), 0.05)
    out_w = u(ks[5], (L, E, E), 0.05)
    out_b = u(ks[6], (L, E), 0.05)
    w1 = u(ks[7], (L, F, E), 0.02)
    b1 = u(ks[8], (L, F), 0.02)
    w2 = u(ks[9], (L, E, F), 0.02)
    b2 = u(ks[10], (L, E), 0.02)

    # decoder padded lane-dense to 128 output columns (extra cols masked in-kernel)
    dec_w_pad = jnp.zeros((E, DEC_PAD), jnp.float32).at[:, :A].set(jnp.transpose(dec_w))
    dec_b_pad = jnp.zeros((1, DEC_PAD), jnp.float32).at[:, :A].set(dec_b)

    bf16 = lambda a: a.astype(jnp.bfloat16)
    return dict(
        pe=positional_encoding(SEQ, E),                        # (S, E) f32
        enc_w=bf16(jnp.transpose(enc_w)),                      # (I, E)
        enc_b=enc_b,                                           # (1, E)
        dec_w=bf16(dec_w_pad),                                 # (E, 128)
        dec_b=dec_b_pad,                                       # (1, 128)
        wqkv=bf16(jnp.transpose(in_proj_w, (0, 2, 1))),        # (L, E, 3E): x @ wqkv = [q|k|v]
        bqkv=in_proj_b.reshape(L, 1, 3 * E),
        wo=bf16(jnp.transpose(out_w, (0, 2, 1))),              # (L, E, E)
        bo=out_b.reshape(L, 1, E),
        w1=bf16(jnp.transpose(w1, (0, 2, 1))),                 # (L, E, F)
        b1=b1.reshape(L, 1, F),
        w2=bf16(jnp.transpose(w2, (0, 2, 1))),                 # (L, F, E)
        b2=b2.reshape(L, 1, E),
        ln1w=jnp.ones((L, 1, E), jnp.float32),
        ln1b=jnp.zeros((L, 1, E), jnp.float32),
        ln2w=jnp.ones((L, 1, E), jnp.float32),
        ln2b=jnp.zeros((L, 1, E), jnp.float32),
    )


# ----------------------------------------------------------------------------------
# Wrapper: pallas_call with grid over layers (per-layer weights double-buffered)
# ----------------------------------------------------------------------------------
def transformer4l_forward(src_sbi, params):
    """src_sbi: (S, B, input_size) (PyTorch batch_first=False layout). Returns (S, B, A)."""
    x2 = jnp.transpose(src_sbi, (1, 0, 2)).reshape(BS, INPUT_SIZE)   # batch-major rows
    pe_t = jnp.tile(params["pe"], (BATCH, 1))                        # (BS, E)

    P = params
    args = (x2, pe_t, P["enc_w"], P["enc_b"], P["dec_w"], P["dec_b"],
            P["wqkv"], P["bqkv"], P["wo"], P["bo"],
            P["w1"], P["b1"], P["w2"], P["b2"],
            P["ln1w"], P["ln1b"], P["ln2w"], P["ln2b"])
    n_fixed = 6

    def fixed_spec(a):
        nd = a.ndim
        return pl.BlockSpec(a.shape, lambda l, nd=nd: (0,) * nd)

    def layer_spec(a):
        nd = a.ndim - 1
        return pl.BlockSpec((1,) + a.shape[1:], lambda l, nd=nd: (l,) + (0,) * nd)

    in_specs = ([fixed_spec(a) for a in args[:n_fixed]] +
                [layer_spec(a) for a in args[n_fixed:]])

    # VMEM budget from the actual footprint (double-buffered inputs) + headroom for
    # activations / spills, instead of a blanket 48 MiB (keeps slack on v7x's 64 MiB).
    per_layer_bytes = sum(int(np.prod(a.shape[1:])) * a.dtype.itemsize for a in args[n_fixed:])
    fixed_bytes = sum(int(np.prod(a.shape)) * a.dtype.itemsize for a in args[:n_fixed])
    vmem_budget = 2 * (per_layer_bytes + fixed_bytes) + (8 << 20)

    out = pl.pallas_call(
        transformer4l_kernel,
        out_shape=jax.ShapeDtypeStruct((BS, DEC_PAD), jnp.float32),
        grid_spec=pltpu.PrefetchScalarGridSpec(
            num_scalar_prefetch=0,
            grid=(NLAYERS,),
            in_specs=in_specs,
            out_specs=pl.BlockSpec((BS, DEC_PAD), lambda l: (0, 0)),
            scratch_shapes=[pltpu.VMEM((BS, HIDDEN), jnp.float32)],
        ),
        compiler_params=pltpu.CompilerParams(
            dimension_semantics=("arbitrary",),
            vmem_limit_bytes=int(vmem_budget),
        ),
    )(*args)

    probs = out[:, :NUM_ACTIONS].reshape(BATCH, SEQ, NUM_ACTIONS)
    return jnp.transpose(probs, (1, 0, 2))                           # -> (S, B, A)


# ----------------------------------------------------------------------------------
# Pure-JAX reference (same math, same bf16-quantized weights) for validation
# ----------------------------------------------------------------------------------
def forward_ref(src_sbi, P):
    E, hd = HIDDEN, HEAD_DIM
    f32 = lambda a: a.astype(jnp.float32)

    def ln(y, w, b):
        mu = jnp.mean(y, -1, keepdims=True)
        var = jnp.mean((y - mu) ** 2, -1, keepdims=True)
        return (y - mu) / jnp.sqrt(var + LN_EPS) * w + b

    x = jnp.transpose(src_sbi, (1, 0, 2)).reshape(BS, INPUT_SIZE)
    h = x @ f32(P["enc_w"]) + P["enc_b"]
    x = h * np.float32(np.sqrt(NUM_ACTIONS)) + jnp.tile(P["pe"], (BATCH, 1))
    for l in range(NLAYERS):
        qkv = x @ f32(P["wqkv"][l]) + P["bqkv"][l]
        q = qkv[:, :E].reshape(BATCH, SEQ, NHEAD, hd)
        k = qkv[:, E:2 * E].reshape(BATCH, SEQ, NHEAD, hd)
        v = qkv[:, 2 * E:].reshape(BATCH, SEQ, NHEAD, hd)
        s = jnp.einsum('bqhd,bkhd->bhqk', q, k) / np.float32(np.sqrt(hd))
        p = jax.nn.softmax(s, axis=-1)
        ctx = jnp.einsum('bhqk,bkhd->bqhd', p, v).reshape(BS, E)
        attn = ctx @ f32(P["wo"][l]) + P["bo"][l]
        x = ln(x + attn, P["ln1w"][l], P["ln1b"][l])
        ff = jax.nn.relu(x @ f32(P["w1"][l]) + P["b1"][l]) @ f32(P["w2"][l]) + P["b2"][l]
        x = ln(x + ff, P["ln2w"][l], P["ln2b"][l])
    logits = x @ f32(P["dec_w"])[:, :NUM_ACTIONS] + P["dec_b"][:, :NUM_ACTIONS]
    probs = jax.nn.softmax(logits, -1).reshape(BATCH, SEQ, NUM_ACTIONS)
    return jnp.transpose(probs, (1, 0, 2))


if __name__ == "__main__":
    key = jax.random.PRNGKey(0)
    kp, kx = jax.random.split(key)
    params = init_params(kp)
    # input in PyTorch layout: (seq, batch, input_size)
    src = jax.random.uniform(kx, (SEQ, BATCH, INPUT_SIZE), jnp.float32, 0.0, 1.0)

    out = transformer4l_forward(src, params)
    out = jax.block_until_ready(out)
    assert out.shape == (SEQ, BATCH, NUM_ACTIONS)

    ref = forward_ref(src, params)
    np.testing.assert_allclose(np.asarray(out), np.asarray(ref), rtol=2e-2, atol=2e-3)
    # softmax rows sum to 1
    np.testing.assert_allclose(np.asarray(out).sum(-1), 1.0, rtol=1e-4, atol=1e-4)

    print("KERNEL_OK")
</pallas_src>

<mosaic_0001>
module attributes {stable_mosaic.version = 11 : i64} {
  func.func @transformer4l_kernel(%arg0: i32, %arg1: memref<16x16xf32, #tpu.memory_space<vmem>>, %arg2: memref<16x128xf32, #tpu.memory_space<vmem>>, %arg3: memref<16x128xbf16, #tpu.memory_space<vmem>>, %arg4: memref<1x128xf32, #tpu.memory_space<vmem>>, %arg5: memref<128x128xbf16, #tpu.memory_space<vmem>>, %arg6: memref<1x128xf32, #tpu.memory_space<vmem>>, %arg7: memref<1x128x384xbf16, #tpu.memory_space<vmem>>, %arg8: memref<1x1x384xf32, #tpu.memory_space<vmem>>, %arg9: memref<1x128x128xbf16, #tpu.memory_space<vmem>>, %arg10: memref<1x1x128xf32, #tpu.memory_space<vmem>>, %arg11: memref<1x128x2048xbf16, #tpu.memory_space<vmem>>, %arg12: memref<1x1x2048xf32, #tpu.memory_space<vmem>>, %arg13: memref<1x2048x128xbf16, #tpu.memory_space<vmem>>, %arg14: memref<1x1x128xf32, #tpu.memory_space<vmem>>, %arg15: memref<1x1x128xf32, #tpu.memory_space<vmem>>, %arg16: memref<1x1x128xf32, #tpu.memory_space<vmem>>, %arg17: memref<1x1x128xf32, #tpu.memory_space<vmem>>, %arg18: memref<1x1x128xf32, #tpu.memory_space<vmem>>, %arg19: memref<16x128xf32, #tpu.memory_space<vmem>>, %arg20: memref<16x128xf32, #tpu.memory_space<vmem>>) attributes {dimension_semantics = [#tpu.dimension_semantics<arbitrary>], iteration_bounds = array<i64: 4>, scalar_prefetch = 0 : i64, scratch_operands = 1 : i64, tpu.core_type = #tpu.core_type<tc>, window_params = [{pipeline_mode = #tpu.pipeline_mode<synchronous>, transform_indices = @transform_0, window_bounds = array<i64: 16, 16>}, {pipeline_mode = #tpu.pipeline_mode<synchronous>, transform_indices = @transform_1, window_bounds = array<i64: 16, 128>}, {pipeline_mode = #tpu.pipeline_mode<synchronous>, transform_indices = @transform_2, window_bounds = array<i64: 16, 128>}, {pipeline_mode = #tpu.pipeline_mode<synchronous>, transform_indices = @transform_3, window_bounds = array<i64: 1, 128>}, {pipeline_mode = #tpu.pipeline_mode<synchronous>, transform_indices = @transform_4, window_bounds = array<i64: 128, 128>}, {pipeline_mode = #tpu.pipeline_mode<synchronous>, transform_indices = @transform_5, window_bounds = array<i64: 1, 128>}, {transform_indices = @transform_6, window_bounds = array<i64: 1, 128, 384>}, {transform_indices = @transform_7, window_bounds = array<i64: 1, 1, 384>}, {transform_indices = @transform_8, window_bounds = array<i64: 1, 128, 128>}, {transform_indices = @transform_9, window_bounds = array<i64: 1, 1, 128>}, {transform_indices = @transform_10, window_bounds = array<i64: 1, 128, 2048>}, {transform_indices = @transform_11, window_bounds = array<i64: 1, 1, 2048>}, {transform_indices = @transform_12, window_bounds = array<i64: 1, 2048, 128>}, {transform_indices = @transform_13, window_bounds = array<i64: 1, 1, 128>}, {transform_indices = @transform_14, window_bounds = array<i64: 1, 1, 128>}, {transform_indices = @transform_15, window_bounds = array<i64: 1, 1, 128>}, {transform_indices = @transform_16, window_bounds = array<i64: 1, 1, 128>}, {transform_indices = @transform_17, window_bounds = array<i64: 1, 1, 128>}, {pipeline_mode = #tpu.pipeline_mode<synchronous>, transform_indices = @transform_18, window_bounds = array<i64: 16, 128>}]} {
    %c0_i32 = arith.constant 0 : i32
    %0 = arith.cmpi eq, %arg0, %c0_i32 : i32
    %1 = arith.extui %0 : i1 to i32
    %c0_i32_0 = arith.constant 0 : i32
    %2 = arith.cmpi ne, %1, %c0_i32_0 : i32
    scf.if %2 {
      %c0_113 = arith.constant 0 : index
      %c0_114 = arith.constant 0 : index
      %279 = vector.load %arg1[%c0_113, %c0_114] : memref<16x16xf32, #tpu.memory_space<vmem>>, vector<16x16xf32>
      %c0_115 = arith.constant 0 : index
      %c0_116 = arith.constant 0 : index
      %280 = vector.load %arg3[%c0_115, %c0_116] : memref<16x128xbf16, #tpu.memory_space<vmem>>, vector<16x128xbf16>
      %281 = arith.extf %280 : vector<16x128xbf16> to vector<16x128xf32>
      %cst_117 = arith.constant dense<0.000000e+00> : vector<16x128xf32>
      %282 = tpu.matmul %279, %281, %cst_117 {dimension_numbers = #tpu.dot_dimension_numbers<[1], [0], [0], [1], [0, 0, 1, 1], [], []>} : vector<16x16xf32>, vector<16x128xf32>, vector<16x128xf32> -> vector<16x128xf32>
      %c0_118 = arith.constant 0 : index
      %c0_119 = arith.constant 0 : index
      %283 = vector.load %arg4[%c0_118, %c0_119] : memref<1x128xf32, #tpu.memory_space<vmem>>, vector<1x128xf32>
      %284 = vector.broadcast %283 : vector<1x128xf32> to vector<16x128xf32>
      %285 = arith.addf %282, %284 : vector<16x128xf32>
      %cst_120 = arith.constant 2.000000e+00 : f32
      %286 = vector.broadcast %cst_120 : f32 to vector<16x128xf32>
      %287 = arith.mulf %285, %286 : vector<16x128xf32>
      %c0_121 = arith.constant 0 : index
      %c0_122 = arith.constant 0 : index
      %288 = vector.load %arg2[%c0_121, %c0_122] : memref<16x128xf32, #tpu.memory_space<vmem>>, vector<16x128xf32>
      %289 = arith.addf %287, %288 : vector<16x128xf32>
      %c0_123 = arith.constant 0 : index
      %c0_124 = arith.constant 0 : index
      %290 = vector.load %arg20[%c0_123, %c0_124] : memref<16x128xf32, #tpu.memory_space<vmem>>, vector<16x128xf32>
      tpu.vector_store %arg20[%c0_123, %c0_124], %289 {strides = array<i32>} : memref<16x128xf32, #tpu.memory_space<vmem>>, vector<16x128xf32>,
    } else {
    }
    %c0 = arith.constant 0 : index
    %c0_1 = arith.constant 0 : index
    %3 = vector.load %arg20[%c0, %c0_1] : memref<16x128xf32, #tpu.memory_space<vmem>>, vector<16x128xf32>
    %c0_2 = arith.constant 0 : index
    %c0_3 = arith.constant 0 : index
    %c0_4 = arith.constant 0 : index
    %4 = vector.load %arg7[%c0_2, %c0_3, %c0_4] : memref<1x128x384xbf16, #tpu.memory_space<vmem>>, vector<1x128x384xbf16>
    %5 = vector.shape_cast %4 : vector<1x128x384xbf16> to vector<128x384xbf16>
    %6 = arith.extf %5 : vector<128x384xbf16> to vector<128x384xf32>
    %cst = arith.constant dense<0.000000e+00> : vector<16x384xf32>
    %7 = tpu.matmul %3, %6, %cst {dimension_numbers = #tpu.dot_dimension_numbers<[1], [0], [0], [1], [0, 0, 1, 1], [], []>} : vector<16x128xf32>, vector<128x384xf32>, vector<16x384xf32> -> vector<16x384xf32>
    %c0_5 = arith.constant 0 : index
    %c0_6 = arith.constant 0 : index
    %c0_7 = arith.constant 0 : index
    %8 = vector.load %arg8[%c0_5, %c0_6, %c0_7] : memref<1x1x384xf32, #tpu.memory_space<vmem>>, vector<1x1x384xf32>
    %9 = vector.shape_cast %8 : vector<1x1x384xf32> to vector<1x384xf32>
    %10 = vector.broadcast %9 : vector<1x384xf32> to vector<16x384xf32>
    %11 = arith.addf %7, %10 : vector<16x384xf32>
    %12 = tpu.iota {dimensions = array<i32: 0>} : vector<16x16xi32>
    %c3_i32 = arith.constant 3 : i32
    %13 = vector.broadcast %c3_i32 : i32 to vector<16x16xi32>
    %14 = arith.shrui %12, %13 : vector<16x16xi32>
    %15 = tpu.iota {dimensions = array<i32: 1>} : vector<16x16xi32>
    %c3_i32_8 = arith.constant 3 : i32
    %16 = vector.broadcast %c3_i32_8 : i32 to vector<16x16xi32>
    %17 = arith.shrui %15, %16 : vector<16x16xi32>
    %18 = arith.cmpi eq, %14, %17 : vector<16x16xi32>
    %c0_9 = arith.constant 0 : index
    %c0_10 = arith.constant 0 : index
    %c0_11 = arith.constant 0 : index
    %19 = vector.load %arg9[%c0_9, %c0_10, %c0_11] : memref<1x128x128xbf16, #tpu.memory_space<vmem>>, vector<1x128x128xbf16>
    %20 = vector.shape_cast %19 : vector<1x128x128xbf16> to vector<128x128xbf16>
    %21 = arith.extf %20 : vector<128x128xbf16> to vector<128x128xf32>
    %cst_12 = arith.constant 0.000000e+00 : f32
    %22 = vector.broadcast %cst_12 : f32 to vector<16x128xf32>
    %23 = vector.extract_strided_slice %11 {offsets = [0, 0], sizes = [16, 16], strides = [1, 1]} : vector<16x384xf32> to vector<16x16xf32>
    %24 = vector.extract_strided_slice %11 {offsets = [0, 128], sizes = [16, 16], strides = [1, 1]} : vector<16x384xf32> to vector<16x16xf32>
    %25 = vector.extract_strided_slice %11 {offsets = [0, 256], sizes = [16, 16], strides = [1, 1]} : vector<16x384xf32> to vector<16x16xf32>
    %cst_13 = arith.constant dense<0.000000e+00> : vector<16x16xf32>
    %26 = tpu.matmul %23, %24, %cst_13 {dimension_numbers = #tpu.dot_dimension_numbers<[1], [1], [0], [0], [0, 0, 1, 0], [], []>} : vector<16x16xf32>, vector<16x16xf32>, vector<16x16xf32> -> vector<16x16xf32>
    %cst_14 = arith.constant 2.500000e-01 : f32
    %27 = vector.broadcast %cst_14 : f32 to vector<16x16xf32>
    %28 = arith.mulf %26, %27 : vector<16x16xf32>
    %cst_15 = arith.constant -1.000000e+30 : f32
    %29 = vector.broadcast %cst_15 : f32 to vector<16x16xf32>
    %30 = arith.select %18, %28, %29 : vector<16x16xi1>, vector<16x16xf32>
    %cst_16 = arith.constant dense<0xFF800000> : vector<16xf32>
    %31 = vector.multi_reduction <maximumf>, %30, %cst_16 [1] : vector<16x16xf32> to vector<16xf32>
    %32 = vector.shape_cast %31 : vector<16xf32> to vector<16x1xf32>
    %33 = vector.broadcast %32 : vector<16x1xf32> to vector<16x16xf32>
    %34 = arith.subf %30, %33 : vector<16x16xf32>
    %35 = math.exp %34 : vector<16x16xf32>
    %cst_17 = arith.constant dense<0.000000e+00> : vector<16xf32>
    %36 = vector.multi_reduction <add>, %35, %cst_17 [1] : vector<16x16xf32> to vector<16xf32>
    %37 = vector.shape_cast %36 : vector<16xf32> to vector<16x1xf32>
    %38 = tpu.reciprocal %37 {approx = true} : vector<16x1xf32> -> vector<16x1xf32>
    %39 = vector.broadcast %38 : vector<16x1xf32> to vector<16x16xf32>
    %40 = arith.mulf %35, %39 : vector<16x16xf32>
    %cst_18 = arith.constant dense<0.000000e+00> : vector<16x16xf32>
    %41 = tpu.matmul %40, %25, %cst_18 {dimension_numbers = #tpu.dot_dimension_numbers<[1], [0], [0], [1], [0, 0, 1, 1], [], []>} : vector<16x16xf32>, vector<16x16xf32>, vector<16x16xf32> -> vector<16x16xf32>
    %42 = vector.extract_strided_slice %21 {offsets = [0, 0], sizes = [16, 128], strides = [1, 1]} : vector<128x128xf32> to vector<16x128xf32>
    %cst_19 = arith.constant dense<0.000000e+00> : vector<16x128xf32>
    %43 = tpu.matmul %41, %42, %cst_19 {dimension_numbers = #tpu.dot_dimension_numbers<[1], [0], [0], [1], [0, 0, 1, 1], [], []>} : vector<16x16xf32>, vector<16x128xf32>, vector<16x128xf32> -> vector<16x128xf32>
    %44 = arith.addf %22, %43 : vector<16x128xf32>
    %45 = vector.extract_strided_slice %11 {offsets = [0, 16], sizes = [16, 16], strides = [1, 1]} : vector<16x384xf32> to vector<16x16xf32>
    %46 = vector.extract_strided_slice %11 {offsets = [0, 144], sizes = [16, 16], strides = [1, 1]} : vector<16x384xf32> to vector<16x16xf32>
    %47 = vector.extract_strided_slice %11 {offsets = [0, 272], sizes = [16, 16], strides = [1, 1]} : vector<16x384xf32> to vector<16x16xf32>
    %cst_20 = arith.constant dense<0.000000e+00> : vector<16x16xf32>
    %48 = tpu.matmul %45, %46, %cst_20 {dimension_numbers = #tpu.dot_dimension_numbers<[1], [1], [0], [0], [0, 0, 1, 0], [], []>} : vector<16x16xf32>, vector<16x16xf32>, vector<16x16xf32> -> vector<16x16xf32>
    %cst_21 = arith.constant 2.500000e-01 : f32
    %49 = vector.broadcast %cst_21 : f32 to vector<16x16xf32>
    %50 = arith.mulf %48, %49 : vector<16x16xf32>
    %cst_22 = arith.constant -1.000000e+30 : f32
    %51 = vector.broadcast %cst_22 : f32 to vector<16x16xf32>
    %52 = arith.select %18, %50, %51 : vector<16x16xi1>, vector<16x16xf32>
    %cst_23 = arith.constant dense<0xFF800000> : vector<16xf32>
    %53 = vector.multi_reduction <maximumf>, %52, %cst_23 [1] : vector<16x16xf32> to vector<16xf32>
    %54 = vector.shape_cast %53 : vector<16xf32> to vector<16x1xf32>
    %55 = vector.broadcast %54 : vector<16x1xf32> to vector<16x16xf32>
    %56 = arith.subf %52, %55 : vector<16x16xf32>
    %57 = math.exp %56 : vector<16x16xf32>
    %cst_24 = arith.constant dense<0.000000e+00> : vector<16xf32>
    %58 = vector.multi_reduction <add>, %57, %cst_24 [1] : vector<16x16xf32> to vector<16xf32>
    %59 = vector.shape_cast %58 : vector<16xf32> to vector<16x1xf32>
    %60 = tpu.reciprocal %59 {approx = true} : vector<16x1xf32> -> vector<16x1xf32>
    %61 = vector.broadcast %60 : vector<16x1xf32> to vector<16x16xf32>
    %62 = arith.mulf %57, %61 : vector<16x16xf32>
    %cst_25 = arith.constant dense<0.000000e+00> : vector<16x16xf32>
    %63 = tpu.matmul %62, %47, %cst_25 {dimension_numbers = #tpu.dot_dimension_numbers<[1], [0], [0], [1], [0, 0, 1, 1], [], []>} : vector<16x16xf32>, vector<16x16xf32>, vector<16x16xf32> -> vector<16x16xf32>
    %64 = vector.extract_strided_slice %21 {offsets = [16, 0], sizes = [16, 128], strides = [1, 1]} : vector<128x128xf32> to vector<16x128xf32>
    %cst_26 = arith.constant dense<0.000000e+00> : vector<16x128xf32>
    %65 = tpu.matmul %63, %64, %cst_26 {dimension_numbers = #tpu.dot_dimension_numbers<[1], [0], [0], [1], [0, 0, 1, 1], [], []>} : vector<16x16xf32>, vector<16x128xf32>, vector<16x128xf32> -> vector<16x128xf32>
    %66 = arith.addf %44, %65 : vector<16x128xf32>
    %67 = vector.extract_strided_slice %11 {offsets = [0, 32], sizes = [16, 16], strides = [1, 1]} : vector<16x384xf32> to vector<16x16xf32>
    %68 = vector.extract_strided_slice %11 {offsets = [0, 160], sizes = [16, 16], strides = [1, 1]} : vector<16x384xf32> to vector<16x16xf32>
    %69 = vector.extract_strided_slice %11 {offsets = [0, 288], sizes = [16, 16], strides = [1, 1]} : vector<16x384xf32> to vector<16x16xf32>
    %cst_27 = arith.constant dense<0.000000e+00> : vector<16x16xf32>
    %70 = tpu.matmul %67, %68, %cst_27 {dimension_numbers = #tpu.dot_dimension_numbers<[1], [1], [0], [0], [0, 0, 1, 0], [], []>} : vector<16x16xf32>, vector<16x16xf32>, vector<16x16xf32> -> vector<16x16xf32>
    %cst_28 = arith.constant 2.500000e-01 : f32
    %71 = vector.broadcast %cst_28 : f32 to vector<16x16xf32>
    %72 = arith.mulf %70, %71 : vector<16x16xf32>
    %cst_29 = arith.constant -1.000000e+30 : f32
    %73 = vector.broadcast %cst_29 : f32 to vector<16x16xf32>
    %74 = arith.select %18, %72, %73 : vector<16x16xi1>, vector<16x16xf32>
    %cst_30 = arith.constant dense<0xFF800000> : vector<16xf32>
    %75 = vector.multi_reduction <maximumf>, %74, %cst_30 [1] : vector<16x16xf32> to vector<16xf32>
    %76 = vector.shape_cast %75 : vector<16xf32> to vector<16x1xf32>
    %77 = vector.broadcast %76 : vector<16x1xf32> to vector<16x16xf32>
    %78 = arith.subf %74, %77 : vector<16x16xf32>
    %79 = math.exp %78 : vector<16x16xf32>
    %cst_31 = arith.constant dense<0.000000e+00> : vector<16xf32>
    %80 = vector.multi_reduction <add>, %79, %cst_31 [1] : vector<16x16xf32> to vector<16xf32>
    %81 = vector.shape_cast %80 : vector<16xf32> to vector<16x1xf32>
    %82 = tpu.reciprocal %81 {approx = true} : vector<16x1xf32> -> vector<16x1xf32>
    %83 = vector.broadcast %82 : vector<16x1xf32> to vector<16x16xf32>
    %84 = arith.mulf %79, %83 : vector<16x16xf32>
    %cst_32 = arith.constant dense<0.000000e+00> : vector<16x16xf32>
    %85 = tpu.matmul %84, %69, %cst_32 {dimension_numbers = #tpu.dot_dimension_numbers<[1], [0], [0], [1], [0, 0, 1, 1], [], []>} : vector<16x16xf32>, vector<16x16xf32>, vector<16x16xf32> -> vector<16x16xf32>
    %86 = vector.extract_strided_slice %21 {offsets = [32, 0], sizes = [16, 128], strides = [1, 1]} : vector<128x128xf32> to vector<16x128xf32>
    %cst_33 = arith.constant dense<0.000000e+00> : vector<16x128xf32>
    %87 = tpu.matmul %85, %86, %cst_33 {dimension_numbers = #tpu.dot_dimension_numbers<[1], [0], [0], [1], [0, 0, 1, 1], [], []>} : vector<16x16xf32>, vector<16x128xf32>, vector<16x128xf32> -> vector<16x128xf32>
    %88 = arith.addf %66, %87 : vector<16x128xf32>
    %89 = vector.extract_strided_slice %11 {offsets = [0, 48], sizes = [16, 16], strides = [1, 1]} : vector<16x384xf32> to vector<16x16xf32>
    %90 = vector.extract_strided_slice %11 {offsets = [0, 176], sizes = [16, 16], strides = [1, 1]} : vector<16x384xf32> to vector<16x16xf32>
    %91 = vector.extract_strided_slice %11 {offsets = [0, 304], sizes = [16, 16], strides = [1, 1]} : vector<16x384xf32> to vector<16x16xf32>
    %cst_34 = arith.constant dense<0.000000e+00> : vector<16x16xf32>
    %92 = tpu.matmul %89, %90, %cst_34 {dimension_numbers = #tpu.dot_dimension_numbers<[1], [1], [0], [0], [0, 0, 1, 0], [], []>} : vector<16x16xf32>, vector<16x16xf32>, vector<16x16xf32> -> vector<16x16xf32>
    %cst_35 = arith.constant 2.500000e-01 : f32
    %93 = vector.broadcast %cst_35 : f32 to vector<16x16xf32>
    %94 = arith.mulf %92, %93 : vector<16x16xf32>
    %cst_36 = arith.constant -1.000000e+30 : f32
    %95 = vector.broadcast %cst_36 : f32 to vector<16x16xf32>
    %96 = arith.select %18, %94, %95 : vector<16x16xi1>, vector<16x16xf32>
    %cst_37 = arith.constant dense<0xFF800000> : vector<16xf32>
    %97 = vector.multi_reduction <maximumf>, %96, %cst_37 [1] : vector<16x16xf32> to vector<16xf32>
    %98 = vector.shape_cast %97 : vector<16xf32> to vector<16x1xf32>
    %99 = vector.broadcast %98 : vector<16x1xf32> to vector<16x16xf32>
    %100 = arith.subf %96, %99 : vector<16x16xf32>
    %101 = math.exp %100 : vector<16x16xf32>
    %cst_38 = arith.constant dense<0.000000e+00> : vector<16xf32>
    %102 = vector.multi_reduction <add>, %101, %cst_38 [1] : vector<16x16xf32> to vector<16xf32>
    %103 = vector.shape_cast %102 : vector<16xf32> to vector<16x1xf32>
    %104 = tpu.reciprocal %103 {approx = true} : vector<16x1xf32> -> vector<16x1xf32>
    %105 = vector.broadcast %104 : vector<16x1xf32> to vector<16x16xf32>
    %106 = arith.mulf %101, %105 : vector<16x16xf32>
    %cst_39 = arith.constant dense<0.000000e+00> : vector<16x16xf32>
    %107 = tpu.matmul %106, %91, %cst_39 {dimension_numbers = #tpu.dot_dimension_numbers<[1], [0], [0], [1], [0, 0, 1, 1], [], []>} : vector<16x16xf32>, vector<16x16xf32>, vector<16x16xf32> -> vector<16x16xf32>
    %108 = vector.extract_strided_slice %21 {offsets = [48, 0], sizes = [16, 128], strides = [1, 1]} : vector<128x128xf32> to vector<16x128xf32>
    %cst_40 = arith.constant dense<0.000000e+00> : vector<16x128xf32>
    %109 = tpu.matmul %107, %108, %cst_40 {dimension_numbers = #tpu.dot_dimension_numbers<[1], [0], [0], [1], [0, 0, 1, 1], [], []>} : vector<16x16xf32>, vector<16x128xf32>, vector<16x128xf32> -> vector<16x128xf32>
    %110 = arith.addf %88, %109 : vector<16x128xf32>
    %111 = vector.extract_strided_slice %11 {offsets = [0, 64], sizes = [16, 16], strides = [1, 1]} : vector<16x384xf32> to vector<16x16xf32>
    %112 = vector.extract_strided_slice %11 {offsets = [0, 192], sizes = [16, 16], strides = [1, 1]} : vector<16x384xf32> to vector<16x16xf32>
    %113 = vector.extract_strided_slice %11 {offsets = [0, 320], sizes = [16, 16], strides = [1, 1]} : vector<16x384xf32> to vector<16x16xf32>
    %cst_41 = arith.constant dense<0.000000e+00> : vector<16x16xf32>
    %114 = tpu.matmul %111, %112, %cst_41 {dimension_numbers = #tpu.dot_dimension_numbers<[1], [1], [0], [0], [0, 0, 1, 0], [], []>} : vector<16x16xf32>, vector<16x16xf32>, vector<16x16xf32> -> vector<16x16xf32>
    %cst_42 = arith.constant 2.500000e-01 : f32
    %115 = vector.broadcast %cst_42 : f32 to vector<16x16xf32>
    %116 = arith.mulf %114, %115 : vector<16x16xf32>
    %cst_43 = arith.constant -1.000000e+30 : f32
    %117 = vector.broadcast %cst_43 : f32 to vector<16x16xf32>
    %118 = arith.select %18, %116, %117 : vector<16x16xi1>, vector<16x16xf32>
    %cst_44 = arith.constant dense<0xFF800000> : vector<16xf32>
    %119 = vector.multi_reduction <maximumf>, %118, %cst_44 [1] : vector<16x16xf32> to vector<16xf32>
    %120 = vector.shape_cast %119 : vector<16xf32> to vector<16x1xf32>
    %121 = vector.broadcast %120 : vector<16x1xf32> to vector<16x16xf32>
    %122 = arith.subf %118, %121 : vector<16x16xf32>
    %123 = math.exp %122 : vector<16x16xf32>
    %cst_45 = arith.constant dense<0.000000e+00> : vector<16xf32>
    %124 = vector.multi_reduction <add>, %123, %cst_45 [1] : vector<16x16xf32> to vector<16xf32>
    %125 = vector.shape_cast %124 : vector<16xf32> to vector<16x1xf32>
    %126 = tpu.reciprocal %125 {approx = true} : vector<16x1xf32> -> vector<16x1xf32>
    %127 = vector.broadcast %126 : vector<16x1xf32> to vector<16x16xf32>
    %128 = arith.mulf %123, %127 : vector<16x16xf32>
    %cst_46 = arith.constant dense<0.000000e+00> : vector<16x16xf32>
    %129 = tpu.matmul %128, %113, %cst_46 {dimension_numbers = #tpu.dot_dimension_numbers<[1], [0], [0], [1], [0, 0, 1, 1], [], []>} : vector<16x16xf32>, vector<16x16xf32>, vector<16x16xf32> -> vector<16x16xf32>
    %130 = vector.extract_strided_slice %21 {offsets = [64, 0], sizes = [16, 128], strides = [1, 1]} : vector<128x128xf32> to vector<16x128xf32>
    %cst_47 = arith.constant dense<0.000000e+00> : vector<16x128xf32>
    %131 = tpu.matmul %129, %130, %cst_47 {dimension_numbers = #tpu.dot_dimension_numbers<[1], [0], [0], [1], [0, 0, 1, 1], [], []>} : vector<16x16xf32>, vector<16x128xf32>, vector<16x128xf32> -> vector<16x128xf32>
    %132 = arith.addf %110, %131 : vector<16x128xf32>
    %133 = vector.extract_strided_slice %11 {offsets = [0, 80], sizes = [16, 16], strides = [1, 1]} : vector<16x384xf32> to vector<16x16xf32>
    %134 = vector.extract_strided_slice %11 {offsets = [0, 208], sizes = [16, 16], strides = [1, 1]} : vector<16x384xf32> to vector<16x16xf32>
    %135 = vector.extract_strided_slice %11 {offsets = [0, 336], sizes = [16, 16], strides = [1, 1]} : vector<16x384xf32> to vector<16x16xf32>
    %cst_48 = arith.constant dense<0.000000e+00> : vector<16x16xf32>
    %136 = tpu.matmul %133, %134, %cst_48 {dimension_numbers = #tpu.dot_dimension_numbers<[1], [1], [0], [0], [0, 0, 1, 0], [], []>} : vector<16x16xf32>, vector<16x16xf32>, vector<16x16xf32> -> vector<16x16xf32>
    %cst_49 = arith.constant 2.500000e-01 : f32
    %137 = vector.broadcast %cst_49 : f32 to vector<16x16xf32>
    %138 = arith.mulf %136, %137 : vector<16x16xf32>
    %cst_50 = arith.constant -1.000000e+30 : f32
    %139 = vector.broadcast %cst_50 : f32 to vector<16x16xf32>
    %140 = arith.select %18, %138, %139 : vector<16x16xi1>, vector<16x16xf32>
    %cst_51 = arith.constant dense<0xFF800000> : vector<16xf32>
    %141 = vector.multi_reduction <maximumf>, %140, %cst_51 [1] : vector<16x16xf32> to vector<16xf32>
    %142 = vector.shape_cast %141 : vector<16xf32> to vector<16x1xf32>
    %143 = vector.broadcast %142 : vector<16x1xf32> to vector<16x16xf32>
    %144 = arith.subf %140, %143 : vector<16x16xf32>
    %145 = math.exp %144 : vector<16x16xf32>
    %cst_52 = arith.constant dense<0.000000e+00> : vector<16xf32>
    %146 = vector.multi_reduction <add>, %145, %cst_52 [1] : vector<16x16xf32> to vector<16xf32>
    %147 = vector.shape_cast %146 : vector<16xf32> to vector<16x1xf32>
    %148 = tpu.reciprocal %147 {approx = true} : vector<16x1xf32> -> vector<16x1xf32>
    %149 = vector.broadcast %148 : vector<16x1xf32> to vector<16x16xf32>
    %150 = arith.mulf %145, %149 : vector<16x16xf32>
    %cst_53 = arith.constant dense<0.000000e+00> : vector<16x16xf32>
    %151 = tpu.matmul %150, %135, %cst_53 {dimension_numbers = #tpu.dot_dimension_numbers<[1], [0], [0], [1], [0, 0, 1, 1], [], []>} : vector<16x16xf32>, vector<16x16xf32>, vector<16x16xf32> -> vector<16x16xf32>
    %152 = vector.extract_strided_slice %21 {offsets = [80, 0], sizes = [16, 128], strides = [1, 1]} : vector<128x128xf32> to vector<16x128xf32>
    %cst_54 = arith.constant dense<0.000000e+00> : vector<16x128xf32>
    %153 = tpu.matmul %151, %152, %cst_54 {dimension_numbers = #tpu.dot_dimension_numbers<[1], [0], [0], [1], [0, 0, 1, 1], [], []>} : vector<16x16xf32>, vector<16x128xf32>, vector<16x128xf32> -> vector<16x128xf32>
    %154 = arith.addf %132, %153 : vector<16x128xf32>
    %155 = vector.extract_strided_slice %11 {offsets = [0, 96], sizes = [16, 16], strides = [1, 1]} : vector<16x384xf32> to vector<16x16xf32>
    %156 = vector.extract_strided_slice %11 {offsets = [0, 224], sizes = [16, 16], strides = [1, 1]} : vector<16x384xf32> to vector<16x16xf32>
    %157 = vector.extract_strided_slice %11 {offsets = [0, 352], sizes = [16, 16], strides = [1, 1]} : vector<16x384xf32> to vector<16x16xf32>
    %cst_55 = arith.constant dense<0.000000e+00> : vector<16x16xf32>
    %158 = tpu.matmul %155, %156, %cst_55 {dimension_numbers = #tpu.dot_dimension_numbers<[1], [1], [0], [0], [0, 0, 1, 0], [], []>} : vector<16x16xf32>, vector<16x16xf32>, vector<16x16xf32> -> vector<16x16xf32>
    %cst_56 = arith.constant 2.500000e-01 : f32
    %159 = vector.broadcast %cst_56 : f32 to vector<16x16xf32>
    %160 = arith.mulf %158, %159 : vector<16x16xf32>
    %cst_57 = arith.constant -1.000000e+30 : f32
    %161 = vector.broadcast %cst_57 : f32 to vector<16x16xf32>
    %162 = arith.select %18, %160, %161 : vector<16x16xi1>, vector<16x16xf32>
    %cst_58 = arith.constant dense<0xFF800000> : vector<16xf32>
    %163 = vector.multi_reduction <maximumf>, %162, %cst_58 [1] : vector<16x16xf32> to vector<16xf32>
    %164 = vector.shape_cast %163 : vector<16xf32> to vector<16x1xf32>
    %165 = vector.broadcast %164 : vector<16x1xf32> to vector<16x16xf32>
    %166 = arith.subf %162, %165 : vector<16x16xf32>
    %167 = math.exp %166 : vector<16x16xf32>
    %cst_59 = arith.constant dense<0.000000e+00> : vector<16xf32>
    %168 = vector.multi_reduction <add>, %167, %cst_59 [1] : vector<16x16xf32> to vector<16xf32>
    %169 = vector.shape_cast %168 : vector<16xf32> to vector<16x1xf32>
    %170 = tpu.reciprocal %169 {approx = true} : vector<16x1xf32> -> vector<16x1xf32>
    %171 = vector.broadcast %170 : vector<16x1xf32> to vector<16x16xf32>
    %172 = arith.mulf %167, %171 : vector<16x16xf32>
    %cst_60 = arith.constant dense<0.000000e+00> : vector<16x16xf32>
    %173 = tpu.matmul %172, %157, %cst_60 {dimension_numbers = #tpu.dot_dimension_numbers<[1], [0], [0], [1], [0, 0, 1, 1], [], []>} : vector<16x16xf32>, vector<16x16xf32>, vector<16x16xf32> -> vector<16x16xf32>
    %174 = vector.extract_strided_slice %21 {offsets = [96, 0], sizes = [16, 128], strides = [1, 1]} : vector<128x128xf32> to vector<16x128xf32>
    %cst_61 = arith.constant dense<0.000000e+00> : vector<16x128xf32>
    %175 = tpu.matmul %173, %174, %cst_61 {dimension_numbers = #tpu.dot_dimension_numbers<[1], [0], [0], [1], [0, 0, 1, 1], [], []>} : vector<16x16xf32>, vector<16x128xf32>, vector<16x128xf32> -> vector<16x128xf32>
    %176 = arith.addf %154, %175 : vector<16x128xf32>
    %177 = vector.extract_strided_slice %11 {offsets = [0, 112], sizes = [16, 16], strides = [1, 1]} : vector<16x384xf32> to vector<16x16xf32>
    %178 = vector.extract_strided_slice %11 {offsets = [0, 240], sizes = [16, 16], strides = [1, 1]} : vector<16x384xf32> to vector<16x16xf32>
    %179 = vector.extract_strided_slice %11 {offsets = [0, 368], sizes = [16, 16], strides = [1, 1]} : vector<16x384xf32> to vector<16x16xf32>
    %cst_62 = arith.constant dense<0.000000e+00> : vector<16x16xf32>
    %180 = tpu.matmul %177, %178, %cst_62 {dimension_numbers = #tpu.dot_dimension_numbers<[1], [1], [0], [0], [0, 0, 1, 0], [], []>} : vector<16x16xf32>, vector<16x16xf32>, vector<16x16xf32> -> vector<16x16xf32>
    %cst_63 = arith.constant 2.500000e-01 : f32
    %181 = vector.broadcast %cst_63 : f32 to vector<16x16xf32>
    %182 = arith.mulf %180, %181 : vector<16x16xf32>
    %cst_64 = arith.constant -1.000000e+30 : f32
    %183 = vector.broadcast %cst_64 : f32 to vector<16x16xf32>
    %184 = arith.select %18, %182, %183 : vector<16x16xi1>, vector<16x16xf32>
    %cst_65 = arith.constant dense<0xFF800000> : vector<16xf32>
    %185 = vector.multi_reduction <maximumf>, %184, %cst_65 [1] : vector<16x16xf32> to vector<16xf32>
    %186 = vector.shape_cast %185 : vector<16xf32> to vector<16x1xf32>
    %187 = vector.broadcast %186 : vector<16x1xf32> to vector<16x16xf32>
    %188 = arith.subf %184, %187 : vector<16x16xf32>
    %189 = math.exp %188 : vector<16x16xf32>
    %cst_66 = arith.constant dense<0.000000e+00> : vector<16xf32>
    %190 = vector.multi_reduction <add>, %189, %cst_66 [1] : vector<16x16xf32> to vector<16xf32>
    %191 = vector.shape_cast %190 : vector<16xf32> to vector<16x1xf32>
    %192 = tpu.reciprocal %191 {approx = true} : vector<16x1xf32> -> vector<16x1xf32>
    %193 = vector.broadcast %192 : vector<16x1xf32> to vector<16x16xf32>
    %194 = arith.mulf %189, %193 : vector<16x16xf32>
    %cst_67 = arith.constant dense<0.000000e+00> : vector<16x16xf32>
    %195 = tpu.matmul %194, %179, %cst_67 {dimension_numbers = #tpu.dot_dimension_numbers<[1], [0], [0], [1], [0, 0, 1, 1], [], []>} : vector<16x16xf32>, vector<16x16xf32>, vector<16x16xf32> -> vector<16x16xf32>
    %196 = vector.extract_strided_slice %21 {offsets = [112, 0], sizes = [16, 128], strides = [1, 1]} : vector<128x128xf32> to vector<16x128xf32>
    %cst_68 = arith.constant dense<0.000000e+00> : vector<16x128xf32>
    %197 = tpu.matmul %195, %196, %cst_68 {dimension_numbers = #tpu.dot_dimension_numbers<[1], [0], [0], [1], [0, 0, 1, 1], [], []>} : vector<16x16xf32>, vector<16x128xf32>, vector<16x128xf32> -> vector<16x128xf32>
    %198 = arith.addf %176, %197 : vector<16x128xf32>
    %c0_69 = arith.constant 0 : index
    %c0_70 = arith.constant 0 : index
    %c0_71 = arith.constant 0 : index
    %199 = vector.load %arg10[%c0_69, %c0_70, %c0_71] : memref<1x1x128xf32, #tpu.memory_space<vmem>>, vector<1x1x128xf32>
    %200 = vector.shape_cast %199 : vector<1x1x128xf32> to vector<1x128xf32>
    %201 = vector.broadcast %200 : vector<1x128xf32> to vector<16x128xf32>
    %202 = arith.addf %198, %201 : vector<16x128xf32>
    %203 = arith.addf %3, %202 : vector<16x128xf32>
    %c0_72 = arith.constant 0 : index
    %c0_73 = arith.constant 0 : index
    %c0_74 = arith.constant 0 : index
    %204 = vector.load %arg15[%c0_72, %c0_73, %c0_74] : memref<1x1x128xf32, #tpu.memory_space<vmem>>, vector<1x1x128xf32>
    %205 = vector.shape_cast %204 : vector<1x1x128xf32> to vector<1x128xf32>
    %c0_75 = arith.constant 0 : index
    %c0_76 = arith.constant 0 : index
    %c0_77 = arith.constant 0 : index
    %206 = vector.load %arg16[%c0_75, %c0_76, %c0_77] : memref<1x1x128xf32, #tpu.memory_space<vmem>>, vector<1x1x128xf32>
    %207 = vector.shape_cast %206 : vector<1x1x128xf32> to vector<1x128xf32>
    %cst_78 = arith.constant dense<0.000000e+00> : vector<16xf32>
    %208 = vector.multi_reduction <add>, %203, %cst_78 [1] : vector<16x128xf32> to vector<16xf32>
    %209 = vector.shape_cast %208 : vector<16xf32> to vector<16x1xf32>
    %cst_79 = arith.constant 1.280000e+02 : f32
    %210 = vector.broadcast %cst_79 : f32 to vector<16x1xf32>
    %211 = arith.divf %209, %210 : vector<16x1xf32>
    %212 = vector.broadcast %211 : vector<16x1xf32> to vector<16x128xf32>
    %213 = arith.subf %203, %212 : vector<16x128xf32>
    %214 = arith.mulf %213, %213 : vector<16x128xf32>
    %cst_80 = arith.constant dense<0.000000e+00> : vector<16xf32>
    %215 = vector.multi_reduction <add>, %214, %cst_80 [1] : vector<16x128xf32> to vector<16xf32>
    %216 = vector.shape_cast %215 : vector<16xf32> to vector<16x1xf32>
    %cst_81 = arith.constant 1.280000e+02 : f32
    %217 = vector.broadcast %cst_81 : f32 to vector<16x1xf32>
    %218 = arith.divf %216, %217 : vector<16x1xf32>
    %219 = vector.broadcast %211 : vector<16x1xf32> to vector<16x128xf32>
    %220 = arith.subf %203, %219 : vector<16x128xf32>
    %cst_82 = arith.constant 9.99999974E-6 : f32
    %221 = vector.broadcast %cst_82 : f32 to vector<16x1xf32>
    %222 = arith.addf %218, %221 : vector<16x1xf32>
    %223 = math.rsqrt %222 : vector<16x1xf32>
    %224 = vector.broadcast %223 : vector<16x1xf32> to vector<16x128xf32>
    %225 = arith.mulf %220, %224 : vector<16x128xf32>
    %226 = vector.broadcast %205 : vector<1x128xf32> to vector<16x128xf32>
    %227 = arith.mulf %225, %226 : vector<16x128xf32>
    %228 = vector.broadcast %207 : vector<1x128xf32> to vector<16x128xf32>
    %229 = arith.addf %227, %228 : vector<16x128xf32>
    %c0_83 = arith.constant 0 : index
    %c0_84 = arith.constant 0 : index
    %c0_85 = arith.constant 0 : index
    %230 = vector.load %arg11[%c0_83, %c0_84, %c0_85] : memref<1x128x2048xbf16, #tpu.memory_space<vmem>>, vector<1x128x2048xbf16>
    %231 = vector.shape_cast %230 : vector<1x128x2048xbf16> to vector<128x2048xbf16>
    %232 = arith.extf %231 : vector<128x2048xbf16> to vector<128x2048xf32>
    %cst_86 = arith.constant dense<0.000000e+00> : vector<16x2048xf32>
    %233 = tpu.matmul %229, %232, %cst_86 {dimension_numbers = #tpu.dot_dimension_numbers<[1], [0], [0], [1], [0, 0, 1, 1], [], []>} : vector<16x128xf32>, vector<128x2048xf32>, vector<16x2048xf32> -> vector<16x2048xf32>
    %c0_87 = arith.constant 0 : index
    %c0_88 = arith.constant 0 : index
    %c0_89 = arith.constant 0 : index
    %234 = vector.load %arg12[%c0_87, %c0_88, %c0_89] : memref<1x1x2048xf32, #tpu.memory_space<vmem>>, vector<1x1x2048xf32>
    %235 = vector.shape_cast %234 : vector<1x1x2048xf32> to vector<1x2048xf32>
    %236 = vector.broadcast %235 : vector<1x2048xf32> to vector<16x2048xf32>
    %237 = arith.addf %233, %236 : vector<16x2048xf32>
    %cst_90 = arith.constant 0.000000e+00 : f32
    %238 = vector.broadcast %cst_90 : f32 to vector<16x2048xf32>
    %239 = arith.maximumf %237, %238 : vector<16x2048xf32>
    %c0_91 = arith.constant 0 : index
    %c0_92 = arith.constant 0 : index
    %c0_93 = arith.constant 0 : index
    %240 = vector.load %arg13[%c0_91, %c0_92, %c0_93] : memref<1x2048x128xbf16, #tpu.memory_space<vmem>>, vector<1x2048x128xbf16>
    %241 = vector.shape_cast %240 : vector<1x2048x128xbf16> to vector<2048x128xbf16>
    %242 = arith.extf %241 : vector<2048x128xbf16> to vector<2048x128xf32>
    %cst_94 = arith.constant dense<0.000000e+00> : vector<16x128xf32>
    %243 = tpu.matmul %239, %242, %cst_94 {dimension_numbers = #tpu.dot_dimension_numbers<[1], [0], [0], [1], [0, 0, 1, 1], [], []>} : vector<16x2048xf32>, vector<2048x128xf32>, vector<16x128xf32> -> vector<16x128xf32>
    %c0_95 = arith.constant 0 : index
    %c0_96 = arith.constant 0 : index
    %c0_97 = arith.constant 0 : index
    %244 = vector.load %arg14[%c0_95, %c0_96, %c0_97] : memref<1x1x128xf32, #tpu.memory_space<vmem>>, vector<1x1x128xf32>
    %245 = vector.shape_cast %244 : vector<1x1x128xf32> to vector<1x128xf32>
    %246 = vector.broadcast %245 : vector<1x128xf32> to vector<16x128xf32>
    %247 = arith.addf %243, %246 : vector<16x128xf32>
    %248 = arith.addf %229, %247 : vector<16x128xf32>
    %c0_98 = arith.constant 0 : index
    %c0_99 = arith.constant 0 : index
    %c0_100 = arith.constant 0 : index
    %249 = vector.load %arg17[%c0_98, %c0_99, %c0_100] : memref<1x1x128xf32, #tpu.memory_space<vmem>>, vector<1x1x128xf32>
    %250 = vector.shape_cast %249 : vector<1x1x128xf32> to vector<1x128xf32>
    %c0_101 = arith.constant 0 : index
    %c0_102 = arith.constant 0 : index
    %c0_103 = arith.constant 0 : index
    %251 = vector.load %arg18[%c0_101, %c0_102, %c0_103] : memref<1x1x128xf32, #tpu.memory_space<vmem>>, vector<1x1x128xf32>
    %252 = vector.shape_cast %251 : vector<1x1x128xf32> to vector<1x128xf32>
    %cst_104 = arith.constant dense<0.000000e+00> : vector<16xf32>
    %253 = vector.multi_reduction <add>, %248, %cst_104 [1] : vector<16x128xf32> to vector<16xf32>
    %254 = vector.shape_cast %253 : vector<16xf32> to vector<16x1xf32>
    %cst_105 = arith.constant 1.280000e+02 : f32
    %255 = vector.broadcast %cst_105 : f32 to vector<16x1xf32>
    %256 = arith.divf %254, %255 : vector<16x1xf32>
    %257 = vector.broadcast %256 : vector<16x1xf32> to vector<16x128xf32>
    %258 = arith.subf %248, %257 : vector<16x128xf32>
    %259 = arith.mulf %258, %258 : vector<16x128xf32>
    %cst_106 = arith.constant dense<0.000000e+00> : vector<16xf32>
    %260 = vector.multi_reduction <add>, %259, %cst_106 [1] : vector<16x128xf32> to vector<16xf32>
    %261 = vector.shape_cast %260 : vector<16xf32> to vector<16x1xf32>
    %cst_107 = arith.constant 1.280000e+02 : f32
    %262 = vector.broadcast %cst_107 : f32 to vector<16x1xf32>
    %263 = arith.divf %261, %262 : vector<16x1xf32>
    %264 = vector.broadcast %256 : vector<16x1xf32> to vector<16x128xf32>
    %265 = arith.subf %248, %264 : vector<16x128xf32>
    %cst_108 = arith.constant 9.99999974E-6 : f32
    %266 = vector.broadcast %cst_108 : f32 to vector<16x1xf32>
    %267 = arith.addf %263, %266 : vector<16x1xf32>
    %268 = math.rsqrt %267 : vector<16x1xf32>
    %269 = vector.broadcast %268 : vector<16x1xf32> to vector<16x128xf32>
    %270 = arith.mulf %265, %269 : vector<16x128xf32>
    %271 = vector.broadcast %250 : vector<1x128xf32> to vector<16x128xf32>
    %272 = arith.mulf %270, %271 : vector<16x128xf32>
    %273 = vector.broadcast %252 : vector<1x128xf32> to vector<16x128xf32>
    %274 = arith.addf %272, %273 : vector<16x128xf32>
    %c0_109 = arith.constant 0 : index
    %c0_110 = arith.constant 0 : index
    %275 = vector.load %arg20[%c0_109, %c0_110] : memref<16x128xf32, #tpu.memory_space<vmem>>, vector<16x128xf32>
    tpu.vector_store %arg20[%c0_109, %c0_110], %274 {strides = array<i32>} : memref<16x128xf32, #tpu.memory_space<vmem>>, vector<16x128xf32>,
    %c3_i32_111 = arith.constant 3 : i32
    %276 = arith.cmpi eq, %arg0, %c3_i32_111 : i32
    %277 = arith.extui %276 : i1 to i32
    %c0_i32_112 = arith.constant 0 : i32
    %278 = arith.cmpi ne, %277, %c0_i32_112 : i32
    scf.if %278 {
      %c0_113 = arith.constant 0 : index
      %c0_114 = arith.constant 0 : index
      %279 = vector.load %arg5[%c0_113, %c0_114] : memref<128x128xbf16, #tpu.memory_space<vmem>>, vector<128x128xbf16>
      %280 = arith.extf %279 : vector<128x128xbf16> to vector<128x128xf32>
      %cst_115 = arith.constant dense<0.000000e+00> : vector<16x128xf32>
      %281 = tpu.matmul %274, %280, %cst_115 {dimension_numbers = #tpu.dot_dimension_numbers<[1], [0], [0], [1], [0, 0, 1, 1], [], []>} : vector<16x128xf32>, vector<128x128xf32>, vector<16x128xf32> -> vector<16x128xf32>
      %c0_116 = arith.constant 0 : index
      %c0_117 = arith.constant 0 : index
      %282 = vector.load %arg6[%c0_116, %c0_117] : memref<1x128xf32, #tpu.memory_space<vmem>>, vector<1x128xf32>
      %283 = vector.broadcast %282 : vector<1x128xf32> to vector<16x128xf32>
      %284 = arith.addf %281, %283 : vector<16x128xf32>
      %285 = tpu.iota {dimensions = array<i32: 1>} : vector<16x128xi32>
      %c4_i32 = arith.constant 4 : i32
      %286 = vector.broadcast %c4_i32 : i32 to vector<16x128xi32>
      %287 = arith.cmpi slt, %285, %286 : vector<16x128xi32>
      %cst_118 = arith.constant -1.000000e+30 : f32
      %288 = vector.broadcast %cst_118 : f32 to vector<16x128xf32>
      %289 = arith.select %287, %284, %288 : vector<16x128xi1>, vector<16x128xf32>
      %cst_119 = arith.constant dense<0xFF800000> : vector<16xf32>
      %290 = vector.multi_reduction <maximumf>, %289, %cst_119 [1] : vector<16x128xf32> to vector<16xf32>
      %291 = vector.shape_cast %290 : vector<16xf32> to vector<16x1xf32>
      %292 = vector.broadcast %291 : vector<16x1xf32> to vector<16x128xf32>
      %293 = arith.subf %289, %292 : vector<16x128xf32>
      %294 = math.exp %293 : vector<16x128xf32>
      %cst_120 = arith.constant dense<0.000000e+00> : vector<16xf32>
      %295 = vector.multi_reduction <add>, %294, %cst_120 [1] : vector<16x128xf32> to vector<16xf32>
      %296 = vector.shape_cast %295 : vector<16xf32> to vector<16x1xf32>
      %297 = vector.broadcast %296 : vector<16x1xf32> to vector<16x128xf32>
      %298 = arith.divf %294, %297 : vector<16x128xf32>
      %c0_121 = arith.constant 0 : index
      %c0_122 = arith.constant 0 : index
      %299 = vector.load %arg19[%c0_121, %c0_122] : memref<16x128xf32, #tpu.memory_space<vmem>>, vector<16x128xf32>
      tpu.vector_store %arg19[%c0_121, %c0_122], %298 {strides = array<i32>} : memref<16x128xf32, #tpu.memory_space<vmem>>, vector<16x128xf32>,
    } else {
    }
    return
  }
  func.func @transform_0(%arg0: i32) -> (i32, i32) {
    %c0_i32 = arith.constant 0 : i32
    %c0_i32_0 = arith.constant 0 : i32
    %c0_i32_1 = arith.constant 0 : i32
    return %c0_i32, %c0_i32_0 : i32, i32
  }
  func.func @transform_1(%arg0: i32) -> (i32, i32) {
    %c0_i32 = arith.constant 0 : i32
    %c0_i32_0 = arith.constant 0 : i32
    %c0_i32_1 = arith.constant 0 : i32
    return %c0_i32, %c0_i32_0 : i32, i32
  }
  func.func @transform_2(%arg0: i32) -> (i32, i32) {
    %c0_i32 = arith.constant 0 : i32
    %c0_i32_0 = arith.constant 0 : i32
    %c0_i32_1 = arith.constant 0 : i32
    return %c0_i32, %c0_i32_0 : i32, i32
  }
  func.func @transform_3(%arg0: i32) -> (i32, i32) {
    %c0_i32 = arith.constant 0 : i32
    %c0_i32_0 = arith.constant 0 : i32
    %c0_i32_1 = arith.constant 0 : i32
    return %c0_i32, %c0_i32_0 : i32, i32
  }
  func.func @transform_4(%arg0: i32) -> (i32, i32) {
    %c0_i32 = arith.constant 0 : i32
    %c0_i32_0 = arith.constant 0 : i32
    %c0_i32_1 = arith.constant 0 : i32
    return %c0_i32, %c0_i32_0 : i32, i32
  }
  func.func @transform_5(%arg0: i32) -> (i32, i32) {
    %c0_i32 = arith.constant 0 : i32
    %c0_i32_0 = arith.constant 0 : i32
    %c0_i32_1 = arith.constant 0 : i32
    return %c0_i32, %c0_i32_0 : i32, i32
  }
  func.func @transform_6(%arg0: i32) -> (i32, i32, i32) {
    %c0_i32 = arith.constant 0 : i32
    %c0_i32_0 = arith.constant 0 : i32
    %c0_i32_1 = arith.constant 0 : i32
    return %arg0, %c0_i32, %c0_i32_0 : i32, i32, i32
  }
  func.func @transform_7(%arg0: i32) -> (i32, i32, i32) {
    %c0_i32 = arith.constant 0 : i32
    %c0_i32_0 = arith.constant 0 : i32
    %c0_i32_1 = arith.constant 0 : i32
    return %arg0, %c0_i32, %c0_i32_0 : i32, i32, i32
  }
  func.func @transform_8(%arg0: i32) -> (i32, i32, i32) {
    %c0_i32 = arith.constant 0 : i32
    %c0_i32_0 = arith.constant 0 : i32
    %c0_i32_1 = arith.constant 0 : i32
    return %arg0, %c0_i32, %c0_i32_0 : i32, i32, i32
  }
  func.func @transform_9(%arg0: i32) -> (i32, i32, i32) {
    %c0_i32 = arith.constant 0 : i32
    %c0_i32_0 = arith.constant 0 : i32
    %c0_i32_1 = arith.constant 0 : i32
    return %arg0, %c0_i32, %c0_i32_0 : i32, i32, i32
  }
  func.func @transform_10(%arg0: i32) -> (i32, i32, i32) {
    %c0_i32 = arith.constant 0 : i32
    %c0_i32_0 = arith.constant 0 : i32
    %c0_i32_1 = arith.constant 0 : i32
    return %arg0, %c0_i32, %c0_i32_0 : i32, i32, i32
  }
  func.func @transform_11(%arg0: i32) -> (i32, i32, i32) {
    %c0_i32 = arith.constant 0 : i32
    %c0_i32_0 = arith.constant 0 : i32
    %c0_i32_1 = arith.constant 0 : i32
    return %arg0, %c0_i32, %c0_i32_0 : i32, i32, i32
  }
  func.func @transform_12(%arg0: i32) -> (i32, i32, i32) {
    %c0_i32 = arith.constant 0 : i32
    %c0_i32_0 = arith.constant 0 : i32
    %c0_i32_1 = arith.constant 0 : i32
    return %arg0, %c0_i32, %c0_i32_0 : i32, i32, i32
  }
  func.func @transform_13(%arg0: i32) -> (i32, i32, i32) {
    %c0_i32 = arith.constant 0 : i32
    %c0_i32_0 = arith.constant 0 : i32
    %c0_i32_1 = arith.constant 0 : i32
    return %arg0, %c0_i32, %c0_i32_0 : i32, i32, i32
  }
  func.func @transform_14(%arg0: i32) -> (i32, i32, i32) {
    %c0_i32 = arith.constant 0 : i32
    %c0_i32_0 = arith.constant 0 : i32
    %c0_i32_1 = arith.constant 0 : i32
    return %arg0, %c0_i32, %c0_i32_0 : i32, i32, i32
  }
  func.func @transform_15(%arg0: i32) -> (i32, i32, i32) {
    %c0_i32 = arith.constant 0 : i32
    %c0_i32_0 = arith.constant 0 : i32
    %c0_i32_1 = arith.constant 0 : i32
    return %arg0, %c0_i32, %c0_i32_0 : i32, i32, i32
  }
  func.func @transform_16(%arg0: i32) -> (i32, i32, i32) {
    %c0_i32 = arith.constant 0 : i32
    %c0_i32_0 = arith.constant 0 : i32
    %c0_i32_1 = arith.constant 0 : i32
    return %arg0, %c0_i32, %c0_i32_0 : i32, i32, i32
  }
  func.func @transform_17(%arg0: i32) -> (i32, i32, i32) {
    %c0_i32 = arith.constant 0 : i32
    %c0_i32_0 = arith.constant 0 : i32
    %c0_i32_1 = arith.constant 0 : i32
    return %arg0, %c0_i32, %c0_i32_0 : i32, i32, i32
  }
  func.func @transform_18(%arg0: i32) -> (i32, i32) {
    %c0_i32 = arith.constant 0 : i32
    %c0_i32_0 = arith.constant 0 : i32
    %c0_i32_1 = arith.constant 0 : i32
    return %c0_i32, %c0_i32_0 : i32, i32
  }
}

</mosaic_0001>

<llo_original>
// kernel: tpu_custom_call.1
$region0: #{tpu_custom_call.1}
  #allocation0 [shape = 'u32[]', space=smem, size = 0x4, offset = 0x4, fixed_abs, tag = 'smem constant byte address 0x4 - core index']
  #allocation1 [shape = 'u32[144,128]{1,0:T(1,128)}', space=vmem, size = 0x12000, scoped, tag = 'internal scratch']
  #allocation2 [shape = 'f32[16,128]{1,0:T(8,128)}', space=vmem, size = 0x2000, scoped, tag = 'scratch operand']
  %s0 = inlined_call_operand.hbm [shape: f32[16,16], index: 0, kind: input, shape index: {}]
  %s1 = inlined_call_operand.hbm [shape: f32[16,128], index: 1, kind: input, shape index: {}]
  %s2 = inlined_call_operand.hbm [shape: bf16[16,128], index: 2, kind: input, shape index: {}]
  %s3 = inlined_call_operand.hbm [shape: f32[1,128], index: 3, kind: input, shape index: {}]
  %s4 = inlined_call_operand.hbm [shape: bf16[128,128], index: 4, kind: input, shape index: {}]
  %s5 = inlined_call_operand.hbm [shape: f32[1,128], index: 5, kind: input, shape index: {}]
  %s6 = inlined_call_operand.hbm [shape: bf16[4,128,384], index: 6, kind: input, shape index: {}]
  %s7 = inlined_call_operand.hbm [shape: f32[4,1,384], index: 7, kind: input, shape index: {}]
  %s8 = inlined_call_operand.hbm [shape: bf16[4,128,128], index: 8, kind: input, shape index: {}]
  %s9 = inlined_call_operand.hbm [shape: f32[4,1,128], index: 9, kind: input, shape index: {}]
  %s10 = inlined_call_operand.hbm [shape: bf16[4,128,2048], index: 10, kind: input, shape index: {}]
  %s11 = inlined_call_operand.hbm [shape: f32[4,1,2048], index: 11, kind: input, shape index: {}]
  %s12 = inlined_call_operand.hbm [shape: bf16[4,2048,128], index: 12, kind: input, shape index: {}]
  %s13 = inlined_call_operand.hbm [shape: f32[4,1,128], index: 13, kind: input, shape index: {}]
  %s14 = inlined_call_operand.hbm [shape: f32[4,1,128], index: 14, kind: input, shape index: {}]
  %s15 = inlined_call_operand.hbm [shape: f32[4,1,128], index: 15, kind: input, shape index: {}]
  %s16 = inlined_call_operand.hbm [shape: f32[4,1,128], index: 16, kind: input, shape index: {}]
  %s17 = inlined_call_operand.hbm [shape: f32[4,1,128], index: 17, kind: input, shape index: {}]
  %s18 = inlined_call_operand.hbm [shape: f32[16,128], index: 18, kind: output, shape index: {}]
  %s19 = sld [smem:[#allocation0]]
  $region185: #{tpu_custom_call.1} parent=0
    _
  %s21 = ssub.s32 1, %s19
  %s22 = scalar_select 0, %s21, %s19
  $region1: #{tpu_custom_call.1} parent=0
    #allocation3 [shape = 'u8[8192]{0}', space=vmem, size = 0x2000, scoped, tag = 'input window, operand 0, single buffered']
    #allocation4 [shape = 's32[2]{0}', space=sflag, size = 0x8, scoped, tag = 'scoped memory for tpu_custom_call.1']
    #allocation5 [shape = 's32[2]{0}', space=sflag, size = 0x8, scoped, tag = 'scoped memory for tpu_custom_call.1']
    #allocation6 [shape = 'u8[8192]{0}', space=vmem, size = 0x2000, scoped, tag = 'input window, operand 1, single buffered']
    #allocation7 [shape = 's32[1]{0}', space=sflag, size = 0x4, scoped, tag = 'scoped memory for tpu_custom_call.1']
    #allocation8 [shape = 'u8[4096]{0}', space=vmem, size = 0x1000, scoped, tag = 'input window, operand 2, single buffered']
    #allocation9 [shape = 'u8[512]{0}', space=vmem, size = 0x400, scoped, tag = 'input window, operand 3, single buffered']
    #allocation10 [shape = 's32[1]{0}', space=sflag, size = 0x4, scoped, tag = 'scoped memory for tpu_custom_call.1']
    #allocation11 [shape = 'u8[32768]{0}', space=vmem, size = 0x8000, scoped, tag = 'input window, operand 4, single buffered']
    #allocation12 [shape = 'u8[512]{0}', space=vmem, size = 0x400, scoped, tag = 'input window, operand 5, single buffered']
    #allocation13 [shape = 's32[1]{0}', space=sflag, size = 0x4, scoped, tag = 'scoped memory for tpu_custom_call.1']
    #allocation14 [shape = 'u8[196608]{0}', space=vmem, size = 0x30000, scoped, tag = 'input window, operand 6']
    #allocation15 [shape = 'u8[3072]{0}', space=vmem, size = 0xc00, scoped, tag = 'input window, operand 7']
    #allocation16 [shape = 'u8[65536]{0}', space=vmem, size = 0x10000, scoped, tag = 'input window, operand 8']
    #allocation17 [shape = 'u8[1024]{0}', space=vmem, size = 0x400, scoped, tag = 'input window, operand 9']
    #allocation18 [shape = 'u8[1048576]{0}', space=vmem, size = 0x100000, scoped, tag = 'input window, operand 10']
    #allocation19 [shape = 'u8[16384]{0}', space=vmem, size = 0x4000, scoped, tag = 'input window, operand 11']
    #allocation20 [shape = 'u8[1048576]{0}', space=vmem, size = 0x100000, scoped, tag = 'input window, operand 12']
    #allocation21 [shape = 'u8[1024]{0}', space=vmem, size = 0x400, scoped, tag = 'input window, operand 13']
    #allocation22 [shape = 'u8[1024]{0}', space=vmem, size = 0x400, scoped, tag = 'input window, operand 14']
    #allocation23 [shape = 'u8[1024]{0}', space=vmem, size = 0x400, scoped, tag = 'input window, operand 15']
    #allocation24 [shape = 'u8[1024]{0}', space=vmem, size = 0x400, scoped, tag = 'input window, operand 16']
    #allocation25 [shape = 'u8[1024]{0}', space=vmem, size = 0x400, scoped, tag = 'input window, operand 17']
    #allocation26 [shape = 'u8[8192]{0}', space=vmem, size = 0x2000, scoped, tag = 'output window, operand 0, single buffered']
    %23 = vsyncpa [#allocation4], 0
    %24 = vsyncpa [#allocation7], 0
    %25 = vsyncpa [#allocation10], 0
    %26 = vsyncpa [#allocation13], 0
    %27 = vsyncpa [#allocation5], 0
    loop: start=0, step=1, limit=6
    $region2: #{tpu_custom_call.1} parent=1 // loop_pre_header
      _
    $region3: #{tpu_custom_call.1} parent=1 // loop_header
      %s29 = sphi 0, %s33
      %p30 = scmp.ge.s32.totalorder %s29, 6
      %s37 = sphi 0, %s37
      %s39 = sphi 0, %s37
      %s40 = sphi 0, %s39
      %s54 = sphi 0, %s40
      %s58 = sphi 0, %s58
      %s60 = sphi 0, %s58
      %s61 = sphi 0, %s60
      %s75 = sphi 0, %s61
      %s79 = sphi 0, %s79
      %s81 = sphi 0, %s79
      %s82 = sphi 0, %s81
      %s96 = sphi 0, %s82
      %s100 = sphi 0, %s100
      %s102 = sphi 0, %s100
      %s103 = sphi 0, %s102
      %s117 = sphi 0, %s103
      %s121 = sphi 0, %s121
      %s123 = sphi 0, %s121
      %s124 = sphi 0, %s123
      %s138 = sphi 0, %s124
      %s142 = sphi 0, %s142
      %s144 = sphi 0, %s142
      %s145 = sphi 0, %s144
      %s159 = sphi 0, %s145
      %s165 = sphi 0, %s167
      %s168 = sphi 0, %s165
      %s169 = sphi 0, %s168
      %s185 = sphi 0, %s169
      %s191 = sphi 0, %s193
      %s194 = sphi 0, %s191
      %s195 = sphi 0, %s194
      %s211 = sphi 0, %s195
      %s217 = sphi 0, %s219
      %s220 = sphi 0, %s217
      %s221 = sphi 0, %s220
      %s237 = sphi 0, %s221
      %s243 = sphi 0, %s245
      %s246 = sphi 0, %s243
      %s247 = sphi 0, %s246
      %s263 = sphi 0, %s247
      %s269 = sphi 0, %s271
      %s272 = sphi 0, %s269
      %s273 = sphi 0, %s272
      %s289 = sphi 0, %s273
      %s295 = sphi 0, %s297
      %s298 = sphi 0, %s295
      %s299 = sphi 0, %s298
      %s315 = sphi 0, %s299
      %s321 = sphi 0, %s323
      %s324 = sphi 0, %s321
      %s325 = sphi 0, %s324
      %s341 = sphi 0, %s325
      %s347 = sphi 0, %s349
      %s350 = sphi 0, %s347
      %s351 = sphi 0, %s350
      %s367 = sphi 0, %s351
      %s373 = sphi 0, %s375
      %s376 = sphi 0, %s373
      %s377 = sphi 0, %s376
      %s393 = sphi 0, %s377
      %s399 = sphi 0, %s401
      %s402 = sphi 0, %s399
      %s403 = sphi 0, %s402
      %s419 = sphi 0, %s403
      %s425 = sphi 0, %s427
      %s428 = sphi 0, %s425
      %s429 = sphi 0, %s428
      %s445 = sphi 0, %s429
      %s451 = sphi 0, %s453
      %s454 = sphi 0, %s451
      %s455 = sphi 0, %s454
      %s471 = sphi 0, %s455
      %s475 = sphi 0, %s475
      %s477 = sphi 0, %s475
      %s478 = sphi 0, %s477
      %s492 = sphi 0, %s478
    $region4: #{tpu_custom_call.1} parent=1 // loop_header_branch
      %32 = sbr.rel (%p30) target = $region8
    $region5: #{tpu_custom_call.1} parent=1 // loop_body
      %s34 = ssub.s32 %s29, 1
      %s35 = ssub.s32 %s29, 2
      %s36 = sadd.s32 %s29, 1
      %s38 = sadd.s32 %s37, 1
      %p41 = scmp.eq.s32.totalorder %s29, 3
      %p42 = scmp.ne.s32.totalorder %s37, %s39
      %p43 = scmp.eq.s32.totalorder %s29, 0
      %p44 = por %p42, %p43
      %p45 = scmp.ne.s32.totalorder %s37, %s39
      %p46 = scmp.eq.s32.totalorder %s34, 3
      %p47 = por %p45, %p46
      %p48 = scmp.ne.s32.totalorder %s39, %s40
      %p49 = scmp.eq.s32.totalorder %s34, 0
      %p50 = por %p48, %p49
      %p51 = scmp.ne.s32.totalorder %s39, %s40
      %p52 = scmp.eq.s32.totalorder %s35, 3
      %p53 = por %p51, %p52
      %p55 = scmp.ne.s32.totalorder %s40, %s54
      %p56 = scmp.eq.s32.totalorder %s35, 0
      %p57 = por %p55, %p56
      %s59 = sadd.s32 %s58, 1
      %p62 = scmp.eq.s32.totalorder %s29, 3
      %p63 = scmp.ne.s32.totalorder %s58, %s60
      %p64 = scmp.eq.s32.totalorder %s29, 0
      %p65 = por %p63, %p64
      %p66 = scmp.ne.s32.totalorder %s58, %s60
      %p67 = scmp.eq.s32.totalorder %s34, 3
      %p68 = por %p66, %p67
      %p69 = scmp.ne.s32.totalorder %s60, %s61
      %p70 = scmp.eq.s32.totalorder %s34, 0
      %p71 = por %p69, %p70
      %p72 = scmp.ne.s32.totalorder %s60, %s61
      %p73 = scmp.eq.s32.totalorder %s35, 3
      %p74 = por %p72, %p73
      %p76 = scmp.ne.s32.totalorder %s61, %s75
      %p77 = scmp.eq.s32.totalorder %s35, 0
      %p78 = por %p76, %p77
      %s80 = sadd.s32 %s79, 1
      %p83 = scmp.eq.s32.totalorder %s29, 3
      %p84 = scmp.ne.s32.totalorder %s79, %s81
      %p85 = scmp.eq.s32.totalorder %s29, 0
      %p86 = por %p84, %p85
      %p87 = scmp.ne.s32.totalorder %s79, %s81
      %p88 = scmp.eq.s32.totalorder %s34, 3
      %p89 = por %p87, %p88
      %p90 = scmp.ne.s32.totalorder %s81, %s82
      %p91 = scmp.eq.s32.totalorder %s34, 0
      %p92 = por %p90, %p91
      %p93 = scmp.ne.s32.totalorder %s81, %s82
      %p94 = scmp.eq.s32.totalorder %s35, 3
      %p95 = por %p93, %p94
      %p97 = scmp.ne.s32.totalorder %s82, %s96
      %p98 = scmp.eq.s32.totalorder %s35, 0
      %p99 = por %p97, %p98
      %s101 = sadd.s32 %s100, 1
      %p104 = scmp.eq.s32.totalorder %s29, 3
      %p105 = scmp.ne.s32.totalorder %s100, %s102
      %p106 = scmp.eq.s32.totalorder %s29, 0
      %p107 = por %p105, %p106
      %p108 = scmp.ne.s32.totalorder %s100, %s102
      %p109 = scmp.eq.s32.totalorder %s34, 3
      %p110 = por %p108, %p109
      %p111 = scmp.ne.s32.totalorder %s102, %s103
      %p112 = scmp.eq.s32.totalorder %s34, 0
      %p113 = por %p111, %p112
      %p114 = scmp.ne.s32.totalorder %s102, %s103
      %p115 = scmp.eq.s32.totalorder %s35, 3
      %p116 = por %p114, %p115
      %p118 = scmp.ne.s32.totalorder %s103, %s117
      %p119 = scmp.eq.s32.totalorder %s35, 0
      %p120 = por %p118, %p119
      %s122 = sadd.s32 %s121, 1
      %p125 = scmp.eq.s32.totalorder %s29, 3
      %p126 = scmp.ne.s32.totalorder %s121, %s123
      %p127 = scmp.eq.s32.totalorder %s29, 0
      %p128 = por %p126, %p127
      %p129 = scmp.ne.s32.totalorder %s121, %s123
      %p130 = scmp.eq.s32.totalorder %s34, 3
      %p131 = por %p129, %p130
      %p132 = scmp.ne.s32.totalorder %s123, %s124
      %p133 = scmp.eq.s32.totalorder %s34, 0
      %p134 = por %p132, %p133
      %p135 = scmp.ne.s32.totalorder %s123, %s124
      %p136 = scmp.eq.s32.totalorder %s35, 3
      %p137 = por %p135, %p136
      %p139 = scmp.ne.s32.totalorder %s124, %s138
      %p140 = scmp.eq.s32.totalorder %s35, 0
      %p141 = por %p139, %p140
      %s143 = sadd.s32 %s142, 1
      %p146 = scmp.eq.s32.totalorder %s29, 3
      %p147 = scmp.ne.s32.totalorder %s142, %s144
      %p148 = scmp.eq.s32.totalorder %s29, 0
      %p149 = por %p147, %p148
      %p150 = scmp.ne.s32.totalorder %s142, %s144
      %p151 = scmp.eq.s32.totalorder %s34, 3
      %p152 = por %p150, %p151
      %p153 = scmp.ne.s32.totalorder %s144, %s145
      %p154 = scmp.eq.s32.totalorder %s34, 0
      %p155 = por %p153, %p154
      %p156 = scmp.ne.s32.totalorder %s144, %s145
      %p157 = scmp.eq.s32.totalorder %s35, 3
      %p158 = por %p156, %p157
      %p160 = scmp.ne.s32.totalorder %s145, %s159
      %p161 = scmp.eq.s32.totalorder %s35, 0
      %p162 = por %p160, %p161
      %s163 = ssub.s32 %s29, %s36
      %p164 = scmp.eq.s32.totalorder %s163, 0
      %s166 = sadd.s32 %s165, 1
      %s167 = scalar_select %p164, %s165, %s166
      %p170 = pneg %p164
      %p171 = scmp.eq.s32.totalorder %s29, 3
      %p172 = por %p170, %p171
      %p173 = scmp.ne.s32.totalorder %s165, %s168
      %p174 = scmp.eq.s32.totalorder %s29, 0
      %p175 = por %p173, %p174
      %p176 = scmp.ne.s32.totalorder %s165, %s168
      %p177 = scmp.eq.s32.totalorder %s34, 3
      %p178 = por %p176, %p177
      %p179 = scmp.ne.s32.totalorder %s168, %s169
      %p180 = scmp.eq.s32.totalorder %s34, 0
      %p181 = por %p179, %p180
      %p182 = scmp.ne.s32.totalorder %s168, %s169
      %p183 = scmp.eq.s32.totalorder %s35, 3
      %p184 = por %p182, %p183
      %p186 = scmp.ne.s32.totalorder %s169, %s185
      %p187 = scmp.eq.s32.totalorder %s35, 0
      %p188 = por %p186, %p187
      %s189 = ssub.s32 %s29, %s36
      %p190 = scmp.eq.s32.totalorder %s189, 0
      %s192 = sadd.s32 %s191, 1
      %s193 = scalar_select %p190, %s191, %s192
      %p196 = pneg %p190
      %p197 = scmp.eq.s32.totalorder %s29, 3
      %p198 = por %p196, %p197
      %p199 = scmp.ne.s32.totalorder %s191, %s194
      %p200 = scmp.eq.s32.totalorder %s29, 0
      %p201 = por %p199, %p200
      %p202 = scmp.ne.s32.totalorder %s191, %s194
      %p203 = scmp.eq.s32.totalorder %s34, 3
      %p204 = por %p202, %p203
      %p205 = scmp.ne.s32.totalorder %s194, %s195
      %p206 = scmp.eq.s32.totalorder %s34, 0
      %p207 = por %p205, %p206
      %p208 = scmp.ne.s32.totalorder %s194, %s195
      %p209 = scmp.eq.s32.totalorder %s35, 3
      %p210 = por %p208, %p209
      %p212 = scmp.ne.s32.totalorder %s195, %s211
      %p213 = scmp.eq.s32.totalorder %s35, 0
      %p214 = por %p212, %p213
      %s215 = ssub.s32 %s29, %s36
      %p216 = scmp.eq.s32.totalorder %s215, 0
      %s218 = sadd.s32 %s217, 1
      %s219 = scalar_select %p216, %s217, %s218
      %p222 = pneg %p216
      %p223 = scmp.eq.s32.totalorder %s29, 3
      %p224 = por %p222, %p223
      %p225 = scmp.ne.s32.totalorder %s217, %s220
      %p226 = scmp.eq.s32.totalorder %s29, 0
      %p227 = por %p225, %p226
      %p228 = scmp.ne.s32.totalorder %s217, %s220
      %p229 = scmp.eq.s32.totalorder %s34, 3
      %p230 = por %p228, %p229
      %p231 = scmp.ne.s32.totalorder %s220, %s221
      %p232 = scmp.eq.s32.totalorder %s34, 0
      %p233 = por %p231, %p232
      %p234 = scmp.ne.s32.totalorder %s220, %s221
      %p235 = scmp.eq.s32.totalorder %s35, 3
      %p236 = por %p234, %p235
      %p238 = scmp.ne.s32.totalorder %s221, %s237
      %p239 = scmp.eq.s32.totalorder %s35, 0
      %p240 = por %p238, %p239
      %s241 = ssub.s32 %s29, %s36
      %p242 = scmp.eq.s32.totalorder %s241, 0
      %s244 = sadd.s32 %s243, 1
      %s245 = scalar_select %p242, %s243, %s244
      %p248 = pneg %p242
      %p249 = scmp.eq.s32.totalorder %s29, 3
      %p250 = por %p248, %p249
      %p251 = scmp.ne.s32.totalorder %s243, %s246
      %p252 = scmp.eq.s32.totalorder %s29, 0
      %p253 = por %p251, %p252
      %p254 = scmp.ne.s32.totalorder %s243, %s246
      %p255 = scmp.eq.s32.totalorder %s34, 3
      %p256 = por %p254, %p255
      %p257 = scmp.ne.s32.totalorder %s246, %s247
      %p258 = scmp.eq.s32.totalorder %s34, 0
      %p259 = por %p257, %p258
      %p260 = scmp.ne.s32.totalorder %s246, %s247
      %p261 = scmp.eq.s32.totalorder %s35, 3
      %p262 = por %p260, %p261
      %p264 = scmp.ne.s32.totalorder %s247, %s263
      %p265 = scmp.eq.s32.totalorder %s35, 0
      %p266 = por %p264, %p265
      %s267 = ssub.s32 %s29, %s36
      %p268 = scmp.eq.s32.totalorder %s267, 0
      %s270 = sadd.s32 %s269, 1
      %s271 = scalar_select %p268, %s269, %s270
      %p274 = pneg %p268
      %p275 = scmp.eq.s32.totalorder %s29, 3
      %p276 = por %p274, %p275
      %p277 = scmp.ne.s32.totalorder %s269, %s272
      %p278 = scmp.eq.s32.totalorder %s29, 0
      %p279 = por %p277, %p278
      %p280 = scmp.ne.s32.totalorder %s269, %s272
      %p281 = scmp.eq.s32.totalorder %s34, 3
      %p282 = por %p280, %p281
      %p283 = scmp.ne.s32.totalorder %s272, %s273
      %p284 = scmp.eq.s32.totalorder %s34, 0
      %p285 = por %p283, %p284
      %p286 = scmp.ne.s32.totalorder %s272, %s273
      %p287 = scmp.eq.s32.totalorder %s35, 3
      %p288 = por %p286, %p287
      %p290 = scmp.ne.s32.totalorder %s273, %s289
      %p291 = scmp.eq.s32.totalorder %s35, 0
      %p292 = por %p290, %p291
      %s293 = ssub.s32 %s29, %s36
      %p294 = scmp.eq.s32.totalorder %s293, 0
      %s296 = sadd.s32 %s295, 1
      %s297 = scalar_select %p294, %s295, %s296
      %p300 = pneg %p294
      %p301 = scmp.eq.s32.totalorder %s29, 3
      %p302 = por %p300, %p301
      %p303 = scmp.ne.s32.totalorder %s295, %s298
      %p304 = scmp.eq.s32.totalorder %s29, 0
      %p305 = por %p303, %p304
      %p306 = scmp.ne.s32.totalorder %s295, %s298
      %p307 = scmp.eq.s32.totalorder %s34, 3
      %p308 = por %p306, %p307
      %p309 = scmp.ne.s32.totalorder %s298, %s299
      %p310 = scmp.eq.s32.totalorder %s34, 0
      %p311 = por %p309, %p310
      %p312 = scmp.ne.s32.totalorder %s298, %s299
      %p313 = scmp.eq.s32.totalorder %s35, 3
      %p314 = por %p312, %p313
      %p316 = scmp.ne.s32.totalorder %s299, %s315
      %p317 = scmp.eq.s32.totalorder %s35, 0
      %p318 = por %p316, %p317
      %s319 = ssub.s32 %s29, %s36
      %p320 = scmp.eq.s32.totalorder %s319, 0
      %s322 = sadd.s32 %s321, 1
      %s323 = scalar_select %p320, %s321, %s322
      %p326 = pneg %p320
      %p327 = scmp.eq.s32.totalorder %s29, 3
      %p328 = por %p326, %p327
      %p329 = scmp.ne.s32.totalorder %s321, %s324
      %p330 = scmp.eq.s32.totalorder %s29, 0
      %p331 = por %p329, %p330
      %p332 = scmp.ne.s32.totalorder %s321, %s324
      %p333 = scmp.eq.s32.totalorder %s34, 3
      %p334 = por %p332, %p333
      %p335 = scmp.ne.s32.totalorder %s324, %s325
      %p336 = scmp.eq.s32.totalorder %s34, 0
      %p337 = por %p335, %p336
      %p338 = scmp.ne.s32.totalorder %s324, %s325
      %p339 = scmp.eq.s32.totalorder %s35, 3
      %p340 = por %p338, %p339
      %p342 = scmp.ne.s32.totalorder %s325, %s341
      %p343 = scmp.eq.s32.totalorder %s35, 0
      %p344 = por %p342, %p343
      %s345 = ssub.s32 %s29, %s36
      %p346 = scmp.eq.s32.totalorder %s345, 0
      %s348 = sadd.s32 %s347, 1
      %s349 = scalar_select %p346, %s347, %s348
      %p352 = pneg %p346
      %p353 = scmp.eq.s32.totalorder %s29, 3
      %p354 = por %p352, %p353
      %p355 = scmp.ne.s32.totalorder %s347, %s350
      %p356 = scmp.eq.s32.totalorder %s29, 0
      %p357 = por %p355, %p356
      %p358 = scmp.ne.s32.totalorder %s347, %s350
      %p359 = scmp.eq.s32.totalorder %s34, 3
      %p360 = por %p358, %p359
      %p361 = scmp.ne.s32.totalorder %s350, %s351
      %p362 = scmp.eq.s32.totalorder %s34, 0
      %p363 = por %p361, %p362
      %p364 = scmp.ne.s32.totalorder %s350, %s351
      %p365 = scmp.eq.s32.totalorder %s35, 3
      %p366 = por %p364, %p365
      %p368 = scmp.ne.s32.totalorder %s351, %s367
      %p369 = scmp.eq.s32.totalorder %s35, 0
      %p370 = por %p368, %p369
      %s371 = ssub.s32 %s29, %s36
      %p372 = scmp.eq.s32.totalorder %s371, 0
      %s374 = sadd.s32 %s373, 1
      %s375 = scalar_select %p372, %s373, %s374
      %p378 = pneg %p372
      %p379 = scmp.eq.s32.totalorder %s29, 3
      %p380 = por %p378, %p379
      %p381 = scmp.ne.s32.totalorder %s373, %s376
      %p382 = scmp.eq.s32.totalorder %s29, 0
      %p383 = por %p381, %p382
      %p384 = scmp.ne.s32.totalorder %s373, %s376
      %p385 = scmp.eq.s32.totalorder %s34, 3
      %p386 = por %p384, %p385
      %p387 = scmp.ne.s32.totalorder %s376, %s377
      %p388 = scmp.eq.s32.totalorder %s34, 0
      %p389 = por %p387, %p388
      %p390 = scmp.ne.s32.totalorder %s376, %s377
      %p391 = scmp.eq.s32.totalorder %s35, 3
      %p392 = por %p390, %p391
      %p394 = scmp.ne.s32.totalorder %s377, %s393
      %p395 = scmp.eq.s32.totalorder %s35, 0
      %p396 = por %p394, %p395
      %s397 = ssub.s32 %s29, %s36
      %p398 = scmp.eq.s32.totalorder %s397, 0
      %s400 = sadd.s32 %s399, 1
      %s401 = scalar_select %p398, %s399, %s400
      %p404 = pneg %p398
      %p405 = scmp.eq.s32.totalorder %s29, 3
      %p406 = por %p404, %p405
      %p407 = scmp.ne.s32.totalorder %s399, %s402
      %p408 = scmp.eq.s32.totalorder %s29, 0
      %p409 = por %p407, %p408
      %p410 = scmp.ne.s32.totalorder %s399, %s402
      %p411 = scmp.eq.s32.totalorder %s34, 3
      %p412 = por %p410, %p411
      %p413 = scmp.ne.s32.totalorder %s402, %s403
      %p414 = scmp.eq.s32.totalorder %s34, 0
      %p415 = por %p413, %p414
      %p416 = scmp.ne.s32.totalorder %s402, %s403
      %p417 = scmp.eq.s32.totalorder %s35, 3
      %p418 = por %p416, %p417
      %p420 = scmp.ne.s32.totalorder %s403, %s419
      %p421 = scmp.eq.s32.totalorder %s35, 0
      %p422 = por %p420, %p421
      %s423 = ssub.s32 %s29, %s36
      %p424 = scmp.eq.s32.totalorder %s423, 0
      %s426 = sadd.s32 %s425, 1
      %s427 = scalar_select %p424, %s425, %s426
      %p430 = pneg %p424
      %p431 = scmp.eq.s32.totalorder %s29, 3
      %p432 = por %p430, %p431
      %p433 = scmp.ne.s32.totalorder %s425, %s428
      %p434 = scmp.eq.s32.totalorder %s29, 0
      %p435 = por %p433, %p434
      %p436 = scmp.ne.s32.totalorder %s425, %s428
      %p437 = scmp.eq.s32.totalorder %s34, 3
      %p438 = por %p436, %p437
      %p439 = scmp.ne.s32.totalorder %s428, %s429
      %p440 = scmp.eq.s32.totalorder %s34, 0
      %p441 = por %p439, %p440
      %p442 = scmp.ne.s32.totalorder %s428, %s429
      %p443 = scmp.eq.s32.totalorder %s35, 3
      %p444 = por %p442, %p443
      %p446 = scmp.ne.s32.totalorder %s429, %s445
      %p447 = scmp.eq.s32.totalorder %s35, 0
      %p448 = por %p446, %p447
      %s449 = ssub.s32 %s29, %s36
      %p450 = scmp.eq.s32.totalorder %s449, 0
      %s452 = sadd.s32 %s451, 1
      %s453 = scalar_select %p450, %s451, %s452
      %p456 = pneg %p450
      %p457 = scmp.eq.s32.totalorder %s29, 3
      %p458 = por %p456, %p457
      %p459 = scmp.ne.s32.totalorder %s451, %s454
      %p460 = scmp.eq.s32.totalorder %s29, 0
      %p461 = por %p459, %p460
      %p462 = scmp.ne.s32.totalorder %s451, %s454
      %p463 = scmp.eq.s32.totalorder %s34, 3
      %p464 = por %p462, %p463
      %p465 = scmp.ne.s32.totalorder %s454, %s455
      %p466 = scmp.eq.s32.totalorder %s34, 0
      %p467 = por %p465, %p466
      %p468 = scmp.ne.s32.totalorder %s454, %s455
      %p469 = scmp.eq.s32.totalorder %s35, 3
      %p470 = por %p468, %p469
      %p472 = scmp.ne.s32.totalorder %s455, %s471
      %p473 = scmp.eq.s32.totalorder %s35, 0
      %p474 = por %p472, %p473
      %s476 = sadd.s32 %s475, 1
      %p479 = scmp.eq.s32.totalorder %s29, 3
      %p480 = scmp.ne.s32.totalorder %s475, %s477
      %p481 = scmp.eq.s32.totalorder %s29, 0
      %p482 = por %p480, %p481
      %p483 = scmp.ne.s32.totalorder %s475, %s477
      %p484 = scmp.eq.s32.totalorder %s34, 3
      %p485 = por %p483, %p484
      %p486 = scmp.ne.s32.totalorder %s477, %s478
      %p487 = scmp.eq.s32.totalorder %s34, 0
      %p488 = por %p486, %p487
      %p489 = scmp.ne.s32.totalorder %s477, %s478
      %p490 = scmp.eq.s32.totalorder %s35, 3
      %p491 = por %p489, %p490
      %p493 = scmp.ne.s32.totalorder %s478, %s492
      %p494 = scmp.eq.s32.totalorder %s35, 0
      %p495 = por %p493, %p494
      %p496 = scmp.le.s32.totalorder 1, %s29
      %p497 = scmp.lt.s32.totalorder %s29, 5
      %p498 = pnand %p496, %p497
      %p499 = pneg %p498
      // Predicated region
      $region9: #{tpu_custom_call.1} parent=5 // pred_check
        _
      $region10: #{tpu_custom_call.1} parent=5 // pred_check_branch
        %501 = sbr.rel (%p498) target = $region12
      $region11: #{tpu_custom_call.1} parent=5 // pred_region
        %s502 = ssub.s32 %s29, 1
        // Predicated region
        $region13: #{tpu_custom_call.1} parent=11 // pred_check
          %p503 = pneg %p50
        $region14: #{tpu_custom_call.1} parent=11 // pred_check_branch
          %505 = sbr.rel (%p503) target = $region16
        $region15: #{tpu_custom_call.1} parent=11 // pred_region
          %s507 = ssub.s32 256, 256
          %508 = vsyncadd [#allocation4], %s507
          %s509 = sshll.u32 [#allocation3], 4
          %s510 = int_to_ptr.vmem [resolvable:$true] %s509
          %515 = dma.hbm_to_vmem [thread:$0]  %s0, 256, %s510, [#allocation4], 128, 128, 8
        $region16: #{tpu_custom_call.1} parent=11 // pred_fallthru
          _
        // Predicated region
        $region17: #{tpu_custom_call.1} parent=11 // pred_check
          %p516 = pneg %p71
        $region18: #{tpu_custom_call.1} parent=11 // pred_check_branch
          %518 = sbr.rel (%p516) target = $region20
        $region19: #{tpu_custom_call.1} parent=11 // pred_region
          %s520 = ssub.s32 256, 256
          %521 = vsyncadd [#allocation7], %s520
          %s522 = sshll.u32 [#allocation6], 4
          %s523 = int_to_ptr.vmem [resolvable:$true] %s522
          %528 = dma.hbm_to_vmem [thread:$0]  %s1, 256, %s523, [#allocation7], 128, 128, 8
        $region20: #{tpu_custom_call.1} parent=11 // pred_fallthru
          _
        // Predicated region
        $region21: #{tpu_custom_call.1} parent=11 // pred_check
          %p529 = pneg %p92
        $region22: #{tpu_custom_call.1} parent=11 // pred_check_branch
          %531 = sbr.rel (%p529) target = $region24
        $region23: #{tpu_custom_call.1} parent=11 // pred_region
          %s533 = ssub.s32 128, 128
          %534 = vsyncadd [#allocation7], %s533
          %s535 = sshll.u32 [#allocation8], 4
          %s536 = int_to_ptr.vmem [resolvable:$true] %s535
          %541 = dma.hbm_to_vmem [thread:$0]  %s2, 128, %s536, [#allocation7], 64, 64, 4
        $region24: #{tpu_custom_call.1} parent=11 // pred_fallthru
          _
        // Predicated region
        $region25: #{tpu_custom_call.1} parent=11 // pred_check
          %p542 = pneg %p113
        $region26: #{tpu_custom_call.1} parent=11 // pred_check_branch
          %544 = sbr.rel (%p542) target = $region28
        $region27: #{tpu_custom_call.1} parent=11 // pred_region
          %s546 = ssub.s32 16, 16
          %547 = vsyncadd [#allocation10], %s546
          %s549 = sshll.u32 [#allocation9], 4
          %s550 = int_to_ptr.vmem [resolvable:$true] %s549
          %552 = dma.hbm_to_vmem [thread:$0]  %s3, 16, %s550, [#allocation10]
        $region28: #{tpu_custom_call.1} parent=11 // pred_fallthru
          _
        // Predicated region
        $region29: #{tpu_custom_call.1} parent=11 // pred_check
          %p553 = pneg %p134
        $region30: #{tpu_custom_call.1} parent=11 // pred_check_branch
          %555 = sbr.rel (%p553) target = $region32
        $region31: #{tpu_custom_call.1} parent=11 // pred_region
          %s557 = ssub.s32 1024, 1024
          %558 = vsyncadd [#allocation10], %s557
          %s559 = sshll.u32 [#allocation11], 4
          %s560 = int_to_ptr.vmem [resolvable:$true] %s559
          %565 = dma.hbm_to_vmem [thread:$0]  %s4, 1024, %s560, [#allocation10], 64, 64, 4
        $region32: #{tpu_custom_call.1} parent=11 // pred_fallthru
          _
        // Predicated region
        $region33: #{tpu_custom_call.1} parent=11 // pred_check
          %p566 = pneg %p155
        $region34: #{tpu_custom_call.1} parent=11 // pred_check_branch
          %568 = sbr.rel (%p566) target = $region36
        $region35: #{tpu_custom_call.1} parent=11 // pred_region
          %s570 = ssub.s32 16, 16
          %571 = vsyncadd [#allocation13], %s570
          %s573 = sshll.u32 [#allocation12], 4
          %s574 = int_to_ptr.vmem [resolvable:$true] %s573
          %576 = dma.hbm_to_vmem [thread:$0]  %s5, 16, %s574, [#allocation13]
        $region36: #{tpu_custom_call.1} parent=11 // pred_fallthru
          _
      $region12: #{tpu_custom_call.1} parent=5 // pred_fallthru
        _
      %p577 = scmp.lt.s32.totalorder %s29, 4
      // Predicated region
      $region37: #{tpu_custom_call.1} parent=5 // pred_check
        %p578 = pneg %p577
      $region38: #{tpu_custom_call.1} parent=5 // pred_check_branch
        %580 = sbr.rel (%p578) target = $region40
      $region39: #{tpu_custom_call.1} parent=5 // pred_region
        // Predicated region
        $region41: #{tpu_custom_call.1} parent=39 // pred_check
          %p581 = pneg %p175
        $region42: #{tpu_custom_call.1} parent=39 // pred_check_branch
          %583 = sbr.rel (%p581) target = $region44
        $region43: #{tpu_custom_call.1} parent=39 // pred_region
          %s584 = sand.u32 %s29, 1
          %s585 = scalar_lea.sflag [#allocation4], %s584
          %s586 = sand.u32 %s165, 1
          %s587 = smul.addr %s586, 192
          %s588 = scalar_lea.vmem [#allocation14], %s587
          %s590 = ssub.s32 3072, 3072
          %591 = vsyncadd %s585, %s590
          %s592 = smul.addr %s29, 48
          %s593 = smul.addr %s592, 64
          %s594 = scalar_lea.hbm %s6, %s593
          %s595 = sshll.u32 %s588, 4
          %s596 = int_to_ptr.vmem [resolvable:$true] %s595
          %601 = dma.hbm_to_vmem [thread:$0]  %s594, 3072, %s596, %s585, 192, 192, 12
        $region44: #{tpu_custom_call.1} parent=39 // pred_fallthru
          _
        // Predicated region
        $region45: #{tpu_custom_call.1} parent=39 // pred_check
          %p602 = pneg %p201
        $region46: #{tpu_custom_call.1} parent=39 // pred_check_branch
          %604 = sbr.rel (%p602) target = $region48
        $region47: #{tpu_custom_call.1} parent=39 // pred_region
          %s605 = sand.u32 %s29, 1
          %s606 = scalar_lea.sflag [#allocation4], %s605
          %s607 = sand.u32 %s191, 1
          %s608 = smul.addr %s607, 3
          %s609 = scalar_lea.vmem [#allocation15], %s608
          %s611 = ssub.s32 48, 48
          %612 = vsyncadd %s606, %s611
          %s613 = smul.addr %s29, 3
          %s614 = smul.addr %s613, 16
          %s615 = scalar_lea.hbm %s7, %s614
          %s617 = sshll.u32 %s609, 4
          %s618 = int_to_ptr.vmem [resolvable:$true] %s617
          %620 = dma.hbm_to_vmem [thread:$0]  %s615, 48, %s618, %s606
        $region48: #{tpu_custom_call.1} parent=39 // pred_fallthru
          _
        // Predicated region
        $region49: #{tpu_custom_call.1} parent=39 // pred_check
          %p621 = pneg %p227
        $region50: #{tpu_custom_call.1} parent=39 // pred_check_branch
          %623 = sbr.rel (%p621) target = $region52
        $region51: #{tpu_custom_call.1} parent=39 // pred_region
          %s624 = sand.u32 %s29, 1
          %s625 = scalar_lea.sflag [#allocation4], %s624
          %s626 = sand.u32 %s217, 1
          %s627 = smul.addr %s626, 64
          %s628 = scalar_lea.vmem [#allocation16], %s627
          %s630 = ssub.s32 1024, 1024
          %631 = vsyncadd %s625, %s630
          %s632 = smul.addr %s29, 16
          %s633 = smul.addr %s632, 64
          %s634 = scalar_lea.hbm %s8, %s633
          %s635 = sshll.u32 %s628, 4
          %s636 = int_to_ptr.vmem [resolvable:$true] %s635
          %641 = dma.hbm_to_vmem [thread:$0]  %s634, 1024, %s636, %s625, 64, 64, 4
        $region52: #{tpu_custom_call.1} parent=39 // pred_fallthru
          _
        // Predicated region
        $region53: #{tpu_custom_call.1} parent=39 // pred_check
          %p642 = pneg %p253
        $region54: #{tpu_custom_call.1} parent=39 // pred_check_branch
          %644 = sbr.rel (%p642) target = $region56
        $region55: #{tpu_custom_call.1} parent=39 // pred_region
          %s645 = sand.u32 %s29, 1
          %s646 = scalar_lea.sflag [#allocation4], %s645
          %s647 = sand.u32 %s243, 1
          %s648 = scalar_lea.vmem [#allocation17], %s647
          %s650 = ssub.s32 16, 16
          %651 = vsyncadd %s646, %s650
          %s652 = smul.addr %s29, 16
          %s653 = scalar_lea.hbm %s9, %s652
          %s655 = sshll.u32 %s648, 4
          %s656 = int_to_ptr.vmem [resolvable:$true] %s655
          %658 = dma.hbm_to_vmem [thread:$0]  %s653, 16, %s656, %s646
        $region56: #{tpu_custom_call.1} parent=39 // pred_fallthru
          _
        // Predicated region
        $region57: #{tpu_custom_call.1} parent=39 // pred_check
          %p659 = pneg %p279
        $region58: #{tpu_custom_call.1} parent=39 // pred_check_branch
          %661 = sbr.rel (%p659) target = $region60
        $region59: #{tpu_custom_call.1} parent=39 // pred_region
          %s662 = sand.u32 %s29, 1
          %s663 = scalar_lea.sflag [#allocation4], %s662
          %s664 = sand.u32 %s269, 1
          %s665 = smul.addr %s664, 1024
          %s666 = scalar_lea.vmem [#allocation18], %s665
          %s668 = ssub.s32 16384, 16384
          %669 = vsyncadd %s663, %s668
          %s670 = smul.addr %s29, 256
          %s671 = smul.addr %s670, 64
          %s672 = scalar_lea.hbm %s10, %s671
          %s673 = sshll.u32 %s666, 4
          %s674 = int_to_ptr.vmem [resolvable:$true] %s673
          %679 = dma.hbm_to_vmem [thread:$0]  %s672, 16384, %s674, %s663, 1024, 1024, 64
        $region60: #{tpu_custom_call.1} parent=39 // pred_fallthru
          _
        // Predicated region
        $region61: #{tpu_custom_call.1} parent=39 // pred_check
          %p680 = pneg %p305
        $region62: #{tpu_custom_call.1} parent=39 // pred_check_branch
          %682 = sbr.rel (%p680) target = $region64
        $region63: #{tpu_custom_call.1} parent=39 // pred_region
          %s683 = sand.u32 %s29, 1
          %s684 = scalar_lea.sflag [#allocation4], %s683
          %s685 = sand.u32 %s295, 1
          %s686 = smul.addr %s685, 16
          %s687 = scalar_lea.vmem [#allocation19], %s686
          %s689 = ssub.s32 256, 256
          %690 = vsyncadd %s684, %s689
          %s691 = smul.addr %s29, 16
          %s692 = smul.addr %s691, 16
          %s693 = scalar_lea.hbm %s11, %s692
          %s695 = sshll.u32 %s687, 4
          %s696 = int_to_ptr.vmem [resolvable:$true] %s695
          %698 = dma.hbm_to_vmem [thread:$0]  %s693, 256, %s696, %s684
        $region64: #{tpu_custom_call.1} parent=39 // pred_fallthru
          _
        // Predicated region
        $region65: #{tpu_custom_call.1} parent=39 // pred_check
          %p699 = pneg %p331
        $region66: #{tpu_custom_call.1} parent=39 // pred_check_branch
          %701 = sbr.rel (%p699) target = $region68
        $region67: #{tpu_custom_call.1} parent=39 // pred_region
          %s702 = sand.u32 %s29, 1
          %s703 = scalar_lea.sflag [#allocation4], %s702
          %s704 = sand.u32 %s321, 1
          %s705 = smul.addr %s704, 1024
          %s706 = scalar_lea.vmem [#allocation20], %s705
          %s708 = ssub.s32 16384, 16384
          %709 = vsyncadd %s703, %s708
          %s710 = smul.addr %s29, 256
          %s711 = smul.addr %s710, 64
          %s712 = scalar_lea.hbm %s12, %s711
          %s713 = sshll.u32 %s706, 4
          %s714 = int_to_ptr.vmem [resolvable:$true] %s713
          %719 = dma.hbm_to_vmem [thread:$0]  %s712, 16384, %s714, %s703, 64, 64, 4
        $region68: #{tpu_custom_call.1} parent=39 // pred_fallthru
          _
        // Predicated region
        $region69: #{tpu_custom_call.1} parent=39 // pred_check
          %p720 = pneg %p357
        $region70: #{tpu_custom_call.1} parent=39 // pred_check_branch
          %722 = sbr.rel (%p720) target = $region72
        $region71: #{tpu_custom_call.1} parent=39 // pred_region
          %s723 = sand.u32 %s29, 1
          %s724 = scalar_lea.sflag [#allocation4], %s723
          %s725 = sand.u32 %s347, 1
          %s726 = scalar_lea.vmem [#allocation21], %s725
          %s728 = ssub.s32 16, 16
          %729 = vsyncadd %s724, %s728
          %s730 = smul.addr %s29, 16
          %s731 = scalar_lea.hbm %s13, %s730
          %s733 = sshll.u32 %s726, 4
          %s734 = int_to_ptr.vmem [resolvable:$true] %s733
          %736 = dma.hbm_to_vmem [thread:$0]  %s731, 16, %s734, %s724
        $region72: #{tpu_custom_call.1} parent=39 // pred_fallthru
          _
        // Predicated region
        $region73: #{tpu_custom_call.1} parent=39 // pred_check
          %p737 = pneg %p383
        $region74: #{tpu_custom_call.1} parent=39 // pred_check_branch
          %739 = sbr.rel (%p737) target = $region76
        $region75: #{tpu_custom_call.1} parent=39 // pred_region
          %s740 = sand.u32 %s29, 1
          %s741 = scalar_lea.sflag [#allocation4], %s740
          %s742 = sand.u32 %s373, 1
          %s743 = scalar_lea.vmem [#allocation22], %s742
          %s745 = ssub.s32 16, 16
          %746 = vsyncadd %s741, %s745
          %s747 = smul.addr %s29, 16
          %s748 = scalar_lea.hbm %s14, %s747
          %s750 = sshll.u32 %s743, 4
          %s751 = int_to_ptr.vmem [resolvable:$true] %s750
          %753 = dma.hbm_to_vmem [thread:$0]  %s748, 16, %s751, %s741
        $region76: #{tpu_custom_call.1} parent=39 // pred_fallthru
          _
        // Predicated region
        $region77: #{tpu_custom_call.1} parent=39 // pred_check
          %p754 = pneg %p409
        $region78: #{tpu_custom_call.1} parent=39 // pred_check_branch
          %756 = sbr.rel (%p754) target = $region80
        $region79: #{tpu_custom_call.1} parent=39 // pred_region
          %s757 = sand.u32 %s29, 1
          %s758 = scalar_lea.sflag [#allocation4], %s757
          %s759 = sand.u32 %s399, 1
          %s760 = scalar_lea.vmem [#allocation23], %s759
          %s762 = ssub.s32 16, 16
          %763 = vsyncadd %s758, %s762
          %s764 = smul.addr %s29, 16
          %s765 = scalar_lea.hbm %s15, %s764
          %s767 = sshll.u32 %s760, 4
          %s768 = int_to_ptr.vmem [resolvable:$true] %s767
          %770 = dma.hbm_to_vmem [thread:$0]  %s765, 16, %s768, %s758
        $region80: #{tpu_custom_call.1} parent=39 // pred_fallthru
          _
        // Predicated region
        $region81: #{tpu_custom_call.1} parent=39 // pred_check
          %p771 = pneg %p435
        $region82: #{tpu_custom_call.1} parent=39 // pred_check_branch
          %773 = sbr.rel (%p771) target = $region84
        $region83: #{tpu_custom_call.1} parent=39 // pred_region
          %s774 = sand.u32 %s29, 1
          %s775 = scalar_lea.sflag [#allocation4], %s774
          %s776 = sand.u32 %s425, 1
          %s777 = scalar_lea.vmem [#allocation24], %s776
          %s779 = ssub.s32 16, 16
          %780 = vsyncadd %s775, %s779
          %s781 = smul.addr %s29, 16
          %s782 = scalar_lea.hbm %s16, %s781
          %s784 = sshll.u32 %s777, 4
          %s785 = int_to_ptr.vmem [resolvable:$true] %s784
          %787 = dma.hbm_to_vmem [thread:$0]  %s782, 16, %s785, %s775
        $region84: #{tpu_custom_call.1} parent=39 // pred_fallthru
          _
        // Predicated region
        $region85: #{tpu_custom_call.1} parent=39 // pred_check
          %p788 = pneg %p461
        $region86: #{tpu_custom_call.1} parent=39 // pred_check_branch
          %790 = sbr.rel (%p788) target = $region88
        $region87: #{tpu_custom_call.1} parent=39 // pred_region
          %s791 = sand.u32 %s29, 1
          %s792 = scalar_lea.sflag [#allocation4], %s791
          %s793 = sand.u32 %s451, 1
          %s794 = scalar_lea.vmem [#allocation25], %s793
          %s796 = ssub.s32 16, 16
          %797 = vsyncadd %s792, %s796
          %s798 = smul.addr %s29, 16
          %s799 = scalar_lea.hbm %s17, %s798
          %s801 = sshll.u32 %s794, 4
          %s802 = int_to_ptr.vmem [resolvable:$true] %s801
          %804 = dma.hbm_to_vmem [thread:$0]  %s799, 16, %s802, %s792
        $region88: #{tpu_custom_call.1} parent=39 // pred_fallthru
          _
      $region40: #{tpu_custom_call.1} parent=5 // pred_fallthru
        _
      %p805 = scmp.le.s32.totalorder 1, %s29
      %p806 = scmp.lt.s32.totalorder %s29, 5
      %p807 = pnand %p805, %p806
      %p808 = pneg %p807
      // Predicated region
      $region89: #{tpu_custom_call.1} parent=5 // pred_check
        _
      $region90: #{tpu_custom_call.1} parent=5 // pred_check_branch
        %810 = sbr.rel (%p807) target = $region92
      $region91: #{tpu_custom_call.1} parent=5 // pred_region
        %s811 = ssub.s32 %s29, 1
        // Predicated region
        $region93: #{tpu_custom_call.1} parent=91 // pred_check
          %p812 = pneg %p50
        $region94: #{tpu_custom_call.1} parent=91 // pred_check_branch
          %814 = sbr.rel (%p812) target = $region96
        $region95: #{tpu_custom_call.1} parent=91 // pred_region
          %815 = dma.done [#allocation4], 256
        $region96: #{tpu_custom_call.1} parent=91 // pred_fallthru
          _
        // Predicated region
        $region97: #{tpu_custom_call.1} parent=91 // pred_check
          %p816 = pneg %p71
        $region98: #{tpu_custom_call.1} parent=91 // pred_check_branch
          %818 = sbr.rel (%p816) target = $region100
        $region99: #{tpu_custom_call.1} parent=91 // pred_region
          %819 = dma.done [#allocation7], 256
        $region100: #{tpu_custom_call.1} parent=91 // pred_fallthru
          _
        // Predicated region
        $region101: #{tpu_custom_call.1} parent=91 // pred_check
          %p820 = pneg %p92
        $region102: #{tpu_custom_call.1} parent=91 // pred_check_branch
          %822 = sbr.rel (%p820) target = $region104
        $region103: #{tpu_custom_call.1} parent=91 // pred_region
          %823 = dma.done [#allocation7], 128
        $region104: #{tpu_custom_call.1} parent=91 // pred_fallthru
          _
        // Predicated region
        $region105: #{tpu_custom_call.1} parent=91 // pred_check
          %p824 = pneg %p113
        $region106: #{tpu_custom_call.1} parent=91 // pred_check_branch
          %826 = sbr.rel (%p824) target = $region108
        $region107: #{tpu_custom_call.1} parent=91 // pred_region
          %827 = dma.done [#allocation10], 16
        $region108: #{tpu_custom_call.1} parent=91 // pred_fallthru
          _
        // Predicated region
        $region109: #{tpu_custom_call.1} parent=91 // pred_check
          %p828 = pneg %p134
        $region110: #{tpu_custom_call.1} parent=91 // pred_check_branch
          %830 = sbr.rel (%p828) target = $region112
        $region111: #{tpu_custom_call.1} parent=91 // pred_region
          %831 = dma.done [#allocation10], 1024
        $region112: #{tpu_custom_call.1} parent=91 // pred_fallthru
          _
        // Predicated region
        $region113: #{tpu_custom_call.1} parent=91 // pred_check
          %p832 = pneg %p155
        $region114: #{tpu_custom_call.1} parent=91 // pred_check_branch
          %834 = sbr.rel (%p832) target = $region116
        $region115: #{tpu_custom_call.1} parent=91 // pred_region
          %835 = dma.done [#allocation13], 16
        $region116: #{tpu_custom_call.1} parent=91 // pred_fallthru
          _
        %s836 = sand.u32 %s34, 1
        %s837 = scalar_lea.sflag [#allocation4], %s836
        %s838 = sand.u32 %s168, 1
        %s839 = smul.addr %s838, 192
        %s840 = scalar_lea.vmem [#allocation14], %s839
        // Predicated region
        $region117: #{tpu_custom_call.1} parent=91 // pred_check
          %p841 = pneg %p181
        $region118: #{tpu_custom_call.1} parent=91 // pred_check_branch
          %843 = sbr.rel (%p841) target = $region120
        $region119: #{tpu_custom_call.1} parent=91 // pred_region
          %844 = dma.done %s837, 3072
        $region120: #{tpu_custom_call.1} parent=91 // pred_fallthru
          _
        %s845 = sand.u32 %s34, 1
        %s846 = scalar_lea.sflag [#allocation4], %s845
        %s847 = sand.u32 %s194, 1
        %s848 = smul.addr %s847, 3
        %s849 = scalar_lea.vmem [#allocation15], %s848
        // Predicated region
        $region121: #{tpu_custom_call.1} parent=91 // pred_check
          %p850 = pneg %p207
        $region122: #{tpu_custom_call.1} parent=91 // pred_check_branch
          %852 = sbr.rel (%p850) target = $region124
        $region123: #{tpu_custom_call.1} parent=91 // pred_region
          %853 = dma.done %s846, 48
        $region124: #{tpu_custom_call.1} parent=91 // pred_fallthru
          _
        %s854 = sand.u32 %s34, 1
        %s855 = scalar_lea.sflag [#allocation4], %s854
        %s856 = sand.u32 %s220, 1
        %s857 = smul.addr %s856, 64
        %s858 = scalar_lea.vmem [#allocation16], %s857
        // Predicated region
        $region125: #{tpu_custom_call.1} parent=91 // pred_check
          %p859 = pneg %p233
        $region126: #{tpu_custom_call.1} parent=91 // pred_check_branch
          %861 = sbr.rel (%p859) target = $region128
        $region127: #{tpu_custom_call.1} parent=91 // pred_region
          %862 = dma.done %s855, 1024
        $region128: #{tpu_custom_call.1} parent=91 // pred_fallthru
          _
        %s863 = sand.u32 %s34, 1
        %s864 = scalar_lea.sflag [#allocation4], %s863
        %s865 = sand.u32 %s246, 1
        %s866 = scalar_lea.vmem [#allocation17], %s865
        // Predicated region
        $region129: #{tpu_custom_call.1} parent=91 // pred_check
          %p867 = pneg %p259
        $region130: #{tpu_custom_call.1} parent=91 // pred_check_branch
          %869 = sbr.rel (%p867) target = $region132
        $region131: #{tpu_custom_call.1} parent=91 // pred_region
          %870 = dma.done %s864, 16
        $region132: #{tpu_custom_call.1} parent=91 // pred_fallthru
          _
        %s871 = sand.u32 %s34, 1
        %s872 = scalar_lea.sflag [#allocation4], %s871
        %s873 = sand.u32 %s272, 1
        %s874 = smul.addr %s873, 1024
        %s875 = scalar_lea.vmem [#allocation18], %s874
        // Predicated region
        $region133: #{tpu_custom_call.1} parent=91 // pred_check
          %p876 = pneg %p285
        $region134: #{tpu_custom_call.1} parent=91 // pred_check_branch
          %878 = sbr.rel (%p876) target = $region136
        $region135: #{tpu_custom_call.1} parent=91 // pred_region
          %879 = dma.done %s872, 16384
        $region136: #{tpu_custom_call.1} parent=91 // pred_fallthru
          _
        %s880 = sand.u32 %s34, 1
        %s881 = scalar_lea.sflag [#allocation4], %s880
        %s882 = sand.u32 %s298, 1
        %s883 = smul.addr %s882, 16
        %s884 = scalar_lea.vmem [#allocation19], %s883
        // Predicated region
        $region137: #{tpu_custom_call.1} parent=91 // pred_check
          %p885 = pneg %p311
        $region138: #{tpu_custom_call.1} parent=91 // pred_check_branch
          %887 = sbr.rel (%p885) target = $region140
        $region139: #{tpu_custom_call.1} parent=91 // pred_region
          %888 = dma.done %s881, 256
        $region140: #{tpu_custom_call.1} parent=91 // pred_fallthru
          _
        %s889 = sand.u32 %s34, 1
        %s890 = scalar_lea.sflag [#allocation4], %s889
        %s891 = sand.u32 %s324, 1
        %s892 = smul.addr %s891, 1024
        %s893 = scalar_lea.vmem [#allocation20], %s892
        // Predicated region
        $region141: #{tpu_custom_call.1} parent=91 // pred_check
          %p894 = pneg %p337
        $region142: #{tpu_custom_call.1} parent=91 // pred_check_branch
          %896 = sbr.rel (%p894) target = $region144
        $region143: #{tpu_custom_call.1} parent=91 // pred_region
          %897 = dma.done %s890, 16384
        $region144: #{tpu_custom_call.1} parent=91 // pred_fallthru
          _
        %s898 = sand.u32 %s34, 1
        %s899 = scalar_lea.sflag [#allocation4], %s898
        %s900 = sand.u32 %s350, 1
        %s901 = scalar_lea.vmem [#allocation21], %s900
        // Predicated region
        $region145: #{tpu_custom_call.1} parent=91 // pred_check
          %p902 = pneg %p363
        $region146: #{tpu_custom_call.1} parent=91 // pred_check_branch
          %904 = sbr.rel (%p902) target = $region148
        $region147: #{tpu_custom_call.1} parent=91 // pred_region
          %905 = dma.done %s899, 16
        $region148: #{tpu_custom_call.1} parent=91 // pred_fallthru
          _
        %s906 = sand.u32 %s34, 1
        %s907 = scalar_lea.sflag [#allocation4], %s906
        %s908 = sand.u32 %s376, 1
        %s909 = scalar_lea.vmem [#allocation22], %s908
        // Predicated region
        $region149: #{tpu_custom_call.1} parent=91 // pred_check
          %p910 = pneg %p389
        $region150: #{tpu_custom_call.1} parent=91 // pred_check_branch
          %912 = sbr.rel (%p910) target = $region152
        $region151: #{tpu_custom_call.1} parent=91 // pred_region
          %913 = dma.done %s907, 16
        $region152: #{tpu_custom_call.1} parent=91 // pred_fallthru
          _
        %s914 = sand.u32 %s34, 1
        %s915 = scalar_lea.sflag [#allocation4], %s914
        %s916 = sand.u32 %s402, 1
        %s917 = scalar_lea.vmem [#allocation23], %s916
        // Predicated region
        $region153: #{tpu_custom_call.1} parent=91 // pred_check
          %p918 = pneg %p415
        $region154: #{tpu_custom_call.1} parent=91 // pred_check_branch
          %920 = sbr.rel (%p918) target = $region156
        $region155: #{tpu_custom_call.1} parent=91 // pred_region
          %921 = dma.done %s915, 16
        $region156: #{tpu_custom_call.1} parent=91 // pred_fallthru
          _
        %s922 = sand.u32 %s34, 1
        %s923 = scalar_lea.sflag [#allocation4], %s922
        %s924 = sand.u32 %s428, 1
        %s925 = scalar_lea.vmem [#allocation24], %s924
        // Predicated region
        $region157: #{tpu_custom_call.1} parent=91 // pred_check
          %p926 = pneg %p441
        $region158: #{tpu_custom_call.1} parent=91 // pred_check_branch
          %928 = sbr.rel (%p926) target = $region160
        $region159: #{tpu_custom_call.1} parent=91 // pred_region
          %929 = dma.done %s923, 16
        $region160: #{tpu_custom_call.1} parent=91 // pred_fallthru
          _
        %s930 = sand.u32 %s34, 1
        %s931 = scalar_lea.sflag [#allocation4], %s930
        %s932 = sand.u32 %s454, 1
        %s933 = scalar_lea.vmem [#allocation25], %s932
        // Predicated region
        $region161: #{tpu_custom_call.1} parent=91 // pred_check
          %p934 = pneg %p467
        $region162: #{tpu_custom_call.1} parent=91 // pred_check_branch
          %936 = sbr.rel (%p934) target = $region164
        $region163: #{tpu_custom_call.1} parent=91 // pred_region
          %937 = dma.done %s931, 16
        $region164: #{tpu_custom_call.1} parent=91 // pred_fallthru
          _
        %p938 = pneg %p50
        %p939 = pneg %p47
        %p940 = pneg %p71
        %p941 = pneg %p68
        %p942 = pneg %p92
        %p943 = pneg %p89
        %p944 = pneg %p113
        %p945 = pneg %p110
        %p946 = pneg %p134
        %p947 = pneg %p131
        %p948 = pneg %p155
        %p949 = pneg %p152
        %s950 = sand.u32 %s34, 1
        %s951 = scalar_lea.sflag [#allocation4], %s950
        %s952 = sand.u32 %s168, 1
        %s953 = smul.addr %s952, 192
        %s954 = scalar_lea.vmem [#allocation14], %s953
        %p955 = pneg %p181
        %p956 = pneg %p178
        %s957 = sand.u32 %s34, 1
        %s958 = scalar_lea.sflag [#allocation4], %s957
        %s959 = sand.u32 %s194, 1
        %s960 = smul.addr %s959, 3
        %s961 = scalar_lea.vmem [#allocation15], %s960
        %p962 = pneg %p207
        %p963 = pneg %p204
        %s964 = sand.u32 %s34, 1
        %s965 = scalar_lea.sflag [#allocation4], %s964
        %s966 = sand.u32 %s220, 1
        %s967 = smul.addr %s966, 64
        %s968 = scalar_lea.vmem [#allocation16], %s967
        %p969 = pneg %p233
        %p970 = pneg %p230
        %s971 = sand.u32 %s34, 1
        %s972 = scalar_lea.sflag [#allocation4], %s971
        %s973 = sand.u32 %s246, 1
        %s974 = scalar_lea.vmem [#allocation17], %s973
        %p975 = pneg %p259
        %p976 = pneg %p256
        %s977 = sand.u32 %s34, 1
        %s978 = scalar_lea.sflag [#allocation4], %s977
        %s979 = sand.u32 %s272, 1
        %s980 = smul.addr %s979, 1024
        %s981 = scalar_lea.vmem [#allocation18], %s980
        %p982 = pneg %p285
        %p983 = pneg %p282
        %s984 = sand.u32 %s34, 1
        %s985 = scalar_lea.sflag [#allocation4], %s984
        %s986 = sand.u32 %s298, 1
        %s987 = smul.addr %s986, 16
        %s988 = scalar_lea.vmem [#allocation19], %s987
        %p989 = pneg %p311
        %p990 = pneg %p308
        %s991 = sand.u32 %s34, 1
        %s992 = scalar_lea.sflag [#allocation4], %s991
        %s993 = sand.u32 %s324, 1
        %s994 = smul.addr %s993, 1024
        %s995 = scalar_lea.vmem [#allocation20], %s994
        %p996 = pneg %p337
        %p997 = pneg %p334
        %s998 = sand.u32 %s34, 1
        %s999 = scalar_lea.sflag [#allocation4], %s998
        %s1000 = sand.u32 %s350, 1
        %s1001 = scalar_lea.vmem [#allocation21], %s1000
        %p1002 = pneg %p363
        %p1003 = pneg %p360
        %s1004 = sand.u32 %s34, 1
        %s1005 = scalar_lea.sflag [#allocation4], %s1004
        %s1006 = sand.u32 %s376, 1
        %s1007 = scalar_lea.vmem [#allocation22], %s1006
        %p1008 = pneg %p389
        %p1009 = pneg %p386
        %s1010 = sand.u32 %s34, 1
        %s1011 = scalar_lea.sflag [#allocation4], %s1010
        %s1012 = sand.u32 %s402, 1
        %s1013 = scalar_lea.vmem [#allocation23], %s1012
        %p1014 = pneg %p415
        %p1015 = pneg %p412
        %s1016 = sand.u32 %s34, 1
        %s1017 = scalar_lea.sflag [#allocation4], %s1016
        %s1018 = sand.u32 %s428, 1
        %s1019 = scalar_lea.vmem [#allocation24], %s1018
        %p1020 = pneg %p441
        %p1021 = pneg %p438
        %s1022 = sand.u32 %s34, 1
        %s1023 = scalar_lea.sflag [#allocation4], %s1022
        %s1024 = sand.u32 %s454, 1
        %s1025 = scalar_lea.vmem [#allocation25], %s1024
        %p1026 = pneg %p467
        %p1027 = pneg %p464
        %p1028 = pneg %p488
        %p1029 = pneg %p485
        %p1030 = scmp.eq.s32.totalorder %s34, 0
        // Predicated region
        $region165: #{tpu_custom_call.1} parent=91 // pred_check
          %p1031 = pneg %p1030
        $region166: #{tpu_custom_call.1} parent=91 // pred_check_branch
          %1033 = sbr.rel (%p1031) target = $region168
        $region167: #{tpu_custom_call.1} parent=91 // pred_region
          %v1034 = vld [vmem:[#allocation3] sm:$0xff]
          %v1035 = vld [vmem:[#allocation3 + $0x8] sm:$0xff]
          %v1036 = vld [vmem:[#allocation8] sm:$0xf]
          %v1037 = vld [vmem:[#allocation8 + $0x4] sm:$0xf]
          %v1038 = vunpack.c.l.bf16 %v1036
          %v1039 = vunpack.c.l.bf16 %v1037
          %v1040 = vld [vmem:[#allocation9] sm:$0x1]
          %v1042 = vlaneseq
          %v1043 = vshrl.u32 %v1042, 7
          %v1044 = vsub.s32 0, %v1043
          %v1045 = vrot.slane %v1040, %v1044
          %vm1047 = vcmask 130048
          %v1049 = vsel %vm1047, %v1034, 0
          %v1052 = vsel %vm1047, %v1035, 0
          %1054 = vmatprep.subr.mxu0 0.0
          %1055 = vmatpush1.msra.mxu0 %v1038
          %1056 = vmatprep.subr.mxu0 0.0
          %1057 = vmatpush1.msra.mxu0 %v1039
          %1058 = vmatprep.subr.mxu0 0.0
          %1059 = vmatpush1.msra.mxu0 0.0
          %1060 = vmatprep.subr.mxu0 0.0
          %1061 = vmatpush1.msra.mxu0 0.0
          %1062 = vmatprep.subr.mxu0 0.0
          %1063 = vmatpush1.msra.mxu0 0.0
          %1064 = vmatprep.subr.mxu0 0.0
          %1065 = vmatpush1.msra.mxu0 0.0
          %1066 = vmatprep.subr.mxu0 0.0
          %1067 = vmatpush1.msra.mxu0 0.0
          %1068 = vmatprep.subr.mxu0 0.0
          %1069 = vmatpush1.msra.mxu0 0.0
          %1070 = vmatprep.subr.mxu0 0.0
          %1071 = vmatpush1.msra.mxu0 0.0
          %1072 = vmatprep.subr.mxu0 0.0
          %1073 = vmatpush1.msra.mxu0 0.0
          %1074 = vmatprep.subr.mxu0 0.0
          %1075 = vmatpush1.msra.mxu0 0.0
          %1076 = vmatprep.subr.mxu0 0.0
          %1077 = vmatpush1.msra.mxu0 0.0
          %1078 = vmatprep.subr.mxu0 0.0
          %1079 = vmatpush1.msra.mxu0 0.0
          %1080 = vmatprep.subr.mxu0 0.0
          %1081 = vmatpush1.msra.mxu0 0.0
          %1082 = vmatprep.subr.mxu0 0.0
          %1083 = vmatpush1.msra.mxu0 0.0
          %1084 = vmatprep.subr.mxu0 0.0
          %1085 = vmatpush1.msra.mxu0 0.0
          %1086 = vmatprep.subr.mxu0 0.0
          %1087 = vmatpush1.msra.mxu0 0.0
          %1088 = vmatprep.subr.mxu0 0.0
          %1089 = vmatpush1.msra.mxu0 0.0
          %1090 = vmatprep.subr.mxu0 0.0
          %1091 = vmatpush1.msra.mxu0 0.0
          %1092 = vmatprep.subr.mxu0 0.0
          %1093 = vmatpush1.msra.mxu0 0.0
          %1094 = vmatprep.subr.mxu0 0.0
          %1095 = vmatpush1.msra.mxu0 0.0
          %1096 = vmatprep.subr.mxu0 0.0
          %1097 = vmatpush1.msra.mxu0 0.0
          %1098 = vmatprep.subr.mxu0 0.0
          %1099 = vmatpush1.msra.mxu0 0.0
          %1100 = vmatprep.subr.mxu0 0.0
          %1101 = vmatpush1.msra.mxu0 0.0
          %1102 = vmatprep.subr.mxu0 0.0
          %1103 = vmatpush1.msra.mxu0 0.0
          %1104 = vmatprep.subr.mxu0 0.0
          %1105 = vmatpush1.msra.mxu0 0.0
          %1106 = vmatprep.subr.mxu0 0.0
          %1107 = vmatpush1.msra.mxu0 0.0
          %1108 = vmatprep.subr.mxu0 0.0
          %1109 = vmatpush1.msra.mxu0 0.0
          %1110 = vmatprep.subr.mxu0 0.0
          %1111 = vmatpush1.msra.mxu0 0.0
          %1112 = vmatprep.subr.mxu0 0.0
          %1113 = vmatpush1.msra.mxu0 0.0
          %1114 = vmatprep.subr.mxu0 0.0
          %1115 = vmatpush1.msra.mxu0 0.0
          %1116 = vmatprep.subr.mxu0 0.0
          %1117 = vmatpush1.msra.mxu0 0.0
          %1118 = vmatprep.mubr.f32.mxu0 0.0
          %1119 = vmatmul.mubr.f32.gmra.mrb[0].mxu0 %v1049
          %v1120 = vpop.f32.mrb[0].mxu0
          %v1121 = vadd.f32 %v1045, %v1120
          %v1122 = vpop.f32.mrb[0].mxu0
          %1123 = vmatprep.mubr.f32.mxu0 0.0
          %1124 = vmatmul.mubr.f32.gmra.mrb[0].mxu0 %v1052
          %v1125 = vpop.f32.mrb[0].mxu0
          %v1126 = vadd.f32 %v1045, %v1125
          %v1127 = vpop.f32.mrb[0].mxu0
          %1128 = vdwg.mxu0
          %v1129 = vmul.f32 %v1121, 2.0
          %v1130 = vmul.f32 %v1126, 2.0
          %v1131 = vld [vmem:[#allocation6] sm:$0xff]
          %v1132 = vld [vmem:[#allocation6 + $0x8] sm:$0xff]
          %v1133 = vadd.f32 %v1129, %v1131
          %v1134 = vadd.f32 %v1130, %v1132
          %1135 = vst [vmem:[#allocation2] sm:$0xff] %v1133
          %1136 = vst [vmem:[#allocation2 + $0x8] sm:$0xff] %v1134
        $region168: #{tpu_custom_call.1} parent=91 // pred_fallthru
          _
        %v1137 = vld [vmem:[#allocation2] sm:$0xff]
        %v1138 = vld [vmem:[#allocation2 + $0x8] sm:$0xff]
        %v1139 = vld [vmem:[%s840] sm:$0xff]
        %v1140 = vld [vmem:[%s840 + $0x8] sm:$0xf]
        %v1141 = vld [vmem:[%s840 + $0xc] sm:$0xff]
        %v1142 = vld [vmem:[%s840 + $0x14] sm:$0xf]
        %v1143 = vld [vmem:[%s840 + $0x18] sm:$0xff]
        %v1144 = vld [vmem:[%s840 + $0x20] sm:$0xf]
        %v1145 = vld [vmem:[%s840 + $0x24] sm:$0xff]
        %v1146 = vld [vmem:[%s840 + $0x2c] sm:$0xf]
        %v1147 = vld [vmem:[%s840 + $0x30] sm:$0xff]
        %v1148 = vld [vmem:[%s840 + $0x38] sm:$0xf]
        %v1149 = vld [vmem:[%s840 + $0x3c] sm:$0xff]
        %v1150 = vld [vmem:[%s840 + $0x44] sm:$0xf]
        %v1151 = vld [vmem:[%s840 + $0x48] sm:$0xff]
        %v1152 = vld [vmem:[%s840 + $0x50] sm:$0xf]
        %v1153 = vld [vmem:[%s840 + $0x54] sm:$0xff]
        %v1154 = vld [vmem:[%s840 + $0x5c] sm:$0xf]
        %v1155 = vld [vmem:[%s840 + $0x60] sm:$0xff]
        %v1156 = vld [vmem:[%s840 + $0x68] sm:$0xf]
        %v1157 = vld [vmem:[%s840 + $0x6c] sm:$0xff]
        %v1158 = vld [vmem:[%s840 + $0x74] sm:$0xf]
        %v1159 = vld [vmem:[%s840 + $0x78] sm:$0xff]
        %v1160 = vld [vmem:[%s840 + $0x80] sm:$0xf]
        %v1161 = vld [vmem:[%s840 + $0x84] sm:$0xff]
        %v1162 = vld [vmem:[%s840 + $0x8c] sm:$0xf]
        %v1163 = vld [vmem:[%s840 + $0x90] sm:$0xff]
        %v1164 = vld [vmem:[%s840 + $0x98] sm:$0xf]
        %v1165 = vld [vmem:[%s840 + $0x9c] sm:$0xff]
        %v1166 = vld [vmem:[%s840 + $0xa4] sm:$0xf]
        %v1167 = vld [vmem:[%s840 + $0xa8] sm:$0xff]
        %v1168 = vld [vmem:[%s840 + $0xb0] sm:$0xf]
        %v1169 = vld [vmem:[%s840 + $0xb4] sm:$0xff]
        %v1170 = vld [vmem:[%s840 + $0xbc] sm:$0xf]
        %v1171 = vunpack.c.l.bf16 %v1139
        %v1172 = vunpack.c.h.bf16 %v1139
        %v1173 = vunpack.c.l.bf16 %v1140
        %v1174 = vunpack.c.l.bf16 %v1141
        %v1175 = vunpack.c.h.bf16 %v1141
        %v1176 = vunpack.c.l.bf16 %v1142
        %v1177 = vunpack.c.l.bf16 %v1143
        %v1178 = vunpack.c.h.bf16 %v1143
        %v1179 = vunpack.c.l.bf16 %v1144
        %v1180 = vunpack.c.l.bf16 %v1145
        %v1181 = vunpack.c.h.bf16 %v1145
        %v1182 = vunpack.c.l.bf16 %v1146
        %v1183 = vunpack.c.l.bf16 %v1147
        %v1184 = vunpack.c.h.bf16 %v1147
        %v1185 = vunpack.c.l.bf16 %v1148
        %v1186 = vunpack.c.l.bf16 %v1149
        %v1187 = vunpack.c.h.bf16 %v1149
        %v1188 = vunpack.c.l.bf16 %v1150
        %v1189 = vunpack.c.l.bf16 %v1151
        %v1190 = vunpack.c.h.bf16 %v1151
        %v1191 = vunpack.c.l.bf16 %v1152
        %v1192 = vunpack.c.l.bf16 %v1153
        %v1193 = vunpack.c.h.bf16 %v1153
        %v1194 = vunpack.c.l.bf16 %v1154
        %v1195 = vunpack.c.l.bf16 %v1155
        %v1196 = vunpack.c.h.bf16 %v1155
        %v1197 = vunpack.c.l.bf16 %v1156
        %v1198 = vunpack.c.l.bf16 %v1157
        %v1199 = vunpack.c.h.bf16 %v1157
        %v1200 = vunpack.c.l.bf16 %v1158
        %v1201 = vunpack.c.l.bf16 %v1159
        %v1202 = vunpack.c.h.bf16 %v1159
        %v1203 = vunpack.c.l.bf16 %v1160
        %v1204 = vunpack.c.l.bf16 %v1161
        %v1205 = vunpack.c.h.bf16 %v1161
        %v1206 = vunpack.c.l.bf16 %v1162
        %v1207 = vunpack.c.l.bf16 %v1163
        %v1208 = vunpack.c.h.bf16 %v1163
        %v1209 = vunpack.c.l.bf16 %v1164
        %v1210 = vunpack.c.l.bf16 %v1165
        %v1211 = vunpack.c.h.bf16 %v1165
        %v1212 = vunpack.c.l.bf16 %v1166
        %v1213 = vunpack.c.l.bf16 %v1167
        %v1214 = vunpack.c.h.bf16 %v1167
        %v1215 = vunpack.c.l.bf16 %v1168
        %v1216 = vunpack.c.l.bf16 %v1169
        %v1217 = vunpack.c.h.bf16 %v1169
        %v1218 = vunpack.c.l.bf16 %v1170
        %v1219 = vld [vmem:[%s849] sm:$0x7]
        %v1221 = vlaneseq
        %v1222 = vshrl.u32 %v1221, 7
        %v1223 = vsub.s32 0, %v1222
        %v1224 = vrot.slane %v1219, %v1223
        %v1225 = vlaneseq
        %v1226 = vshrl.u32 %v1225, 7
        %v1227 = vsub.s32 1, %v1226
        %v1228 = vrot.slane %v1219, %v1227
        %v1229 = vlaneseq
        %v1230 = vshrl.u32 %v1229, 7
        %v1231 = vsub.s32 2, %v1230
        %v1232 = vrot.slane %v1219, %v1231
        %1236 = vmatprep.subr.mxu0 %v1172
        %1237 = vmatpush1.msra.mxu0 %v1171
        %1238 = vmatprep.subr.mxu0 %v1175
        %1239 = vmatpush1.msra.mxu0 %v1174
        %1240 = vmatprep.subr.mxu0 %v1178
        %1241 = vmatpush1.msra.mxu0 %v1177
        %1242 = vmatprep.subr.mxu0 %v1181
        %1243 = vmatpush1.msra.mxu0 %v1180
        %1244 = vmatprep.subr.mxu0 %v1184
        %1245 = vmatpush1.msra.mxu0 %v1183
        %1246 = vmatprep.subr.mxu0 %v1187
        %1247 = vmatpush1.msra.mxu0 %v1186
        %1248 = vmatprep.subr.mxu0 %v1190
        %1249 = vmatpush1.msra.mxu0 %v1189
        %1250 = vmatprep.subr.mxu0 %v1193
        %1251 = vmatpush1.msra.mxu0 %v1192
        %1252 = vmatprep.subr.mxu0 %v1196
        %1253 = vmatpush1.msra.mxu0 %v1195
        %1254 = vmatprep.subr.mxu0 %v1199
        %1255 = vmatpush1.msra.mxu0 %v1198
        %1256 = vmatprep.subr.mxu0 %v1202
        %1257 = vmatpush1.msra.mxu0 %v1201
        %1258 = vmatprep.subr.mxu0 %v1205
        %1259 = vmatpush1.msra.mxu0 %v1204
        %1260 = vmatprep.subr.mxu0 %v1208
        %1261 = vmatpush1.msra.mxu0 %v1207
        %1262 = vmatprep.subr.mxu0 %v1211
        %1263 = vmatpush1.msra.mxu0 %v1210
        %1264 = vmatprep.subr.mxu0 %v1214
        %1265 = vmatpush1.msra.mxu0 %v1213
        %1266 = vmatprep.subr.mxu0 %v1217
        %1267 = vmatpush1.msra.mxu0 %v1216
        %1268 = vmatprep.subr.mxu0 0.0
        %1269 = vmatpush1.msra.mxu0 0.0
        %1270 = vmatprep.subr.mxu0 0.0
        %1271 = vmatpush1.msra.mxu0 0.0
        %1272 = vmatprep.subr.mxu0 0.0
        %1273 = vmatpush1.msra.mxu0 0.0
        %1274 = vmatprep.subr.mxu0 0.0
        %1275 = vmatpush1.msra.mxu0 0.0
        %1276 = vmatprep.subr.mxu0 0.0
        %1277 = vmatpush1.msra.mxu0 0.0
        %1278 = vmatprep.subr.mxu0 0.0
        %1279 = vmatpush1.msra.mxu0 0.0
        %1280 = vmatprep.subr.mxu0 0.0
        %1281 = vmatpush1.msra.mxu0 0.0
        %1282 = vmatprep.subr.mxu0 0.0
        %1283 = vmatpush1.msra.mxu0 0.0
        %1284 = vmatprep.subr.mxu0 0.0
        %1285 = vmatpush1.msra.mxu0 0.0
        %1286 = vmatprep.subr.mxu0 0.0
        %1287 = vmatpush1.msra.mxu0 0.0
        %1288 = vmatprep.subr.mxu0 0.0
        %1289 = vmatpush1.msra.mxu0 0.0
        %1290 = vmatprep.subr.mxu0 0.0
        %1291 = vmatpush1.msra.mxu0 0.0
        %1292 = vmatprep.subr.mxu0 0.0
        %1293 = vmatpush1.msra.mxu0 0.0
        %1294 = vmatprep.subr.mxu0 0.0
        %1295 = vmatpush1.msra.mxu0 0.0
        %1296 = vmatprep.subr.mxu0 0.0
        %1297 = vmatpush1.msra.mxu0 0.0
        %1298 = vmatprep.subr.mxu0 0.0
        %1299 = vmatpush1.msra.mxu0 0.0
        %1300 = vmatprep.mubr.f32.mxu0 0.0
        %1301 = vmatmul.mubr.f32.gmra.mrb[0].mxu0 %v1137
        %v1302 = vpop.f32.mrb[0].mxu0
        %v1303 = vadd.f32 %v1224, %v1302
        %v1304 = vpop.f32.mrb[0].mxu0
        %v1305 = vadd.f32 %v1228, %v1304
        %1306 = vmatprep.mubr.f32.mxu0 0.0
        %1307 = vmatmul.mubr.f32.gmra.mrb[0].mxu0 %v1138
        %v1308 = vpop.f32.mrb[0].mxu0
        %v1309 = vadd.f32 %v1224, %v1308
        %v1310 = vpop.f32.mrb[0].mxu0
        %v1311 = vadd.f32 %v1228, %v1310
        %1312 = vdwg.mxu0
        %1313 = vmatprep.subr.mxu0 0.0
        %1314 = vmatpush1.msra.mxu0 %v1173
        %1315 = vmatprep.subr.mxu0 0.0
        %1316 = vmatpush1.msra.mxu0 %v1176
        %1317 = vmatprep.subr.mxu0 0.0
        %1318 = vmatpush1.msra.mxu0 %v1179
        %1319 = vmatprep.subr.mxu0 0.0
        %1320 = vmatpush1.msra.mxu0 %v1182
        %1321 = vmatprep.subr.mxu0 0.0
        %1322 = vmatpush1.msra.mxu0 %v1185
        %1323 = vmatprep.subr.mxu0 0.0
        %1324 = vmatpush1.msra.mxu0 %v1188
        %1325 = vmatprep.subr.mxu0 0.0
        %1326 = vmatpush1.msra.mxu0 %v1191
        %1327 = vmatprep.subr.mxu0 0.0
        %1328 = vmatpush1.msra.mxu0 %v1194
        %1329 = vmatprep.subr.mxu0 0.0
        %1330 = vmatpush1.msra.mxu0 %v1197
        %1331 = vmatprep.subr.mxu0 0.0
        %1332 = vmatpush1.msra.mxu0 %v1200
        %1333 = vmatprep.subr.mxu0 0.0
        %1334 = vmatpush1.msra.mxu0 %v1203
        %1335 = vmatprep.subr.mxu0 0.0
        %1336 = vmatpush1.msra.mxu0 %v1206
        %1337 = vmatprep.subr.mxu0 0.0
        %1338 = vmatpush1.msra.mxu0 %v1209
        %1339 = vmatprep.subr.mxu0 0.0
        %1340 = vmatpush1.msra.mxu0 %v1212
        %1341 = vmatprep.subr.mxu0 0.0
        %1342 = vmatpush1.msra.mxu0 %v1215
        %1343 = vmatprep.subr.mxu0 0.0
        %1344 = vmatpush1.msra.mxu0 %v1218
        %1345 = vmatprep.subr.mxu0 0.0
        %1346 = vmatpush1.msra.mxu0 0.0
        %1347 = vmatprep.subr.mxu0 0.0
        %1348 = vmatpush1.msra.mxu0 0.0
        %1349 = vmatprep.subr.mxu0 0.0
        %1350 = vmatpush1.msra.mxu0 0.0
        %1351 = vmatprep.subr.mxu0 0.0
        %1352 = vmatpush1.msra.mxu0 0.0
        %1353 = vmatprep.subr.mxu0 0.0
        %1354 = vmatpush1.msra.mxu0 0.0
        %1355 = vmatprep.subr.mxu0 0.0
        %1356 = vmatpush1.msra.mxu0 0.0
        %1357 = vmatprep.subr.mxu0 0.0
        %1358 = vmatpush1.msra.mxu0 0.0
        %1359 = vmatprep.subr.mxu0 0.0
        %1360 = vmatpush1.msra.mxu0 0.0
        %1361 = vmatprep.subr.mxu0 0.0
        %1362 = vmatpush1.msra.mxu0 0.0
        %1363 = vmatprep.subr.mxu0 0.0
        %1364 = vmatpush1.msra.mxu0 0.0
        %1365 = vmatprep.subr.mxu0 0.0
        %1366 = vmatpush1.msra.mxu0 0.0
        %1367 = vmatprep.subr.mxu0 0.0
        %1368 = vmatpush1.msra.mxu0 0.0
        %1369 = vmatprep.subr.mxu0 0.0
        %1370 = vmatpush1.msra.mxu0 0.0
        %1371 = vmatprep.subr.mxu0 0.0
        %1372 = vmatpush1.msra.mxu0 0.0
        %1373 = vmatprep.subr.mxu0 0.0
        %1374 = vmatpush1.msra.mxu0 0.0
        %1375 = vmatprep.subr.mxu0 0.0
        %1376 = vmatpush1.msra.mxu0 0.0
        %1377 = vmatprep.mubr.f32.mxu0 0.0
        %1378 = vmatmul.mubr.f32.gmra.mrb[0].mxu0 %v1137
        %v1379 = vpop.f32.mrb[0].mxu0
        %v1380 = vadd.f32 %v1232, %v1379
        %v1381 = vpop.f32.mrb[0].mxu0
        %1382 = vmatprep.mubr.f32.mxu0 0.0
        %1383 = vmatmul.mubr.f32.gmra.mrb[0].mxu0 %v1138
        %v1384 = vpop.f32.mrb[0].mxu0
        %v1385 = vadd.f32 %v1232, %v1384
        %v1386 = vpop.f32.mrb[0].mxu0
        %1387 = vdwg.mxu0
        %v1388 = vlaneseq
        %v1389 = vshrl.u32 %v1388, 7
        %v1390 = vadd.s32 %v1389, 8
        %v1391 = vshrl.u32 %v1389, 3
        %v1392 = vshrl.u32 %v1390, 3
        %v1393 = vlaneseq
        %v1394 = vand.u32 %v1393, 127
        %v1395 = vshrl.u32 %v1394, 3
        %vm1396 = vcmp.eq.s32.totalorder %v1391, %v1395
        %vm1397 = vcmp.eq.s32.totalorder %v1392, %v1395
        %v1398 = vld [vmem:[%s858] sm:$0xf]
        %v1399 = vld [vmem:[%s858 + $0x4] sm:$0xf]
        %v1400 = vld [vmem:[%s858 + $0x8] sm:$0xf]
        %v1401 = vld [vmem:[%s858 + $0xc] sm:$0xf]
        %v1402 = vld [vmem:[%s858 + $0x10] sm:$0xf]
        %v1403 = vld [vmem:[%s858 + $0x14] sm:$0xf]
        %v1404 = vld [vmem:[%s858 + $0x18] sm:$0xf]
        %v1405 = vld [vmem:[%s858 + $0x1c] sm:$0xf]
        %v1406 = vld [vmem:[%s858 + $0x20] sm:$0xf]
        %v1407 = vld [vmem:[%s858 + $0x24] sm:$0xf]
        %v1408 = vld [vmem:[%s858 + $0x28] sm:$0xf]
        %v1409 = vld [vmem:[%s858 + $0x2c] sm:$0xf]
        %v1410 = vld [vmem:[%s858 + $0x30] sm:$0xf]
        %v1411 = vld [vmem:[%s858 + $0x34] sm:$0xf]
        %v1412 = vld [vmem:[%s858 + $0x38] sm:$0xf]
        %v1413 = vld [vmem:[%s858 + $0x3c] sm:$0xf]
        %v1414 = vunpack.c.l.bf16 %v1398
        %v1415 = vunpack.c.l.bf16 %v1399
        %v1416 = vunpack.c.l.bf16 %v1400
        %v1417 = vunpack.c.l.bf16 %v1401
        %v1418 = vunpack.c.l.bf16 %v1402
        %v1419 = vunpack.c.l.bf16 %v1403
        %v1420 = vunpack.c.l.bf16 %v1404
        %v1421 = vunpack.c.l.bf16 %v1405
        %v1422 = vunpack.c.l.bf16 %v1406
        %v1423 = vunpack.c.l.bf16 %v1407
        %v1424 = vunpack.c.l.bf16 %v1408
        %v1425 = vunpack.c.l.bf16 %v1409
        %v1426 = vunpack.c.l.bf16 %v1410
        %v1427 = vunpack.c.l.bf16 %v1411
        %v1428 = vunpack.c.l.bf16 %v1412
        %v1429 = vunpack.c.l.bf16 %v1413
        %vm1430 = vcmask 130048
        %v1432 = vsel %vm1430, %v1303, 0
        %v1435 = vsel %vm1430, %v1309, 0
        %v1438 = vsel %vm1430, %v1305, 0
        %v1441 = vsel %vm1430, %v1311, 0
        %1443 = vmatprep.subr.mxu0 0.0
        %1444 = vmatpush1.xpose.msra.mxu0 %v1438
        %1445 = vmatprep.subr.mxu0 0.0
        %1446 = vmatpush1.xpose.msra.mxu0 %v1441
        %1447 = vmatprep.subr.mxu0 0.0
        %1448 = vmatpush1.xpose.msra.mxu0 0.0
        %1449 = vmatprep.subr.mxu0 0.0
        %1450 = vmatpush1.xpose.msra.mxu0 0.0
        %1451 = vmatprep.subr.mxu0 0.0
        %1452 = vmatpush1.xpose.msra.mxu0 0.0
        %1453 = vmatprep.subr.mxu0 0.0
        %1454 = vmatpush1.xpose.msra.mxu0 0.0
        %1455 = vmatprep.subr.mxu0 0.0
        %1456 = vmatpush1.xpose.msra.mxu0 0.0
        %1457 = vmatprep.subr.mxu0 0.0
        %1458 = vmatpush1.xpose.msra.mxu0 0.0
        %1459 = vmatprep.subr.mxu0 0.0
        %1460 = vmatpush1.xpose.msra.mxu0 0.0
        %1461 = vmatprep.subr.mxu0 0.0
        %1462 = vmatpush1.xpose.msra.mxu0 0.0
        %1463 = vmatprep.subr.mxu0 0.0
        %1464 = vmatpush1.xpose.msra.mxu0 0.0
        %1465 = vmatprep.subr.mxu0 0.0
        %1466 = vmatpush1.xpose.msra.mxu0 0.0
        %1467 = vmatprep.subr.mxu0 0.0
        %1468 = vmatpush1.xpose.msra.mxu0 0.0
        %1469 = vmatprep.subr.mxu0 0.0
        %1470 = vmatpush1.xpose.msra.mxu0 0.0
        %1471 = vmatprep.subr.mxu0 0.0
        %1472 = vmatpush1.xpose.msra.mxu0 0.0
        %1473 = vmatprep.subr.mxu0 0.0
        %1474 = vmatpush1.xpose.msra.mxu0 0.0
        %1475 = vmatprep.subr.mxu0 0.0
        %1476 = vmatpush1.xpose.msra.mxu0 0.0
        %1477 = vmatprep.subr.mxu0 0.0
        %1478 = vmatpush1.xpose.msra.mxu0 0.0
        %1479 = vmatprep.subr.mxu0 0.0
        %1480 = vmatpush1.xpose.msra.mxu0 0.0
        %1481 = vmatprep.subr.mxu0 0.0
        %1482 = vmatpush1.xpose.msra.mxu0 0.0
        %1483 = vmatprep.subr.mxu0 0.0
        %1484 = vmatpush1.xpose.msra.mxu0 0.0
        %1485 = vmatprep.subr.mxu0 0.0
        %1486 = vmatpush1.xpose.msra.mxu0 0.0
        %1487 = vmatprep.subr.mxu0 0.0
        %1488 = vmatpush1.xpose.msra.mxu0 0.0
        %1489 = vmatprep.subr.mxu0 0.0
        %1490 = vmatpush1.xpose.msra.mxu0 0.0
        %1491 = vmatprep.subr.mxu0 0.0
        %1492 = vmatpush1.xpose.msra.mxu0 0.0
        %1493 = vmatprep.subr.mxu0 0.0
        %1494 = vmatpush1.xpose.msra.mxu0 0.0
        %1495 = vmatprep.subr.mxu0 0.0
        %1496 = vmatpush1.xpose.msra.mxu0 0.0
        %1497 = vmatprep.subr.mxu0 0.0
        %1498 = vmatpush1.xpose.msra.mxu0 0.0
        %1499 = vmatprep.subr.mxu0 0.0
        %1500 = vmatpush1.xpose.msra.mxu0 0.0
        %1501 = vmatprep.subr.mxu0 0.0
        %1502 = vmatpush1.xpose.msra.mxu0 0.0
        %1503 = vmatprep.subr.mxu0 0.0
        %1504 = vmatpush1.xpose.msra.mxu0 0.0
        %1505 = vmatprep.subr.mxu0 0.0
        %1506 = vmatpush1.xpose.msra.mxu0 0.0
        %1507 = vmatprep.mubr.f32.mxu0 0.0
        %1508 = vmatmul.mubr.f32.gmra.mrb[0].mxu0 %v1432
        %v1509 = vpop.f32.mrb[0].mxu0
        %v1510 = vadd.f32 0.0, %v1509
        %v1511 = vpop.f32.mrb[0].mxu0
        %1512 = vmatprep.mubr.f32.mxu0 0.0
        %1513 = vmatmul.mubr.f32.gmra.mrb[0].mxu0 %v1435
        %v1514 = vpop.f32.mrb[0].mxu0
        %v1515 = vadd.f32 0.0, %v1514
        %v1516 = vpop.f32.mrb[0].mxu0
        %1517 = vdwg.mxu0
        %v1518 = vmul.f32 %v1510, 0.25
        %v1519 = vmul.f32 %v1515, 0.25
        %v1520 = vsel %vm1396, %v1518, -1e+30
        %v1521 = vsel %vm1397, %v1519, -1e+30
        %v1522 = vsel %vm1430, %v1520, -inf
        %1523 = vmax.xlane.f32.xlu0 %v1522
        %v1524 = vpop.xlane.xlu0 %1523
        %v1525 = vsel %vm1430, %v1521, -inf
        %1526 = vmax.xlane.f32.xlu0 %v1525
        %v1527 = vpop.xlane.xlu0 %1526
        %v1528 = vsub.f32 %v1520, %v1524
        %v1529 = vsub.f32 %v1521, %v1527
        %v1530 = vmul.f32 %v1528, 1.442695
        %v1531 = vpow.pop %v1530
        %v1532 = vmul.f32 %v1529, 1.442695
        %v1533 = vpow.pop %v1532
        %v1534 = vsel %vm1430, %v1531, 0.0
        %1535 = vadd.xlane.f32.xlu0 %v1534
        %v1536 = vpop.xlane.xlu0 %1535
        %v1537 = vsel %vm1430, %v1533, 0.0
        %1538 = vadd.xlane.f32.xlu0 %v1537
        %v1539 = vpop.xlane.xlu0 %1538
        %v1540 = vrcp.pop %v1536
        %v1541 = vrcp.pop %v1539
        %v1542 = vmul.f32 %v1531, %v1540
        %v1543 = vmul.f32 %v1533, %v1541
        %v1545 = vsel %vm1430, %v1542, 0
        %v1548 = vsel %vm1430, %v1543, 0
        %1550 = vmatprep.subr.mxu0 0.0
        %1551 = vmatpush1.msra.mxu0 %v1380
        %1552 = vmatprep.subr.mxu0 0.0
        %1553 = vmatpush1.msra.mxu0 %v1385
        %1554 = vmatprep.subr.mxu0 0.0
        %1555 = vmatpush1.msra.mxu0 0.0
        %1556 = vmatprep.subr.mxu0 0.0
        %1557 = vmatpush1.msra.mxu0 0.0
        %1558 = vmatprep.subr.mxu0 0.0
        %1559 = vmatpush1.msra.mxu0 0.0
        %1560 = vmatprep.subr.mxu0 0.0
        %1561 = vmatpush1.msra.mxu0 0.0
        %1562 = vmatprep.subr.mxu0 0.0
        %1563 = vmatpush1.msra.mxu0 0.0
        %1564 = vmatprep.subr.mxu0 0.0
        %1565 = vmatpush1.msra.mxu0 0.0
        %1566 = vmatprep.subr.mxu0 0.0
        %1567 = vmatpush1.msra.mxu0 0.0
        %1568 = vmatprep.subr.mxu0 0.0
        %1569 = vmatpush1.msra.mxu0 0.0
        %1570 = vmatprep.subr.mxu0 0.0
        %1571 = vmatpush1.msra.mxu0 0.0
        %1572 = vmatprep.subr.mxu0 0.0
        %1573 = vmatpush1.msra.mxu0 0.0
        %1574 = vmatprep.subr.mxu0 0.0
        %1575 = vmatpush1.msra.mxu0 0.0
        %1576 = vmatprep.subr.mxu0 0.0
        %1577 = vmatpush1.msra.mxu0 0.0
        %1578 = vmatprep.subr.mxu0 0.0
        %1579 = vmatpush1.msra.mxu0 0.0
        %1580 = vmatprep.subr.mxu0 0.0
        %1581 = vmatpush1.msra.mxu0 0.0
        %1582 = vmatprep.subr.mxu0 0.0
        %1583 = vmatpush1.msra.mxu0 0.0
        %1584 = vmatprep.subr.mxu0 0.0
        %1585 = vmatpush1.msra.mxu0 0.0
        %1586 = vmatprep.subr.mxu0 0.0
        %1587 = vmatpush1.msra.mxu0 0.0
        %1588 = vmatprep.subr.mxu0 0.0
        %1589 = vmatpush1.msra.mxu0 0.0
        %1590 = vmatprep.subr.mxu0 0.0
        %1591 = vmatpush1.msra.mxu0 0.0
        %1592 = vmatprep.subr.mxu0 0.0
        %1593 = vmatpush1.msra.mxu0 0.0
        %1594 = vmatprep.subr.mxu0 0.0
        %1595 = vmatpush1.msra.mxu0 0.0
        %1596 = vmatprep.subr.mxu0 0.0
        %1597 = vmatpush1.msra.mxu0 0.0
        %1598 = vmatprep.subr.mxu0 0.0
        %1599 = vmatpush1.msra.mxu0 0.0
        %1600 = vmatprep.subr.mxu0 0.0
        %1601 = vmatpush1.msra.mxu0 0.0
        %1602 = vmatprep.subr.mxu0 0.0
        %1603 = vmatpush1.msra.mxu0 0.0
        %1604 = vmatprep.subr.mxu0 0.0
        %1605 = vmatpush1.msra.mxu0 0.0
        %1606 = vmatprep.subr.mxu0 0.0
        %1607 = vmatpush1.msra.mxu0 0.0
        %1608 = vmatprep.subr.mxu0 0.0
        %1609 = vmatpush1.msra.mxu0 0.0
        %1610 = vmatprep.subr.mxu0 0.0
        %1611 = vmatpush1.msra.mxu0 0.0
        %1612 = vmatprep.subr.mxu0 0.0
        %1613 = vmatpush1.msra.mxu0 0.0
        %1614 = vmatprep.mubr.f32.mxu0 0.0
        %1615 = vmatmul.mubr.f32.gmra.mrb[0].mxu0 %v1545
        %v1616 = vpop.f32.mrb[0].mxu0
        %v1617 = vadd.f32 0.0, %v1616
        %v1618 = vpop.f32.mrb[0].mxu0
        %1619 = vmatprep.mubr.f32.mxu0 0.0
        %1620 = vmatmul.mubr.f32.gmra.mrb[0].mxu0 %v1548
        %v1621 = vpop.f32.mrb[0].mxu0
        %v1622 = vadd.f32 0.0, %v1621
        %v1623 = vpop.f32.mrb[0].mxu0
        %1624 = vdwg.mxu0
        %1625 = vrot.lane.b32.xlu0 %v1303, 112
        %v1626 = vpop.permute.xlu0 %1625
        %1627 = vrot.lane.b32.xlu0 %v1309, 112
        %v1628 = vpop.permute.xlu0 %1627
        %1629 = vrot.lane.b32.xlu0 %v1305, 112
        %v1630 = vpop.permute.xlu0 %1629
        %1631 = vrot.lane.b32.xlu0 %v1311, 112
        %v1632 = vpop.permute.xlu0 %1631
        %v1633 = vsel %vm1430, %v1626, 0
        %v1635 = vsel %vm1430, %v1628, 0
        %v1637 = vsel %vm1430, %v1630, 0
        %v1639 = vsel %vm1430, %v1632, 0
        %1641 = vmatprep.subr.mxu0 0.0
        %1642 = vmatpush1.xpose.msra.mxu0 %v1637
        %1643 = vmatprep.subr.mxu0 0.0
        %1644 = vmatpush1.xpose.msra.mxu0 %v1639
        %1645 = vmatprep.subr.mxu0 0.0
        %1646 = vmatpush1.xpose.msra.mxu0 0.0
        %1647 = vmatprep.subr.mxu0 0.0
        %1648 = vmatpush1.xpose.msra.mxu0 0.0
        %1649 = vmatprep.subr.mxu0 0.0
        %1650 = vmatpush1.xpose.msra.mxu0 0.0
        %1651 = vmatprep.subr.mxu0 0.0
        %1652 = vmatpush1.xpose.msra.mxu0 0.0
        %1653 = vmatprep.subr.mxu0 0.0
        %1654 = vmatpush1.xpose.msra.mxu0 0.0
        %1655 = vmatprep.subr.mxu0 0.0
        %1656 = vmatpush1.xpose.msra.mxu0 0.0
        %1657 = vmatprep.subr.mxu0 0.0
        %1658 = vmatpush1.xpose.msra.mxu0 0.0
        %1659 = vmatprep.subr.mxu0 0.0
        %1660 = vmatpush1.xpose.msra.mxu0 0.0
        %1661 = vmatprep.subr.mxu0 0.0
        %1662 = vmatpush1.xpose.msra.mxu0 0.0
        %1663 = vmatprep.subr.mxu0 0.0
        %1664 = vmatpush1.xpose.msra.mxu0 0.0
        %1665 = vmatprep.subr.mxu0 0.0
        %1666 = vmatpush1.xpose.msra.mxu0 0.0
        %1667 = vmatprep.subr.mxu0 0.0
        %1668 = vmatpush1.xpose.msra.mxu0 0.0
        %1669 = vmatprep.subr.mxu0 0.0
        %1670 = vmatpush1.xpose.msra.mxu0 0.0
        %1671 = vmatprep.subr.mxu0 0.0
        %1672 = vmatpush1.xpose.msra.mxu0 0.0
        %1673 = vmatprep.subr.mxu0 0.0
        %1674 = vmatpush1.xpose.msra.mxu0 0.0
        %1675 = vmatprep.subr.mxu0 0.0
        %1676 = vmatpush1.xpose.msra.mxu0 0.0
        %1677 = vmatprep.subr.mxu0 0.0
        %1678 = vmatpush1.xpose.msra.mxu0 0.0
        %1679 = vmatprep.subr.mxu0 0.0
        %1680 = vmatpush1.xpose.msra.mxu0 0.0
        %1681 = vmatprep.subr.mxu0 0.0
        %1682 = vmatpush1.xpose.msra.mxu0 0.0
        %1683 = vmatprep.subr.mxu0 0.0
        %1684 = vmatpush1.xpose.msra.mxu0 0.0
        %1685 = vmatprep.subr.mxu0 0.0
        %1686 = vmatpush1.xpose.msra.mxu0 0.0
        %1687 = vmatprep.subr.mxu0 0.0
        %1688 = vmatpush1.xpose.msra.mxu0 0.0
        %1689 = vmatprep.subr.mxu0 0.0
        %1690 = vmatpush1.xpose.msra.mxu0 0.0
        %1691 = vmatprep.subr.mxu0 0.0
        %1692 = vmatpush1.xpose.msra.mxu0 0.0
        %1693 = vmatprep.subr.mxu0 0.0
        %1694 = vmatpush1.xpose.msra.mxu0 0.0
        %1695 = vmatprep.subr.mxu0 0.0
        %1696 = vmatpush1.xpose.msra.mxu0 0.0
        %1697 = vmatprep.subr.mxu0 0.0
        %1698 = vmatpush1.xpose.msra.mxu0 0.0
        %1699 = vmatprep.subr.mxu0 0.0
        %1700 = vmatpush1.xpose.msra.mxu0 0.0
        %1701 = vmatprep.subr.mxu0 0.0
        %1702 = vmatpush1.xpose.msra.mxu0 0.0
        %1703 = vmatprep.subr.mxu0 0.0
        %1704 = vmatpush1.xpose.msra.mxu0 0.0
        %1705 = vmatprep.mubr.f32.mxu0 0.0
        %1706 = vmatmul.mubr.f32.gmra.mrb[0].mxu0 %v1633
        %v1707 = vpop.f32.mrb[0].mxu0
        %v1708 = vadd.f32 0.0, %v1707
        %v1709 = vpop.f32.mrb[0].mxu0
        %1710 = vmatprep.mubr.f32.mxu0 0.0
        %1711 = vmatmul.mubr.f32.gmra.mrb[0].mxu0 %v1635
        %v1712 = vpop.f32.mrb[0].mxu0
        %v1713 = vadd.f32 0.0, %v1712
        %v1714 = vpop.f32.mrb[0].mxu0
        %1715 = vdwg.mxu0
        %v1716 = vmul.f32 %v1708, 0.25
        %v1717 = vmul.f32 %v1713, 0.25
        %v1718 = vsel %vm1396, %v1716, -1e+30
        %v1719 = vsel %vm1397, %v1717, -1e+30
        %v1720 = vsel %vm1430, %v1718, -inf
        %1721 = vmax.xlane.f32.xlu0 %v1720
        %v1722 = vpop.xlane.xlu0 %1721
        %v1723 = vsel %vm1430, %v1719, -inf
        %1724 = vmax.xlane.f32.xlu0 %v1723
        %v1725 = vpop.xlane.xlu0 %1724
        %v1726 = vsub.f32 %v1718, %v1722
        %v1727 = vsub.f32 %v1719, %v1725
        %v1728 = vmul.f32 %v1726, 1.442695
        %v1729 = vpow.pop %v1728
        %v1730 = vmul.f32 %v1727, 1.442695
        %v1731 = vpow.pop %v1730
        %v1732 = vsel %vm1430, %v1729, 0.0
        %1733 = vadd.xlane.f32.xlu0 %v1732
        %v1734 = vpop.xlane.xlu0 %1733
        %v1735 = vsel %vm1430, %v1731, 0.0
        %1736 = vadd.xlane.f32.xlu0 %v1735
        %v1737 = vpop.xlane.xlu0 %1736
        %v1738 = vrcp.pop %v1734
        %v1739 = vrcp.pop %v1737
        %v1740 = vmul.f32 %v1729, %v1738
        %v1741 = vmul.f32 %v1731, %v1739
        %1744 = vrot.lane.b32.xlu0 %v1380, 112
        %v1745 = vpop.permute.xlu0 %1744
        %1746 = vrot.lane.b32.xlu0 %v1385, 112
        %v1747 = vpop.permute.xlu0 %1746
        %v1751 = vsel %vm1430, %v1740, 0
        %v1754 = vsel %vm1430, %v1741, 0
        %1756 = vmatprep.subr.mxu0 0.0
        %1757 = vmatpush1.msra.mxu0 %v1745
        %1758 = vmatprep.subr.mxu0 0.0
        %1759 = vmatpush1.msra.mxu0 %v1747
        %1760 = vmatprep.subr.mxu0 0.0
        %1761 = vmatpush1.msra.mxu0 0.0
        %1762 = vmatprep.subr.mxu0 0.0
        %1763 = vmatpush1.msra.mxu0 0.0
        %1764 = vmatprep.subr.mxu0 0.0
        %1765 = vmatpush1.msra.mxu0 0.0
        %1766 = vmatprep.subr.mxu0 0.0
        %1767 = vmatpush1.msra.mxu0 0.0
        %1768 = vmatprep.subr.mxu0 0.0
        %1769 = vmatpush1.msra.mxu0 0.0
        %1770 = vmatprep.subr.mxu0 0.0
        %1771 = vmatpush1.msra.mxu0 0.0
        %1772 = vmatprep.subr.mxu0 0.0
        %1773 = vmatpush1.msra.mxu0 0.0
        %1774 = vmatprep.subr.mxu0 0.0
        %1775 = vmatpush1.msra.mxu0 0.0
        %1776 = vmatprep.subr.mxu0 0.0
        %1777 = vmatpush1.msra.mxu0 0.0
        %1778 = vmatprep.subr.mxu0 0.0
        %1779 = vmatpush1.msra.mxu0 0.0
        %1780 = vmatprep.subr.mxu0 0.0
        %1781 = vmatpush1.msra.mxu0 0.0
        %1782 = vmatprep.subr.mxu0 0.0
        %1783 = vmatpush1.msra.mxu0 0.0
        %1784 = vmatprep.subr.mxu0 0.0
        %1785 = vmatpush1.msra.mxu0 0.0
        %1786 = vmatprep.subr.mxu0 0.0
        %1787 = vmatpush1.msra.mxu0 0.0
        %1788 = vmatprep.subr.mxu0 0.0
        %1789 = vmatpush1.msra.mxu0 0.0
        %1790 = vmatprep.subr.mxu0 0.0
        %1791 = vmatpush1.msra.mxu0 0.0
        %1792 = vmatprep.subr.mxu0 0.0
        %1793 = vmatpush1.msra.mxu0 0.0
        %1794 = vmatprep.subr.mxu0 0.0
        %1795 = vmatpush1.msra.mxu0 0.0
        %1796 = vmatprep.subr.mxu0 0.0
        %1797 = vmatpush1.msra.mxu0 0.0
        %1798 = vmatprep.subr.mxu0 0.0
        %1799 = vmatpush1.msra.mxu0 0.0
        %1800 = vmatprep.subr.mxu0 0.0
        %1801 = vmatpush1.msra.mxu0 0.0
        %1802 = vmatprep.subr.mxu0 0.0
        %1803 = vmatpush1.msra.mxu0 0.0
        %1804 = vmatprep.subr.mxu0 0.0
        %1805 = vmatpush1.msra.mxu0 0.0
        %1806 = vmatprep.subr.mxu0 0.0
        %1807 = vmatpush1.msra.mxu0 0.0
        %1808 = vmatprep.subr.mxu0 0.0
        %1809 = vmatpush1.msra.mxu0 0.0
        %1810 = vmatprep.subr.mxu0 0.0
        %1811 = vmatpush1.msra.mxu0 0.0
        %1812 = vmatprep.subr.mxu0 0.0
        %1813 = vmatpush1.msra.mxu0 0.0
        %1814 = vmatprep.subr.mxu0 0.0
        %1815 = vmatpush1.msra.mxu0 0.0
        %1816 = vmatprep.subr.mxu0 0.0
        %1817 = vmatpush1.msra.mxu0 0.0
        %1818 = vmatprep.subr.mxu0 0.0
        %1819 = vmatpush1.msra.mxu0 0.0
        %1820 = vmatprep.mubr.f32.mxu0 0.0
        %1821 = vmatmul.mubr.f32.gmra.mrb[0].mxu0 %v1751
        %v1822 = vpop.f32.mrb[0].mxu0
        %v1823 = vadd.f32 0.0, %v1822
        %v1824 = vpop.f32.mrb[0].mxu0
        %1825 = vmatprep.mubr.f32.mxu0 0.0
        %1826 = vmatmul.mubr.f32.gmra.mrb[0].mxu0 %v1754
        %v1827 = vpop.f32.mrb[0].mxu0
        %v1828 = vadd.f32 0.0, %v1827
        %v1829 = vpop.f32.mrb[0].mxu0
        %1830 = vdwg.mxu0
        %v1832 = vsel %vm1430, %v1823, 0
        %v1835 = vsel %vm1430, %v1828, 0
        %1837 = vmatprep.subr.mxu0 0.0
        %1838 = vmatpush1.msra.mxu0 %v1416
        %1839 = vmatprep.subr.mxu0 0.0
        %1840 = vmatpush1.msra.mxu0 %v1417
        %1841 = vmatprep.subr.mxu0 0.0
        %1842 = vmatpush1.msra.mxu0 0.0
        %1843 = vmatprep.subr.mxu0 0.0
        %1844 = vmatpush1.msra.mxu0 0.0
        %1845 = vmatprep.subr.mxu0 0.0
        %1846 = vmatpush1.msra.mxu0 0.0
        %1847 = vmatprep.subr.mxu0 0.0
        %1848 = vmatpush1.msra.mxu0 0.0
        %1849 = vmatprep.subr.mxu0 0.0
        %1850 = vmatpush1.msra.mxu0 0.0
        %1851 = vmatprep.subr.mxu0 0.0
        %1852 = vmatpush1.msra.mxu0 0.0
        %1853 = vmatprep.subr.mxu0 0.0
        %1854 = vmatpush1.msra.mxu0 0.0
        %1855 = vmatprep.subr.mxu0 0.0
        %1856 = vmatpush1.msra.mxu0 0.0
        %1857 = vmatprep.subr.mxu0 0.0
        %1858 = vmatpush1.msra.mxu0 0.0
        %1859 = vmatprep.subr.mxu0 0.0
        %1860 = vmatpush1.msra.mxu0 0.0
        %1861 = vmatprep.subr.mxu0 0.0
        %1862 = vmatpush1.msra.mxu0 0.0
        %1863 = vmatprep.subr.mxu0 0.0
        %1864 = vmatpush1.msra.mxu0 0.0
        %1865 = vmatprep.subr.mxu0 0.0
        %1866 = vmatpush1.msra.mxu0 0.0
        %1867 = vmatprep.subr.mxu0 0.0
        %1868 = vmatpush1.msra.mxu0 0.0
        %1869 = vmatprep.subr.mxu0 0.0
        %1870 = vmatpush1.msra.mxu0 0.0
        %1871 = vmatprep.subr.mxu0 0.0
        %1872 = vmatpush1.msra.mxu0 0.0
        %1873 = vmatprep.subr.mxu0 0.0
        %1874 = vmatpush1.msra.mxu0 0.0
        %1875 = vmatprep.subr.mxu0 0.0
        %1876 = vmatpush1.msra.mxu0 0.0
        %1877 = vmatprep.subr.mxu0 0.0
        %1878 = vmatpush1.msra.mxu0 0.0
        %1879 = vmatprep.subr.mxu0 0.0
        %1880 = vmatpush1.msra.mxu0 0.0
        %1881 = vmatprep.subr.mxu0 0.0
        %1882 = vmatpush1.msra.mxu0 0.0
        %1883 = vmatprep.subr.mxu0 0.0
        %1884 = vmatpush1.msra.mxu0 0.0
        %1885 = vmatprep.subr.mxu0 0.0
        %1886 = vmatpush1.msra.mxu0 0.0
        %1887 = vmatprep.subr.mxu0 0.0
        %1888 = vmatpush1.msra.mxu0 0.0
        %1889 = vmatprep.subr.mxu0 0.0
        %1890 = vmatpush1.msra.mxu0 0.0
        %1891 = vmatprep.subr.mxu0 0.0
        %1892 = vmatpush1.msra.mxu0 0.0
        %1893 = vmatprep.subr.mxu0 0.0
        %1894 = vmatpush1.msra.mxu0 0.0
        %1895 = vmatprep.subr.mxu0 0.0
        %1896 = vmatpush1.msra.mxu0 0.0
        %1897 = vmatprep.subr.mxu0 0.0
        %1898 = vmatpush1.msra.mxu0 0.0
        %1899 = vmatprep.subr.mxu0 0.0
        %1900 = vmatpush1.msra.mxu0 0.0
        %1901 = vmatprep.mubr.f32.mxu0 0.0
        %1902 = vmatmul.mubr.f32.gmra.mrb[0].mxu0 %v1832
        %v1903 = vpop.f32.mrb[0].mxu0
        %v1904 = vadd.f32 0.0, %v1903
        %v1905 = vpop.f32.mrb[0].mxu0
        %1906 = vmatprep.mubr.f32.mxu0 0.0
        %1907 = vmatmul.mubr.f32.gmra.mrb[0].mxu0 %v1835
        %v1908 = vpop.f32.mrb[0].mxu0
        %v1909 = vadd.f32 0.0, %v1908
        %v1910 = vpop.f32.mrb[0].mxu0
        %1911 = vdwg.mxu0
        %v1913 = vsel %vm1430, %v1617, 0
        %v1916 = vsel %vm1430, %v1622, 0
        %1918 = vmatprep.subr.mxu0 0.0
        %1919 = vmatpush1.msra.mxu0 %v1414
        %1920 = vmatprep.subr.mxu0 0.0
        %1921 = vmatpush1.msra.mxu0 %v1415
        %1922 = vmatprep.subr.mxu0 0.0
        %1923 = vmatpush1.msra.mxu0 0.0
        %1924 = vmatprep.subr.mxu0 0.0
        %1925 = vmatpush1.msra.mxu0 0.0
        %1926 = vmatprep.subr.mxu0 0.0
        %1927 = vmatpush1.msra.mxu0 0.0
        %1928 = vmatprep.subr.mxu0 0.0
        %1929 = vmatpush1.msra.mxu0 0.0
        %1930 = vmatprep.subr.mxu0 0.0
        %1931 = vmatpush1.msra.mxu0 0.0
        %1932 = vmatprep.subr.mxu0 0.0
        %1933 = vmatpush1.msra.mxu0 0.0
        %1934 = vmatprep.subr.mxu0 0.0
        %1935 = vmatpush1.msra.mxu0 0.0
        %1936 = vmatprep.subr.mxu0 0.0
        %1937 = vmatpush1.msra.mxu0 0.0
        %1938 = vmatprep.subr.mxu0 0.0
        %1939 = vmatpush1.msra.mxu0 0.0
        %1940 = vmatprep.subr.mxu0 0.0
        %1941 = vmatpush1.msra.mxu0 0.0
        %1942 = vmatprep.subr.mxu0 0.0
        %1943 = vmatpush1.msra.mxu0 0.0
        %1944 = vmatprep.subr.mxu0 0.0
        %1945 = vmatpush1.msra.mxu0 0.0
        %1946 = vmatprep.subr.mxu0 0.0
        %1947 = vmatpush1.msra.mxu0 0.0
        %1948 = vmatprep.subr.mxu0 0.0
        %1949 = vmatpush1.msra.mxu0 0.0
        %1950 = vmatprep.subr.mxu0 0.0
        %1951 = vmatpush1.msra.mxu0 0.0
        %1952 = vmatprep.subr.mxu0 0.0
        %1953 = vmatpush1.msra.mxu0 0.0
        %1954 = vmatprep.subr.mxu0 0.0
        %1955 = vmatpush1.msra.mxu0 0.0
        %1956 = vmatprep.subr.mxu0 0.0
        %1957 = vmatpush1.msra.mxu0 0.0
        %1958 = vmatprep.subr.mxu0 0.0
        %1959 = vmatpush1.msra.mxu0 0.0
        %1960 = vmatprep.subr.mxu0 0.0
        %1961 = vmatpush1.msra.mxu0 0.0
        %1962 = vmatprep.subr.mxu0 0.0
        %1963 = vmatpush1.msra.mxu0 0.0
        %1964 = vmatprep.subr.mxu0 0.0
        %1965 = vmatpush1.msra.mxu0 0.0
        %1966 = vmatprep.subr.mxu0 0.0
        %1967 = vmatpush1.msra.mxu0 0.0
        %1968 = vmatprep.subr.mxu0 0.0
        %1969 = vmatpush1.msra.mxu0 0.0
        %1970 = vmatprep.subr.mxu0 0.0
        %1971 = vmatpush1.msra.mxu0 0.0
        %1972 = vmatprep.subr.mxu0 0.0
        %1973 = vmatpush1.msra.mxu0 0.0
        %1974 = vmatprep.subr.mxu0 0.0
        %1975 = vmatpush1.msra.mxu0 0.0
        %1976 = vmatprep.subr.mxu0 0.0
        %1977 = vmatpush1.msra.mxu0 0.0
        %1978 = vmatprep.subr.mxu0 0.0
        %1979 = vmatpush1.msra.mxu0 0.0
        %1980 = vmatprep.subr.mxu0 0.0
        %1981 = vmatpush1.msra.mxu0 0.0
        %1982 = vmatprep.mubr.f32.mxu0 0.0
        %1983 = vmatmul.mubr.f32.gmra.mrb[0].mxu0 %v1913
        %v1984 = vpop.f32.mrb[0].mxu0
        %v1985 = vadd.f32 %v1904, %v1984
        %v1986 = vpop.f32.mrb[0].mxu0
        %1987 = vmatprep.mubr.f32.mxu0 0.0
        %1988 = vmatmul.mubr.f32.gmra.mrb[0].mxu0 %v1916
        %v1989 = vpop.f32.mrb[0].mxu0
        %v1990 = vadd.f32 %v1909, %v1989
        %v1991 = vpop.f32.mrb[0].mxu0
        %1992 = vdwg.mxu0
        %1993 = vrot.lane.b32.xlu0 %v1303, 96
        %v1994 = vpop.permute.xlu0 %1993
        %1995 = vrot.lane.b32.xlu0 %v1309, 96
        %v1996 = vpop.permute.xlu0 %1995
        %1997 = vrot.lane.b32.xlu0 %v1305, 96
        %v1998 = vpop.permute.xlu0 %1997
        %1999 = vrot.lane.b32.xlu0 %v1311, 96
        %v2000 = vpop.permute.xlu0 %1999
        %v2001 = vsel %vm1430, %v1994, 0
        %v2003 = vsel %vm1430, %v1996, 0
        %v2005 = vsel %vm1430, %v1998, 0
        %v2007 = vsel %vm1430, %v2000, 0
        %2009 = vmatprep.subr.mxu0 0.0
        %2010 = vmatpush1.xpose.msra.mxu0 %v2005
        %2011 = vmatprep.subr.mxu0 0.0
        %2012 = vmatpush1.xpose.msra.mxu0 %v2007
        %2013 = vmatprep.subr.mxu0 0.0
        %2014 = vmatpush1.xpose.msra.mxu0 0.0
        %2015 = vmatprep.subr.mxu0 0.0
        %2016 = vmatpush1.xpose.msra.mxu0 0.0
        %2017 = vmatprep.subr.mxu0 0.0
        %2018 = vmatpush1.xpose.msra.mxu0 0.0
        %2019 = vmatprep.subr.mxu0 0.0
        %2020 = vmatpush1.xpose.msra.mxu0 0.0
        %2021 = vmatprep.subr.mxu0 0.0
        %2022 = vmatpush1.xpose.msra.mxu0 0.0
        %2023 = vmatprep.subr.mxu0 0.0
        %2024 = vmatpush1.xpose.msra.mxu0 0.0
        %2025 = vmatprep.subr.mxu0 0.0
        %2026 = vmatpush1.xpose.msra.mxu0 0.0
        %2027 = vmatprep.subr.mxu0 0.0
        %2028 = vmatpush1.xpose.msra.mxu0 0.0
        %2029 = vmatprep.subr.mxu0 0.0
        %2030 = vmatpush1.xpose.msra.mxu0 0.0
        %2031 = vmatprep.subr.mxu0 0.0
        %2032 = vmatpush1.xpose.msra.mxu0 0.0
        %2033 = vmatprep.subr.mxu0 0.0
        %2034 = vmatpush1.xpose.msra.mxu0 0.0
        %2035 = vmatprep.subr.mxu0 0.0
        %2036 = vmatpush1.xpose.msra.mxu0 0.0
        %2037 = vmatprep.subr.mxu0 0.0
        %2038 = vmatpush1.xpose.msra.mxu0 0.0
        %2039 = vmatprep.subr.mxu0 0.0
        %2040 = vmatpush1.xpose.msra.mxu0 0.0
        %2041 = vmatprep.subr.mxu0 0.0
        %2042 = vmatpush1.xpose.msra.mxu0 0.0
        %2043 = vmatprep.subr.mxu0 0.0
        %2044 = vmatpush1.xpose.msra.mxu0 0.0
        %2045 = vmatprep.subr.mxu0 0.0
        %2046 = vmatpush1.xpose.msra.mxu0 0.0
        %2047 = vmatprep.subr.mxu0 0.0
        %2048 = vmatpush1.xpose.msra.mxu0 0.0
        %2049 = vmatprep.subr.mxu0 0.0
        %2050 = vmatpush1.xpose.msra.mxu0 0.0
        %2051 = vmatprep.subr.mxu0 0.0
        %2052 = vmatpush1.xpose.msra.mxu0 0.0
        %2053 = vmatprep.subr.mxu0 0.0
        %2054 = vmatpush1.xpose.msra.mxu0 0.0
        %2055 = vmatprep.subr.mxu0 0.0
        %2056 = vmatpush1.xpose.msra.mxu0 0.0
        %2057 = vmatprep.subr.mxu0 0.0
        %2058 = vmatpush1.xpose.msra.mxu0 0.0
        %2059 = vmatprep.subr.mxu0 0.0
        %2060 = vmatpush1.xpose.msra.mxu0 0.0
        %2061 = vmatprep.subr.mxu0 0.0
        %2062 = vmatpush1.xpose.msra.mxu0 0.0
        %2063 = vmatprep.subr.mxu0 0.0
        %2064 = vmatpush1.xpose.msra.mxu0 0.0
        %2065 = vmatprep.subr.mxu0 0.0
        %2066 = vmatpush1.xpose.msra.mxu0 0.0
        %2067 = vmatprep.subr.mxu0 0.0
        %2068 = vmatpush1.xpose.msra.mxu0 0.0
        %2069 = vmatprep.subr.mxu0 0.0
        %2070 = vmatpush1.xpose.msra.mxu0 0.0
        %2071 = vmatprep.subr.mxu0 0.0
        %2072 = vmatpush1.xpose.msra.mxu0 0.0
        %2073 = vmatprep.mubr.f32.mxu0 0.0
        %2074 = vmatmul.mubr.f32.gmra.mrb[0].mxu0 %v2001
        %v2075 = vpop.f32.mrb[0].mxu0
        %v2076 = vadd.f32 0.0, %v2075
        %v2077 = vpop.f32.mrb[0].mxu0
        %2078 = vmatprep.mubr.f32.mxu0 0.0
        %2079 = vmatmul.mubr.f32.gmra.mrb[0].mxu0 %v2003
        %v2080 = vpop.f32.mrb[0].mxu0
        %v2081 = vadd.f32 0.0, %v2080
        %v2082 = vpop.f32.mrb[0].mxu0
        %2083 = vdwg.mxu0
        %v2084 = vmul.f32 %v2076, 0.25
        %v2085 = vmul.f32 %v2081, 0.25
        %v2086 = vsel %vm1396, %v2084, -1e+30
        %v2087 = vsel %vm1397, %v2085, -1e+30
        %v2088 = vsel %vm1430, %v2086, -inf
        %2089 = vmax.xlane.f32.xlu0 %v2088
        %v2090 = vpop.xlane.xlu0 %2089
        %v2091 = vsel %vm1430, %v2087, -inf
        %2092 = vmax.xlane.f32.xlu0 %v2091
        %v2093 = vpop.xlane.xlu0 %2092
        %v2094 = vsub.f32 %v2086, %v2090
        %v2095 = vsub.f32 %v2087, %v2093
        %v2096 = vmul.f32 %v2094, 1.442695
        %v2097 = vpow.pop %v2096
        %v2098 = vmul.f32 %v2095, 1.442695
        %v2099 = vpow.pop %v2098
        %v2100 = vsel %vm1430, %v2097, 0.0
        %2101 = vadd.xlane.f32.xlu0 %v2100
        %v2102 = vpop.xlane.xlu0 %2101
        %v2103 = vsel %vm1430, %v2099, 0.0
        %2104 = vadd.xlane.f32.xlu0 %v2103
        %v2105 = vpop.xlane.xlu0 %2104
        %v2106 = vrcp.pop %v2102
        %v2107 = vrcp.pop %v2105
        %v2108 = vmul.f32 %v2097, %v2106
        %v2109 = vmul.f32 %v2099, %v2107
        %2110 = vrot.lane.b32.xlu0 %v1380, 96
        %v2111 = vpop.permute.xlu0 %2110
        %2112 = vrot.lane.b32.xlu0 %v1385, 96
        %v2113 = vpop.permute.xlu0 %2112
        %v2117 = vsel %vm1430, %v2108, 0
        %v2120 = vsel %vm1430, %v2109, 0
        %2122 = vmatprep.subr.mxu0 0.0
        %2123 = vmatpush1.msra.mxu0 %v2111
        %2124 = vmatprep.subr.mxu0 0.0
        %2125 = vmatpush1.msra.mxu0 %v2113
        %2126 = vmatprep.subr.mxu0 0.0
        %2127 = vmatpush1.msra.mxu0 0.0
        %2128 = vmatprep.subr.mxu0 0.0
        %2129 = vmatpush1.msra.mxu0 0.0
        %2130 = vmatprep.subr.mxu0 0.0
        %2131 = vmatpush1.msra.mxu0 0.0
        %2132 = vmatprep.subr.mxu0 0.0
        %2133 = vmatpush1.msra.mxu0 0.0
        %2134 = vmatprep.subr.mxu0 0.0
        %2135 = vmatpush1.msra.mxu0 0.0
        %2136 = vmatprep.subr.mxu0 0.0
        %2137 = vmatpush1.msra.mxu0 0.0
        %2138 = vmatprep.subr.mxu0 0.0
        %2139 = vmatpush1.msra.mxu0 0.0
        %2140 = vmatprep.subr.mxu0 0.0
        %2141 = vmatpush1.msra.mxu0 0.0
        %2142 = vmatprep.subr.mxu0 0.0
        %2143 = vmatpush1.msra.mxu0 0.0
        %2144 = vmatprep.subr.mxu0 0.0
        %2145 = vmatpush1.msra.mxu0 0.0
        %2146 = vmatprep.subr.mxu0 0.0
        %2147 = vmatpush1.msra.mxu0 0.0
        %2148 = vmatprep.subr.mxu0 0.0
        %2149 = vmatpush1.msra.mxu0 0.0
        %2150 = vmatprep.subr.mxu0 0.0
        %2151 = vmatpush1.msra.mxu0 0.0
        %2152 = vmatprep.subr.mxu0 0.0
        %2153 = vmatpush1.msra.mxu0 0.0
        %2154 = vmatprep.subr.mxu0 0.0
        %2155 = vmatpush1.msra.mxu0 0.0
        %2156 = vmatprep.subr.mxu0 0.0
        %2157 = vmatpush1.msra.mxu0 0.0
        %2158 = vmatprep.subr.mxu0 0.0
        %2159 = vmatpush1.msra.mxu0 0.0
        %2160 = vmatprep.subr.mxu0 0.0
        %2161 = vmatpush1.msra.mxu0 0.0
        %2162 = vmatprep.subr.mxu0 0.0
        %2163 = vmatpush1.msra.mxu0 0.0
        %2164 = vmatprep.subr.mxu0 0.0
        %2165 = vmatpush1.msra.mxu0 0.0
        %2166 = vmatprep.subr.mxu0 0.0
        %2167 = vmatpush1.msra.mxu0 0.0
        %2168 = vmatprep.subr.mxu0 0.0
        %2169 = vmatpush1.msra.mxu0 0.0
        %2170 = vmatprep.subr.mxu0 0.0
        %2171 = vmatpush1.msra.mxu0 0.0
        %2172 = vmatprep.subr.mxu0 0.0
        %2173 = vmatpush1.msra.mxu0 0.0
        %2174 = vmatprep.subr.mxu0 0.0
        %2175 = vmatpush1.msra.mxu0 0.0
        %2176 = vmatprep.subr.mxu0 0.0
        %2177 = vmatpush1.msra.mxu0 0.0
        %2178 = vmatprep.subr.mxu0 0.0
        %2179 = vmatpush1.msra.mxu0 0.0
        %2180 = vmatprep.subr.mxu0 0.0
        %2181 = vmatpush1.msra.mxu0 0.0
        %2182 = vmatprep.subr.mxu0 0.0
        %2183 = vmatpush1.msra.mxu0 0.0
        %2184 = vmatprep.subr.mxu0 0.0
        %2185 = vmatpush1.msra.mxu0 0.0
        %2186 = vmatprep.mubr.f32.mxu0 0.0
        %2187 = vmatmul.mubr.f32.gmra.mrb[0].mxu0 %v2117
        %v2188 = vpop.f32.mrb[0].mxu0
        %v2189 = vadd.f32 0.0, %v2188
        %v2190 = vpop.f32.mrb[0].mxu0
        %2191 = vmatprep.mubr.f32.mxu0 0.0
        %2192 = vmatmul.mubr.f32.gmra.mrb[0].mxu0 %v2120
        %v2193 = vpop.f32.mrb[0].mxu0
        %v2194 = vadd.f32 0.0, %v2193
        %v2195 = vpop.f32.mrb[0].mxu0
        %2196 = vdwg.mxu0
        %v2198 = vsel %vm1430, %v2189, 0
        %v2201 = vsel %vm1430, %v2194, 0
        %2203 = vmatprep.subr.mxu0 0.0
        %2204 = vmatpush1.msra.mxu0 %v1418
        %2205 = vmatprep.subr.mxu0 0.0
        %2206 = vmatpush1.msra.mxu0 %v1419
        %2207 = vmatprep.subr.mxu0 0.0
        %2208 = vmatpush1.msra.mxu0 0.0
        %2209 = vmatprep.subr.mxu0 0.0
        %2210 = vmatpush1.msra.mxu0 0.0
        %2211 = vmatprep.subr.mxu0 0.0
        %2212 = vmatpush1.msra.mxu0 0.0
        %2213 = vmatprep.subr.mxu0 0.0
        %2214 = vmatpush1.msra.mxu0 0.0
        %2215 = vmatprep.subr.mxu0 0.0
        %2216 = vmatpush1.msra.mxu0 0.0
        %2217 = vmatprep.subr.mxu0 0.0
        %2218 = vmatpush1.msra.mxu0 0.0
        %2219 = vmatprep.subr.mxu0 0.0
        %2220 = vmatpush1.msra.mxu0 0.0
        %2221 = vmatprep.subr.mxu0 0.0
        %2222 = vmatpush1.msra.mxu0 0.0
        %2223 = vmatprep.subr.mxu0 0.0
        %2224 = vmatpush1.msra.mxu0 0.0
        %2225 = vmatprep.subr.mxu0 0.0
        %2226 = vmatpush1.msra.mxu0 0.0
        %2227 = vmatprep.subr.mxu0 0.0
        %2228 = vmatpush1.msra.mxu0 0.0
        %2229 = vmatprep.subr.mxu0 0.0
        %2230 = vmatpush1.msra.mxu0 0.0
        %2231 = vmatprep.subr.mxu0 0.0
        %2232 = vmatpush1.msra.mxu0 0.0
        %2233 = vmatprep.subr.mxu0 0.0
        %2234 = vmatpush1.msra.mxu0 0.0
        %2235 = vmatprep.subr.mxu0 0.0
        %2236 = vmatpush1.msra.mxu0 0.0
        %2237 = vmatprep.subr.mxu0 0.0
        %2238 = vmatpush1.msra.mxu0 0.0
        %2239 = vmatprep.subr.mxu0 0.0
        %2240 = vmatpush1.msra.mxu0 0.0
        %2241 = vmatprep.subr.mxu0 0.0
        %2242 = vmatpush1.msra.mxu0 0.0
        %2243 = vmatprep.subr.mxu0 0.0
        %2244 = vmatpush1.msra.mxu0 0.0
        %2245 = vmatprep.subr.mxu0 0.0
        %2246 = vmatpush1.msra.mxu0 0.0
        %2247 = vmatprep.subr.mxu0 0.0
        %2248 = vmatpush1.msra.mxu0 0.0
        %2249 = vmatprep.subr.mxu0 0.0
        %2250 = vmatpush1.msra.mxu0 0.0
        %2251 = vmatprep.subr.mxu0 0.0
        %2252 = vmatpush1.msra.mxu0 0.0
        %2253 = vmatprep.subr.mxu0 0.0
        %2254 = vmatpush1.msra.mxu0 0.0
        %2255 = vmatprep.subr.mxu0 0.0
        %2256 = vmatpush1.msra.mxu0 0.0
        %2257 = vmatprep.subr.mxu0 0.0
        %2258 = vmatpush1.msra.mxu0 0.0
        %2259 = vmatprep.subr.mxu0 0.0
        %2260 = vmatpush1.msra.mxu0 0.0
        %2261 = vmatprep.subr.mxu0 0.0
        %2262 = vmatpush1.msra.mxu0 0.0
        %2263 = vmatprep.subr.mxu0 0.0
        %2264 = vmatpush1.msra.mxu0 0.0
        %2265 = vmatprep.subr.mxu0 0.0
        %2266 = vmatpush1.msra.mxu0 0.0
        %2267 = vmatprep.mubr.f32.mxu0 0.0
        %2268 = vmatmul.mubr.f32.gmra.mrb[0].mxu0 %v2198
        %v2269 = vpop.f32.mrb[0].mxu0
        %v2270 = vadd.f32 0.0, %v2269
        %v2271 = vpop.f32.mrb[0].mxu0
        %2272 = vmatprep.mubr.f32.mxu0 0.0
        %2273 = vmatmul.mubr.f32.gmra.mrb[0].mxu0 %v2201
        %v2274 = vpop.f32.mrb[0].mxu0
        %v2275 = vadd.f32 0.0, %v2274
        %v2276 = vpop.f32.mrb[0].mxu0
        %2277 = vdwg.mxu0
        %v2278 = vadd.f32 %v1985, %v2270
        %v2279 = vadd.f32 %v1990, %v2275
        %2280 = vrot.lane.b32.xlu0 %v1303, 80
        %v2281 = vpop.permute.xlu0 %2280
        %2282 = vrot.lane.b32.xlu0 %v1309, 80
        %v2283 = vpop.permute.xlu0 %2282
        %2284 = vrot.lane.b32.xlu0 %v1305, 80
        %v2285 = vpop.permute.xlu0 %2284
        %2286 = vrot.lane.b32.xlu0 %v1311, 80
        %v2287 = vpop.permute.xlu0 %2286
        %v2288 = vsel %vm1430, %v2281, 0
        %v2290 = vsel %vm1430, %v2283, 0
        %v2292 = vsel %vm1430, %v2285, 0
        %v2294 = vsel %vm1430, %v2287, 0
        %2296 = vmatprep.subr.mxu0 0.0
        %2297 = vmatpush1.xpose.msra.mxu0 %v2292
        %2298 = vmatprep.subr.mxu0 0.0
        %2299 = vmatpush1.xpose.msra.mxu0 %v2294
        %2300 = vmatprep.subr.mxu0 0.0
        %2301 = vmatpush1.xpose.msra.mxu0 0.0
        %2302 = vmatprep.subr.mxu0 0.0
        %2303 = vmatpush1.xpose.msra.mxu0 0.0
        %2304 = vmatprep.subr.mxu0 0.0
        %2305 = vmatpush1.xpose.msra.mxu0 0.0
        %2306 = vmatprep.subr.mxu0 0.0
        %2307 = vmatpush1.xpose.msra.mxu0 0.0
        %2308 = vmatprep.subr.mxu0 0.0
        %2309 = vmatpush1.xpose.msra.mxu0 0.0
        %2310 = vmatprep.subr.mxu0 0.0
        %2311 = vmatpush1.xpose.msra.mxu0 0.0
        %2312 = vmatprep.subr.mxu0 0.0
        %2313 = vmatpush1.xpose.msra.mxu0 0.0
        %2314 = vmatprep.subr.mxu0 0.0
        %2315 = vmatpush1.xpose.msra.mxu0 0.0
        %2316 = vmatprep.subr.mxu0 0.0
        %2317 = vmatpush1.xpose.msra.mxu0 0.0
        %2318 = vmatprep.subr.mxu0 0.0
        %2319 = vmatpush1.xpose.msra.mxu0 0.0
        %2320 = vmatprep.subr.mxu0 0.0
        %2321 = vmatpush1.xpose.msra.mxu0 0.0
        %2322 = vmatprep.subr.mxu0 0.0
        %2323 = vmatpush1.xpose.msra.mxu0 0.0
        %2324 = vmatprep.subr.mxu0 0.0
        %2325 = vmatpush1.xpose.msra.mxu0 0.0
        %2326 = vmatprep.subr.mxu0 0.0
        %2327 = vmatpush1.xpose.msra.mxu0 0.0
        %2328 = vmatprep.subr.mxu0 0.0
        %2329 = vmatpush1.xpose.msra.mxu0 0.0
        %2330 = vmatprep.subr.mxu0 0.0
        %2331 = vmatpush1.xpose.msra.mxu0 0.0
        %2332 = vmatprep.subr.mxu0 0.0
        %2333 = vmatpush1.xpose.msra.mxu0 0.0
        %2334 = vmatprep.subr.mxu0 0.0
        %2335 = vmatpush1.xpose.msra.mxu0 0.0
        %2336 = vmatprep.subr.mxu0 0.0
        %2337 = vmatpush1.xpose.msra.mxu0 0.0
        %2338 = vmatprep.subr.mxu0 0.0
        %2339 = vmatpush1.xpose.msra.mxu0 0.0
        %2340 = vmatprep.subr.mxu0 0.0
        %2341 = vmatpush1.xpose.msra.mxu0 0.0
        %2342 = vmatprep.subr.mxu0 0.0
        %2343 = vmatpush1.xpose.msra.mxu0 0.0
        %2344 = vmatprep.subr.mxu0 0.0
        %2345 = vmatpush1.xpose.msra.mxu0 0.0
        %2346 = vmatprep.subr.mxu0 0.0
        %2347 = vmatpush1.xpose.msra.mxu0 0.0
        %2348 = vmatprep.subr.mxu0 0.0
        %2349 = vmatpush1.xpose.msra.mxu0 0.0
        %2350 = vmatprep.subr.mxu0 0.0
        %2351 = vmatpush1.xpose.msra.mxu0 0.0
        %2352 = vmatprep.subr.mxu0 0.0
        %2353 = vmatpush1.xpose.msra.mxu0 0.0
        %2354 = vmatprep.subr.mxu0 0.0
        %2355 = vmatpush1.xpose.msra.mxu0 0.0
        %2356 = vmatprep.subr.mxu0 0.0
        %2357 = vmatpush1.xpose.msra.mxu0 0.0
        %2358 = vmatprep.subr.mxu0 0.0
        %2359 = vmatpush1.xpose.msra.mxu0 0.0
        %2360 = vmatprep.mubr.f32.mxu0 0.0
        %2361 = vmatmul.mubr.f32.gmra.mrb[0].mxu0 %v2288
        %v2362 = vpop.f32.mrb[0].mxu0
        %v2363 = vadd.f32 0.0, %v2362
        %v2364 = vpop.f32.mrb[0].mxu0
        %2365 = vmatprep.mubr.f32.mxu0 0.0
        %2366 = vmatmul.mubr.f32.gmra.mrb[0].mxu0 %v2290
        %v2367 = vpop.f32.mrb[0].mxu0
        %v2368 = vadd.f32 0.0, %v2367
        %v2369 = vpop.f32.mrb[0].mxu0
        %2370 = vdwg.mxu0
        %v2371 = vmul.f32 %v2363, 0.25
        %v2372 = vmul.f32 %v2368, 0.25
        %v2373 = vsel %vm1396, %v2371, -1e+30
        %v2374 = vsel %vm1397, %v2372, -1e+30
        %v2375 = vsel %vm1430, %v2373, -inf
        %2376 = vmax.xlane.f32.xlu0 %v2375
        %v2377 = vpop.xlane.xlu0 %2376
        %v2378 = vsel %vm1430, %v2374, -inf
        %2379 = vmax.xlane.f32.xlu0 %v2378
        %v2380 = vpop.xlane.xlu0 %2379
        %v2381 = vsub.f32 %v2373, %v2377
        %v2382 = vsub.f32 %v2374, %v2380
        %v2383 = vmul.f32 %v2381, 1.442695
        %v2384 = vpow.pop %v2383
        %v2385 = vmul.f32 %v2382, 1.442695
        %v2386 = vpow.pop %v2385
        %v2387 = vsel %vm1430, %v2384, 0.0
        %2388 = vadd.xlane.f32.xlu0 %v2387
        %v2389 = vpop.xlane.xlu0 %2388
        %v2390 = vsel %vm1430, %v2386, 0.0
        %2391 = vadd.xlane.f32.xlu0 %v2390
        %v2392 = vpop.xlane.xlu0 %2391
        %v2393 = vrcp.pop %v2389
        %v2394 = vrcp.pop %v2392
        %v2395 = vmul.f32 %v2384, %v2393
        %v2396 = vmul.f32 %v2386, %v2394
        %2397 = vrot.lane.b32.xlu0 %v1380, 80
        %v2398 = vpop.permute.xlu0 %2397
        %2399 = vrot.lane.b32.xlu0 %v1385, 80
        %v2400 = vpop.permute.xlu0 %2399
        %v2404 = vsel %vm1430, %v2395, 0
        %v2407 = vsel %vm1430, %v2396, 0
        %2409 = vmatprep.subr.mxu0 0.0
        %2410 = vmatpush1.msra.mxu0 %v2398
        %2411 = vmatprep.subr.mxu0 0.0
        %2412 = vmatpush1.msra.mxu0 %v2400
        %2413 = vmatprep.subr.mxu0 0.0
        %2414 = vmatpush1.msra.mxu0 0.0
        %2415 = vmatprep.subr.mxu0 0.0
        %2416 = vmatpush1.msra.mxu0 0.0
        %2417 = vmatprep.subr.mxu0 0.0
        %2418 = vmatpush1.msra.mxu0 0.0
        %2419 = vmatprep.subr.mxu0 0.0
        %2420 = vmatpush1.msra.mxu0 0.0
        %2421 = vmatprep.subr.mxu0 0.0
        %2422 = vmatpush1.msra.mxu0 0.0
        %2423 = vmatprep.subr.mxu0 0.0
        %2424 = vmatpush1.msra.mxu0 0.0
        %2425 = vmatprep.subr.mxu0 0.0
        %2426 = vmatpush1.msra.mxu0 0.0
        %2427 = vmatprep.subr.mxu0 0.0
        %2428 = vmatpush1.msra.mxu0 0.0
        %2429 = vmatprep.subr.mxu0 0.0
        %2430 = vmatpush1.msra.mxu0 0.0
        %2431 = vmatprep.subr.mxu0 0.0
        %2432 = vmatpush1.msra.mxu0 0.0
        %2433 = vmatprep.subr.mxu0 0.0
        %2434 = vmatpush1.msra.mxu0 0.0
        %2435 = vmatprep.subr.mxu0 0.0
        %2436 = vmatpush1.msra.mxu0 0.0
        %2437 = vmatprep.subr.mxu0 0.0
        %2438 = vmatpush1.msra.mxu0 0.0
        %2439 = vmatprep.subr.mxu0 0.0
        %2440 = vmatpush1.msra.mxu0 0.0
        %2441 = vmatprep.subr.mxu0 0.0
        %2442 = vmatpush1.msra.mxu0 0.0
        %2443 = vmatprep.subr.mxu0 0.0
        %2444 = vmatpush1.msra.mxu0 0.0
        %2445 = vmatprep.subr.mxu0 0.0
        %2446 = vmatpush1.msra.mxu0 0.0
        %2447 = vmatprep.subr.mxu0 0.0
        %2448 = vmatpush1.msra.mxu0 0.0
        %2449 = vmatprep.subr.mxu0 0.0
        %2450 = vmatpush1.msra.mxu0 0.0
        %2451 = vmatprep.subr.mxu0 0.0
        %2452 = vmatpush1.msra.mxu0 0.0
        %2453 = vmatprep.subr.mxu0 0.0
        %2454 = vmatpush1.msra.mxu0 0.0
        %2455 = vmatprep.subr.mxu0 0.0
        %2456 = vmatpush1.msra.mxu0 0.0
        %2457 = vmatprep.subr.mxu0 0.0
        %2458 = vmatpush1.msra.mxu0 0.0
        %2459 = vmatprep.subr.mxu0 0.0
        %2460 = vmatpush1.msra.mxu0 0.0
        %2461 = vmatprep.subr.mxu0 0.0
        %2462 = vmatpush1.msra.mxu0 0.0
        %2463 = vmatprep.subr.mxu0 0.0
        %2464 = vmatpush1.msra.mxu0 0.0
        %2465 = vmatprep.subr.mxu0 0.0
        %2466 = vmatpush1.msra.mxu0 0.0
        %2467 = vmatprep.subr.mxu0 0.0
        %2468 = vmatpush1.msra.mxu0 0.0
        %2469 = vmatprep.subr.mxu0 0.0
        %2470 = vmatpush1.msra.mxu0 0.0
        %2471 = vmatprep.subr.mxu0 0.0
        %2472 = vmatpush1.msra.mxu0 0.0
        %2473 = vmatprep.mubr.f32.mxu0 0.0
        %2474 = vmatmul.mubr.f32.gmra.mrb[0].mxu0 %v2404
        %v2475 = vpop.f32.mrb[0].mxu0
        %v2476 = vadd.f32 0.0, %v2475
        %v2477 = vpop.f32.mrb[0].mxu0
        %2478 = vmatprep.mubr.f32.mxu0 0.0
        %2479 = vmatmul.mubr.f32.gmra.mrb[0].mxu0 %v2407
        %v2480 = vpop.f32.mrb[0].mxu0
        %v2481 = vadd.f32 0.0, %v2480
        %v2482 = vpop.f32.mrb[0].mxu0
        %2483 = vdwg.mxu0
        %v2485 = vsel %vm1430, %v2476, 0
        %v2488 = vsel %vm1430, %v2481, 0
        %2490 = vmatprep.subr.mxu0 0.0
        %2491 = vmatpush1.msra.mxu0 %v1420
        %2492 = vmatprep.subr.mxu0 0.0
        %2493 = vmatpush1.msra.mxu0 %v1421
        %2494 = vmatprep.subr.mxu0 0.0
        %2495 = vmatpush1.msra.mxu0 0.0
        %2496 = vmatprep.subr.mxu0 0.0
        %2497 = vmatpush1.msra.mxu0 0.0
        %2498 = vmatprep.subr.mxu0 0.0
        %2499 = vmatpush1.msra.mxu0 0.0
        %2500 = vmatprep.subr.mxu0 0.0
        %2501 = vmatpush1.msra.mxu0 0.0
        %2502 = vmatprep.subr.mxu0 0.0
        %2503 = vmatpush1.msra.mxu0 0.0
        %2504 = vmatprep.subr.mxu0 0.0
        %2505 = vmatpush1.msra.mxu0 0.0
        %2506 = vmatprep.subr.mxu0 0.0
        %2507 = vmatpush1.msra.mxu0 0.0
        %2508 = vmatprep.subr.mxu0 0.0
        %2509 = vmatpush1.msra.mxu0 0.0
        %2510 = vmatprep.subr.mxu0 0.0
        %2511 = vmatpush1.msra.mxu0 0.0
        %2512 = vmatprep.subr.mxu0 0.0
        %2513 = vmatpush1.msra.mxu0 0.0
        %2514 = vmatprep.subr.mxu0 0.0
        %2515 = vmatpush1.msra.mxu0 0.0
        %2516 = vmatprep.subr.mxu0 0.0
        %2517 = vmatpush1.msra.mxu0 0.0
        %2518 = vmatprep.subr.mxu0 0.0
        %2519 = vmatpush1.msra.mxu0 0.0
        %2520 = vmatprep.subr.mxu0 0.0
        %2521 = vmatpush1.msra.mxu0 0.0
        %2522 = vmatprep.subr.mxu0 0.0
        %2523 = vmatpush1.msra.mxu0 0.0
        %2524 = vmatprep.subr.mxu0 0.0
        %2525 = vmatpush1.msra.mxu0 0.0
        %2526 = vmatprep.subr.mxu0 0.0
        %2527 = vmatpush1.msra.mxu0 0.0
        %2528 = vmatprep.subr.mxu0 0.0
        %2529 = vmatpush1.msra.mxu0 0.0
        %2530 = vmatprep.subr.mxu0 0.0
        %2531 = vmatpush1.msra.mxu0 0.0
        %2532 = vmatprep.subr.mxu0 0.0
        %2533 = vmatpush1.msra.mxu0 0.0
        %2534 = vmatprep.subr.mxu0 0.0
        %2535 = vmatpush1.msra.mxu0 0.0
        %2536 = vmatprep.subr.mxu0 0.0
        %2537 = vmatpush1.msra.mxu0 0.0
        %2538 = vmatprep.subr.mxu0 0.0
        %2539 = vmatpush1.msra.mxu0 0.0
        %2540 = vmatprep.subr.mxu0 0.0
        %2541 = vmatpush1.msra.mxu0 0.0
        %2542 = vmatprep.subr.mxu0 0.0
        %2543 = vmatpush1.msra.mxu0 0.0
        %2544 = vmatprep.subr.mxu0 0.0
        %2545 = vmatpush1.msra.mxu0 0.0
        %2546 = vmatprep.subr.mxu0 0.0
        %2547 = vmatpush1.msra.mxu0 0.0
        %2548 = vmatprep.subr.mxu0 0.0
        %2549 = vmatpush1.msra.mxu0 0.0
        %2550 = vmatprep.subr.mxu0 0.0
        %2551 = vmatpush1.msra.mxu0 0.0
        %2552 = vmatprep.subr.mxu0 0.0
        %2553 = vmatpush1.msra.mxu0 0.0
        %2554 = vmatprep.mubr.f32.mxu0 0.0
        %2555 = vmatmul.mubr.f32.gmra.mrb[0].mxu0 %v2485
        %v2556 = vpop.f32.mrb[0].mxu0
        %v2557 = vadd.f32 0.0, %v2556
        %v2558 = vpop.f32.mrb[0].mxu0
        %2559 = vmatprep.mubr.f32.mxu0 0.0
        %2560 = vmatmul.mubr.f32.gmra.mrb[0].mxu0 %v2488
        %v2561 = vpop.f32.mrb[0].mxu0
        %v2562 = vadd.f32 0.0, %v2561
        %v2563 = vpop.f32.mrb[0].mxu0
        %2564 = vdwg.mxu0
        %v2565 = vadd.f32 %v2278, %v2557
        %v2566 = vadd.f32 %v2279, %v2562
        %2567 = vrot.lane.b32.xlu0 %v1303, 64
        %v2568 = vpop.permute.xlu0 %2567
        %2569 = vrot.lane.b32.xlu0 %v1309, 64
        %v2570 = vpop.permute.xlu0 %2569
        %2571 = vrot.lane.b32.xlu0 %v1305, 64
        %v2572 = vpop.permute.xlu0 %2571
        %2573 = vrot.lane.b32.xlu0 %v1311, 64
        %v2574 = vpop.permute.xlu0 %2573
        %v2575 = vsel %vm1430, %v2568, 0
        %v2577 = vsel %vm1430, %v2570, 0
        %v2579 = vsel %vm1430, %v2572, 0
        %v2581 = vsel %vm1430, %v2574, 0
        %2583 = vmatprep.subr.mxu0 0.0
        %2584 = vmatpush1.xpose.msra.mxu0 %v2579
        %2585 = vmatprep.subr.mxu0 0.0
        %2586 = vmatpush1.xpose.msra.mxu0 %v2581
        %2587 = vmatprep.subr.mxu0 0.0
        %2588 = vmatpush1.xpose.msra.mxu0 0.0
        %2589 = vmatprep.subr.mxu0 0.0
        %2590 = vmatpush1.xpose.msra.mxu0 0.0
        %2591 = vmatprep.subr.mxu0 0.0
        %2592 = vmatpush1.xpose.msra.mxu0 0.0
        %2593 = vmatprep.subr.mxu0 0.0
        %2594 = vmatpush1.xpose.msra.mxu0 0.0
        %2595 = vmatprep.subr.mxu0 0.0
        %2596 = vmatpush1.xpose.msra.mxu0 0.0
        %2597 = vmatprep.subr.mxu0 0.0
        %2598 = vmatpush1.xpose.msra.mxu0 0.0
        %2599 = vmatprep.subr.mxu0 0.0
        %2600 = vmatpush1.xpose.msra.mxu0 0.0
        %2601 = vmatprep.subr.mxu0 0.0
        %2602 = vmatpush1.xpose.msra.mxu0 0.0
        %2603 = vmatprep.subr.mxu0 0.0
        %2604 = vmatpush1.xpose.msra.mxu0 0.0
        %2605 = vmatprep.subr.mxu0 0.0
        %2606 = vmatpush1.xpose.msra.mxu0 0.0
        %2607 = vmatprep.subr.mxu0 0.0
        %2608 = vmatpush1.xpose.msra.mxu0 0.0
        %2609 = vmatprep.subr.mxu0 0.0
        %2610 = vmatpush1.xpose.msra.mxu0 0.0
        %2611 = vmatprep.subr.mxu0 0.0
        %2612 = vmatpush1.xpose.msra.mxu0 0.0
        %2613 = vmatprep.subr.mxu0 0.0
        %2614 = vmatpush1.xpose.msra.mxu0 0.0
        %2615 = vmatprep.subr.mxu0 0.0
        %2616 = vmatpush1.xpose.msra.mxu0 0.0
        %2617 = vmatprep.subr.mxu0 0.0
        %2618 = vmatpush1.xpose.msra.mxu0 0.0
        %2619 = vmatprep.subr.mxu0 0.0
        %2620 = vmatpush1.xpose.msra.mxu0 0.0
        %2621 = vmatprep.subr.mxu0 0.0
        %2622 = vmatpush1.xpose.msra.mxu0 0.0
        %2623 = vmatprep.subr.mxu0 0.0
        %2624 = vmatpush1.xpose.msra.mxu0 0.0
        %2625 = vmatprep.subr.mxu0 0.0
        %2626 = vmatpush1.xpose.msra.mxu0 0.0
        %2627 = vmatprep.subr.mxu0 0.0
        %2628 = vmatpush1.xpose.msra.mxu0 0.0
        %2629 = vmatprep.subr.mxu0 0.0
        %2630 = vmatpush1.xpose.msra.mxu0 0.0
        %2631 = vmatprep.subr.mxu0 0.0
        %2632 = vmatpush1.xpose.msra.mxu0 0.0
        %2633 = vmatprep.subr.mxu0 0.0
        %2634 = vmatpush1.xpose.msra.mxu0 0.0
        %2635 = vmatprep.subr.mxu0 0.0
        %2636 = vmatpush1.xpose.msra.mxu0 0.0
        %2637 = vmatprep.subr.mxu0 0.0
        %2638 = vmatpush1.xpose.msra.mxu0 0.0
        %2639 = vmatprep.subr.mxu0 0.0
        %2640 = vmatpush1.xpose.msra.mxu0 0.0
        %2641 = vmatprep.subr.mxu0 0.0
        %2642 = vmatpush1.xpose.msra.mxu0 0.0
        %2643 = vmatprep.subr.mxu0 0.0
        %2644 = vmatpush1.xpose.msra.mxu0 0.0
        %2645 = vmatprep.subr.mxu0 0.0
        %2646 = vmatpush1.xpose.msra.mxu0 0.0
        %2647 = vmatprep.mubr.f32.mxu0 0.0
        %2648 = vmatmul.mubr.f32.gmra.mrb[0].mxu0 %v2575
        %v2649 = vpop.f32.mrb[0].mxu0
        %v2650 = vadd.f32 0.0, %v2649
        %v2651 = vpop.f32.mrb[0].mxu0
        %2652 = vmatprep.mubr.f32.mxu0 0.0
        %2653 = vmatmul.mubr.f32.gmra.mrb[0].mxu0 %v2577
        %v2654 = vpop.f32.mrb[0].mxu0
        %v2655 = vadd.f32 0.0, %v2654
        %v2656 = vpop.f32.mrb[0].mxu0
        %2657 = vdwg.mxu0
        %v2658 = vmul.f32 %v2650, 0.25
        %v2659 = vmul.f32 %v2655, 0.25
        %v2660 = vsel %vm1396, %v2658, -1e+30
        %v2661 = vsel %vm1397, %v2659, -1e+30
        %v2662 = vsel %vm1430, %v2660, -inf
        %2663 = vmax.xlane.f32.xlu0 %v2662
        %v2664 = vpop.xlane.xlu0 %2663
        %v2665 = vsel %vm1430, %v2661, -inf
        %2666 = vmax.xlane.f32.xlu0 %v2665
        %v2667 = vpop.xlane.xlu0 %2666
        %v2668 = vsub.f32 %v2660, %v2664
        %v2669 = vsub.f32 %v2661, %v2667
        %v2670 = vmul.f32 %v2668, 1.442695
        %v2671 = vpow.pop %v2670
        %v2672 = vmul.f32 %v2669, 1.442695
        %v2673 = vpow.pop %v2672
        %v2674 = vsel %vm1430, %v2671, 0.0
        %2675 = vadd.xlane.f32.xlu0 %v2674
        %v2676 = vpop.xlane.xlu0 %2675
        %v2677 = vsel %vm1430, %v2673, 0.0
        %2678 = vadd.xlane.f32.xlu0 %v2677
        %v2679 = vpop.xlane.xlu0 %2678
        %v2680 = vrcp.pop %v2676
        %v2681 = vrcp.pop %v2679
        %v2682 = vmul.f32 %v2671, %v2680
        %v2683 = vmul.f32 %v2673, %v2681
        %2684 = vrot.lane.b32.xlu0 %v1380, 64
        %v2685 = vpop.permute.xlu0 %2684
        %2686 = vrot.lane.b32.xlu0 %v1385, 64
        %v2687 = vpop.permute.xlu0 %2686
        %v2691 = vsel %vm1430, %v2682, 0
        %v2694 = vsel %vm1430, %v2683, 0
        %2696 = vmatprep.subr.mxu0 0.0
        %2697 = vmatpush1.msra.mxu0 %v2685
        %2698 = vmatprep.subr.mxu0 0.0
        %2699 = vmatpush1.msra.mxu0 %v2687
        %2700 = vmatprep.subr.mxu0 0.0
        %2701 = vmatpush1.msra.mxu0 0.0
        %2702 = vmatprep.subr.mxu0 0.0
        %2703 = vmatpush1.msra.mxu0 0.0
        %2704 = vmatprep.subr.mxu0 0.0
        %2705 = vmatpush1.msra.mxu0 0.0
        %2706 = vmatprep.subr.mxu0 0.0
        %2707 = vmatpush1.msra.mxu0 0.0
        %2708 = vmatprep.subr.mxu0 0.0
        %2709 = vmatpush1.msra.mxu0 0.0
        %2710 = vmatprep.subr.mxu0 0.0
        %2711 = vmatpush1.msra.mxu0 0.0
        %2712 = vmatprep.subr.mxu0 0.0
        %2713 = vmatpush1.msra.mxu0 0.0
        %2714 = vmatprep.subr.mxu0 0.0
        %2715 = vmatpush1.msra.mxu0 0.0
        %2716 = vmatprep.subr.mxu0 0.0
        %2717 = vmatpush1.msra.mxu0 0.0
        %2718 = vmatprep.subr.mxu0 0.0
        %2719 = vmatpush1.msra.mxu0 0.0
        %2720 = vmatprep.subr.mxu0 0.0
        %2721 = vmatpush1.msra.mxu0 0.0
        %2722 = vmatprep.subr.mxu0 0.0
        %2723 = vmatpush1.msra.mxu0 0.0
        %2724 = vmatprep.subr.mxu0 0.0
        %2725 = vmatpush1.msra.mxu0 0.0
        %2726 = vmatprep.subr.mxu0 0.0
        %2727 = vmatpush1.msra.mxu0 0.0
        %2728 = vmatprep.subr.mxu0 0.0
        %2729 = vmatpush1.msra.mxu0 0.0
        %2730 = vmatprep.subr.mxu0 0.0
        %2731 = vmatpush1.msra.mxu0 0.0
        %2732 = vmatprep.subr.mxu0 0.0
        %2733 = vmatpush1.msra.mxu0 0.0
        %2734 = vmatprep.subr.mxu0 0.0
        %2735 = vmatpush1.msra.mxu0 0.0
        %2736 = vmatprep.subr.mxu0 0.0
        %2737 = vmatpush1.msra.mxu0 0.0
        %2738 = vmatprep.subr.mxu0 0.0
        %2739 = vmatpush1.msra.mxu0 0.0
        %2740 = vmatprep.subr.mxu0 0.0
        %2741 = vmatpush1.msra.mxu0 0.0
        %2742 = vmatprep.subr.mxu0 0.0
        %2743 = vmatpush1.msra.mxu0 0.0
        %2744 = vmatprep.subr.mxu0 0.0
        %2745 = vmatpush1.msra.mxu0 0.0
        %2746 = vmatprep.subr.mxu0 0.0
        %2747 = vmatpush1.msra.mxu0 0.0
        %2748 = vmatprep.subr.mxu0 0.0
        %2749 = vmatpush1.msra.mxu0 0.0
        %2750 = vmatprep.subr.mxu0 0.0
        %2751 = vmatpush1.msra.mxu0 0.0
        %2752 = vmatprep.subr.mxu0 0.0
        %2753 = vmatpush1.msra.mxu0 0.0
        %2754 = vmatprep.subr.mxu0 0.0
        %2755 = vmatpush1.msra.mxu0 0.0
        %2756 = vmatprep.subr.mxu0 0.0
        %2757 = vmatpush1.msra.mxu0 0.0
        %2758 = vmatprep.subr.mxu0 0.0
        %2759 = vmatpush1.msra.mxu0 0.0
        %2760 = vmatprep.mubr.f32.mxu0 0.0
        %2761 = vmatmul.mubr.f32.gmra.mrb[0].mxu0 %v2691
        %v2762 = vpop.f32.mrb[0].mxu0
        %v2763 = vadd.f32 0.0, %v2762
        %v2764 = vpop.f32.mrb[0].mxu0
        %2765 = vmatprep.mubr.f32.mxu0 0.0
        %2766 = vmatmul.mubr.f32.gmra.mrb[0].mxu0 %v2694
        %v2767 = vpop.f32.mrb[0].mxu0
        %v2768 = vadd.f32 0.0, %v2767
        %v2769 = vpop.f32.mrb[0].mxu0
        %2770 = vdwg.mxu0
        %v2772 = vsel %vm1430, %v2763, 0
        %v2775 = vsel %vm1430, %v2768, 0
        %2777 = vmatprep.subr.mxu0 0.0
        %2778 = vmatpush1.msra.mxu0 %v1422
        %2779 = vmatprep.subr.mxu0 0.0
        %2780 = vmatpush1.msra.mxu0 %v1423
        %2781 = vmatprep.subr.mxu0 0.0
        %2782 = vmatpush1.msra.mxu0 0.0
        %2783 = vmatprep.subr.mxu0 0.0
        %2784 = vmatpush1.msra.mxu0 0.0
        %2785 = vmatprep.subr.mxu0 0.0
        %2786 = vmatpush1.msra.mxu0 0.0
        %2787 = vmatprep.subr.mxu0 0.0
        %2788 = vmatpush1.msra.mxu0 0.0
        %2789 = vmatprep.subr.mxu0 0.0
        %2790 = vmatpush1.msra.mxu0 0.0
        %2791 = vmatprep.subr.mxu0 0.0
        %2792 = vmatpush1.msra.mxu0 0.0
        %2793 = vmatprep.subr.mxu0 0.0
        %2794 = vmatpush1.msra.mxu0 0.0
        %2795 = vmatprep.subr.mxu0 0.0
        %2796 = vmatpush1.msra.mxu0 0.0
        %2797 = vmatprep.subr.mxu0 0.0
        %2798 = vmatpush1.msra.mxu0 0.0
        %2799 = vmatprep.subr.mxu0 0.0
        %2800 = vmatpush1.msra.mxu0 0.0
        %2801 = vmatprep.subr.mxu0 0.0
        %2802 = vmatpush1.msra.mxu0 0.0
        %2803 = vmatprep.subr.mxu0 0.0
        %2804 = vmatpush1.msra.mxu0 0.0
        %2805 = vmatprep.subr.mxu0 0.0
        %2806 = vmatpush1.msra.mxu0 0.0
        %2807 = vmatprep.subr.mxu0 0.0
        %2808 = vmatpush1.msra.mxu0 0.0
        %2809 = vmatprep.subr.mxu0 0.0
        %2810 = vmatpush1.msra.mxu0 0.0
        %2811 = vmatprep.subr.mxu0 0.0
        %2812 = vmatpush1.msra.mxu0 0.0
        %2813 = vmatprep.subr.mxu0 0.0
        %2814 = vmatpush1.msra.mxu0 0.0
        %2815 = vmatprep.subr.mxu0 0.0
        %2816 = vmatpush1.msra.mxu0 0.0
        %2817 = vmatprep.subr.mxu0 0.0
        %2818 = vmatpush1.msra.mxu0 0.0
        %2819 = vmatprep.subr.mxu0 0.0
        %2820 = vmatpush1.msra.mxu0 0.0
        %2821 = vmatprep.subr.mxu0 0.0
        %2822 = vmatpush1.msra.mxu0 0.0
        %2823 = vmatprep.subr.mxu0 0.0
        %2824 = vmatpush1.msra.mxu0 0.0
        %2825 = vmatprep.subr.mxu0 0.0
        %2826 = vmatpush1.msra.mxu0 0.0
        %2827 = vmatprep.subr.mxu0 0.0
        %2828 = vmatpush1.msra.mxu0 0.0
        %2829 = vmatprep.subr.mxu0 0.0
        %2830 = vmatpush1.msra.mxu0 0.0
        %2831 = vmatprep.subr.mxu0 0.0
        %2832 = vmatpush1.msra.mxu0 0.0
        %2833 = vmatprep.subr.mxu0 0.0
        %2834 = vmatpush1.msra.mxu0 0.0
        %2835 = vmatprep.subr.mxu0 0.0
        %2836 = vmatpush1.msra.mxu0 0.0
        %2837 = vmatprep.subr.mxu0 0.0
        %2838 = vmatpush1.msra.mxu0 0.0
        %2839 = vmatprep.subr.mxu0 0.0
        %2840 = vmatpush1.msra.mxu0 0.0
        %2841 = vmatprep.mubr.f32.mxu0 0.0
        %2842 = vmatmul.mubr.f32.gmra.mrb[0].mxu0 %v2772
        %v2843 = vpop.f32.mrb[0].mxu0
        %v2844 = vadd.f32 0.0, %v2843
        %v2845 = vpop.f32.mrb[0].mxu0
        %2846 = vmatprep.mubr.f32.mxu0 0.0
        %2847 = vmatmul.mubr.f32.gmra.mrb[0].mxu0 %v2775
        %v2848 = vpop.f32.mrb[0].mxu0
        %v2849 = vadd.f32 0.0, %v2848
        %v2850 = vpop.f32.mrb[0].mxu0
        %2851 = vdwg.mxu0
        %v2852 = vadd.f32 %v2565, %v2844
        %v2853 = vadd.f32 %v2566, %v2849
        %2854 = vrot.lane.b32.xlu0 %v1303, 48
        %v2855 = vpop.permute.xlu0 %2854
        %2856 = vrot.lane.b32.xlu0 %v1309, 48
        %v2857 = vpop.permute.xlu0 %2856
        %2858 = vrot.lane.b32.xlu0 %v1305, 48
        %v2859 = vpop.permute.xlu0 %2858
        %2860 = vrot.lane.b32.xlu0 %v1311, 48
        %v2861 = vpop.permute.xlu0 %2860
        %v2862 = vsel %vm1430, %v2855, 0
        %v2864 = vsel %vm1430, %v2857, 0
        %v2866 = vsel %vm1430, %v2859, 0
        %v2868 = vsel %vm1430, %v2861, 0
        %2870 = vmatprep.subr.mxu0 0.0
        %2871 = vmatpush1.xpose.msra.mxu0 %v2866
        %2872 = vmatprep.subr.mxu0 0.0
        %2873 = vmatpush1.xpose.msra.mxu0 %v2868
        %2874 = vmatprep.subr.mxu0 0.0
        %2875 = vmatpush1.xpose.msra.mxu0 0.0
        %2876 = vmatprep.subr.mxu0 0.0
        %2877 = vmatpush1.xpose.msra.mxu0 0.0
        %2878 = vmatprep.subr.mxu0 0.0
        %2879 = vmatpush1.xpose.msra.mxu0 0.0
        %2880 = vmatprep.subr.mxu0 0.0
        %2881 = vmatpush1.xpose.msra.mxu0 0.0
        %2882 = vmatprep.subr.mxu0 0.0
        %2883 = vmatpush1.xpose.msra.mxu0 0.0
        %2884 = vmatprep.subr.mxu0 0.0
        %2885 = vmatpush1.xpose.msra.mxu0 0.0
        %2886 = vmatprep.subr.mxu0 0.0
        %2887 = vmatpush1.xpose.msra.mxu0 0.0
        %2888 = vmatprep.subr.mxu0 0.0
        %2889 = vmatpush1.xpose.msra.mxu0 0.0
        %2890 = vmatprep.subr.mxu0 0.0
        %2891 = vmatpush1.xpose.msra.mxu0 0.0
        %2892 = vmatprep.subr.mxu0 0.0
        %2893 = vmatpush1.xpose.msra.mxu0 0.0
        %2894 = vmatprep.subr.mxu0 0.0
        %2895 = vmatpush1.xpose.msra.mxu0 0.0
        %2896 = vmatprep.subr.mxu0 0.0
        %2897 = vmatpush1.xpose.msra.mxu0 0.0
        %2898 = vmatprep.subr.mxu0 0.0
        %2899 = vmatpush1.xpose.msra.mxu0 0.0
        %2900 = vmatprep.subr.mxu0 0.0
        %2901 = vmatpush1.xpose.msra.mxu0 0.0
        %2902 = vmatprep.subr.mxu0 0.0
        %2903 = vmatpush1.xpose.msra.mxu0 0.0
        %2904 = vmatprep.subr.mxu0 0.0
        %2905 = vmatpush1.xpose.msra.mxu0 0.0
        %2906 = vmatprep.subr.mxu0 0.0
        %2907 = vmatpush1.xpose.msra.mxu0 0.0
        %2908 = vmatprep.subr.mxu0 0.0
        %2909 = vmatpush1.xpose.msra.mxu0 0.0
        %2910 = vmatprep.subr.mxu0 0.0
        %2911 = vmatpush1.xpose.msra.mxu0 0.0
        %2912 = vmatprep.subr.mxu0 0.0
        %2913 = vmatpush1.xpose.msra.mxu0 0.0
        %2914 = vmatprep.subr.mxu0 0.0
        %2915 = vmatpush1.xpose.msra.mxu0 0.0
        %2916 = vmatprep.subr.mxu0 0.0
        %2917 = vmatpush1.xpose.msra.mxu0 0.0
        %2918 = vmatprep.subr.mxu0 0.0
        %2919 = vmatpush1.xpose.msra.mxu0 0.0
        %2920 = vmatprep.subr.mxu0 0.0
        %2921 = vmatpush1.xpose.msra.mxu0 0.0
        %2922 = vmatprep.subr.mxu0 0.0
        %2923 = vmatpush1.xpose.msra.mxu0 0.0
        %2924 = vmatprep.subr.mxu0 0.0
        %2925 = vmatpush1.xpose.msra.mxu0 0.0
        %2926 = vmatprep.subr.mxu0 0.0
        %2927 = vmatpush1.xpose.msra.mxu0 0.0
        %2928 = vmatprep.subr.mxu0 0.0
        %2929 = vmatpush1.xpose.msra.mxu0 0.0
        %2930 = vmatprep.subr.mxu0 0.0
        %2931 = vmatpush1.xpose.msra.mxu0 0.0
        %2932 = vmatprep.subr.mxu0 0.0
        %2933 = vmatpush1.xpose.msra.mxu0 0.0
        %2934 = vmatprep.mubr.f32.mxu0 0.0
        %2935 = vmatmul.mubr.f32.gmra.mrb[0].mxu0 %v2862
        %v2936 = vpop.f32.mrb[0].mxu0
        %v2937 = vadd.f32 0.0, %v2936
        %v2938 = vpop.f32.mrb[0].mxu0
        %2939 = vmatprep.mubr.f32.mxu0 0.0
        %2940 = vmatmul.mubr.f32.gmra.mrb[0].mxu0 %v2864
        %v2941 = vpop.f32.mrb[0].mxu0
        %v2942 = vadd.f32 0.0, %v2941
        %v2943 = vpop.f32.mrb[0].mxu0
        %2944 = vdwg.mxu0
        %v2945 = vmul.f32 %v2937, 0.25
        %v2946 = vmul.f32 %v2942, 0.25
        %v2947 = vsel %vm1396, %v2945, -1e+30
        %v2948 = vsel %vm1397, %v2946, -1e+30
        %v2949 = vsel %vm1430, %v2947, -inf
        %2950 = vmax.xlane.f32.xlu0 %v2949
        %v2951 = vpop.xlane.xlu0 %2950
        %v2952 = vsel %vm1430, %v2948, -inf
        %2953 = vmax.xlane.f32.xlu0 %v2952
        %v2954 = vpop.xlane.xlu0 %2953
        %v2955 = vsub.f32 %v2947, %v2951
        %v2956 = vsub.f32 %v2948, %v2954
        %v2957 = vmul.f32 %v2955, 1.442695
        %v2958 = vpow.pop %v2957
        %v2959 = vmul.f32 %v2956, 1.442695
        %v2960 = vpow.pop %v2959
        %v2961 = vsel %vm1430, %v2958, 0.0
        %2962 = vadd.xlane.f32.xlu0 %v2961
        %v2963 = vpop.xlane.xlu0 %2962
        %v2964 = vsel %vm1430, %v2960, 0.0
        %2965 = vadd.xlane.f32.xlu0 %v2964
        %v2966 = vpop.xlane.xlu0 %2965
        %v2967 = vrcp.pop %v2963
        %v2968 = vrcp.pop %v2966
        %v2969 = vmul.f32 %v2958, %v2967
        %v2970 = vmul.f32 %v2960, %v2968
        %2971 = vrot.lane.b32.xlu0 %v1380, 48
        %v2972 = vpop.permute.xlu0 %2971
        %2973 = vrot.lane.b32.xlu0 %v1385, 48
        %v2974 = vpop.permute.xlu0 %2973
        %v2978 = vsel %vm1430, %v2969, 0
        %v2981 = vsel %vm1430, %v2970, 0
        %2983 = vmatprep.subr.mxu0 0.0
        %2984 = vmatpush1.msra.mxu0 %v2972
        %2985 = vmatprep.subr.mxu0 0.0
        %2986 = vmatpush1.msra.mxu0 %v2974
        %2987 = vmatprep.subr.mxu0 0.0
        %2988 = vmatpush1.msra.mxu0 0.0
        %2989 = vmatprep.subr.mxu0 0.0
        %2990 = vmatpush1.msra.mxu0 0.0
        %2991 = vmatprep.subr.mxu0 0.0
        %2992 = vmatpush1.msra.mxu0 0.0
        %2993 = vmatprep.subr.mxu0 0.0
        %2994 = vmatpush1.msra.mxu0 0.0
        %2995 = vmatprep.subr.mxu0 0.0
        %2996 = vmatpush1.msra.mxu0 0.0
        %2997 = vmatprep.subr.mxu0 0.0
        %2998 = vmatpush1.msra.mxu0 0.0
        %2999 = vmatprep.subr.mxu0 0.0
        %3000 = vmatpush1.msra.mxu0 0.0
        %3001 = vmatprep.subr.mxu0 0.0
        %3002 = vmatpush1.msra.mxu0 0.0
        %3003 = vmatprep.subr.mxu0 0.0
        %3004 = vmatpush1.msra.mxu0 0.0
        %3005 = vmatprep.subr.mxu0 0.0
        %3006 = vmatpush1.msra.mxu0 0.0
        %3007 = vmatprep.subr.mxu0 0.0
        %3008 = vmatpush1.msra.mxu0 0.0
        %3009 = vmatprep.subr.mxu0 0.0
        %3010 = vmatpush1.msra.mxu0 0.0
        %3011 = vmatprep.subr.mxu0 0.0
        %3012 = vmatpush1.msra.mxu0 0.0
        %3013 = vmatprep.subr.mxu0 0.0
        %3014 = vmatpush1.msra.mxu0 0.0
        %3015 = vmatprep.subr.mxu0 0.0
        %3016 = vmatpush1.msra.mxu0 0.0
        %3017 = vmatprep.subr.mxu0 0.0
        %3018 = vmatpush1.msra.mxu0 0.0
        %3019 = vmatprep.subr.mxu0 0.0
        %3020 = vmatpush1.msra.mxu0 0.0
        %3021 = vmatprep.subr.mxu0 0.0
        %3022 = vmatpush1.msra.mxu0 0.0
        %3023 = vmatprep.subr.mxu0 0.0
        %3024 = vmatpush1.msra.mxu0 0.0
        %3025 = vmatprep.subr.mxu0 0.0
        %3026 = vmatpush1.msra.mxu0 0.0
        %3027 = vmatprep.subr.mxu0 0.0
        %3028 = vmatpush1.msra.mxu0 0.0
        %3029 = vmatprep.subr.mxu0 0.0
        %3030 = vmatpush1.msra.mxu0 0.0
        %3031 = vmatprep.subr.mxu0 0.0
        %3032 = vmatpush1.msra.mxu0 0.0
        %3033 = vmatprep.subr.mxu0 0.0
        %3034 = vmatpush1.msra.mxu0 0.0
        %3035 = vmatprep.subr.mxu0 0.0
        %3036 = vmatpush1.msra.mxu0 0.0
        %3037 = vmatprep.subr.mxu0 0.0
        %3038 = vmatpush1.msra.mxu0 0.0
        %3039 = vmatprep.subr.mxu0 0.0
        %3040 = vmatpush1.msra.mxu0 0.0
        %3041 = vmatprep.subr.mxu0 0.0
        %3042 = vmatpush1.msra.mxu0 0.0
        %3043 = vmatprep.subr.mxu0 0.0
        %3044 = vmatpush1.msra.mxu0 0.0
        %3045 = vmatprep.subr.mxu0 0.0
        %3046 = vmatpush1.msra.mxu0 0.0
        %3047 = vmatprep.mubr.f32.mxu0 0.0
        %3048 = vmatmul.mubr.f32.gmra.mrb[0].mxu0 %v2978
        %v3049 = vpop.f32.mrb[0].mxu0
        %v3050 = vadd.f32 0.0, %v3049
        %v3051 = vpop.f32.mrb[0].mxu0
        %3052 = vmatprep.mubr.f32.mxu0 0.0
        %3053 = vmatmul.mubr.f32.gmra.mrb[0].mxu0 %v2981
        %v3054 = vpop.f32.mrb[0].mxu0
        %v3055 = vadd.f32 0.0, %v3054
        %v3056 = vpop.f32.mrb[0].mxu0
        %3057 = vdwg.mxu0
        %v3059 = vsel %vm1430, %v3050, 0
        %v3062 = vsel %vm1430, %v3055, 0
        %3064 = vmatprep.subr.mxu0 0.0
        %3065 = vmatpush1.msra.mxu0 %v1424
        %3066 = vmatprep.subr.mxu0 0.0
        %3067 = vmatpush1.msra.mxu0 %v1425
        %3068 = vmatprep.subr.mxu0 0.0
        %3069 = vmatpush1.msra.mxu0 0.0
        %3070 = vmatprep.subr.mxu0 0.0
        %3071 = vmatpush1.msra.mxu0 0.0
        %3072 = vmatprep.subr.mxu0 0.0
        %3073 = vmatpush1.msra.mxu0 0.0
        %3074 = vmatprep.subr.mxu0 0.0
        %3075 = vmatpush1.msra.mxu0 0.0
        %3076 = vmatprep.subr.mxu0 0.0
        %3077 = vmatpush1.msra.mxu0 0.0
        %3078 = vmatprep.subr.mxu0 0.0
        %3079 = vmatpush1.msra.mxu0 0.0
        %3080 = vmatprep.subr.mxu0 0.0
        %3081 = vmatpush1.msra.mxu0 0.0
        %3082 = vmatprep.subr.mxu0 0.0
        %3083 = vmatpush1.msra.mxu0 0.0
        %3084 = vmatprep.subr.mxu0 0.0
        %3085 = vmatpush1.msra.mxu0 0.0
        %3086 = vmatprep.subr.mxu0 0.0
        %3087 = vmatpush1.msra.mxu0 0.0
        %3088 = vmatprep.subr.mxu0 0.0
        %3089 = vmatpush1.msra.mxu0 0.0
        %3090 = vmatprep.subr.mxu0 0.0
        %3091 = vmatpush1.msra.mxu0 0.0
        %3092 = vmatprep.subr.mxu0 0.0
        %3093 = vmatpush1.msra.mxu0 0.0
        %3094 = vmatprep.subr.mxu0 0.0
        %3095 = vmatpush1.msra.mxu0 0.0
        %3096 = vmatprep.subr.mxu0 0.0
        %3097 = vmatpush1.msra.mxu0 0.0
        %3098 = vmatprep.subr.mxu0 0.0
        %3099 = vmatpush1.msra.mxu0 0.0
        %3100 = vmatprep.subr.mxu0 0.0
        %3101 = vmatpush1.msra.mxu0 0.0
        %3102 = vmatprep.subr.mxu0 0.0
        %3103 = vmatpush1.msra.mxu0 0.0
        %3104 = vmatprep.subr.mxu0 0.0
        %3105 = vmatpush1.msra.mxu0 0.0
        %3106 = vmatprep.subr.mxu0 0.0
        %3107 = vmatpush1.msra.mxu0 0.0
        %3108 = vmatprep.subr.mxu0 0.0
        %3109 = vmatpush1.msra.mxu0 0.0
        %3110 = vmatprep.subr.mxu0 0.0
        %3111 = vmatpush1.msra.mxu0 0.0
        %3112 = vmatprep.subr.mxu0 0.0
        %3113 = vmatpush1.msra.mxu0 0.0
        %3114 = vmatprep.subr.mxu0 0.0
        %3115 = vmatpush1.msra.mxu0 0.0
        %3116 = vmatprep.subr.mxu0 0.0
        %3117 = vmatpush1.msra.mxu0 0.0
        %3118 = vmatprep.subr.mxu0 0.0
        %3119 = vmatpush1.msra.mxu0 0.0
        %3120 = vmatprep.subr.mxu0 0.0
        %3121 = vmatpush1.msra.mxu0 0.0
        %3122 = vmatprep.subr.mxu0 0.0
        %3123 = vmatpush1.msra.mxu0 0.0
        %3124 = vmatprep.subr.mxu0 0.0
        %3125 = vmatpush1.msra.mxu0 0.0
        %3126 = vmatprep.subr.mxu0 0.0
        %3127 = vmatpush1.msra.mxu0 0.0
        %3128 = vmatprep.mubr.f32.mxu0 0.0
        %3129 = vmatmul.mubr.f32.gmra.mrb[0].mxu0 %v3059
        %v3130 = vpop.f32.mrb[0].mxu0
        %v3131 = vadd.f32 0.0, %v3130
        %v3132 = vpop.f32.mrb[0].mxu0
        %3133 = vmatprep.mubr.f32.mxu0 0.0
        %3134 = vmatmul.mubr.f32.gmra.mrb[0].mxu0 %v3062
        %v3135 = vpop.f32.mrb[0].mxu0
        %v3136 = vadd.f32 0.0, %v3135
        %v3137 = vpop.f32.mrb[0].mxu0
        %3138 = vdwg.mxu0
        %v3139 = vadd.f32 %v2852, %v3131
        %v3140 = vadd.f32 %v2853, %v3136
        %3141 = vrot.lane.b32.xlu0 %v1303, 32
        %v3142 = vpop.permute.xlu0 %3141
        %3143 = vrot.lane.b32.xlu0 %v1309, 32
        %v3144 = vpop.permute.xlu0 %3143
        %3145 = vrot.lane.b32.xlu0 %v1305, 32
        %v3146 = vpop.permute.xlu0 %3145
        %3147 = vrot.lane.b32.xlu0 %v1311, 32
        %v3148 = vpop.permute.xlu0 %3147
        %v3149 = vsel %vm1430, %v3142, 0
        %v3151 = vsel %vm1430, %v3144, 0
        %v3153 = vsel %vm1430, %v3146, 0
        %v3155 = vsel %vm1430, %v3148, 0
        %3157 = vmatprep.subr.mxu0 0.0
        %3158 = vmatpush1.xpose.msra.mxu0 %v3153
        %3159 = vmatprep.subr.mxu0 0.0
        %3160 = vmatpush1.xpose.msra.mxu0 %v3155
        %3161 = vmatprep.subr.mxu0 0.0
        %3162 = vmatpush1.xpose.msra.mxu0 0.0
        %3163 = vmatprep.subr.mxu0 0.0
        %3164 = vmatpush1.xpose.msra.mxu0 0.0
        %3165 = vmatprep.subr.mxu0 0.0
        %3166 = vmatpush1.xpose.msra.mxu0 0.0
        %3167 = vmatprep.subr.mxu0 0.0
        %3168 = vmatpush1.xpose.msra.mxu0 0.0
        %3169 = vmatprep.subr.mxu0 0.0
        %3170 = vmatpush1.xpose.msra.mxu0 0.0
        %3171 = vmatprep.subr.mxu0 0.0
        %3172 = vmatpush1.xpose.msra.mxu0 0.0
        %3173 = vmatprep.subr.mxu0 0.0
        %3174 = vmatpush1.xpose.msra.mxu0 0.0
        %3175 = vmatprep.subr.mxu0 0.0
        %3176 = vmatpush1.xpose.msra.mxu0 0.0
        %3177 = vmatprep.subr.mxu0 0.0
        %3178 = vmatpush1.xpose.msra.mxu0 0.0
        %3179 = vmatprep.subr.mxu0 0.0
        %3180 = vmatpush1.xpose.msra.mxu0 0.0
        %3181 = vmatprep.subr.mxu0 0.0
        %3182 = vmatpush1.xpose.msra.mxu0 0.0
        %3183 = vmatprep.subr.mxu0 0.0
        %3184 = vmatpush1.xpose.msra.mxu0 0.0
        %3185 = vmatprep.subr.mxu0 0.0
        %3186 = vmatpush1.xpose.msra.mxu0 0.0
        %3187 = vmatprep.subr.mxu0 0.0
        %3188 = vmatpush1.xpose.msra.mxu0 0.0
        %3189 = vmatprep.subr.mxu0 0.0
        %3190 = vmatpush1.xpose.msra.mxu0 0.0
        %3191 = vmatprep.subr.mxu0 0.0
        %3192 = vmatpush1.xpose.msra.mxu0 0.0
        %3193 = vmatprep.subr.mxu0 0.0
        %3194 = vmatpush1.xpose.msra.mxu0 0.0
        %3195 = vmatprep.subr.mxu0 0.0
        %3196 = vmatpush1.xpose.msra.mxu0 0.0
        %3197 = vmatprep.subr.mxu0 0.0
        %3198 = vmatpush1.xpose.msra.mxu0 0.0
        %3199 = vmatprep.subr.mxu0 0.0
        %3200 = vmatpush1.xpose.msra.mxu0 0.0
        %3201 = vmatprep.subr.mxu0 0.0
        %3202 = vmatpush1.xpose.msra.mxu0 0.0
        %3203 = vmatprep.subr.mxu0 0.0
        %3204 = vmatpush1.xpose.msra.mxu0 0.0
        %3205 = vmatprep.subr.mxu0 0.0
        %3206 = vmatpush1.xpose.msra.mxu0 0.0
        %3207 = vmatprep.subr.mxu0 0.0
        %3208 = vmatpush1.xpose.msra.mxu0 0.0
        %3209 = vmatprep.subr.mxu0 0.0
        %3210 = vmatpush1.xpose.msra.mxu0 0.0
        %3211 = vmatprep.subr.mxu0 0.0
        %3212 = vmatpush1.xpose.msra.mxu0 0.0
        %3213 = vmatprep.subr.mxu0 0.0
        %3214 = vmatpush1.xpose.msra.mxu0 0.0
        %3215 = vmatprep.subr.mxu0 0.0
        %3216 = vmatpush1.xpose.msra.mxu0 0.0
        %3217 = vmatprep.subr.mxu0 0.0
        %3218 = vmatpush1.xpose.msra.mxu0 0.0
        %3219 = vmatprep.subr.mxu0 0.0
        %3220 = vmatpush1.xpose.msra.mxu0 0.0
        %3221 = vmatprep.mubr.f32.mxu0 0.0
        %3222 = vmatmul.mubr.f32.gmra.mrb[0].mxu0 %v3149
        %v3223 = vpop.f32.mrb[0].mxu0
        %v3224 = vadd.f32 0.0, %v3223
        %v3225 = vpop.f32.mrb[0].mxu0
        %3226 = vmatprep.mubr.f32.mxu0 0.0
        %3227 = vmatmul.mubr.f32.gmra.mrb[0].mxu0 %v3151
        %v3228 = vpop.f32.mrb[0].mxu0
        %v3229 = vadd.f32 0.0, %v3228
        %v3230 = vpop.f32.mrb[0].mxu0
        %3231 = vdwg.mxu0
        %v3232 = vmul.f32 %v3224, 0.25
        %v3233 = vmul.f32 %v3229, 0.25
        %v3234 = vsel %vm1396, %v3232, -1e+30
        %v3235 = vsel %vm1397, %v3233, -1e+30
        %v3236 = vsel %vm1430, %v3234, -inf
        %3237 = vmax.xlane.f32.xlu0 %v3236
        %v3238 = vpop.xlane.xlu0 %3237
        %v3239 = vsel %vm1430, %v3235, -inf
        %3240 = vmax.xlane.f32.xlu0 %v3239
        %v3241 = vpop.xlane.xlu0 %3240
        %v3242 = vsub.f32 %v3234, %v3238
        %v3243 = vsub.f32 %v3235, %v3241
        %v3244 = vmul.f32 %v3242, 1.442695
        %v3245 = vpow.pop %v3244
        %v3246 = vmul.f32 %v3243, 1.442695
        %v3247 = vpow.pop %v3246
        %v3248 = vsel %vm1430, %v3245, 0.0
        %3249 = vadd.xlane.f32.xlu0 %v3248
        %v3250 = vpop.xlane.xlu0 %3249
        %v3251 = vsel %vm1430, %v3247, 0.0
        %3252 = vadd.xlane.f32.xlu0 %v3251
        %v3253 = vpop.xlane.xlu0 %3252
        %v3254 = vrcp.pop %v3250
        %v3255 = vrcp.pop %v3253
        %v3256 = vmul.f32 %v3245, %v3254
        %v3257 = vmul.f32 %v3247, %v3255
        %3258 = vrot.lane.b32.xlu0 %v1380, 32
        %v3259 = vpop.permute.xlu0 %3258
        %3260 = vrot.lane.b32.xlu0 %v1385, 32
        %v3261 = vpop.permute.xlu0 %3260
        %v3265 = vsel %vm1430, %v3256, 0
        %v3268 = vsel %vm1430, %v3257, 0
        %3270 = vmatprep.subr.mxu0 0.0
        %3271 = vmatpush1.msra.mxu0 %v3259
        %3272 = vmatprep.subr.mxu0 0.0
        %3273 = vmatpush1.msra.mxu0 %v3261
        %3274 = vmatprep.subr.mxu0 0.0
        %3275 = vmatpush1.msra.mxu0 0.0
        %3276 = vmatprep.subr.mxu0 0.0
        %3277 = vmatpush1.msra.mxu0 0.0
        %3278 = vmatprep.subr.mxu0 0.0
        %3279 = vmatpush1.msra.mxu0 0.0
        %3280 = vmatprep.subr.mxu0 0.0
        %3281 = vmatpush1.msra.mxu0 0.0
        %3282 = vmatprep.subr.mxu0 0.0
        %3283 = vmatpush1.msra.mxu0 0.0
        %3284 = vmatprep.subr.mxu0 0.0
        %3285 = vmatpush1.msra.mxu0 0.0
        %3286 = vmatprep.subr.mxu0 0.0
        %3287 = vmatpush1.msra.mxu0 0.0
        %3288 = vmatprep.subr.mxu0 0.0
        %3289 = vmatpush1.msra.mxu0 0.0
        %3290 = vmatprep.subr.mxu0 0.0
        %3291 = vmatpush1.msra.mxu0 0.0
        %3292 = vmatprep.subr.mxu0 0.0
        %3293 = vmatpush1.msra.mxu0 0.0
        %3294 = vmatprep.subr.mxu0 0.0
        %3295 = vmatpush1.msra.mxu0 0.0
        %3296 = vmatprep.subr.mxu0 0.0
        %3297 = vmatpush1.msra.mxu0 0.0
        %3298 = vmatprep.subr.mxu0 0.0
        %3299 = vmatpush1.msra.mxu0 0.0
        %3300 = vmatprep.subr.mxu0 0.0
        %3301 = vmatpush1.msra.mxu0 0.0
        %3302 = vmatprep.subr.mxu0 0.0
        %3303 = vmatpush1.msra.mxu0 0.0
        %3304 = vmatprep.subr.mxu0 0.0
        %3305 = vmatpush1.msra.mxu0 0.0
        %3306 = vmatprep.subr.mxu0 0.0
        %3307 = vmatpush1.msra.mxu0 0.0
        %3308 = vmatprep.subr.mxu0 0.0
        %3309 = vmatpush1.msra.mxu0 0.0
        %3310 = vmatprep.subr.mxu0 0.0
        %3311 = vmatpush1.msra.mxu0 0.0
        %3312 = vmatprep.subr.mxu0 0.0
        %3313 = vmatpush1.msra.mxu0 0.0
        %3314 = vmatprep.subr.mxu0 0.0
        %3315 = vmatpush1.msra.mxu0 0.0
        %3316 = vmatprep.subr.mxu0 0.0
        %3317 = vmatpush1.msra.mxu0 0.0
        %3318 = vmatprep.subr.mxu0 0.0
        %3319 = vmatpush1.msra.mxu0 0.0
        %3320 = vmatprep.subr.mxu0 0.0
        %3321 = vmatpush1.msra.mxu0 0.0
        %3322 = vmatprep.subr.mxu0 0.0
        %3323 = vmatpush1.msra.mxu0 0.0
        %3324 = vmatprep.subr.mxu0 0.0
        %3325 = vmatpush1.msra.mxu0 0.0
        %3326 = vmatprep.subr.mxu0 0.0
        %3327 = vmatpush1.msra.mxu0 0.0
        %3328 = vmatprep.subr.mxu0 0.0
        %3329 = vmatpush1.msra.mxu0 0.0
        %3330 = vmatprep.subr.mxu0 0.0
        %3331 = vmatpush1.msra.mxu0 0.0
        %3332 = vmatprep.subr.mxu0 0.0
        %3333 = vmatpush1.msra.mxu0 0.0
        %3334 = vmatprep.mubr.f32.mxu0 0.0
        %3335 = vmatmul.mubr.f32.gmra.mrb[0].mxu0 %v3265
        %v3336 = vpop.f32.mrb[0].mxu0
        %v3337 = vadd.f32 0.0, %v3336
        %v3338 = vpop.f32.mrb[0].mxu0
        %3339 = vmatprep.mubr.f32.mxu0 0.0
        %3340 = vmatmul.mubr.f32.gmra.mrb[0].mxu0 %v3268
        %v3341 = vpop.f32.mrb[0].mxu0
        %v3342 = vadd.f32 0.0, %v3341
        %v3343 = vpop.f32.mrb[0].mxu0
        %3344 = vdwg.mxu0
        %v3346 = vsel %vm1430, %v3337, 0
        %v3349 = vsel %vm1430, %v3342, 0
        %3351 = vmatprep.subr.mxu0 0.0
        %3352 = vmatpush1.msra.mxu0 %v1426
        %3353 = vmatprep.subr.mxu0 0.0
        %3354 = vmatpush1.msra.mxu0 %v1427
        %3355 = vmatprep.subr.mxu0 0.0
        %3356 = vmatpush1.msra.mxu0 0.0
        %3357 = vmatprep.subr.mxu0 0.0
        %3358 = vmatpush1.msra.mxu0 0.0
        %3359 = vmatprep.subr.mxu0 0.0
        %3360 = vmatpush1.msra.mxu0 0.0
        %3361 = vmatprep.subr.mxu0 0.0
        %3362 = vmatpush1.msra.mxu0 0.0
        %3363 = vmatprep.subr.mxu0 0.0
        %3364 = vmatpush1.msra.mxu0 0.0
        %3365 = vmatprep.subr.mxu0 0.0
        %3366 = vmatpush1.msra.mxu0 0.0
        %3367 = vmatprep.subr.mxu0 0.0
        %3368 = vmatpush1.msra.mxu0 0.0
        %3369 = vmatprep.subr.mxu0 0.0
        %3370 = vmatpush1.msra.mxu0 0.0
        %3371 = vmatprep.subr.mxu0 0.0
        %3372 = vmatpush1.msra.mxu0 0.0
        %3373 = vmatprep.subr.mxu0 0.0
        %3374 = vmatpush1.msra.mxu0 0.0
        %3375 = vmatprep.subr.mxu0 0.0
        %3376 = vmatpush1.msra.mxu0 0.0
        %3377 = vmatprep.subr.mxu0 0.0
        %3378 = vmatpush1.msra.mxu0 0.0
        %3379 = vmatprep.subr.mxu0 0.0
        %3380 = vmatpush1.msra.mxu0 0.0
        %3381 = vmatprep.subr.mxu0 0.0
        %3382 = vmatpush1.msra.mxu0 0.0
        %3383 = vmatprep.subr.mxu0 0.0
        %3384 = vmatpush1.msra.mxu0 0.0
        %3385 = vmatprep.subr.mxu0 0.0
        %3386 = vmatpush1.msra.mxu0 0.0
        %3387 = vmatprep.subr.mxu0 0.0
        %3388 = vmatpush1.msra.mxu0 0.0
        %3389 = vmatprep.subr.mxu0 0.0
        %3390 = vmatpush1.msra.mxu0 0.0
        %3391 = vmatprep.subr.mxu0 0.0
        %3392 = vmatpush1.msra.mxu0 0.0
        %3393 = vmatprep.subr.mxu0 0.0
        %3394 = vmatpush1.msra.mxu0 0.0
        %3395 = vmatprep.subr.mxu0 0.0
        %3396 = vmatpush1.msra.mxu0 0.0
        %3397 = vmatprep.subr.mxu0 0.0
        %3398 = vmatpush1.msra.mxu0 0.0
        %3399 = vmatprep.subr.mxu0 0.0
        %3400 = vmatpush1.msra.mxu0 0.0
        %3401 = vmatprep.subr.mxu0 0.0
        %3402 = vmatpush1.msra.mxu0 0.0
        %3403 = vmatprep.subr.mxu0 0.0
        %3404 = vmatpush1.msra.mxu0 0.0
        %3405 = vmatprep.subr.mxu0 0.0
        %3406 = vmatpush1.msra.mxu0 0.0
        %3407 = vmatprep.subr.mxu0 0.0
        %3408 = vmatpush1.msra.mxu0 0.0
        %3409 = vmatprep.subr.mxu0 0.0
        %3410 = vmatpush1.msra.mxu0 0.0
        %3411 = vmatprep.subr.mxu0 0.0
        %3412 = vmatpush1.msra.mxu0 0.0
        %3413 = vmatprep.subr.mxu0 0.0
        %3414 = vmatpush1.msra.mxu0 0.0
        %3415 = vmatprep.mubr.f32.mxu0 0.0
        %3416 = vmatmul.mubr.f32.gmra.mrb[0].mxu0 %v3346
        %v3417 = vpop.f32.mrb[0].mxu0
        %v3418 = vadd.f32 0.0, %v3417
        %v3419 = vpop.f32.mrb[0].mxu0
        %3420 = vmatprep.mubr.f32.mxu0 0.0
        %3421 = vmatmul.mubr.f32.gmra.mrb[0].mxu0 %v3349
        %v3422 = vpop.f32.mrb[0].mxu0
        %v3423 = vadd.f32 0.0, %v3422
        %v3424 = vpop.f32.mrb[0].mxu0
        %3425 = vdwg.mxu0
        %v3426 = vadd.f32 %v3139, %v3418
        %v3427 = vadd.f32 %v3140, %v3423
        %3428 = vrot.lane.b32.xlu0 %v1303, 16
        %v3429 = vpop.permute.xlu0 %3428
        %3430 = vrot.lane.b32.xlu0 %v1309, 16
        %v3431 = vpop.permute.xlu0 %3430
        %3432 = vrot.lane.b32.xlu0 %v1305, 16
        %v3433 = vpop.permute.xlu0 %3432
        %3434 = vrot.lane.b32.xlu0 %v1311, 16
        %v3435 = vpop.permute.xlu0 %3434
        %v3436 = vsel %vm1430, %v3429, 0
        %v3438 = vsel %vm1430, %v3431, 0
        %v3440 = vsel %vm1430, %v3433, 0
        %v3442 = vsel %vm1430, %v3435, 0
        %3444 = vmatprep.subr.mxu0 0.0
        %3445 = vmatpush1.xpose.msra.mxu0 %v3440
        %3446 = vmatprep.subr.mxu0 0.0
        %3447 = vmatpush1.xpose.msra.mxu0 %v3442
        %3448 = vmatprep.subr.mxu0 0.0
        %3449 = vmatpush1.xpose.msra.mxu0 0.0
        %3450 = vmatprep.subr.mxu0 0.0
        %3451 = vmatpush1.xpose.msra.mxu0 0.0
        %3452 = vmatprep.subr.mxu0 0.0
        %3453 = vmatpush1.xpose.msra.mxu0 0.0
        %3454 = vmatprep.subr.mxu0 0.0
        %3455 = vmatpush1.xpose.msra.mxu0 0.0
        %3456 = vmatprep.subr.mxu0 0.0
        %3457 = vmatpush1.xpose.msra.mxu0 0.0
        %3458 = vmatprep.subr.mxu0 0.0
        %3459 = vmatpush1.xpose.msra.mxu0 0.0
        %3460 = vmatprep.subr.mxu0 0.0
        %3461 = vmatpush1.xpose.msra.mxu0 0.0
        %3462 = vmatprep.subr.mxu0 0.0
        %3463 = vmatpush1.xpose.msra.mxu0 0.0
        %3464 = vmatprep.subr.mxu0 0.0
        %3465 = vmatpush1.xpose.msra.mxu0 0.0
        %3466 = vmatprep.subr.mxu0 0.0
        %3467 = vmatpush1.xpose.msra.mxu0 0.0
        %3468 = vmatprep.subr.mxu0 0.0
        %3469 = vmatpush1.xpose.msra.mxu0 0.0
        %3470 = vmatprep.subr.mxu0 0.0
        %3471 = vmatpush1.xpose.msra.mxu0 0.0
        %3472 = vmatprep.subr.mxu0 0.0
        %3473 = vmatpush1.xpose.msra.mxu0 0.0
        %3474 = vmatprep.subr.mxu0 0.0
        %3475 = vmatpush1.xpose.msra.mxu0 0.0
        %3476 = vmatprep.subr.mxu0 0.0
        %3477 = vmatpush1.xpose.msra.mxu0 0.0
        %3478 = vmatprep.subr.mxu0 0.0
        %3479 = vmatpush1.xpose.msra.mxu0 0.0
        %3480 = vmatprep.subr.mxu0 0.0
        %3481 = vmatpush1.xpose.msra.mxu0 0.0
        %3482 = vmatprep.subr.mxu0 0.0
        %3483 = vmatpush1.xpose.msra.mxu0 0.0
        %3484 = vmatprep.subr.mxu0 0.0
        %3485 = vmatpush1.xpose.msra.mxu0 0.0
        %3486 = vmatprep.subr.mxu0 0.0
        %3487 = vmatpush1.xpose.msra.mxu0 0.0
        %3488 = vmatprep.subr.mxu0 0.0
        %3489 = vmatpush1.xpose.msra.mxu0 0.0
        %3490 = vmatprep.subr.mxu0 0.0
        %3491 = vmatpush1.xpose.msra.mxu0 0.0
        %3492 = vmatprep.subr.mxu0 0.0
        %3493 = vmatpush1.xpose.msra.mxu0 0.0
        %3494 = vmatprep.subr.mxu0 0.0
        %3495 = vmatpush1.xpose.msra.mxu0 0.0
        %3496 = vmatprep.subr.mxu0 0.0
        %3497 = vmatpush1.xpose.msra.mxu0 0.0
        %3498 = vmatprep.subr.mxu0 0.0
        %3499 = vmatpush1.xpose.msra.mxu0 0.0
        %3500 = vmatprep.subr.mxu0 0.0
        %3501 = vmatpush1.xpose.msra.mxu0 0.0
        %3502 = vmatprep.subr.mxu0 0.0
        %3503 = vmatpush1.xpose.msra.mxu0 0.0
        %3504 = vmatprep.subr.mxu0 0.0
        %3505 = vmatpush1.xpose.msra.mxu0 0.0
        %3506 = vmatprep.subr.mxu0 0.0
        %3507 = vmatpush1.xpose.msra.mxu0 0.0
        %3508 = vmatprep.mubr.f32.mxu0 0.0
        %3509 = vmatmul.mubr.f32.gmra.mrb[0].mxu0 %v3436
        %v3510 = vpop.f32.mrb[0].mxu0
        %v3511 = vadd.f32 0.0, %v3510
        %v3512 = vpop.f32.mrb[0].mxu0
        %3513 = vmatprep.mubr.f32.mxu0 0.0
        %3514 = vmatmul.mubr.f32.gmra.mrb[0].mxu0 %v3438
        %v3515 = vpop.f32.mrb[0].mxu0
        %v3516 = vadd.f32 0.0, %v3515
        %v3517 = vpop.f32.mrb[0].mxu0
        %3518 = vdwg.mxu0
        %v3519 = vmul.f32 %v3511, 0.25
        %v3520 = vmul.f32 %v3516, 0.25
        %v3521 = vsel %vm1396, %v3519, -1e+30
        %v3522 = vsel %vm1397, %v3520, -1e+30
        %v3523 = vsel %vm1430, %v3521, -inf
        %3524 = vmax.xlane.f32.xlu0 %v3523
        %v3525 = vpop.xlane.xlu0 %3524
        %v3526 = vsel %vm1430, %v3522, -inf
        %3527 = vmax.xlane.f32.xlu0 %v3526
        %v3528 = vpop.xlane.xlu0 %3527
        %v3529 = vsub.f32 %v3521, %v3525
        %v3530 = vsub.f32 %v3522, %v3528
        %v3531 = vmul.f32 %v3529, 1.442695
        %v3532 = vpow.pop %v3531
        %v3533 = vmul.f32 %v3530, 1.442695
        %v3534 = vpow.pop %v3533
        %v3535 = vsel %vm1430, %v3532, 0.0
        %3536 = vadd.xlane.f32.xlu0 %v3535
        %v3537 = vpop.xlane.xlu0 %3536
        %v3538 = vsel %vm1430, %v3534, 0.0
        %3539 = vadd.xlane.f32.xlu0 %v3538
        %v3540 = vpop.xlane.xlu0 %3539
        %v3541 = vrcp.pop %v3537
        %v3542 = vrcp.pop %v3540
        %v3543 = vmul.f32 %v3532, %v3541
        %v3544 = vmul.f32 %v3534, %v3542
        %3545 = vrot.lane.b32.xlu0 %v1380, 16
        %v3546 = vpop.permute.xlu0 %3545
        %3547 = vrot.lane.b32.xlu0 %v1385, 16
        %v3548 = vpop.permute.xlu0 %3547
        %v3552 = vsel %vm1430, %v3543, 0
        %v3555 = vsel %vm1430, %v3544, 0
        %3557 = vmatprep.subr.mxu0 0.0
        %3558 = vmatpush1.msra.mxu0 %v3546
        %3559 = vmatprep.subr.mxu0 0.0
        %3560 = vmatpush1.msra.mxu0 %v3548
        %3561 = vmatprep.subr.mxu0 0.0
        %3562 = vmatpush1.msra.mxu0 0.0
        %3563 = vmatprep.subr.mxu0 0.0
        %3564 = vmatpush1.msra.mxu0 0.0
        %3565 = vmatprep.subr.mxu0 0.0
        %3566 = vmatpush1.msra.mxu0 0.0
        %3567 = vmatprep.subr.mxu0 0.0
        %3568 = vmatpush1.msra.mxu0 0.0
        %3569 = vmatprep.subr.mxu0 0.0
        %3570 = vmatpush1.msra.mxu0 0.0
        %3571 = vmatprep.subr.mxu0 0.0
        %3572 = vmatpush1.msra.mxu0 0.0
        %3573 = vmatprep.subr.mxu0 0.0
        %3574 = vmatpush1.msra.mxu0 0.0
        %3575 = vmatprep.subr.mxu0 0.0
        %3576 = vmatpush1.msra.mxu0 0.0
        %3577 = vmatprep.subr.mxu0 0.0
        %3578 = vmatpush1.msra.mxu0 0.0
        %3579 = vmatprep.subr.mxu0 0.0
        %3580 = vmatpush1.msra.mxu0 0.0
        %3581 = vmatprep.subr.mxu0 0.0
        %3582 = vmatpush1.msra.mxu0 0.0
        %3583 = vmatprep.subr.mxu0 0.0
        %3584 = vmatpush1.msra.mxu0 0.0
        %3585 = vmatprep.subr.mxu0 0.0
        %3586 = vmatpush1.msra.mxu0 0.0
        %3587 = vmatprep.subr.mxu0 0.0
        %3588 = vmatpush1.msra.mxu0 0.0
        %3589 = vmatprep.subr.mxu0 0.0
        %3590 = vmatpush1.msra.mxu0 0.0
        %3591 = vmatprep.subr.mxu0 0.0
        %3592 = vmatpush1.msra.mxu0 0.0
        %3593 = vmatprep.subr.mxu0 0.0
        %3594 = vmatpush1.msra.mxu0 0.0
        %3595 = vmatprep.subr.mxu0 0.0
        %3596 = vmatpush1.msra.mxu0 0.0
        %3597 = vmatprep.subr.mxu0 0.0
        %3598 = vmatpush1.msra.mxu0 0.0
        %3599 = vmatprep.subr.mxu0 0.0
        %3600 = vmatpush1.msra.mxu0 0.0
        %3601 = vmatprep.subr.mxu0 0.0
        %3602 = vmatpush1.msra.mxu0 0.0
        %3603 = vmatprep.subr.mxu0 0.0
        %3604 = vmatpush1.msra.mxu0 0.0
        %3605 = vmatprep.subr.mxu0 0.0
        %3606 = vmatpush1.msra.mxu0 0.0
        %3607 = vmatprep.subr.mxu0 0.0
        %3608 = vmatpush1.msra.mxu0 0.0
        %3609 = vmatprep.subr.mxu0 0.0
        %3610 = vmatpush1.msra.mxu0 0.0
        %3611 = vmatprep.subr.mxu0 0.0
        %3612 = vmatpush1.msra.mxu0 0.0
        %3613 = vmatprep.subr.mxu0 0.0
        %3614 = vmatpush1.msra.mxu0 0.0
        %3615 = vmatprep.subr.mxu0 0.0
        %3616 = vmatpush1.msra.mxu0 0.0
        %3617 = vmatprep.subr.mxu0 0.0
        %3618 = vmatpush1.msra.mxu0 0.0
        %3619 = vmatprep.subr.mxu0 0.0
        %3620 = vmatpush1.msra.mxu0 0.0
        %3621 = vmatprep.mubr.f32.mxu0 0.0
        %3622 = vmatmul.mubr.f32.gmra.mrb[0].mxu0 %v3552
        %v3623 = vpop.f32.mrb[0].mxu0
        %v3624 = vadd.f32 0.0, %v3623
        %v3625 = vpop.f32.mrb[0].mxu0
        %3626 = vmatprep.mubr.f32.mxu0 0.0
        %3627 = vmatmul.mubr.f32.gmra.mrb[0].mxu0 %v3555
        %v3628 = vpop.f32.mrb[0].mxu0
        %v3629 = vadd.f32 0.0, %v3628
        %v3630 = vpop.f32.mrb[0].mxu0
        %3631 = vdwg.mxu0
        %v3633 = vsel %vm1430, %v3624, 0
        %v3636 = vsel %vm1430, %v3629, 0
        %3638 = vmatprep.subr.mxu0 0.0
        %3639 = vmatpush1.msra.mxu0 %v1428
        %3640 = vmatprep.subr.mxu0 0.0
        %3641 = vmatpush1.msra.mxu0 %v1429
        %3642 = vmatprep.subr.mxu0 0.0
        %3643 = vmatpush1.msra.mxu0 0.0
        %3644 = vmatprep.subr.mxu0 0.0
        %3645 = vmatpush1.msra.mxu0 0.0
        %3646 = vmatprep.subr.mxu0 0.0
        %3647 = vmatpush1.msra.mxu0 0.0
        %3648 = vmatprep.subr.mxu0 0.0
        %3649 = vmatpush1.msra.mxu0 0.0
        %3650 = vmatprep.subr.mxu0 0.0
        %3651 = vmatpush1.msra.mxu0 0.0
        %3652 = vmatprep.subr.mxu0 0.0
        %3653 = vmatpush1.msra.mxu0 0.0
        %3654 = vmatprep.subr.mxu0 0.0
        %3655 = vmatpush1.msra.mxu0 0.0
        %3656 = vmatprep.subr.mxu0 0.0
        %3657 = vmatpush1.msra.mxu0 0.0
        %3658 = vmatprep.subr.mxu0 0.0
        %3659 = vmatpush1.msra.mxu0 0.0
        %3660 = vmatprep.subr.mxu0 0.0
        %3661 = vmatpush1.msra.mxu0 0.0
        %3662 = vmatprep.subr.mxu0 0.0
        %3663 = vmatpush1.msra.mxu0 0.0
        %3664 = vmatprep.subr.mxu0 0.0
        %3665 = vmatpush1.msra.mxu0 0.0
        %3666 = vmatprep.subr.mxu0 0.0
        %3667 = vmatpush1.msra.mxu0 0.0
        %3668 = vmatprep.subr.mxu0 0.0
        %3669 = vmatpush1.msra.mxu0 0.0
        %3670 = vmatprep.subr.mxu0 0.0
        %3671 = vmatpush1.msra.mxu0 0.0
        %3672 = vmatprep.subr.mxu0 0.0
        %3673 = vmatpush1.msra.mxu0 0.0
        %3674 = vmatprep.subr.mxu0 0.0
        %3675 = vmatpush1.msra.mxu0 0.0
        %3676 = vmatprep.subr.mxu0 0.0
        %3677 = vmatpush1.msra.mxu0 0.0
        %3678 = vmatprep.subr.mxu0 0.0
        %3679 = vmatpush1.msra.mxu0 0.0
        %3680 = vmatprep.subr.mxu0 0.0
        %3681 = vmatpush1.msra.mxu0 0.0
        %3682 = vmatprep.subr.mxu0 0.0
        %3683 = vmatpush1.msra.mxu0 0.0
        %3684 = vmatprep.subr.mxu0 0.0
        %3685 = vmatpush1.msra.mxu0 0.0
        %3686 = vmatprep.subr.mxu0 0.0
        %3687 = vmatpush1.msra.mxu0 0.0
        %3688 = vmatprep.subr.mxu0 0.0
        %3689 = vmatpush1.msra.mxu0 0.0
        %3690 = vmatprep.subr.mxu0 0.0
        %3691 = vmatpush1.msra.mxu0 0.0
        %3692 = vmatprep.subr.mxu0 0.0
        %3693 = vmatpush1.msra.mxu0 0.0
        %3694 = vmatprep.subr.mxu0 0.0
        %3695 = vmatpush1.msra.mxu0 0.0
        %3696 = vmatprep.subr.mxu0 0.0
        %3697 = vmatpush1.msra.mxu0 0.0
        %3698 = vmatprep.subr.mxu0 0.0
        %3699 = vmatpush1.msra.mxu0 0.0
        %3700 = vmatprep.subr.mxu0 0.0
        %3701 = vmatpush1.msra.mxu0 0.0
        %3702 = vmatprep.mubr.f32.mxu0 0.0
        %3703 = vmatmul.mubr.f32.gmra.mrb[0].mxu0 %v3633
        %v3704 = vpop.f32.mrb[0].mxu0
        %v3705 = vadd.f32 0.0, %v3704
        %v3706 = vpop.f32.mrb[0].mxu0
        %3707 = vmatprep.mubr.f32.mxu0 0.0
        %3708 = vmatmul.mubr.f32.gmra.mrb[0].mxu0 %v3636
        %v3709 = vpop.f32.mrb[0].mxu0
        %v3710 = vadd.f32 0.0, %v3709
        %v3711 = vpop.f32.mrb[0].mxu0
        %3712 = vdwg.mxu0
        %v3713 = vadd.f32 %v3426, %v3705
        %v3714 = vadd.f32 %v3427, %v3710
        %v3715 = vld [vmem:[%s866] sm:$0x1]
        %v3717 = vlaneseq
        %v3718 = vshrl.u32 %v3717, 7
        %v3719 = vsub.s32 0, %v3718
        %v3720 = vrot.slane %v3715, %v3719
        %v3722 = vadd.f32 %v3713, %v3720
        %v3723 = vadd.f32 %v3714, %v3720
        %v3724 = vadd.f32 %v1137, %v3722
        %v3725 = vadd.f32 %v1138, %v3723
        %v3726 = vld [vmem:[%s909] sm:$0x1]
        %v3727 = vld [vmem:[%s917] sm:$0x1]
        %3728 = vadd.xlane.f32.xlu0 %v3724
        %v3729 = vpop.xlane.xlu0 %3728
        %3730 = vadd.xlane.f32.xlu0 %v3725
        %v3731 = vpop.xlane.xlu0 %3730
        %v3732 = vrcp.pop 128.0
        %v3733 = vmul.f32 %v3729, %v3732
        %v3734 = vmul.f32 %v3731, %v3732
        %v3735 = vsub.f32 %v3724, %v3733
        %v3736 = vsub.f32 %v3725, %v3734
        %v3737 = vmul.f32 %v3735, %v3735
        %v3738 = vmul.f32 %v3736, %v3736
        %3739 = vadd.xlane.f32.xlu0 %v3737
        %v3740 = vpop.xlane.xlu0 %3739
        %3741 = vadd.xlane.f32.xlu0 %v3738
        %v3742 = vpop.xlane.xlu0 %3741
        %v3743 = vmul.f32 %v3740, %v3732
        %v3744 = vmul.f32 %v3742, %v3732
        %v3745 = vadd.f32 %v3743, 1e-05
        %v3746 = vadd.f32 %v3744, 1e-05
        %v3747 = vrsqrt.pop %v3745
        %v3748 = vrsqrt.pop %v3746
        %v3749 = vmul.f32 %v3735, %v3747
        %v3750 = vmul.f32 %v3736, %v3748
        %v3752 = vlaneseq
        %v3753 = vshrl.u32 %v3752, 7
        %v3754 = vsub.s32 0, %v3753
        %v3755 = vrot.slane %v3726, %v3754
        %v3757 = vmul.f32 %v3749, %v3755
        %v3758 = vmul.f32 %v3750, %v3755
        %v3760 = vlaneseq
        %v3761 = vshrl.u32 %v3760, 7
        %v3762 = vsub.s32 0, %v3761
        %v3763 = vrot.slane %v3727, %v3762
        %v3765 = vadd.f32 %v3757, %v3763
        %v3766 = vadd.f32 %v3758, %v3763
        %v3767 = vld [vmem:[%s875] sm:$0xff]
        %v3768 = vld [vmem:[%s875 + $0x8] sm:$0xff]
        %v3769 = vld [vmem:[%s875 + $0x10] sm:$0xff]
        %v3770 = vld [vmem:[%s875 + $0x18] sm:$0xff]
        %v3771 = vld [vmem:[%s875 + $0x20] sm:$0xff]
        %v3772 = vld [vmem:[%s875 + $0x28] sm:$0xff]
        %v3773 = vld [vmem:[%s875 + $0x30] sm:$0xff]
        %v3774 = vld [vmem:[%s875 + $0x38] sm:$0xff]
        %v3775 = vld [vmem:[%s875 + $0x40] sm:$0xff]
        %v3776 = vld [vmem:[%s875 + $0x48] sm:$0xff]
        %v3777 = vld [vmem:[%s875 + $0x50] sm:$0xff]
        %v3778 = vld [vmem:[%s875 + $0x58] sm:$0xff]
        %v3779 = vld [vmem:[%s875 + $0x60] sm:$0xff]
        %v3780 = vld [vmem:[%s875 + $0x68] sm:$0xff]
        %v3781 = vld [vmem:[%s875 + $0x70] sm:$0xff]
        %v3782 = vld [vmem:[%s875 + $0x78] sm:$0xff]
        %v3783 = vld [vmem:[%s875 + $0x80] sm:$0xff]
        %v3784 = vld [vmem:[%s875 + $0x88] sm:$0xff]
        %v3785 = vld [vmem:[%s875 + $0x90] sm:$0xff]
        %v3786 = vld [vmem:[%s875 + $0x98] sm:$0xff]
        %v3787 = vld [vmem:[%s875 + $0xa0] sm:$0xff]
        %v3788 = vld [vmem:[%s875 + $0xa8] sm:$0xff]
        %v3789 = vld [vmem:[%s875 + $0xb0] sm:$0xff]
        %v3790 = vld [vmem:[%s875 + $0xb8] sm:$0xff]
        %v3791 = vld [vmem:[%s875 + $0xc0] sm:$0xff]
        %v3792 = vld [vmem:[%s875 + $0xc8] sm:$0xff]
        %v3793 = vld [vmem:[%s875 + $0xd0] sm:$0xff]
        %v3794 = vld [vmem:[%s875 + $0xd8] sm:$0xff]
        %v3795 = vld [vmem:[%s875 + $0xe0] sm:$0xff]
        %v3796 = vld [vmem:[%s875 + $0xe8] sm:$0xff]
        %v3797 = vld [vmem:[%s875 + $0xf0] sm:$0xff]
        %v3798 = vld [vmem:[%s875 + $0xf8] sm:$0xff]
        %v3799 = vld [vmem:[%s875 + $0x100] sm:$0xff]
        %v3800 = vld [vmem:[%s875 + $0x108] sm:$0xff]
        %v3801 = vld [vmem:[%s875 + $0x110] sm:$0xff]
        %v3802 = vld [vmem:[%s875 + $0x118] sm:$0xff]
        %v3803 = vld [vmem:[%s875 + $0x120] sm:$0xff]
        %v3804 = vld [vmem:[%s875 + $0x128] sm:$0xff]
        %v3805 = vld [vmem:[%s875 + $0x130] sm:$0xff]
        %v3806 = vld [vmem:[%s875 + $0x138] sm:$0xff]
        %v3807 = vld [vmem:[%s875 + $0x140] sm:$0xff]
        %v3808 = vld [vmem:[%s875 + $0x148] sm:$0xff]
        %v3809 = vld [vmem:[%s875 + $0x150] sm:$0xff]
        %v3810 = vld [vmem:[%s875 + $0x158] sm:$0xff]
        %v3811 = vld [vmem:[%s875 + $0x160] sm:$0xff]
        %v3812 = vld [vmem:[%s875 + $0x168] sm:$0xff]
        %v3813 = vld [vmem:[%s875 + $0x170] sm:$0xff]
        %v3814 = vld [vmem:[%s875 + $0x178] sm:$0xff]
        %v3815 = vld [vmem:[%s875 + $0x180] sm:$0xff]
        %v3816 = vld [vmem:[%s875 + $0x188] sm:$0xff]
        %v3817 = vld [vmem:[%s875 + $0x190] sm:$0xff]
        %v3818 = vld [vmem:[%s875 + $0x198] sm:$0xff]
        %v3819 = vld [vmem:[%s875 + $0x1a0] sm:$0xff]
        %v3820 = vld [vmem:[%s875 + $0x1a8] sm:$0xff]
        %v3821 = vld [vmem:[%s875 + $0x1b0] sm:$0xff]
        %v3822 = vld [vmem:[%s875 + $0x1b8] sm:$0xff]
        %v3823 = vld [vmem:[%s875 + $0x1c0] sm:$0xff]
        %v3824 = vld [vmem:[%s875 + $0x1c8] sm:$0xff]
        %v3825 = vld [vmem:[%s875 + $0x1d0] sm:$0xff]
        %v3826 = vld [vmem:[%s875 + $0x1d8] sm:$0xff]
        %v3827 = vld [vmem:[%s875 + $0x1e0] sm:$0xff]
        %v3828 = vld [vmem:[%s875 + $0x1e8] sm:$0xff]
        %v3829 = vld [vmem:[%s875 + $0x1f0] sm:$0xff]
        %v3830 = vld [vmem:[%s875 + $0x1f8] sm:$0xff]
        %v3831 = vld [vmem:[%s875 + $0x200] sm:$0xff]
        %v3832 = vld [vmem:[%s875 + $0x208] sm:$0xff]
        %v3833 = vld [vmem:[%s875 + $0x210] sm:$0xff]
        %v3834 = vld [vmem:[%s875 + $0x218] sm:$0xff]
        %v3835 = vld [vmem:[%s875 + $0x220] sm:$0xff]
        %v3836 = vld [vmem:[%s875 + $0x228] sm:$0xff]
        %v3837 = vld [vmem:[%s875 + $0x230] sm:$0xff]
        %v3838 = vld [vmem:[%s875 + $0x238] sm:$0xff]
        %v3839 = vld [vmem:[%s875 + $0x240] sm:$0xff]
        %v3840 = vld [vmem:[%s875 + $0x248] sm:$0xff]
        %v3841 = vld [vmem:[%s875 + $0x250] sm:$0xff]
        %v3842 = vld [vmem:[%s875 + $0x258] sm:$0xff]
        %v3843 = vld [vmem:[%s875 + $0x260] sm:$0xff]
        %v3844 = vld [vmem:[%s875 + $0x268] sm:$0xff]
        %v3845 = vld [vmem:[%s875 + $0x270] sm:$0xff]
        %v3846 = vld [vmem:[%s875 + $0x278] sm:$0xff]
        %v3847 = vld [vmem:[%s875 + $0x280] sm:$0xff]
        %v3848 = vld [vmem:[%s875 + $0x288] sm:$0xff]
        %v3849 = vld [vmem:[%s875 + $0x290] sm:$0xff]
        %v3850 = vld [vmem:[%s875 + $0x298] sm:$0xff]
        %v3851 = vld [vmem:[%s875 + $0x2a0] sm:$0xff]
        %v3852 = vld [vmem:[%s875 + $0x2a8] sm:$0xff]
        %v3853 = vld [vmem:[%s875 + $0x2b0] sm:$0xff]
        %v3854 = vld [vmem:[%s875 + $0x2b8] sm:$0xff]
        %v3855 = vld [vmem:[%s875 + $0x2c0] sm:$0xff]
        %v3856 = vld [vmem:[%s875 + $0x2c8] sm:$0xff]
        %v3857 = vld [vmem:[%s875 + $0x2d0] sm:$0xff]
        %v3858 = vld [vmem:[%s875 + $0x2d8] sm:$0xff]
        %v3859 = vld [vmem:[%s875 + $0x2e0] sm:$0xff]
        %v3860 = vld [vmem:[%s875 + $0x2e8] sm:$0xff]
        %v3861 = vld [vmem:[%s875 + $0x2f0] sm:$0xff]
        %v3862 = vld [vmem:[%s875 + $0x2f8] sm:$0xff]
        %v3863 = vld [vmem:[%s875 + $0x300] sm:$0xff]
        %v3864 = vld [vmem:[%s875 + $0x308] sm:$0xff]
        %v3865 = vld [vmem:[%s875 + $0x310] sm:$0xff]
        %v3866 = vld [vmem:[%s875 + $0x318] sm:$0xff]
        %v3867 = vld [vmem:[%s875 + $0x320] sm:$0xff]
        %v3868 = vld [vmem:[%s875 + $0x328] sm:$0xff]
        %v3869 = vld [vmem:[%s875 + $0x330] sm:$0xff]
        %v3870 = vld [vmem:[%s875 + $0x338] sm:$0xff]
        %v3871 = vld [vmem:[%s875 + $0x340] sm:$0xff]
        %v3872 = vld [vmem:[%s875 + $0x348] sm:$0xff]
        %v3873 = vld [vmem:[%s875 + $0x350] sm:$0xff]
        %v3874 = vld [vmem:[%s875 + $0x358] sm:$0xff]
        %v3875 = vld [vmem:[%s875 + $0x360] sm:$0xff]
        %v3876 = vld [vmem:[%s875 + $0x368] sm:$0xff]
        %v3877 = vld [vmem:[%s875 + $0x370] sm:$0xff]
        %v3878 = vld [vmem:[%s875 + $0x378] sm:$0xff]
        %v3879 = vld [vmem:[%s875 + $0x380] sm:$0xff]
        %v3880 = vld [vmem:[%s875 + $0x388] sm:$0xff]
        %v3881 = vld [vmem:[%s875 + $0x390] sm:$0xff]
        %v3882 = vld [vmem:[%s875 + $0x398] sm:$0xff]
        %v3883 = vld [vmem:[%s875 + $0x3a0] sm:$0xff]
        %v3884 = vld [vmem:[%s875 + $0x3a8] sm:$0xff]
        %v3885 = vld [vmem:[%s875 + $0x3b0] sm:$0xff]
        %v3886 = vld [vmem:[%s875 + $0x3b8] sm:$0xff]
        %v3887 = vld [vmem:[%s875 + $0x3c0] sm:$0xff]
        %v3888 = vld [vmem:[%s875 + $0x3c8] sm:$0xff]
        %v3889 = vld [vmem:[%s875 + $0x3d0] sm:$0xff]
        %v3890 = vld [vmem:[%s875 + $0x3d8] sm:$0xff]
        %v3891 = vld [vmem:[%s875 + $0x3e0] sm:$0xff]
        %v3892 = vld [vmem:[%s875 + $0x3e8] sm:$0xff]
        %v3893 = vld [vmem:[%s875 + $0x3f0] sm:$0xff]
        %v3894 = vld [vmem:[%s875 + $0x3f8] sm:$0xff]
        %v3895 = vunpack.c.l.bf16 %v3767
        %v3896 = vunpack.c.h.bf16 %v3767
        %v3897 = vunpack.c.l.bf16 %v3768
        %v3898 = vunpack.c.h.bf16 %v3768
        %v3899 = vunpack.c.l.bf16 %v3769
        %v3900 = vunpack.c.h.bf16 %v3769
        %v3901 = vunpack.c.l.bf16 %v3770
        %v3902 = vunpack.c.h.bf16 %v3770
        %v3903 = vunpack.c.l.bf16 %v3771
        %v3904 = vunpack.c.h.bf16 %v3771
        %v3905 = vunpack.c.l.bf16 %v3772
        %v3906 = vunpack.c.h.bf16 %v3772
        %v3907 = vunpack.c.l.bf16 %v3773
        %v3908 = vunpack.c.h.bf16 %v3773
        %v3909 = vunpack.c.l.bf16 %v3774
        %v3910 = vunpack.c.h.bf16 %v3774
        %v3911 = vunpack.c.l.bf16 %v3775
        %v3912 = vunpack.c.h.bf16 %v3775
        %v3913 = vunpack.c.l.bf16 %v3776
        %v3914 = vunpack.c.h.bf16 %v3776
        %v3915 = vunpack.c.l.bf16 %v3777
        %v3916 = vunpack.c.h.bf16 %v3777
        %v3917 = vunpack.c.l.bf16 %v3778
        %v3918 = vunpack.c.h.bf16 %v3778
        %v3919 = vunpack.c.l.bf16 %v3779
        %v3920 = vunpack.c.h.bf16 %v3779
        %v3921 = vunpack.c.l.bf16 %v3780
        %v3922 = vunpack.c.h.bf16 %v3780
        %v3923 = vunpack.c.l.bf16 %v3781
        %v3924 = vunpack.c.h.bf16 %v3781
        %v3925 = vunpack.c.l.bf16 %v3782
        %v3926 = vunpack.c.h.bf16 %v3782
        %v3927 = vunpack.c.l.bf16 %v3783
        %v3928 = vunpack.c.h.bf16 %v3783
        %v3929 = vunpack.c.l.bf16 %v3784
        %v3930 = vunpack.c.h.bf16 %v3784
        %v3931 = vunpack.c.l.bf16 %v3785
        %v3932 = vunpack.c.h.bf16 %v3785
        %v3933 = vunpack.c.l.bf16 %v3786
        %v3934 = vunpack.c.h.bf16 %v3786
        %v3935 = vunpack.c.l.bf16 %v3787
        %v3936 = vunpack.c.h.bf16 %v3787
        %v3937 = vunpack.c.l.bf16 %v3788
        %v3938 = vunpack.c.h.bf16 %v3788
        %v3939 = vunpack.c.l.bf16 %v3789
        %v3940 = vunpack.c.h.bf16 %v3789
        %v3941 = vunpack.c.l.bf16 %v3790
        %v3942 = vunpack.c.h.bf16 %v3790
        %v3943 = vunpack.c.l.bf16 %v3791
        %v3944 = vunpack.c.h.bf16 %v3791
        %v3945 = vunpack.c.l.bf16 %v3792
        %v3946 = vunpack.c.h.bf16 %v3792
        %v3947 = vunpack.c.l.bf16 %v3793
        %v3948 = vunpack.c.h.bf16 %v3793
        %v3949 = vunpack.c.l.bf16 %v3794
        %v3950 = vunpack.c.h.bf16 %v3794
        %v3951 = vunpack.c.l.bf16 %v3795
        %v3952 = vunpack.c.h.bf16 %v3795
        %v3953 = vunpack.c.l.bf16 %v3796
        %v3954 = vunpack.c.h.bf16 %v3796
        %v3955 = vunpack.c.l.bf16 %v3797
        %v3956 = vunpack.c.h.bf16 %v3797
        %v3957 = vunpack.c.l.bf16 %v3798
        %v3958 = vunpack.c.h.bf16 %v3798
        %v3959 = vunpack.c.l.bf16 %v3799
        %v3960 = vunpack.c.h.bf16 %v3799
        %v3961 = vunpack.c.l.bf16 %v3800
        %v3962 = vunpack.c.h.bf16 %v3800
        %v3963 = vunpack.c.l.bf16 %v3801
        %v3964 = vunpack.c.h.bf16 %v3801
        %v3965 = vunpack.c.l.bf16 %v3802
        %v3966 = vunpack.c.h.bf16 %v3802
        %v3967 = vunpack.c.l.bf16 %v3803
        %v3968 = vunpack.c.h.bf16 %v3803
        %v3969 = vunpack.c.l.bf16 %v3804
        %v3970 = vunpack.c.h.bf16 %v3804
        %v3971 = vunpack.c.l.bf16 %v3805
        %v3972 = vunpack.c.h.bf16 %v3805
        %v3973 = vunpack.c.l.bf16 %v3806
        %v3974 = vunpack.c.h.bf16 %v3806
        %v3975 = vunpack.c.l.bf16 %v3807
        %v3976 = vunpack.c.h.bf16 %v3807
        %v3977 = vunpack.c.l.bf16 %v3808
        %v3978 = vunpack.c.h.bf16 %v3808
        %v3979 = vunpack.c.l.bf16 %v3809
        %v3980 = vunpack.c.h.bf16 %v3809
        %v3981 = vunpack.c.l.bf16 %v3810
        %v3982 = vunpack.c.h.bf16 %v3810
        %v3983 = vunpack.c.l.bf16 %v3811
        %v3984 = vunpack.c.h.bf16 %v3811
        %v3985 = vunpack.c.l.bf16 %v3812
        %v3986 = vunpack.c.h.bf16 %v3812
        %v3987 = vunpack.c.l.bf16 %v3813
        %v3988 = vunpack.c.h.bf16 %v3813
        %v3989 = vunpack.c.l.bf16 %v3814
        %v3990 = vunpack.c.h.bf16 %v3814
        %v3991 = vunpack.c.l.bf16 %v3815
        %v3992 = vunpack.c.h.bf16 %v3815
        %v3993 = vunpack.c.l.bf16 %v3816
        %v3994 = vunpack.c.h.bf16 %v3816
        %v3995 = vunpack.c.l.bf16 %v3817
        %v3996 = vunpack.c.h.bf16 %v3817
        %v3997 = vunpack.c.l.bf16 %v3818
        %v3998 = vunpack.c.h.bf16 %v3818
        %v3999 = vunpack.c.l.bf16 %v3819
        %v4000 = vunpack.c.h.bf16 %v3819
        %v4001 = vunpack.c.l.bf16 %v3820
        %v4002 = vunpack.c.h.bf16 %v3820
        %v4003 = vunpack.c.l.bf16 %v3821
        %v4004 = vunpack.c.h.bf16 %v3821
        %v4005 = vunpack.c.l.bf16 %v3822
        %v4006 = vunpack.c.h.bf16 %v3822
        %v4007 = vunpack.c.l.bf16 %v3823
        %v4008 = vunpack.c.h.bf16 %v3823
        %v4009 = vunpack.c.l.bf16 %v3824
        %v4010 = vunpack.c.h.bf16 %v3824
        %v4011 = vunpack.c.l.bf16 %v3825
        %v4012 = vunpack.c.h.bf16 %v3825
        %v4013 = vunpack.c.l.bf16 %v3826
        %v4014 = vunpack.c.h.bf16 %v3826
        %v4015 = vunpack.c.l.bf16 %v3827
        %v4016 = vunpack.c.h.bf16 %v3827
        %v4017 = vunpack.c.l.bf16 %v3828
        %v4018 = vunpack.c.h.bf16 %v3828
        %v4019 = vunpack.c.l.bf16 %v3829
        %v4020 = vunpack.c.h.bf16 %v3829
        %v4021 = vunpack.c.l.bf16 %v3830
        %v4022 = vunpack.c.h.bf16 %v3830
        %v4023 = vunpack.c.l.bf16 %v3831
        %v4024 = vunpack.c.h.bf16 %v3831
        %v4025 = vunpack.c.l.bf16 %v3832
        %v4026 = vunpack.c.h.bf16 %v3832
        %v4027 = vunpack.c.l.bf16 %v3833
        %v4028 = vunpack.c.h.bf16 %v3833
        %v4029 = vunpack.c.l.bf16 %v3834
        %v4030 = vunpack.c.h.bf16 %v3834
        %v4031 = vunpack.c.l.bf16 %v3835
        %v4032 = vunpack.c.h.bf16 %v3835
        %v4033 = vunpack.c.l.bf16 %v3836
        %v4034 = vunpack.c.h.bf16 %v3836
        %v4035 = vunpack.c.l.bf16 %v3837
        %v4036 = vunpack.c.h.bf16 %v3837
        %v4037 = vunpack.c.l.bf16 %v3838
        %v4038 = vunpack.c.h.bf16 %v3838
        %v4039 = vunpack.c.l.bf16 %v3839
        %v4040 = vunpack.c.h.bf16 %v3839
        %v4041 = vunpack.c.l.bf16 %v3840
        %v4042 = vunpack.c.h.bf16 %v3840
        %v4043 = vunpack.c.l.bf16 %v3841
        %v4044 = vunpack.c.h.bf16 %v3841
        %v4045 = vunpack.c.l.bf16 %v3842
        %v4046 = vunpack.c.h.bf16 %v3842
        %v4047 = vunpack.c.l.bf16 %v3843
        %v4048 = vunpack.c.h.bf16 %v3843
        %v4049 = vunpack.c.l.bf16 %v3844
        %v4050 = vunpack.c.h.bf16 %v3844
        %v4051 = vunpack.c.l.bf16 %v3845
        %v4052 = vunpack.c.h.bf16 %v3845
        %v4053 = vunpack.c.l.bf16 %v3846
        %v4054 = vunpack.c.h.bf16 %v3846
        %v4055 = vunpack.c.l.bf16 %v3847
        %v4056 = vunpack.c.h.bf16 %v3847
        %v4057 = vunpack.c.l.bf16 %v3848
        %v4058 = vunpack.c.h.bf16 %v3848
        %v4059 = vunpack.c.l.bf16 %v3849
        %v4060 = vunpack.c.h.bf16 %v3849
        %v4061 = vunpack.c.l.bf16 %v3850
        %v4062 = vunpack.c.h.bf16 %v3850
        %v4063 = vunpack.c.l.bf16 %v3851
        %v4064 = vunpack.c.h.bf16 %v3851
        %v4065 = vunpack.c.l.bf16 %v3852
        %v4066 = vunpack.c.h.bf16 %v3852
        %v4067 = vunpack.c.l.bf16 %v3853
        %v4068 = vunpack.c.h.bf16 %v3853
        %v4069 = vunpack.c.l.bf16 %v3854
        %v4070 = vunpack.c.h.bf16 %v3854
        %v4071 = vunpack.c.l.bf16 %v3855
        %v4072 = vunpack.c.h.bf16 %v3855
        %v4073 = vunpack.c.l.bf16 %v3856
        %v4074 = vunpack.c.h.bf16 %v3856
        %v4075 = vunpack.c.l.bf16 %v3857
        %v4076 = vunpack.c.h.bf16 %v3857
        %v4077 = vunpack.c.l.bf16 %v3858
        %v4078 = vunpack.c.h.bf16 %v3858
        %v4079 = vunpack.c.l.bf16 %v3859
        %v4080 = vunpack.c.h.bf16 %v3859
        %v4081 = vunpack.c.l.bf16 %v3860
        %v4082 = vunpack.c.h.bf16 %v3860
        %v4083 = vunpack.c.l.bf16 %v3861
        %v4084 = vunpack.c.h.bf16 %v3861
        %v4085 = vunpack.c.l.bf16 %v3862
        %v4086 = vunpack.c.h.bf16 %v3862
        %v4087 = vunpack.c.l.bf16 %v3863
        %v4088 = vunpack.c.h.bf16 %v3863
        %v4089 = vunpack.c.l.bf16 %v3864
        %v4090 = vunpack.c.h.bf16 %v3864
        %v4091 = vunpack.c.l.bf16 %v3865
        %v4092 = vunpack.c.h.bf16 %v3865
        %v4093 = vunpack.c.l.bf16 %v3866
        %v4094 = vunpack.c.h.bf16 %v3866
        %v4095 = vunpack.c.l.bf16 %v3867
        %v4096 = vunpack.c.h.bf16 %v3867
        %v4097 = vunpack.c.l.bf16 %v3868
        %v4098 = vunpack.c.h.bf16 %v3868
        %v4099 = vunpack.c.l.bf16 %v3869
        %v4100 = vunpack.c.h.bf16 %v3869
        %v4101 = vunpack.c.l.bf16 %v3870
        %v4102 = vunpack.c.h.bf16 %v3870
        %v4103 = vunpack.c.l.bf16 %v3871
        %v4104 = vunpack.c.h.bf16 %v3871
        %v4105 = vunpack.c.l.bf16 %v3872
        %v4106 = vunpack.c.h.bf16 %v3872
        %v4107 = vunpack.c.l.bf16 %v3873
        %v4108 = vunpack.c.h.bf16 %v3873
        %v4109 = vunpack.c.l.bf16 %v3874
        %v4110 = vunpack.c.h.bf16 %v3874
        %v4111 = vunpack.c.l.bf16 %v3875
        %v4112 = vunpack.c.h.bf16 %v3875
        %v4113 = vunpack.c.l.bf16 %v3876
        %v4114 = vunpack.c.h.bf16 %v3876
        %v4115 = vunpack.c.l.bf16 %v3877
        %v4116 = vunpack.c.h.bf16 %v3877
        %v4117 = vunpack.c.l.bf16 %v3878
        %v4118 = vunpack.c.h.bf16 %v3878
        %v4119 = vunpack.c.l.bf16 %v3879
        %v4120 = vunpack.c.h.bf16 %v3879
        %v4121 = vunpack.c.l.bf16 %v3880
        %v4122 = vunpack.c.h.bf16 %v3880
        %v4123 = vunpack.c.l.bf16 %v3881
        %v4124 = vunpack.c.h.bf16 %v3881
        %v4125 = vunpack.c.l.bf16 %v3882
        %v4126 = vunpack.c.h.bf16 %v3882
        %v4127 = vunpack.c.l.bf16 %v3883
        %v4128 = vunpack.c.h.bf16 %v3883
        %v4129 = vunpack.c.l.bf16 %v3884
        %v4130 = vunpack.c.h.bf16 %v3884
        %v4131 = vunpack.c.l.bf16 %v3885
        %v4132 = vunpack.c.h.bf16 %v3885
        %v4133 = vunpack.c.l.bf16 %v3886
        %v4134 = vunpack.c.h.bf16 %v3886
        %v4135 = vunpack.c.l.bf16 %v3887
        %v4136 = vunpack.c.h.bf16 %v3887
        %v4137 = vunpack.c.l.bf16 %v3888
        %v4138 = vunpack.c.h.bf16 %v3888
        %v4139 = vunpack.c.l.bf16 %v3889
        %v4140 = vunpack.c.h.bf16 %v3889
        %v4141 = vunpack.c.l.bf16 %v3890
        %v4142 = vunpack.c.h.bf16 %v3890
        %v4143 = vunpack.c.l.bf16 %v3891
        %v4144 = vunpack.c.h.bf16 %v3891
        %v4145 = vunpack.c.l.bf16 %v3892
        %v4146 = vunpack.c.h.bf16 %v3892
        %v4147 = vunpack.c.l.bf16 %v3893
        %v4148 = vunpack.c.h.bf16 %v3893
        %v4149 = vunpack.c.l.bf16 %v3894
        %v4150 = vunpack.c.h.bf16 %v3894
        %v4151 = vld [vmem:[%s884] sm:$0xff]
        %v4152 = vld [vmem:[%s884 + $0x8] sm:$0xff]
        %v4155 = vlaneseq
        %v4156 = vshrl.u32 %v4155, 7
        %v4157 = vsub.s32 0, %v4156
        %v4158 = vrot.slane %v4151, %v4157
        %v4159 = vlaneseq
        %v4160 = vshrl.u32 %v4159, 7
        %v4161 = vsub.s32 1, %v4160
        %v4162 = vrot.slane %v4151, %v4161
        %v4163 = vlaneseq
        %v4164 = vshrl.u32 %v4163, 7
        %v4165 = vsub.s32 2, %v4164
        %v4166 = vrot.slane %v4151, %v4165
        %v4167 = vlaneseq
        %v4168 = vshrl.u32 %v4167, 7
        %v4169 = vsub.s32 3, %v4168
        %v4170 = vrot.slane %v4151, %v4169
        %v4171 = vlaneseq
        %v4172 = vshrl.u32 %v4171, 7
        %v4173 = vsub.s32 4, %v4172
        %v4174 = vrot.slane %v4151, %v4173
        %v4175 = vlaneseq
        %v4176 = vshrl.u32 %v4175, 7
        %v4177 = vsub.s32 5, %v4176
        %v4178 = vrot.slane %v4151, %v4177
        %v4179 = vlaneseq
        %v4180 = vshrl.u32 %v4179, 7
        %v4181 = vsub.s32 6, %v4180
        %v4182 = vrot.slane %v4151, %v4181
        %v4183 = vlaneseq
        %v4184 = vshrl.u32 %v4183, 7
        %v4185 = vsub.s32 7, %v4184
        %v4186 = vrot.slane %v4151, %v4185
        %v4187 = vlaneseq
        %v4188 = vshrl.u32 %v4187, 7
        %v4189 = vsub.s32 0, %v4188
        %v4190 = vrot.slane %v4152, %v4189
        %v4191 = vlaneseq
        %v4192 = vshrl.u32 %v4191, 7
        %v4193 = vsub.s32 1, %v4192
        %v4194 = vrot.slane %v4152, %v4193
        %v4195 = vlaneseq
        %v4196 = vshrl.u32 %v4195, 7
        %v4197 = vsub.s32 2, %v4196
        %v4198 = vrot.slane %v4152, %v4197
        %v4199 = vlaneseq
        %v4200 = vshrl.u32 %v4199, 7
        %v4201 = vsub.s32 3, %v4200
        %v4202 = vrot.slane %v4152, %v4201
        %v4203 = vlaneseq
        %v4204 = vshrl.u32 %v4203, 7
        %v4205 = vsub.s32 4, %v4204
        %v4206 = vrot.slane %v4152, %v4205
        %v4207 = vlaneseq
        %v4208 = vshrl.u32 %v4207, 7
        %v4209 = vsub.s32 5, %v4208
        %v4210 = vrot.slane %v4152, %v4209
        %v4211 = vlaneseq
        %v4212 = vshrl.u32 %v4211, 7
        %v4213 = vsub.s32 6, %v4212
        %v4214 = vrot.slane %v4152, %v4213
        %v4215 = vlaneseq
        %v4216 = vshrl.u32 %v4215, 7
        %v4217 = vsub.s32 7, %v4216
        %v4218 = vrot.slane %v4152, %v4217
        %4235 = vmatprep.subr.mxu0 %v3896
        %4236 = vmatpush1.msra.mxu0 %v3895
        %4237 = vmatprep.subr.mxu0 %v3912
        %4238 = vmatpush1.msra.mxu0 %v3911
        %4239 = vmatprep.subr.mxu0 %v3928
        %4240 = vmatpush1.msra.mxu0 %v3927
        %4241 = vmatprep.subr.mxu0 %v3944
        %4242 = vmatpush1.msra.mxu0 %v3943
        %4243 = vmatprep.subr.mxu0 %v3960
        %4244 = vmatpush1.msra.mxu0 %v3959
        %4245 = vmatprep.subr.mxu0 %v3976
        %4246 = vmatpush1.msra.mxu0 %v3975
        %4247 = vmatprep.subr.mxu0 %v3992
        %4248 = vmatpush1.msra.mxu0 %v3991
        %4249 = vmatprep.subr.mxu0 %v4008
        %4250 = vmatpush1.msra.mxu0 %v4007
        %4251 = vmatprep.subr.mxu0 %v4024
        %4252 = vmatpush1.msra.mxu0 %v4023
        %4253 = vmatprep.subr.mxu0 %v4040
        %4254 = vmatpush1.msra.mxu0 %v4039
        %4255 = vmatprep.subr.mxu0 %v4056
        %4256 = vmatpush1.msra.mxu0 %v4055
        %4257 = vmatprep.subr.mxu0 %v4072
        %4258 = vmatpush1.msra.mxu0 %v4071
        %4259 = vmatprep.subr.mxu0 %v4088
        %4260 = vmatpush1.msra.mxu0 %v4087
        %4261 = vmatprep.subr.mxu0 %v4104
        %4262 = vmatpush1.msra.mxu0 %v4103
        %4263 = vmatprep.subr.mxu0 %v4120
        %4264 = vmatpush1.msra.mxu0 %v4119
        %4265 = vmatprep.subr.mxu0 %v4136
        %4266 = vmatpush1.msra.mxu0 %v4135
        %4267 = vmatprep.subr.mxu0 0.0
        %4268 = vmatpush1.msra.mxu0 0.0
        %4269 = vmatprep.subr.mxu0 0.0
        %4270 = vmatpush1.msra.mxu0 0.0
        %4271 = vmatprep.subr.mxu0 0.0
        %4272 = vmatpush1.msra.mxu0 0.0
        %4273 = vmatprep.subr.mxu0 0.0
        %4274 = vmatpush1.msra.mxu0 0.0
        %4275 = vmatprep.subr.mxu0 0.0
        %4276 = vmatpush1.msra.mxu0 0.0
        %4277 = vmatprep.subr.mxu0 0.0
        %4278 = vmatpush1.msra.mxu0 0.0
        %4279 = vmatprep.subr.mxu0 0.0
        %4280 = vmatpush1.msra.mxu0 0.0
        %4281 = vmatprep.subr.mxu0 0.0
        %4282 = vmatpush1.msra.mxu0 0.0
        %4283 = vmatprep.subr.mxu0 0.0
        %4284 = vmatpush1.msra.mxu0 0.0
        %4285 = vmatprep.subr.mxu0 0.0
        %4286 = vmatpush1.msra.mxu0 0.0
        %4287 = vmatprep.subr.mxu0 0.0
        %4288 = vmatpush1.msra.mxu0 0.0
        %4289 = vmatprep.subr.mxu0 0.0
        %4290 = vmatpush1.msra.mxu0 0.0
        %4291 = vmatprep.subr.mxu0 0.0
        %4292 = vmatpush1.msra.mxu0 0.0
        %4293 = vmatprep.subr.mxu0 0.0
        %4294 = vmatpush1.msra.mxu0 0.0
        %4295 = vmatprep.subr.mxu0 0.0
        %4296 = vmatpush1.msra.mxu0 0.0
        %4297 = vmatprep.subr.mxu0 0.0
        %4298 = vmatpush1.msra.mxu0 0.0
        %4299 = vmatprep.mubr.f32.mxu0 0.0
        %4300 = vmatmul.mubr.f32.gmra.mrb[0].mxu0 %v3765
        %v4301 = vpop.f32.mrb[0].mxu0
        %v4302 = vadd.f32 %v4158, %v4301
        %v4303 = vpop.f32.mrb[0].mxu0
        %v4304 = vadd.f32 %v4162, %v4303
        %4305 = vmatprep.mubr.f32.mxu0 0.0
        %4306 = vmatmul.mubr.f32.gmra.mrb[0].mxu0 %v3766
        %v4307 = vpop.f32.mrb[0].mxu0
        %v4308 = vadd.f32 %v4158, %v4307
        %v4309 = vpop.f32.mrb[0].mxu0
        %v4310 = vadd.f32 %v4162, %v4309
        %4311 = vdwg.mxu0
        %4312 = vmatprep.subr.mxu0 %v3898
        %4313 = vmatpush1.msra.mxu0 %v3897
        %4314 = vmatprep.subr.mxu0 %v3914
        %4315 = vmatpush1.msra.mxu0 %v3913
        %4316 = vmatprep.subr.mxu0 %v3930
        %4317 = vmatpush1.msra.mxu0 %v3929
        %4318 = vmatprep.subr.mxu0 %v3946
        %4319 = vmatpush1.msra.mxu0 %v3945
        %4320 = vmatprep.subr.mxu0 %v3962
        %4321 = vmatpush1.msra.mxu0 %v3961
        %4322 = vmatprep.subr.mxu0 %v3978
        %4323 = vmatpush1.msra.mxu0 %v3977
        %4324 = vmatprep.subr.mxu0 %v3994
        %4325 = vmatpush1.msra.mxu0 %v3993
        %4326 = vmatprep.subr.mxu0 %v4010
        %4327 = vmatpush1.msra.mxu0 %v4009
        %4328 = vmatprep.subr.mxu0 %v4026
        %4329 = vmatpush1.msra.mxu0 %v4025
        %4330 = vmatprep.subr.mxu0 %v4042
        %4331 = vmatpush1.msra.mxu0 %v4041
        %4332 = vmatprep.subr.mxu0 %v4058
        %4333 = vmatpush1.msra.mxu0 %v4057
        %4334 = vmatprep.subr.mxu0 %v4074
        %4335 = vmatpush1.msra.mxu0 %v4073
        %4336 = vmatprep.subr.mxu0 %v4090
        %4337 = vmatpush1.msra.mxu0 %v4089
        %4338 = vmatprep.subr.mxu0 %v4106
        %4339 = vmatpush1.msra.mxu0 %v4105
        %4340 = vmatprep.subr.mxu0 %v4122
        %4341 = vmatpush1.msra.mxu0 %v4121
        %4342 = vmatprep.subr.mxu0 %v4138
        %4343 = vmatpush1.msra.mxu0 %v4137
        %4344 = vmatprep.subr.mxu0 0.0
        %4345 = vmatpush1.msra.mxu0 0.0
        %4346 = vmatprep.subr.mxu0 0.0
        %4347 = vmatpush1.msra.mxu0 0.0
        %4348 = vmatprep.subr.mxu0 0.0
        %4349 = vmatpush1.msra.mxu0 0.0
        %4350 = vmatprep.subr.mxu0 0.0
        %4351 = vmatpush1.msra.mxu0 0.0
        %4352 = vmatprep.subr.mxu0 0.0
        %4353 = vmatpush1.msra.mxu0 0.0
        %4354 = vmatprep.subr.mxu0 0.0
        %4355 = vmatpush1.msra.mxu0 0.0
        %4356 = vmatprep.subr.mxu0 0.0
        %4357 = vmatpush1.msra.mxu0 0.0
        %4358 = vmatprep.subr.mxu0 0.0
        %4359 = vmatpush1.msra.mxu0 0.0
        %4360 = vmatprep.subr.mxu0 0.0
        %4361 = vmatpush1.msra.mxu0 0.0
        %4362 = vmatprep.subr.mxu0 0.0
        %4363 = vmatpush1.msra.mxu0 0.0
        %4364 = vmatprep.subr.mxu0 0.0
        %4365 = vmatpush1.msra.mxu0 0.0
        %4366 = vmatprep.subr.mxu0 0.0
        %4367 = vmatpush1.msra.mxu0 0.0
        %4368 = vmatprep.subr.mxu0 0.0
        %4369 = vmatpush1.msra.mxu0 0.0
        %4370 = vmatprep.subr.mxu0 0.0
        %4371 = vmatpush1.msra.mxu0 0.0
        %4372 = vmatprep.subr.mxu0 0.0
        %4373 = vmatpush1.msra.mxu0 0.0
        %4374 = vmatprep.subr.mxu0 0.0
        %4375 = vmatpush1.msra.mxu0 0.0
        %4376 = vmatprep.mubr.f32.mxu0 0.0
        %4377 = vmatmul.mubr.f32.gmra.mrb[0].mxu0 %v3765
        %v4378 = vpop.f32.mrb[0].mxu0
        %v4379 = vadd.f32 %v4166, %v4378
        %v4380 = vpop.f32.mrb[0].mxu0
        %v4381 = vadd.f32 %v4170, %v4380
        %4382 = vmatprep.mubr.f32.mxu0 0.0
        %4383 = vmatmul.mubr.f32.gmra.mrb[0].mxu0 %v3766
        %v4384 = vpop.f32.mrb[0].mxu0
        %v4385 = vadd.f32 %v4166, %v4384
        %v4386 = vpop.f32.mrb[0].mxu0
        %v4387 = vadd.f32 %v4170, %v4386
        %4388 = vdwg.mxu0
        %4389 = vmatprep.subr.mxu0 %v3900
        %4390 = vmatpush1.msra.mxu0 %v3899
        %4391 = vmatprep.subr.mxu0 %v3916
        %4392 = vmatpush1.msra.mxu0 %v3915
        %4393 = vmatprep.subr.mxu0 %v3932
        %4394 = vmatpush1.msra.mxu0 %v3931
        %4395 = vmatprep.subr.mxu0 %v3948
        %4396 = vmatpush1.msra.mxu0 %v3947
        %4397 = vmatprep.subr.mxu0 %v3964
        %4398 = vmatpush1.msra.mxu0 %v3963
        %4399 = vmatprep.subr.mxu0 %v3980
        %4400 = vmatpush1.msra.mxu0 %v3979
        %4401 = vmatprep.subr.mxu0 %v3996
        %4402 = vmatpush1.msra.mxu0 %v3995
        %4403 = vmatprep.subr.mxu0 %v4012
        %4404 = vmatpush1.msra.mxu0 %v4011
        %4405 = vmatprep.subr.mxu0 %v4028
        %4406 = vmatpush1.msra.mxu0 %v4027
        %4407 = vmatprep.subr.mxu0 %v4044
        %4408 = vmatpush1.msra.mxu0 %v4043
        %4409 = vmatprep.subr.mxu0 %v4060
        %4410 = vmatpush1.msra.mxu0 %v4059
        %4411 = vmatprep.subr.mxu0 %v4076
        %4412 = vmatpush1.msra.mxu0 %v4075
        %4413 = vmatprep.subr.mxu0 %v4092
        %4414 = vmatpush1.msra.mxu0 %v4091
        %4415 = vmatprep.subr.mxu0 %v4108
        %4416 = vmatpush1.msra.mxu0 %v4107
        %4417 = vmatprep.subr.mxu0 %v4124
        %4418 = vmatpush1.msra.mxu0 %v4123
        %4419 = vmatprep.subr.mxu0 %v4140
        %4420 = vmatpush1.msra.mxu0 %v4139
        %4421 = vmatprep.subr.mxu0 0.0
        %4422 = vmatpush1.msra.mxu0 0.0
        %4423 = vmatprep.subr.mxu0 0.0
        %4424 = vmatpush1.msra.mxu0 0.0
        %4425 = vmatprep.subr.mxu0 0.0
        %4426 = vmatpush1.msra.mxu0 0.0
        %4427 = vmatprep.subr.mxu0 0.0
        %4428 = vmatpush1.msra.mxu0 0.0
        %4429 = vmatprep.subr.mxu0 0.0
        %4430 = vmatpush1.msra.mxu0 0.0
        %4431 = vmatprep.subr.mxu0 0.0
        %4432 = vmatpush1.msra.mxu0 0.0
        %4433 = vmatprep.subr.mxu0 0.0
        %4434 = vmatpush1.msra.mxu0 0.0
        %4435 = vmatprep.subr.mxu0 0.0
        %4436 = vmatpush1.msra.mxu0 0.0
        %4437 = vmatprep.subr.mxu0 0.0
        %4438 = vmatpush1.msra.mxu0 0.0
        %4439 = vmatprep.subr.mxu0 0.0
        %4440 = vmatpush1.msra.mxu0 0.0
        %4441 = vmatprep.subr.mxu0 0.0
        %4442 = vmatpush1.msra.mxu0 0.0
        %4443 = vmatprep.subr.mxu0 0.0
        %4444 = vmatpush1.msra.mxu0 0.0
        %4445 = vmatprep.subr.mxu0 0.0
        %4446 = vmatpush1.msra.mxu0 0.0
        %4447 = vmatprep.subr.mxu0 0.0
        %4448 = vmatpush1.msra.mxu0 0.0
        %4449 = vmatprep.subr.mxu0 0.0
        %4450 = vmatpush1.msra.mxu0 0.0
        %4451 = vmatprep.subr.mxu0 0.0
        %4452 = vmatpush1.msra.mxu0 0.0
        %4453 = vmatprep.mubr.f32.mxu0 0.0
        %4454 = vmatmul.mubr.f32.gmra.mrb[0].mxu0 %v3765
        %v4455 = vpop.f32.mrb[0].mxu0
        %v4456 = vadd.f32 %v4174, %v4455
        %v4457 = vpop.f32.mrb[0].mxu0
        %v4458 = vadd.f32 %v4178, %v4457
        %4459 = vmatprep.mubr.f32.mxu0 0.0
        %4460 = vmatmul.mubr.f32.gmra.mrb[0].mxu0 %v3766
        %v4461 = vpop.f32.mrb[0].mxu0
        %v4462 = vadd.f32 %v4174, %v4461
        %v4463 = vpop.f32.mrb[0].mxu0
        %v4464 = vadd.f32 %v4178, %v4463
        %4465 = vdwg.mxu0
        %4466 = vmatprep.subr.mxu0 %v3902
        %4467 = vmatpush1.msra.mxu0 %v3901
        %4468 = vmatprep.subr.mxu0 %v3918
        %4469 = vmatpush1.msra.mxu0 %v3917
        %4470 = vmatprep.subr.mxu0 %v3934
        %4471 = vmatpush1.msra.mxu0 %v3933
        %4472 = vmatprep.subr.mxu0 %v3950
        %4473 = vmatpush1.msra.mxu0 %v3949
        %4474 = vmatprep.subr.mxu0 %v3966
        %4475 = vmatpush1.msra.mxu0 %v3965
        %4476 = vmatprep.subr.mxu0 %v3982
        %4477 = vmatpush1.msra.mxu0 %v3981
        %4478 = vmatprep.subr.mxu0 %v3998
        %4479 = vmatpush1.msra.mxu0 %v3997
        %4480 = vmatprep.subr.mxu0 %v4014
        %4481 = vmatpush1.msra.mxu0 %v4013
        %4482 = vmatprep.subr.mxu0 %v4030
        %4483 = vmatpush1.msra.mxu0 %v4029
        %4484 = vmatprep.subr.mxu0 %v4046
        %4485 = vmatpush1.msra.mxu0 %v4045
        %4486 = vmatprep.subr.mxu0 %v4062
        %4487 = vmatpush1.msra.mxu0 %v4061
        %4488 = vmatprep.subr.mxu0 %v4078
        %4489 = vmatpush1.msra.mxu0 %v4077
        %4490 = vmatprep.subr.mxu0 %v4094
        %4491 = vmatpush1.msra.mxu0 %v4093
        %4492 = vmatprep.subr.mxu0 %v4110
        %4493 = vmatpush1.msra.mxu0 %v4109
        %4494 = vmatprep.subr.mxu0 %v4126
        %4495 = vmatpush1.msra.mxu0 %v4125
        %4496 = vmatprep.subr.mxu0 %v4142
        %4497 = vmatpush1.msra.mxu0 %v4141
        %4498 = vmatprep.subr.mxu0 0.0
        %4499 = vmatpush1.msra.mxu0 0.0
        %4500 = vmatprep.subr.mxu0 0.0
        %4501 = vmatpush1.msra.mxu0 0.0
        %4502 = vmatprep.subr.mxu0 0.0
        %4503 = vmatpush1.msra.mxu0 0.0
        %4504 = vmatprep.subr.mxu0 0.0
        %4505 = vmatpush1.msra.mxu0 0.0
        %4506 = vmatprep.subr.mxu0 0.0
        %4507 = vmatpush1.msra.mxu0 0.0
        %4508 = vmatprep.subr.mxu0 0.0
        %4509 = vmatpush1.msra.mxu0 0.0
        %4510 = vmatprep.subr.mxu0 0.0
        %4511 = vmatpush1.msra.mxu0 0.0
        %4512 = vmatprep.subr.mxu0 0.0
        %4513 = vmatpush1.msra.mxu0 0.0
        %4514 = vmatprep.subr.mxu0 0.0
        %4515 = vmatpush1.msra.mxu0 0.0
        %4516 = vmatprep.subr.mxu0 0.0
        %4517 = vmatpush1.msra.mxu0 0.0
        %4518 = vmatprep.subr.mxu0 0.0
        %4519 = vmatpush1.msra.mxu0 0.0
        %4520 = vmatprep.subr.mxu0 0.0
        %4521 = vmatpush1.msra.mxu0 0.0
        %4522 = vmatprep.subr.mxu0 0.0
        %4523 = vmatpush1.msra.mxu0 0.0
        %4524 = vmatprep.subr.mxu0 0.0
        %4525 = vmatpush1.msra.mxu0 0.0
        %4526 = vmatprep.subr.mxu0 0.0
        %4527 = vmatpush1.msra.mxu0 0.0
        %4528 = vmatprep.subr.mxu0 0.0
        %4529 = vmatpush1.msra.mxu0 0.0
        %4530 = vmatprep.mubr.f32.mxu0 0.0
        %4531 = vmatmul.mubr.f32.gmra.mrb[0].mxu0 %v3765
        %v4532 = vpop.f32.mrb[0].mxu0
        %v4533 = vadd.f32 %v4182, %v4532
        %v4534 = vpop.f32.mrb[0].mxu0
        %v4535 = vadd.f32 %v4186, %v4534
        %4536 = vmatprep.mubr.f32.mxu0 0.0
        %4537 = vmatmul.mubr.f32.gmra.mrb[0].mxu0 %v3766
        %v4538 = vpop.f32.mrb[0].mxu0
        %v4539 = vadd.f32 %v4182, %v4538
        %v4540 = vpop.f32.mrb[0].mxu0
        %v4541 = vadd.f32 %v4186, %v4540
        %4542 = vdwg.mxu0
        %4543 = vmatprep.subr.mxu0 %v3904
        %4544 = vmatpush1.msra.mxu0 %v3903
        %4545 = vmatprep.subr.mxu0 %v3920
        %4546 = vmatpush1.msra.mxu0 %v3919
        %4547 = vmatprep.subr.mxu0 %v3936
        %4548 = vmatpush1.msra.mxu0 %v3935
        %4549 = vmatprep.subr.mxu0 %v3952
        %4550 = vmatpush1.msra.mxu0 %v3951
        %4551 = vmatprep.subr.mxu0 %v3968
        %4552 = vmatpush1.msra.mxu0 %v3967
        %4553 = vmatprep.subr.mxu0 %v3984
        %4554 = vmatpush1.msra.mxu0 %v3983
        %4555 = vmatprep.subr.mxu0 %v4000
        %4556 = vmatpush1.msra.mxu0 %v3999
        %4557 = vmatprep.subr.mxu0 %v4016
        %4558 = vmatpush1.msra.mxu0 %v4015
        %4559 = vmatprep.subr.mxu0 %v4032
        %4560 = vmatpush1.msra.mxu0 %v4031
        %4561 = vmatprep.subr.mxu0 %v4048
        %4562 = vmatpush1.msra.mxu0 %v4047
        %4563 = vmatprep.subr.mxu0 %v4064
        %4564 = vmatpush1.msra.mxu0 %v4063
        %4565 = vmatprep.subr.mxu0 %v4080
        %4566 = vmatpush1.msra.mxu0 %v4079
        %4567 = vmatprep.subr.mxu0 %v4096
        %4568 = vmatpush1.msra.mxu0 %v4095
        %4569 = vmatprep.subr.mxu0 %v4112
        %4570 = vmatpush1.msra.mxu0 %v4111
        %4571 = vmatprep.subr.mxu0 %v4128
        %4572 = vmatpush1.msra.mxu0 %v4127
        %4573 = vmatprep.subr.mxu0 %v4144
        %4574 = vmatpush1.msra.mxu0 %v4143
        %4575 = vmatprep.subr.mxu0 0.0
        %4576 = vmatpush1.msra.mxu0 0.0
        %4577 = vmatprep.subr.mxu0 0.0
        %4578 = vmatpush1.msra.mxu0 0.0
        %4579 = vmatprep.subr.mxu0 0.0
        %4580 = vmatpush1.msra.mxu0 0.0
        %4581 = vmatprep.subr.mxu0 0.0
        %4582 = vmatpush1.msra.mxu0 0.0
        %4583 = vmatprep.subr.mxu0 0.0
        %4584 = vmatpush1.msra.mxu0 0.0
        %4585 = vmatprep.subr.mxu0 0.0
        %4586 = vmatpush1.msra.mxu0 0.0
        %4587 = vmatprep.subr.mxu0 0.0
        %4588 = vmatpush1.msra.mxu0 0.0
        %4589 = vmatprep.subr.mxu0 0.0
        %4590 = vmatpush1.msra.mxu0 0.0
        %4591 = vmatprep.subr.mxu0 0.0
        %4592 = vmatpush1.msra.mxu0 0.0
        %4593 = vmatprep.subr.mxu0 0.0
        %4594 = vmatpush1.msra.mxu0 0.0
        %4595 = vmatprep.subr.mxu0 0.0
        %4596 = vmatpush1.msra.mxu0 0.0
        %4597 = vmatprep.subr.mxu0 0.0
        %4598 = vmatpush1.msra.mxu0 0.0
        %4599 = vmatprep.subr.mxu0 0.0
        %4600 = vmatpush1.msra.mxu0 0.0
        %4601 = vmatprep.subr.mxu0 0.0
        %4602 = vmatpush1.msra.mxu0 0.0
        %4603 = vmatprep.subr.mxu0 0.0
        %4604 = vmatpush1.msra.mxu0 0.0
        %4605 = vmatprep.subr.mxu0 0.0
        %4606 = vmatpush1.msra.mxu0 0.0
        %4607 = vmatprep.mubr.f32.mxu0 0.0
        %4608 = vmatmul.mubr.f32.gmra.mrb[0].mxu0 %v3765
        %v4609 = vpop.f32.mrb[0].mxu0
        %v4610 = vadd.f32 %v4190, %v4609
        %v4611 = vpop.f32.mrb[0].mxu0
        %v4612 = vadd.f32 %v4194, %v4611
        %4613 = vmatprep.mubr.f32.mxu0 0.0
        %4614 = vmatmul.mubr.f32.gmra.mrb[0].mxu0 %v3766
        %v4615 = vpop.f32.mrb[0].mxu0
        %v4616 = vadd.f32 %v4190, %v4615
        %v4617 = vpop.f32.mrb[0].mxu0
        %v4618 = vadd.f32 %v4194, %v4617
        %4619 = vdwg.mxu0
        %4620 = vmatprep.subr.mxu0 %v3906
        %4621 = vmatpush1.msra.mxu0 %v3905
        %4622 = vmatprep.subr.mxu0 %v3922
        %4623 = vmatpush1.msra.mxu0 %v3921
        %4624 = vmatprep.subr.mxu0 %v3938
        %4625 = vmatpush1.msra.mxu0 %v3937
        %4626 = vmatprep.subr.mxu0 %v3954
        %4627 = vmatpush1.msra.mxu0 %v3953
        %4628 = vmatprep.subr.mxu0 %v3970
        %4629 = vmatpush1.msra.mxu0 %v3969
        %4630 = vmatprep.subr.mxu0 %v3986
        %4631 = vmatpush1.msra.mxu0 %v3985
        %4632 = vmatprep.subr.mxu0 %v4002
        %4633 = vmatpush1.msra.mxu0 %v4001
        %4634 = vmatprep.subr.mxu0 %v4018
        %4635 = vmatpush1.msra.mxu0 %v4017
        %4636 = vmatprep.subr.mxu0 %v4034
        %4637 = vmatpush1.msra.mxu0 %v4033
        %4638 = vmatprep.subr.mxu0 %v4050
        %4639 = vmatpush1.msra.mxu0 %v4049
        %4640 = vmatprep.subr.mxu0 %v4066
        %4641 = vmatpush1.msra.mxu0 %v4065
        %4642 = vmatprep.subr.mxu0 %v4082
        %4643 = vmatpush1.msra.mxu0 %v4081
        %4644 = vmatprep.subr.mxu0 %v4098
        %4645 = vmatpush1.msra.mxu0 %v4097
        %4646 = vmatprep.subr.mxu0 %v4114
        %4647 = vmatpush1.msra.mxu0 %v4113
        %4648 = vmatprep.subr.mxu0 %v4130
        %4649 = vmatpush1.msra.mxu0 %v4129
        %4650 = vmatprep.subr.mxu0 %v4146
        %4651 = vmatpush1.msra.mxu0 %v4145
        %4652 = vmatprep.subr.mxu0 0.0
        %4653 = vmatpush1.msra.mxu0 0.0
        %4654 = vmatprep.subr.mxu0 0.0
        %4655 = vmatpush1.msra.mxu0 0.0
        %4656 = vmatprep.subr.mxu0 0.0
        %4657 = vmatpush1.msra.mxu0 0.0
        %4658 = vmatprep.subr.mxu0 0.0
        %4659 = vmatpush1.msra.mxu0 0.0
        %4660 = vmatprep.subr.mxu0 0.0
        %4661 = vmatpush1.msra.mxu0 0.0
        %4662 = vmatprep.subr.mxu0 0.0
        %4663 = vmatpush1.msra.mxu0 0.0
        %4664 = vmatprep.subr.mxu0 0.0
        %4665 = vmatpush1.msra.mxu0 0.0
        %4666 = vmatprep.subr.mxu0 0.0
        %4667 = vmatpush1.msra.mxu0 0.0
        %4668 = vmatprep.subr.mxu0 0.0
        %4669 = vmatpush1.msra.mxu0 0.0
        %4670 = vmatprep.subr.mxu0 0.0
        %4671 = vmatpush1.msra.mxu0 0.0
        %4672 = vmatprep.subr.mxu0 0.0
        %4673 = vmatpush1.msra.mxu0 0.0
        %4674 = vmatprep.subr.mxu0 0.0
        %4675 = vmatpush1.msra.mxu0 0.0
        %4676 = vmatprep.subr.mxu0 0.0
        %4677 = vmatpush1.msra.mxu0 0.0
        %4678 = vmatprep.subr.mxu0 0.0
        %4679 = vmatpush1.msra.mxu0 0.0
        %4680 = vmatprep.subr.mxu0 0.0
        %4681 = vmatpush1.msra.mxu0 0.0
        %4682 = vmatprep.subr.mxu0 0.0
        %4683 = vmatpush1.msra.mxu0 0.0
        %4684 = vmatprep.mubr.f32.mxu0 0.0
        %4685 = vmatmul.mubr.f32.gmra.mrb[0].mxu0 %v3765
        %v4686 = vpop.f32.mrb[0].mxu0
        %v4687 = vadd.f32 %v4198, %v4686
        %v4688 = vpop.f32.mrb[0].mxu0
        %v4689 = vadd.f32 %v4202, %v4688
        %4690 = vmatprep.mubr.f32.mxu0 0.0
        %4691 = vmatmul.mubr.f32.gmra.mrb[0].mxu0 %v3766
        %v4692 = vpop.f32.mrb[0].mxu0
        %v4693 = vadd.f32 %v4198, %v4692
        %v4694 = vpop.f32.mrb[0].mxu0
        %v4695 = vadd.f32 %v4202, %v4694
        %4696 = vdwg.mxu0
        %4697 = vmatprep.subr.mxu0 %v3908
        %4698 = vmatpush1.msra.mxu0 %v3907
        %4699 = vmatprep.subr.mxu0 %v3924
        %4700 = vmatpush1.msra.mxu0 %v3923
        %4701 = vmatprep.subr.mxu0 %v3940
        %4702 = vmatpush1.msra.mxu0 %v3939
        %4703 = vmatprep.subr.mxu0 %v3956
        %4704 = vmatpush1.msra.mxu0 %v3955
        %4705 = vmatprep.subr.mxu0 %v3972
        %4706 = vmatpush1.msra.mxu0 %v3971
        %4707 = vmatprep.subr.mxu0 %v3988
        %4708 = vmatpush1.msra.mxu0 %v3987
        %4709 = vmatprep.subr.mxu0 %v4004
        %4710 = vmatpush1.msra.mxu0 %v4003
        %4711 = vmatprep.subr.mxu0 %v4020
        %4712 = vmatpush1.msra.mxu0 %v4019
        %4713 = vmatprep.subr.mxu0 %v4036
        %4714 = vmatpush1.msra.mxu0 %v4035
        %4715 = vmatprep.subr.mxu0 %v4052
        %4716 = vmatpush1.msra.mxu0 %v4051
        %4717 = vmatprep.subr.mxu0 %v4068
        %4718 = vmatpush1.msra.mxu0 %v4067
        %4719 = vmatprep.subr.mxu0 %v4084
        %4720 = vmatpush1.msra.mxu0 %v4083
        %4721 = vmatprep.subr.mxu0 %v4100
        %4722 = vmatpush1.msra.mxu0 %v4099
        %4723 = vmatprep.subr.mxu0 %v4116
        %4724 = vmatpush1.msra.mxu0 %v4115
        %4725 = vmatprep.subr.mxu0 %v4132
        %4726 = vmatpush1.msra.mxu0 %v4131
        %4727 = vmatprep.subr.mxu0 %v4148
        %4728 = vmatpush1.msra.mxu0 %v4147
        %4729 = vmatprep.subr.mxu0 0.0
        %4730 = vmatpush1.msra.mxu0 0.0
        %4731 = vmatprep.subr.mxu0 0.0
        %4732 = vmatpush1.msra.mxu0 0.0
        %4733 = vmatprep.subr.mxu0 0.0
        %4734 = vmatpush1.msra.mxu0 0.0
        %4735 = vmatprep.subr.mxu0 0.0
        %4736 = vmatpush1.msra.mxu0 0.0
        %4737 = vmatprep.subr.mxu0 0.0
        %4738 = vmatpush1.msra.mxu0 0.0
        %4739 = vmatprep.subr.mxu0 0.0
        %4740 = vmatpush1.msra.mxu0 0.0
        %4741 = vmatprep.subr.mxu0 0.0
        %4742 = vmatpush1.msra.mxu0 0.0
        %4743 = vmatprep.subr.mxu0 0.0
        %4744 = vmatpush1.msra.mxu0 0.0
        %4745 = vmatprep.subr.mxu0 0.0
        %4746 = vmatpush1.msra.mxu0 0.0
        %4747 = vmatprep.subr.mxu0 0.0
        %4748 = vmatpush1.msra.mxu0 0.0
        %4749 = vmatprep.subr.mxu0 0.0
        %4750 = vmatpush1.msra.mxu0 0.0
        %4751 = vmatprep.subr.mxu0 0.0
        %4752 = vmatpush1.msra.mxu0 0.0
        %4753 = vmatprep.subr.mxu0 0.0
        %4754 = vmatpush1.msra.mxu0 0.0
        %4755 = vmatprep.subr.mxu0 0.0
        %4756 = vmatpush1.msra.mxu0 0.0
        %4757 = vmatprep.subr.mxu0 0.0
        %4758 = vmatpush1.msra.mxu0 0.0
        %4759 = vmatprep.subr.mxu0 0.0
        %4760 = vmatpush1.msra.mxu0 0.0
        %4761 = vmatprep.mubr.f32.mxu0 0.0
        %4762 = vmatmul.mubr.f32.gmra.mrb[0].mxu0 %v3765
        %v4763 = vpop.f32.mrb[0].mxu0
        %v4764 = vadd.f32 %v4206, %v4763
        %v4765 = vpop.f32.mrb[0].mxu0
        %v4766 = vadd.f32 %v4210, %v4765
        %4767 = vmatprep.mubr.f32.mxu0 0.0
        %4768 = vmatmul.mubr.f32.gmra.mrb[0].mxu0 %v3766
        %v4769 = vpop.f32.mrb[0].mxu0
        %v4770 = vadd.f32 %v4206, %v4769
        %v4771 = vpop.f32.mrb[0].mxu0
        %v4772 = vadd.f32 %v4210, %v4771
        %4773 = vdwg.mxu0
        %4774 = vmatprep.subr.mxu0 %v3910
        %4775 = vmatpush1.msra.mxu0 %v3909
        %4776 = vmatprep.subr.mxu0 %v3926
        %4777 = vmatpush1.msra.mxu0 %v3925
        %4778 = vmatprep.subr.mxu0 %v3942
        %4779 = vmatpush1.msra.mxu0 %v3941
        %4780 = vmatprep.subr.mxu0 %v3958
        %4781 = vmatpush1.msra.mxu0 %v3957
        %4782 = vmatprep.subr.mxu0 %v3974
        %4783 = vmatpush1.msra.mxu0 %v3973
        %4784 = vmatprep.subr.mxu0 %v3990
        %4785 = vmatpush1.msra.mxu0 %v3989
        %4786 = vmatprep.subr.mxu0 %v4006
        %4787 = vmatpush1.msra.mxu0 %v4005
        %4788 = vmatprep.subr.mxu0 %v4022
        %4789 = vmatpush1.msra.mxu0 %v4021
        %4790 = vmatprep.subr.mxu0 %v4038
        %4791 = vmatpush1.msra.mxu0 %v4037
        %4792 = vmatprep.subr.mxu0 %v4054
        %4793 = vmatpush1.msra.mxu0 %v4053
        %4794 = vmatprep.subr.mxu0 %v4070
        %4795 = vmatpush1.msra.mxu0 %v4069
        %4796 = vmatprep.subr.mxu0 %v4086
        %4797 = vmatpush1.msra.mxu0 %v4085
        %4798 = vmatprep.subr.mxu0 %v4102
        %4799 = vmatpush1.msra.mxu0 %v4101
        %4800 = vmatprep.subr.mxu0 %v4118
        %4801 = vmatpush1.msra.mxu0 %v4117
        %4802 = vmatprep.subr.mxu0 %v4134
        %4803 = vmatpush1.msra.mxu0 %v4133
        %4804 = vmatprep.subr.mxu0 %v4150
        %4805 = vmatpush1.msra.mxu0 %v4149
        %4806 = vmatprep.subr.mxu0 0.0
        %4807 = vmatpush1.msra.mxu0 0.0
        %4808 = vmatprep.subr.mxu0 0.0
        %4809 = vmatpush1.msra.mxu0 0.0
        %4810 = vmatprep.subr.mxu0 0.0
        %4811 = vmatpush1.msra.mxu0 0.0
        %4812 = vmatprep.subr.mxu0 0.0
        %4813 = vmatpush1.msra.mxu0 0.0
        %4814 = vmatprep.subr.mxu0 0.0
        %4815 = vmatpush1.msra.mxu0 0.0
        %4816 = vmatprep.subr.mxu0 0.0
        %4817 = vmatpush1.msra.mxu0 0.0
        %4818 = vmatprep.subr.mxu0 0.0
        %4819 = vmatpush1.msra.mxu0 0.0
        %4820 = vmatprep.subr.mxu0 0.0
        %4821 = vmatpush1.msra.mxu0 0.0
        %4822 = vmatprep.subr.mxu0 0.0
        %4823 = vmatpush1.msra.mxu0 0.0
        %4824 = vmatprep.subr.mxu0 0.0
        %4825 = vmatpush1.msra.mxu0 0.0
        %4826 = vmatprep.subr.mxu0 0.0
        %4827 = vmatpush1.msra.mxu0 0.0
        %4828 = vmatprep.subr.mxu0 0.0
        %4829 = vmatpush1.msra.mxu0 0.0
        %4830 = vmatprep.subr.mxu0 0.0
        %4831 = vmatpush1.msra.mxu0 0.0
        %4832 = vmatprep.subr.mxu0 0.0
        %4833 = vmatpush1.msra.mxu0 0.0
        %4834 = vmatprep.subr.mxu0 0.0
        %4835 = vmatpush1.msra.mxu0 0.0
        %4836 = vmatprep.subr.mxu0 0.0
        %4837 = vmatpush1.msra.mxu0 0.0
        %4838 = vmatprep.mubr.f32.mxu0 0.0
        %4839 = vmatmul.mubr.f32.gmra.mrb[0].mxu0 %v3765
        %v4840 = vpop.f32.mrb[0].mxu0
        %v4841 = vadd.f32 %v4214, %v4840
        %v4842 = vpop.f32.mrb[0].mxu0
        %v4843 = vadd.f32 %v4218, %v4842
        %4844 = vmatprep.mubr.f32.mxu0 0.0
        %4845 = vmatmul.mubr.f32.gmra.mrb[0].mxu0 %v3766
        %v4846 = vpop.f32.mrb[0].mxu0
        %v4847 = vadd.f32 %v4214, %v4846
        %v4848 = vpop.f32.mrb[0].mxu0
        %v4849 = vadd.f32 %v4218, %v4848
        %4850 = vdwg.mxu0
        %v4851 = vmax.f32 %v4302, 0.0
        %v4852 = vmax.f32 %v4304, 0.0
        %v4853 = vmax.f32 %v4379, 0.0
        %v4854 = vmax.f32 %v4381, 0.0
        %v4855 = vmax.f32 %v4456, 0.0
        %v4856 = vmax.f32 %v4458, 0.0
        %v4857 = vmax.f32 %v4533, 0.0
        %v4858 = vmax.f32 %v4535, 0.0
        %v4859 = vmax.f32 %v4610, 0.0
        %v4860 = vmax.f32 %v4612, 0.0
        %v4861 = vmax.f32 %v4687, 0.0
        %v4862 = vmax.f32 %v4689, 0.0
        %v4863 = vmax.f32 %v4764, 0.0
        %v4864 = vmax.f32 %v4766, 0.0
        %v4865 = vmax.f32 %v4841, 0.0
        %v4866 = vmax.f32 %v4843, 0.0
        %v4867 = vmax.f32 %v4308, 0.0
        %v4868 = vmax.f32 %v4310, 0.0
        %v4869 = vmax.f32 %v4385, 0.0
        %v4870 = vmax.f32 %v4387, 0.0
        %v4871 = vmax.f32 %v4462, 0.0
        %v4872 = vmax.f32 %v4464, 0.0
        %v4873 = vmax.f32 %v4539, 0.0
        %v4874 = vmax.f32 %v4541, 0.0
        %v4875 = vmax.f32 %v4616, 0.0
        %v4876 = vmax.f32 %v4618, 0.0
        %v4877 = vmax.f32 %v4693, 0.0
        %v4878 = vmax.f32 %v4695, 0.0
        %v4879 = vmax.f32 %v4770, 0.0
        %v4880 = vmax.f32 %v4772, 0.0
        %v4881 = vmax.f32 %v4847, 0.0
        %v4882 = vmax.f32 %v4849, 0.0
        %v4883 = vld [vmem:[%s893] sm:$0xf]
        %v4884 = vld [vmem:[%s893 + $0x4] sm:$0xf]
        %v4885 = vld [vmem:[%s893 + $0x8] sm:$0xf]
        %v4886 = vld [vmem:[%s893 + $0xc] sm:$0xf]
        %v4887 = vld [vmem:[%s893 + $0x10] sm:$0xf]
        %v4888 = vld [vmem:[%s893 + $0x14] sm:$0xf]
        %v4889 = vld [vmem:[%s893 + $0x18] sm:$0xf]
        %v4890 = vld [vmem:[%s893 + $0x1c] sm:$0xf]
        %v4891 = vld [vmem:[%s893 + $0x20] sm:$0xf]
        %v4892 = vld [vmem:[%s893 + $0x24] sm:$0xf]
        %v4893 = vld [vmem:[%s893 + $0x28] sm:$0xf]
        %v4894 = vld [vmem:[%s893 + $0x2c] sm:$0xf]
        %v4895 = vld [vmem:[%s893 + $0x30] sm:$0xf]
        %v4896 = vld [vmem:[%s893 + $0x34] sm:$0xf]
        %v4897 = vld [vmem:[%s893 + $0x38] sm:$0xf]
        %v4898 = vld [vmem:[%s893 + $0x3c] sm:$0xf]
        %v4899 = vld [vmem:[%s893 + $0x40] sm:$0xf]
        %v4900 = vld [vmem:[%s893 + $0x44] sm:$0xf]
        %v4901 = vld [vmem:[%s893 + $0x48] sm:$0xf]
        %v4902 = vld [vmem:[%s893 + $0x4c] sm:$0xf]
        %v4903 = vld [vmem:[%s893 + $0x50] sm:$0xf]
        %v4904 = vld [vmem:[%s893 + $0x54] sm:$0xf]
        %v4905 = vld [vmem:[%s893 + $0x58] sm:$0xf]
        %v4906 = vld [vmem:[%s893 + $0x5c] sm:$0xf]
        %v4907 = vld [vmem:[%s893 + $0x60] sm:$0xf]
        %v4908 = vld [vmem:[%s893 + $0x64] sm:$0xf]
        %v4909 = vld [vmem:[%s893 + $0x68] sm:$0xf]
        %v4910 = vld [vmem:[%s893 + $0x6c] sm:$0xf]
        %v4911 = vld [vmem:[%s893 + $0x70] sm:$0xf]
        %v4912 = vld [vmem:[%s893 + $0x74] sm:$0xf]
        %v4913 = vld [vmem:[%s893 + $0x78] sm:$0xf]
        %v4914 = vld [vmem:[%s893 + $0x7c] sm:$0xf]
        %v4915 = vld [vmem:[%s893 + $0x80] sm:$0xf]
        %v4916 = vld [vmem:[%s893 + $0x84] sm:$0xf]
        %v4917 = vld [vmem:[%s893 + $0x88] sm:$0xf]
        %v4918 = vld [vmem:[%s893 + $0x8c] sm:$0xf]
        %v4919 = vld [vmem:[%s893 + $0x90] sm:$0xf]
        %v4920 = vld [vmem:[%s893 + $0x94] sm:$0xf]
        %v4921 = vld [vmem:[%s893 + $0x98] sm:$0xf]
        %v4922 = vld [vmem:[%s893 + $0x9c] sm:$0xf]
        %v4923 = vld [vmem:[%s893 + $0xa0] sm:$0xf]
        %v4924 = vld [vmem:[%s893 + $0xa4] sm:$0xf]
        %v4925 = vld [vmem:[%s893 + $0xa8] sm:$0xf]
        %v4926 = vld [vmem:[%s893 + $0xac] sm:$0xf]
        %v4927 = vld [vmem:[%s893 + $0xb0] sm:$0xf]
        %v4928 = vld [vmem:[%s893 + $0xb4] sm:$0xf]
        %v4929 = vld [vmem:[%s893 + $0xb8] sm:$0xf]
        %v4930 = vld [vmem:[%s893 + $0xbc] sm:$0xf]
        %v4931 = vld [vmem:[%s893 + $0xc0] sm:$0xf]
        %v4932 = vld [vmem:[%s893 + $0xc4] sm:$0xf]
        %v4933 = vld [vmem:[%s893 + $0xc8] sm:$0xf]
        %v4934 = vld [vmem:[%s893 + $0xcc] sm:$0xf]
        %v4935 = vld [vmem:[%s893 + $0xd0] sm:$0xf]
        %v4936 = vld [vmem:[%s893 + $0xd4] sm:$0xf]
        %v4937 = vld [vmem:[%s893 + $0xd8] sm:$0xf]
        %v4938 = vld [vmem:[%s893 + $0xdc] sm:$0xf]
        %v4939 = vld [vmem:[%s893 + $0xe0] sm:$0xf]
        %v4940 = vld [vmem:[%s893 + $0xe4] sm:$0xf]
        %v4941 = vld [vmem:[%s893 + $0xe8] sm:$0xf]
        %v4942 = vld [vmem:[%s893 + $0xec] sm:$0xf]
        %v4943 = vld [vmem:[%s893 + $0xf0] sm:$0xf]
        %v4944 = vld [vmem:[%s893 + $0xf4] sm:$0xf]
        %v4945 = vld [vmem:[%s893 + $0xf8] sm:$0xf]
        %v4946 = vld [vmem:[%s893 + $0xfc] sm:$0xf]
        %v4947 = vld [vmem:[%s893 + $0x100] sm:$0xf]
        %v4948 = vld [vmem:[%s893 + $0x104] sm:$0xf]
        %v4949 = vld [vmem:[%s893 + $0x108] sm:$0xf]
        %v4950 = vld [vmem:[%s893 + $0x10c] sm:$0xf]
        %v4951 = vld [vmem:[%s893 + $0x110] sm:$0xf]
        %v4952 = vld [vmem:[%s893 + $0x114] sm:$0xf]
        %v4953 = vld [vmem:[%s893 + $0x118] sm:$0xf]
        %v4954 = vld [vmem:[%s893 + $0x11c] sm:$0xf]
        %v4955 = vld [vmem:[%s893 + $0x120] sm:$0xf]
        %v4956 = vld [vmem:[%s893 + $0x124] sm:$0xf]
        %v4957 = vld [vmem:[%s893 + $0x128] sm:$0xf]
        %v4958 = vld [vmem:[%s893 + $0x12c] sm:$0xf]
        %v4959 = vld [vmem:[%s893 + $0x130] sm:$0xf]
        %v4960 = vld [vmem:[%s893 + $0x134] sm:$0xf]
        %v4961 = vld [vmem:[%s893 + $0x138] sm:$0xf]
        %v4962 = vld [vmem:[%s893 + $0x13c] sm:$0xf]
        %v4963 = vld [vmem:[%s893 + $0x140] sm:$0xf]
        %v4964 = vld [vmem:[%s893 + $0x144] sm:$0xf]
        %v4965 = vld [vmem:[%s893 + $0x148] sm:$0xf]
        %v4966 = vld [vmem:[%s893 + $0x14c] sm:$0xf]
        %v4967 = vld [vmem:[%s893 + $0x150] sm:$0xf]
        %v4968 = vld [vmem:[%s893 + $0x154] sm:$0xf]
        %v4969 = vld [vmem:[%s893 + $0x158] sm:$0xf]
        %v4970 = vld [vmem:[%s893 + $0x15c] sm:$0xf]
        %v4971 = vld [vmem:[%s893 + $0x160] sm:$0xf]
        %v4972 = vld [vmem:[%s893 + $0x164] sm:$0xf]
        %v4973 = vld [vmem:[%s893 + $0x168] sm:$0xf]
        %v4974 = vld [vmem:[%s893 + $0x16c] sm:$0xf]
        %v4975 = vld [vmem:[%s893 + $0x170] sm:$0xf]
        %v4976 = vld [vmem:[%s893 + $0x174] sm:$0xf]
        %v4977 = vld [vmem:[%s893 + $0x178] sm:$0xf]
        %v4978 = vld [vmem:[%s893 + $0x17c] sm:$0xf]
        %v4979 = vld [vmem:[%s893 + $0x180] sm:$0xf]
        %v4980 = vld [vmem:[%s893 + $0x184] sm:$0xf]
        %v4981 = vld [vmem:[%s893 + $0x188] sm:$0xf]
        %v4982 = vld [vmem:[%s893 + $0x18c] sm:$0xf]
        %v4983 = vld [vmem:[%s893 + $0x190] sm:$0xf]
        %v4984 = vld [vmem:[%s893 + $0x194] sm:$0xf]
        %v4985 = vld [vmem:[%s893 + $0x198] sm:$0xf]
        %v4986 = vld [vmem:[%s893 + $0x19c] sm:$0xf]
        %v4987 = vld [vmem:[%s893 + $0x1a0] sm:$0xf]
        %v4988 = vld [vmem:[%s893 + $0x1a4] sm:$0xf]
        %v4989 = vld [vmem:[%s893 + $0x1a8] sm:$0xf]
        %v4990 = vld [vmem:[%s893 + $0x1ac] sm:$0xf]
        %v4991 = vld [vmem:[%s893 + $0x1b0] sm:$0xf]
        %v4992 = vld [vmem:[%s893 + $0x1b4] sm:$0xf]
        %v4993 = vld [vmem:[%s893 + $0x1b8] sm:$0xf]
        %v4994 = vld [vmem:[%s893 + $0x1bc] sm:$0xf]
        %v4995 = vld [vmem:[%s893 + $0x1c0] sm:$0xf]
        %v4996 = vld [vmem:[%s893 + $0x1c4] sm:$0xf]
        %v4997 = vld [vmem:[%s893 + $0x1c8] sm:$0xf]
        %v4998 = vld [vmem:[%s893 + $0x1cc] sm:$0xf]
        %v4999 = vld [vmem:[%s893 + $0x1d0] sm:$0xf]
        %v5000 = vld [vmem:[%s893 + $0x1d4] sm:$0xf]
        %v5001 = vld [vmem:[%s893 + $0x1d8] sm:$0xf]
        %v5002 = vld [vmem:[%s893 + $0x1dc] sm:$0xf]
        %v5003 = vld [vmem:[%s893 + $0x1e0] sm:$0xf]
        %v5004 = vld [vmem:[%s893 + $0x1e4] sm:$0xf]
        %v5005 = vld [vmem:[%s893 + $0x1e8] sm:$0xf]
        %v5006 = vld [vmem:[%s893 + $0x1ec] sm:$0xf]
        %v5007 = vld [vmem:[%s893 + $0x1f0] sm:$0xf]
        %v5008 = vld [vmem:[%s893 + $0x1f4] sm:$0xf]
        %v5009 = vld [vmem:[%s893 + $0x1f8] sm:$0xf]
        %v5010 = vld [vmem:[%s893 + $0x1fc] sm:$0xf]
        %v5011 = vld [vmem:[%s893 + $0x200] sm:$0xf]
        %v5012 = vld [vmem:[%s893 + $0x204] sm:$0xf]
        %v5013 = vld [vmem:[%s893 + $0x208] sm:$0xf]
        %v5014 = vld [vmem:[%s893 + $0x20c] sm:$0xf]
        %v5015 = vld [vmem:[%s893 + $0x210] sm:$0xf]
        %v5016 = vld [vmem:[%s893 + $0x214] sm:$0xf]
        %v5017 = vld [vmem:[%s893 + $0x218] sm:$0xf]
        %v5018 = vld [vmem:[%s893 + $0x21c] sm:$0xf]
        %v5019 = vld [vmem:[%s893 + $0x220] sm:$0xf]
        %v5020 = vld [vmem:[%s893 + $0x224] sm:$0xf]
        %v5021 = vld [vmem:[%s893 + $0x228] sm:$0xf]
        %v5022 = vld [vmem:[%s893 + $0x22c] sm:$0xf]
        %v5023 = vld [vmem:[%s893 + $0x230] sm:$0xf]
        %v5024 = vld [vmem:[%s893 + $0x234] sm:$0xf]
        %v5025 = vld [vmem:[%s893 + $0x238] sm:$0xf]
        %v5026 = vld [vmem:[%s893 + $0x23c] sm:$0xf]
        %v5027 = vld [vmem:[%s893 + $0x240] sm:$0xf]
        %v5028 = vld [vmem:[%s893 + $0x244] sm:$0xf]
        %v5029 = vld [vmem:[%s893 + $0x248] sm:$0xf]
        %v5030 = vld [vmem:[%s893 + $0x24c] sm:$0xf]
        %v5031 = vld [vmem:[%s893 + $0x250] sm:$0xf]
        %v5032 = vld [vmem:[%s893 + $0x254] sm:$0xf]
        %v5033 = vld [vmem:[%s893 + $0x258] sm:$0xf]
        %v5034 = vld [vmem:[%s893 + $0x25c] sm:$0xf]
        %v5035 = vld [vmem:[%s893 + $0x260] sm:$0xf]
        %v5036 = vld [vmem:[%s893 + $0x264] sm:$0xf]
        %v5037 = vld [vmem:[%s893 + $0x268] sm:$0xf]
        %v5038 = vld [vmem:[%s893 + $0x26c] sm:$0xf]
        %v5039 = vld [vmem:[%s893 + $0x270] sm:$0xf]
        %v5040 = vld [vmem:[%s893 + $0x274] sm:$0xf]
        %v5041 = vld [vmem:[%s893 + $0x278] sm:$0xf]
        %v5042 = vld [vmem:[%s893 + $0x27c] sm:$0xf]
        %v5043 = vld [vmem:[%s893 + $0x280] sm:$0xf]
        %v5044 = vld [vmem:[%s893 + $0x284] sm:$0xf]
        %v5045 = vld [vmem:[%s893 + $0x288] sm:$0xf]
        %v5046 = vld [vmem:[%s893 + $0x28c] sm:$0xf]
        %v5047 = vld [vmem:[%s893 + $0x290] sm:$0xf]
        %v5048 = vld [vmem:[%s893 + $0x294] sm:$0xf]
        %v5049 = vld [vmem:[%s893 + $0x298] sm:$0xf]
        %v5050 = vld [vmem:[%s893 + $0x29c] sm:$0xf]
        %v5051 = vld [vmem:[%s893 + $0x2a0] sm:$0xf]
        %v5052 = vld [vmem:[%s893 + $0x2a4] sm:$0xf]
        %v5053 = vld [vmem:[%s893 + $0x2a8] sm:$0xf]
        %v5054 = vld [vmem:[%s893 + $0x2ac] sm:$0xf]
        %v5055 = vld [vmem:[%s893 + $0x2b0] sm:$0xf]
        %v5056 = vld [vmem:[%s893 + $0x2b4] sm:$0xf]
        %v5057 = vld [vmem:[%s893 + $0x2b8] sm:$0xf]
        %v5058 = vld [vmem:[%s893 + $0x2bc] sm:$0xf]
        %v5059 = vld [vmem:[%s893 + $0x2c0] sm:$0xf]
        %v5060 = vld [vmem:[%s893 + $0x2c4] sm:$0xf]
        %v5061 = vld [vmem:[%s893 + $0x2c8] sm:$0xf]
        %v5062 = vld [vmem:[%s893 + $0x2cc] sm:$0xf]
        %v5063 = vld [vmem:[%s893 + $0x2d0] sm:$0xf]
        %v5064 = vld [vmem:[%s893 + $0x2d4] sm:$0xf]
        %v5065 = vld [vmem:[%s893 + $0x2d8] sm:$0xf]
        %v5066 = vld [vmem:[%s893 + $0x2dc] sm:$0xf]
        %v5067 = vld [vmem:[%s893 + $0x2e0] sm:$0xf]
        %v5068 = vld [vmem:[%s893 + $0x2e4] sm:$0xf]
        %v5069 = vld [vmem:[%s893 + $0x2e8] sm:$0xf]
        %v5070 = vld [vmem:[%s893 + $0x2ec] sm:$0xf]
        %v5071 = vld [vmem:[%s893 + $0x2f0] sm:$0xf]
        %v5072 = vld [vmem:[%s893 + $0x2f4] sm:$0xf]
        %v5073 = vld [vmem:[%s893 + $0x2f8] sm:$0xf]
        %v5074 = vld [vmem:[%s893 + $0x2fc] sm:$0xf]
        %v5075 = vld [vmem:[%s893 + $0x300] sm:$0xf]
        %v5076 = vld [vmem:[%s893 + $0x304] sm:$0xf]
        %v5077 = vld [vmem:[%s893 + $0x308] sm:$0xf]
        %v5078 = vld [vmem:[%s893 + $0x30c] sm:$0xf]
        %v5079 = vld [vmem:[%s893 + $0x310] sm:$0xf]
        %v5080 = vld [vmem:[%s893 + $0x314] sm:$0xf]
        %v5081 = vld [vmem:[%s893 + $0x318] sm:$0xf]
        %v5082 = vld [vmem:[%s893 + $0x31c] sm:$0xf]
        %v5083 = vld [vmem:[%s893 + $0x320] sm:$0xf]
        %v5084 = vld [vmem:[%s893 + $0x324] sm:$0xf]
        %v5085 = vld [vmem:[%s893 + $0x328] sm:$0xf]
        %v5086 = vld [vmem:[%s893 + $0x32c] sm:$0xf]
        %v5087 = vld [vmem:[%s893 + $0x330] sm:$0xf]
        %v5088 = vld [vmem:[%s893 + $0x334] sm:$0xf]
        %v5089 = vld [vmem:[%s893 + $0x338] sm:$0xf]
        %v5090 = vld [vmem:[%s893 + $0x33c] sm:$0xf]
        %v5091 = vld [vmem:[%s893 + $0x340] sm:$0xf]
        %v5092 = vld [vmem:[%s893 + $0x344] sm:$0xf]
        %v5093 = vld [vmem:[%s893 + $0x348] sm:$0xf]
        %v5094 = vld [vmem:[%s893 + $0x34c] sm:$0xf]
        %v5095 = vld [vmem:[%s893 + $0x350] sm:$0xf]
        %v5096 = vld [vmem:[%s893 + $0x354] sm:$0xf]
        %v5097 = vld [vmem:[%s893 + $0x358] sm:$0xf]
        %v5098 = vld [vmem:[%s893 + $0x35c] sm:$0xf]
        %v5099 = vld [vmem:[%s893 + $0x360] sm:$0xf]
        %v5100 = vld [vmem:[%s893 + $0x364] sm:$0xf]
        %v5101 = vld [vmem:[%s893 + $0x368] sm:$0xf]
        %v5102 = vld [vmem:[%s893 + $0x36c] sm:$0xf]
        %v5103 = vld [vmem:[%s893 + $0x370] sm:$0xf]
        %v5104 = vld [vmem:[%s893 + $0x374] sm:$0xf]
        %v5105 = vld [vmem:[%s893 + $0x378] sm:$0xf]
        %v5106 = vld [vmem:[%s893 + $0x37c] sm:$0xf]
        %v5107 = vld [vmem:[%s893 + $0x380] sm:$0xf]
        %v5108 = vld [vmem:[%s893 + $0x384] sm:$0xf]
        %v5109 = vld [vmem:[%s893 + $0x388] sm:$0xf]
        %v5110 = vld [vmem:[%s893 + $0x38c] sm:$0xf]
        %v5111 = vld [vmem:[%s893 + $0x390] sm:$0xf]
        %v5112 = vld [vmem:[%s893 + $0x394] sm:$0xf]
        %v5113 = vld [vmem:[%s893 + $0x398] sm:$0xf]
        %v5114 = vld [vmem:[%s893 + $0x39c] sm:$0xf]
        %v5115 = vld [vmem:[%s893 + $0x3a0] sm:$0xf]
        %v5116 = vld [vmem:[%s893 + $0x3a4] sm:$0xf]
        %v5117 = vld [vmem:[%s893 + $0x3a8] sm:$0xf]
        %v5118 = vld [vmem:[%s893 + $0x3ac] sm:$0xf]
        %v5119 = vld [vmem:[%s893 + $0x3b0] sm:$0xf]
        %v5120 = vld [vmem:[%s893 + $0x3b4] sm:$0xf]
        %v5121 = vld [vmem:[%s893 + $0x3b8] sm:$0xf]
        %v5122 = vld [vmem:[%s893 + $0x3bc] sm:$0xf]
        %v5123 = vld [vmem:[%s893 + $0x3c0] sm:$0xf]
        %v5124 = vld [vmem:[%s893 + $0x3c4] sm:$0xf]
        %v5125 = vld [vmem:[%s893 + $0x3c8] sm:$0xf]
        %v5126 = vld [vmem:[%s893 + $0x3cc] sm:$0xf]
        %v5127 = vld [vmem:[%s893 + $0x3d0] sm:$0xf]
        %v5128 = vld [vmem:[%s893 + $0x3d4] sm:$0xf]
        %v5129 = vld [vmem:[%s893 + $0x3d8] sm:$0xf]
        %v5130 = vld [vmem:[%s893 + $0x3dc] sm:$0xf]
        %v5131 = vld [vmem:[%s893 + $0x3e0] sm:$0xf]
        %v5132 = vld [vmem:[%s893 + $0x3e4] sm:$0xf]
        %v5133 = vld [vmem:[%s893 + $0x3e8] sm:$0xf]
        %v5134 = vld [vmem:[%s893 + $0x3ec] sm:$0xf]
        %v5135 = vld [vmem:[%s893 + $0x3f0] sm:$0xf]
        %v5136 = vld [vmem:[%s893 + $0x3f4] sm:$0xf]
        %v5137 = vld [vmem:[%s893 + $0x3f8] sm:$0xf]
        %v5138 = vld [vmem:[%s893 + $0x3fc] sm:$0xf]
        %v5139 = vunpack.c.l.bf16 %v4883
        %v5140 = vunpack.c.l.bf16 %v4884
        %v5141 = vunpack.c.l.bf16 %v4885
        %v5142 = vunpack.c.l.bf16 %v4886
        %v5143 = vunpack.c.l.bf16 %v4887
        %v5144 = vunpack.c.l.bf16 %v4888
        %v5145 = vunpack.c.l.bf16 %v4889
        %v5146 = vunpack.c.l.bf16 %v4890
        %v5147 = vunpack.c.l.bf16 %v4891
        %v5148 = vunpack.c.l.bf16 %v4892
        %v5149 = vunpack.c.l.bf16 %v4893
        %v5150 = vunpack.c.l.bf16 %v4894
        %v5151 = vunpack.c.l.bf16 %v4895
        %v5152 = vunpack.c.l.bf16 %v4896
        %v5153 = vunpack.c.l.bf16 %v4897
        %v5154 = vunpack.c.l.bf16 %v4898
        %v5155 = vunpack.c.l.bf16 %v4899
        %v5156 = vunpack.c.l.bf16 %v4900
        %v5157 = vunpack.c.l.bf16 %v4901
        %v5158 = vunpack.c.l.bf16 %v4902
        %v5159 = vunpack.c.l.bf16 %v4903
        %v5160 = vunpack.c.l.bf16 %v4904
        %v5161 = vunpack.c.l.bf16 %v4905
        %v5162 = vunpack.c.l.bf16 %v4906
        %v5163 = vunpack.c.l.bf16 %v4907
        %v5164 = vunpack.c.l.bf16 %v4908
        %v5165 = vunpack.c.l.bf16 %v4909
        %v5166 = vunpack.c.l.bf16 %v4910
        %v5167 = vunpack.c.l.bf16 %v4911
        %v5168 = vunpack.c.l.bf16 %v4912
        %v5169 = vunpack.c.l.bf16 %v4913
        %v5170 = vunpack.c.l.bf16 %v4914
        %v5171 = vunpack.c.l.bf16 %v4915
        %v5172 = vunpack.c.l.bf16 %v4916
        %v5173 = vunpack.c.l.bf16 %v4917
        %v5174 = vunpack.c.l.bf16 %v4918
        %v5175 = vunpack.c.l.bf16 %v4919
        %v5176 = vunpack.c.l.bf16 %v4920
        %v5177 = vunpack.c.l.bf16 %v4921
        %v5178 = vunpack.c.l.bf16 %v4922
        %v5179 = vunpack.c.l.bf16 %v4923
        %v5180 = vunpack.c.l.bf16 %v4924
        %v5181 = vunpack.c.l.bf16 %v4925
        %v5182 = vunpack.c.l.bf16 %v4926
        %v5183 = vunpack.c.l.bf16 %v4927
        %v5184 = vunpack.c.l.bf16 %v4928
        %v5185 = vunpack.c.l.bf16 %v4929
        %v5186 = vunpack.c.l.bf16 %v4930
        %v5187 = vunpack.c.l.bf16 %v4931
        %v5188 = vunpack.c.l.bf16 %v4932
        %v5189 = vunpack.c.l.bf16 %v4933
        %v5190 = vunpack.c.l.bf16 %v4934
        %v5191 = vunpack.c.l.bf16 %v4935
        %v5192 = vunpack.c.l.bf16 %v4936
        %v5193 = vunpack.c.l.bf16 %v4937
        %v5194 = vunpack.c.l.bf16 %v4938
        %v5195 = vunpack.c.l.bf16 %v4939
        %v5196 = vunpack.c.l.bf16 %v4940
        %v5197 = vunpack.c.l.bf16 %v4941
        %v5198 = vunpack.c.l.bf16 %v4942
        %v5199 = vunpack.c.l.bf16 %v4943
        %v5200 = vunpack.c.l.bf16 %v4944
        %v5201 = vunpack.c.l.bf16 %v4945
        %v5202 = vunpack.c.l.bf16 %v4946
        %v5203 = vunpack.c.l.bf16 %v4947
        %v5204 = vunpack.c.l.bf16 %v4948
        %v5205 = vunpack.c.l.bf16 %v4949
        %v5206 = vunpack.c.l.bf16 %v4950
        %v5207 = vunpack.c.l.bf16 %v4951
        %v5208 = vunpack.c.l.bf16 %v4952
        %v5209 = vunpack.c.l.bf16 %v4953
        %v5210 = vunpack.c.l.bf16 %v4954
        %v5211 = vunpack.c.l.bf16 %v4955
        %v5212 = vunpack.c.l.bf16 %v4956
        %v5213 = vunpack.c.l.bf16 %v4957
        %v5214 = vunpack.c.l.bf16 %v4958
        %v5215 = vunpack.c.l.bf16 %v4959
        %v5216 = vunpack.c.l.bf16 %v4960
        %v5217 = vunpack.c.l.bf16 %v4961
        %v5218 = vunpack.c.l.bf16 %v4962
        %v5219 = vunpack.c.l.bf16 %v4963
        %v5220 = vunpack.c.l.bf16 %v4964
        %v5221 = vunpack.c.l.bf16 %v4965
        %v5222 = vunpack.c.l.bf16 %v4966
        %v5223 = vunpack.c.l.bf16 %v4967
        %v5224 = vunpack.c.l.bf16 %v4968
        %v5225 = vunpack.c.l.bf16 %v4969
        %v5226 = vunpack.c.l.bf16 %v4970
        %v5227 = vunpack.c.l.bf16 %v4971
        %v5228 = vunpack.c.l.bf16 %v4972
        %v5229 = vunpack.c.l.bf16 %v4973
        %v5230 = vunpack.c.l.bf16 %v4974
        %v5231 = vunpack.c.l.bf16 %v4975
        %v5232 = vunpack.c.l.bf16 %v4976
        %v5233 = vunpack.c.l.bf16 %v4977
        %v5234 = vunpack.c.l.bf16 %v4978
        %v5235 = vunpack.c.l.bf16 %v4979
        %v5236 = vunpack.c.l.bf16 %v4980
        %v5237 = vunpack.c.l.bf16 %v4981
        %v5238 = vunpack.c.l.bf16 %v4982
        %v5239 = vunpack.c.l.bf16 %v4983
        %v5240 = vunpack.c.l.bf16 %v4984
        %v5241 = vunpack.c.l.bf16 %v4985
        %v5242 = vunpack.c.l.bf16 %v4986
        %v5243 = vunpack.c.l.bf16 %v4987
        %v5244 = vunpack.c.l.bf16 %v4988
        %v5245 = vunpack.c.l.bf16 %v4989
        %v5246 = vunpack.c.l.bf16 %v4990
        %v5247 = vunpack.c.l.bf16 %v4991
        %v5248 = vunpack.c.l.bf16 %v4992
        %v5249 = vunpack.c.l.bf16 %v4993
        %v5250 = vunpack.c.l.bf16 %v4994
        %v5251 = vunpack.c.l.bf16 %v4995
        %v5252 = vunpack.c.l.bf16 %v4996
        %v5253 = vunpack.c.l.bf16 %v4997
        %v5254 = vunpack.c.l.bf16 %v4998
        %v5255 = vunpack.c.l.bf16 %v4999
        %v5256 = vunpack.c.l.bf16 %v5000
        %v5257 = vunpack.c.l.bf16 %v5001
        %v5258 = vunpack.c.l.bf16 %v5002
        %v5259 = vunpack.c.l.bf16 %v5003
        %v5260 = vunpack.c.l.bf16 %v5004
        %v5261 = vunpack.c.l.bf16 %v5005
        %v5262 = vunpack.c.l.bf16 %v5006
        %v5263 = vunpack.c.l.bf16 %v5007
        %v5264 = vunpack.c.l.bf16 %v5008
        %v5265 = vunpack.c.l.bf16 %v5009
        %v5266 = vunpack.c.l.bf16 %v5010
        %v5267 = vunpack.c.l.bf16 %v5011
        %v5268 = vunpack.c.l.bf16 %v5012
        %v5269 = vunpack.c.l.bf16 %v5013
        %v5270 = vunpack.c.l.bf16 %v5014
        %v5271 = vunpack.c.l.bf16 %v5015
        %v5272 = vunpack.c.l.bf16 %v5016
        %v5273 = vunpack.c.l.bf16 %v5017
        %v5274 = vunpack.c.l.bf16 %v5018
        %v5275 = vunpack.c.l.bf16 %v5019
        %v5276 = vunpack.c.l.bf16 %v5020
        %v5277 = vunpack.c.l.bf16 %v5021
        %v5278 = vunpack.c.l.bf16 %v5022
        %v5279 = vunpack.c.l.bf16 %v5023
        %v5280 = vunpack.c.l.bf16 %v5024
        %v5281 = vunpack.c.l.bf16 %v5025
        %v5282 = vunpack.c.l.bf16 %v5026
        %v5283 = vunpack.c.l.bf16 %v5027
        %v5284 = vunpack.c.l.bf16 %v5028
        %v5285 = vunpack.c.l.bf16 %v5029
        %v5286 = vunpack.c.l.bf16 %v5030
        %v5287 = vunpack.c.l.bf16 %v5031
        %v5288 = vunpack.c.l.bf16 %v5032
        %v5289 = vunpack.c.l.bf16 %v5033
        %v5290 = vunpack.c.l.bf16 %v5034
        %v5291 = vunpack.c.l.bf16 %v5035
        %v5292 = vunpack.c.l.bf16 %v5036
        %v5293 = vunpack.c.l.bf16 %v5037
        %v5294 = vunpack.c.l.bf16 %v5038
        %v5295 = vunpack.c.l.bf16 %v5039
        %v5296 = vunpack.c.l.bf16 %v5040
        %v5297 = vunpack.c.l.bf16 %v5041
        %v5298 = vunpack.c.l.bf16 %v5042
        %v5299 = vunpack.c.l.bf16 %v5043
        %v5300 = vunpack.c.l.bf16 %v5044
        %v5301 = vunpack.c.l.bf16 %v5045
        %v5302 = vunpack.c.l.bf16 %v5046
        %v5303 = vunpack.c.l.bf16 %v5047
        %v5304 = vunpack.c.l.bf16 %v5048
        %v5305 = vunpack.c.l.bf16 %v5049
        %v5306 = vunpack.c.l.bf16 %v5050
        %v5307 = vunpack.c.l.bf16 %v5051
        %v5308 = vunpack.c.l.bf16 %v5052
        %v5309 = vunpack.c.l.bf16 %v5053
        %v5310 = vunpack.c.l.bf16 %v5054
        %v5311 = vunpack.c.l.bf16 %v5055
        %v5312 = vunpack.c.l.bf16 %v5056
        %v5313 = vunpack.c.l.bf16 %v5057
        %v5314 = vunpack.c.l.bf16 %v5058
        %v5315 = vunpack.c.l.bf16 %v5059
        %v5316 = vunpack.c.l.bf16 %v5060
        %v5317 = vunpack.c.l.bf16 %v5061
        %v5318 = vunpack.c.l.bf16 %v5062
        %v5319 = vunpack.c.l.bf16 %v5063
        %v5320 = vunpack.c.l.bf16 %v5064
        %v5321 = vunpack.c.l.bf16 %v5065
        %v5322 = vunpack.c.l.bf16 %v5066
        %v5323 = vunpack.c.l.bf16 %v5067
        %v5324 = vunpack.c.l.bf16 %v5068
        %v5325 = vunpack.c.l.bf16 %v5069
        %v5326 = vunpack.c.l.bf16 %v5070
        %v5327 = vunpack.c.l.bf16 %v5071
        %v5328 = vunpack.c.l.bf16 %v5072
        %v5329 = vunpack.c.l.bf16 %v5073
        %v5330 = vunpack.c.l.bf16 %v5074
        %v5331 = vunpack.c.l.bf16 %v5075
        %v5332 = vunpack.c.l.bf16 %v5076
        %v5333 = vunpack.c.l.bf16 %v5077
        %v5334 = vunpack.c.l.bf16 %v5078
        %v5335 = vunpack.c.l.bf16 %v5079
        %v5336 = vunpack.c.l.bf16 %v5080
        %v5337 = vunpack.c.l.bf16 %v5081
        %v5338 = vunpack.c.l.bf16 %v5082
        %v5339 = vunpack.c.l.bf16 %v5083
        %v5340 = vunpack.c.l.bf16 %v5084
        %v5341 = vunpack.c.l.bf16 %v5085
        %v5342 = vunpack.c.l.bf16 %v5086
        %v5343 = vunpack.c.l.bf16 %v5087
        %v5344 = vunpack.c.l.bf16 %v5088
        %v5345 = vunpack.c.l.bf16 %v5089
        %v5346 = vunpack.c.l.bf16 %v5090
        %v5347 = vunpack.c.l.bf16 %v5091
        %v5348 = vunpack.c.l.bf16 %v5092
        %v5349 = vunpack.c.l.bf16 %v5093
        %v5350 = vunpack.c.l.bf16 %v5094
        %v5351 = vunpack.c.l.bf16 %v5095
        %v5352 = vunpack.c.l.bf16 %v5096
        %v5353 = vunpack.c.l.bf16 %v5097
        %v5354 = vunpack.c.l.bf16 %v5098
        %v5355 = vunpack.c.l.bf16 %v5099
        %v5356 = vunpack.c.l.bf16 %v5100
        %v5357 = vunpack.c.l.bf16 %v5101
        %v5358 = vunpack.c.l.bf16 %v5102
        %v5359 = vunpack.c.l.bf16 %v5103
        %v5360 = vunpack.c.l.bf16 %v5104
        %v5361 = vunpack.c.l.bf16 %v5105
        %v5362 = vunpack.c.l.bf16 %v5106
        %v5363 = vunpack.c.l.bf16 %v5107
        %v5364 = vunpack.c.l.bf16 %v5108
        %v5365 = vunpack.c.l.bf16 %v5109
        %v5366 = vunpack.c.l.bf16 %v5110
        %v5367 = vunpack.c.l.bf16 %v5111
        %v5368 = vunpack.c.l.bf16 %v5112
        %v5369 = vunpack.c.l.bf16 %v5113
        %v5370 = vunpack.c.l.bf16 %v5114
        %v5371 = vunpack.c.l.bf16 %v5115
        %v5372 = vunpack.c.l.bf16 %v5116
        %v5373 = vunpack.c.l.bf16 %v5117
        %v5374 = vunpack.c.l.bf16 %v5118
        %v5375 = vunpack.c.l.bf16 %v5119
        %v5376 = vunpack.c.l.bf16 %v5120
        %v5377 = vunpack.c.l.bf16 %v5121
        %v5378 = vunpack.c.l.bf16 %v5122
        %v5379 = vunpack.c.l.bf16 %v5123
        %v5380 = vunpack.c.l.bf16 %v5124
        %v5381 = vunpack.c.l.bf16 %v5125
        %v5382 = vunpack.c.l.bf16 %v5126
        %v5383 = vunpack.c.l.bf16 %v5127
        %v5384 = vunpack.c.l.bf16 %v5128
        %v5385 = vunpack.c.l.bf16 %v5129
        %v5386 = vunpack.c.l.bf16 %v5130
        %v5387 = vunpack.c.l.bf16 %v5131
        %v5388 = vunpack.c.l.bf16 %v5132
        %v5389 = vunpack.c.l.bf16 %v5133
        %v5390 = vunpack.c.l.bf16 %v5134
        %v5391 = vunpack.c.l.bf16 %v5135
        %v5392 = vunpack.c.l.bf16 %v5136
        %v5393 = vunpack.c.l.bf16 %v5137
        %v5394 = vunpack.c.l.bf16 %v5138
        %v5395 = vld [vmem:[%s901] sm:$0x1]
        %v5397 = vlaneseq
        %v5398 = vshrl.u32 %v5397, 7
        %v5399 = vsub.s32 0, %v5398
        %v5400 = vrot.slane %v5395, %v5399
        %5402 = vmatprep.subr.mxu0 0.0
        %5403 = vmatpush1.msra.mxu0 %v5139
        %5404 = vmatprep.subr.mxu0 0.0
        %5405 = vmatpush1.msra.mxu0 %v5140
        %5406 = vmatprep.subr.mxu0 0.0
        %5407 = vmatpush1.msra.mxu0 %v5141
        %5408 = vmatprep.subr.mxu0 0.0
        %5409 = vmatpush1.msra.mxu0 %v5142
        %5410 = vmatprep.subr.mxu0 0.0
        %5411 = vmatpush1.msra.mxu0 %v5143
        %5412 = vmatprep.subr.mxu0 0.0
        %5413 = vmatpush1.msra.mxu0 %v5144
        %5414 = vmatprep.subr.mxu0 0.0
        %5415 = vmatpush1.msra.mxu0 %v5145
        %5416 = vmatprep.subr.mxu0 0.0
        %5417 = vmatpush1.msra.mxu0 %v5146
        %5418 = vmatprep.subr.mxu0 0.0
        %5419 = vmatpush1.msra.mxu0 %v5147
        %5420 = vmatprep.subr.mxu0 0.0
        %5421 = vmatpush1.msra.mxu0 %v5148
        %5422 = vmatprep.subr.mxu0 0.0
        %5423 = vmatpush1.msra.mxu0 %v5149
        %5424 = vmatprep.subr.mxu0 0.0
        %5425 = vmatpush1.msra.mxu0 %v5150
        %5426 = vmatprep.subr.mxu0 0.0
        %5427 = vmatpush1.msra.mxu0 %v5151
        %5428 = vmatprep.subr.mxu0 0.0
        %5429 = vmatpush1.msra.mxu0 %v5152
        %5430 = vmatprep.subr.mxu0 0.0
        %5431 = vmatpush1.msra.mxu0 %v5153
        %5432 = vmatprep.subr.mxu0 0.0
        %5433 = vmatpush1.msra.mxu0 %v5154
        %5434 = vmatprep.subr.mxu0 0.0
        %5435 = vmatpush1.msra.mxu0 %v5155
        %5436 = vmatprep.subr.mxu0 0.0
        %5437 = vmatpush1.msra.mxu0 %v5156
        %5438 = vmatprep.subr.mxu0 0.0
        %5439 = vmatpush1.msra.mxu0 %v5157
        %5440 = vmatprep.subr.mxu0 0.0
        %5441 = vmatpush1.msra.mxu0 %v5158
        %5442 = vmatprep.subr.mxu0 0.0
        %5443 = vmatpush1.msra.mxu0 %v5159
        %5444 = vmatprep.subr.mxu0 0.0
        %5445 = vmatpush1.msra.mxu0 %v5160
        %5446 = vmatprep.subr.mxu0 0.0
        %5447 = vmatpush1.msra.mxu0 %v5161
        %5448 = vmatprep.subr.mxu0 0.0
        %5449 = vmatpush1.msra.mxu0 %v5162
        %5450 = vmatprep.subr.mxu0 0.0
        %5451 = vmatpush1.msra.mxu0 %v5163
        %5452 = vmatprep.subr.mxu0 0.0
        %5453 = vmatpush1.msra.mxu0 %v5164
        %5454 = vmatprep.subr.mxu0 0.0
        %5455 = vmatpush1.msra.mxu0 %v5165
        %5456 = vmatprep.subr.mxu0 0.0
        %5457 = vmatpush1.msra.mxu0 %v5166
        %5458 = vmatprep.subr.mxu0 0.0
        %5459 = vmatpush1.msra.mxu0 %v5167
        %5460 = vmatprep.subr.mxu0 0.0
        %5461 = vmatpush1.msra.mxu0 %v5168
        %5462 = vmatprep.subr.mxu0 0.0
        %5463 = vmatpush1.msra.mxu0 %v5169
        %5464 = vmatprep.subr.mxu0 0.0
        %5465 = vmatpush1.msra.mxu0 %v5170
        %5466 = vmatprep.mubr.f32.mxu0 %v4852
        %5467 = vmatmul.mubr.f32.gmra.mrb[0].mxu0 %v4851
        %v5468 = vpop.f32.mrb[0].mxu0
        %v5469 = vadd.f32 %v5400, %v5468
        %v5470 = vpop.f32.mrb[0].mxu0
        %5471 = vmatprep.mubr.f32.mxu0 %v4868
        %5472 = vmatmul.mubr.f32.gmra.mrb[0].mxu0 %v4867
        %v5473 = vpop.f32.mrb[0].mxu0
        %v5474 = vadd.f32 %v5400, %v5473
        %v5475 = vpop.f32.mrb[0].mxu0
        %5476 = vdwg.mxu0
        %5477 = vmatprep.subr.mxu0 0.0
        %5478 = vmatpush1.msra.mxu0 %v5171
        %5479 = vmatprep.subr.mxu0 0.0
        %5480 = vmatpush1.msra.mxu0 %v5172
        %5481 = vmatprep.subr.mxu0 0.0
        %5482 = vmatpush1.msra.mxu0 %v5173
        %5483 = vmatprep.subr.mxu0 0.0
        %5484 = vmatpush1.msra.mxu0 %v5174
        %5485 = vmatprep.subr.mxu0 0.0
        %5486 = vmatpush1.msra.mxu0 %v5175
        %5487 = vmatprep.subr.mxu0 0.0
        %5488 = vmatpush1.msra.mxu0 %v5176
        %5489 = vmatprep.subr.mxu0 0.0
        %5490 = vmatpush1.msra.mxu0 %v5177
        %5491 = vmatprep.subr.mxu0 0.0
        %5492 = vmatpush1.msra.mxu0 %v5178
        %5493 = vmatprep.subr.mxu0 0.0
        %5494 = vmatpush1.msra.mxu0 %v5179
        %5495 = vmatprep.subr.mxu0 0.0
        %5496 = vmatpush1.msra.mxu0 %v5180
        %5497 = vmatprep.subr.mxu0 0.0
        %5498 = vmatpush1.msra.mxu0 %v5181
        %5499 = vmatprep.subr.mxu0 0.0
        %5500 = vmatpush1.msra.mxu0 %v5182
        %5501 = vmatprep.subr.mxu0 0.0
        %5502 = vmatpush1.msra.mxu0 %v5183
        %5503 = vmatprep.subr.mxu0 0.0
        %5504 = vmatpush1.msra.mxu0 %v5184
        %5505 = vmatprep.subr.mxu0 0.0
        %5506 = vmatpush1.msra.mxu0 %v5185
        %5507 = vmatprep.subr.mxu0 0.0
        %5508 = vmatpush1.msra.mxu0 %v5186
        %5509 = vmatprep.subr.mxu0 0.0
        %5510 = vmatpush1.msra.mxu0 %v5187
        %5511 = vmatprep.subr.mxu0 0.0
        %5512 = vmatpush1.msra.mxu0 %v5188
        %5513 = vmatprep.subr.mxu0 0.0
        %5514 = vmatpush1.msra.mxu0 %v5189
        %5515 = vmatprep.subr.mxu0 0.0
        %5516 = vmatpush1.msra.mxu0 %v5190
        %5517 = vmatprep.subr.mxu0 0.0
        %5518 = vmatpush1.msra.mxu0 %v5191
        %5519 = vmatprep.subr.mxu0 0.0
        %5520 = vmatpush1.msra.mxu0 %v5192
        %5521 = vmatprep.subr.mxu0 0.0
        %5522 = vmatpush1.msra.mxu0 %v5193
        %5523 = vmatprep.subr.mxu0 0.0
        %5524 = vmatpush1.msra.mxu0 %v5194
        %5525 = vmatprep.subr.mxu0 0.0
        %5526 = vmatpush1.msra.mxu0 %v5195
        %5527 = vmatprep.subr.mxu0 0.0
        %5528 = vmatpush1.msra.mxu0 %v5196
        %5529 = vmatprep.subr.mxu0 0.0
        %5530 = vmatpush1.msra.mxu0 %v5197
        %5531 = vmatprep.subr.mxu0 0.0
        %5532 = vmatpush1.msra.mxu0 %v5198
        %5533 = vmatprep.subr.mxu0 0.0
        %5534 = vmatpush1.msra.mxu0 %v5199
        %5535 = vmatprep.subr.mxu0 0.0
        %5536 = vmatpush1.msra.mxu0 %v5200
        %5537 = vmatprep.subr.mxu0 0.0
        %5538 = vmatpush1.msra.mxu0 %v5201
        %5539 = vmatprep.subr.mxu0 0.0
        %5540 = vmatpush1.msra.mxu0 %v5202
        %5541 = vmatprep.mubr.f32.mxu0 %v4854
        %5542 = vmatmul.mubr.f32.gmra.mrb[0].mxu0 %v4853
        %v5543 = vpop.f32.mrb[0].mxu0
        %v5544 = vadd.f32 %v5469, %v5543
        %v5545 = vpop.f32.mrb[0].mxu0
        %5546 = vmatprep.mubr.f32.mxu0 %v4870
        %5547 = vmatmul.mubr.f32.gmra.mrb[0].mxu0 %v4869
        %v5548 = vpop.f32.mrb[0].mxu0
        %v5549 = vadd.f32 %v5474, %v5548
        %v5550 = vpop.f32.mrb[0].mxu0
        %5551 = vdwg.mxu0
        %5552 = vmatprep.subr.mxu0 0.0
        %5553 = vmatpush1.msra.mxu0 %v5203
        %5554 = vmatprep.subr.mxu0 0.0
        %5555 = vmatpush1.msra.mxu0 %v5204
        %5556 = vmatprep.subr.mxu0 0.0
        %5557 = vmatpush1.msra.mxu0 %v5205
        %5558 = vmatprep.subr.mxu0 0.0
        %5559 = vmatpush1.msra.mxu0 %v5206
        %5560 = vmatprep.subr.mxu0 0.0
        %5561 = vmatpush1.msra.mxu0 %v5207
        %5562 = vmatprep.subr.mxu0 0.0
        %5563 = vmatpush1.msra.mxu0 %v5208
        %5564 = vmatprep.subr.mxu0 0.0
        %5565 = vmatpush1.msra.mxu0 %v5209
        %5566 = vmatprep.subr.mxu0 0.0
        %5567 = vmatpush1.msra.mxu0 %v5210
        %5568 = vmatprep.subr.mxu0 0.0
        %5569 = vmatpush1.msra.mxu0 %v5211
        %5570 = vmatprep.subr.mxu0 0.0
        %5571 = vmatpush1.msra.mxu0 %v5212
        %5572 = vmatprep.subr.mxu0 0.0
        %5573 = vmatpush1.msra.mxu0 %v5213
        %5574 = vmatprep.subr.mxu0 0.0
        %5575 = vmatpush1.msra.mxu0 %v5214
        %5576 = vmatprep.subr.mxu0 0.0
        %5577 = vmatpush1.msra.mxu0 %v5215
        %5578 = vmatprep.subr.mxu0 0.0
        %5579 = vmatpush1.msra.mxu0 %v5216
        %5580 = vmatprep.subr.mxu0 0.0
        %5581 = vmatpush1.msra.mxu0 %v5217
        %5582 = vmatprep.subr.mxu0 0.0
        %5583 = vmatpush1.msra.mxu0 %v5218
        %5584 = vmatprep.subr.mxu0 0.0
        %5585 = vmatpush1.msra.mxu0 %v5219
        %5586 = vmatprep.subr.mxu0 0.0
        %5587 = vmatpush1.msra.mxu0 %v5220
        %5588 = vmatprep.subr.mxu0 0.0
        %5589 = vmatpush1.msra.mxu0 %v5221
        %5590 = vmatprep.subr.mxu0 0.0
        %5591 = vmatpush1.msra.mxu0 %v5222
        %5592 = vmatprep.subr.mxu0 0.0
        %5593 = vmatpush1.msra.mxu0 %v5223
        %5594 = vmatprep.subr.mxu0 0.0
        %5595 = vmatpush1.msra.mxu0 %v5224
        %5596 = vmatprep.subr.mxu0 0.0
        %5597 = vmatpush1.msra.mxu0 %v5225
        %5598 = vmatprep.subr.mxu0 0.0
        %5599 = vmatpush1.msra.mxu0 %v5226
        %5600 = vmatprep.subr.mxu0 0.0
        %5601 = vmatpush1.msra.mxu0 %v5227
        %5602 = vmatprep.subr.mxu0 0.0
        %5603 = vmatpush1.msra.mxu0 %v5228
        %5604 = vmatprep.subr.mxu0 0.0
        %5605 = vmatpush1.msra.mxu0 %v5229
        %5606 = vmatprep.subr.mxu0 0.0
        %5607 = vmatpush1.msra.mxu0 %v5230
        %5608 = vmatprep.subr.mxu0 0.0
        %5609 = vmatpush1.msra.mxu0 %v5231
        %5610 = vmatprep.subr.mxu0 0.0
        %5611 = vmatpush1.msra.mxu0 %v5232
        %5612 = vmatprep.subr.mxu0 0.0
        %5613 = vmatpush1.msra.mxu0 %v5233
        %5614 = vmatprep.subr.mxu0 0.0
        %5615 = vmatpush1.msra.mxu0 %v5234
        %5616 = vmatprep.mubr.f32.mxu0 %v4856
        %5617 = vmatmul.mubr.f32.gmra.mrb[0].mxu0 %v4855
        %v5618 = vpop.f32.mrb[0].mxu0
        %v5619 = vadd.f32 %v5544, %v5618
        %v5620 = vpop.f32.mrb[0].mxu0
        %5621 = vmatprep.mubr.f32.mxu0 %v4872
        %5622 = vmatmul.mubr.f32.gmra.mrb[0].mxu0 %v4871
        %v5623 = vpop.f32.mrb[0].mxu0
        %v5624 = vadd.f32 %v5549, %v5623
        %v5625 = vpop.f32.mrb[0].mxu0
        %5626 = vdwg.mxu0
        %5627 = vmatprep.subr.mxu0 0.0
        %5628 = vmatpush1.msra.mxu0 %v5235
        %5629 = vmatprep.subr.mxu0 0.0
        %5630 = vmatpush1.msra.mxu0 %v5236
        %5631 = vmatprep.subr.mxu0 0.0
        %5632 = vmatpush1.msra.mxu0 %v5237
        %5633 = vmatprep.subr.mxu0 0.0
        %5634 = vmatpush1.msra.mxu0 %v5238
        %5635 = vmatprep.subr.mxu0 0.0
        %5636 = vmatpush1.msra.mxu0 %v5239
        %5637 = vmatprep.subr.mxu0 0.0
        %5638 = vmatpush1.msra.mxu0 %v5240
        %5639 = vmatprep.subr.mxu0 0.0
        %5640 = vmatpush1.msra.mxu0 %v5241
        %5641 = vmatprep.subr.mxu0 0.0
        %5642 = vmatpush1.msra.mxu0 %v5242
        %5643 = vmatprep.subr.mxu0 0.0
        %5644 = vmatpush1.msra.mxu0 %v5243
        %5645 = vmatprep.subr.mxu0 0.0
        %5646 = vmatpush1.msra.mxu0 %v5244
        %5647 = vmatprep.subr.mxu0 0.0
        %5648 = vmatpush1.msra.mxu0 %v5245
        %5649 = vmatprep.subr.mxu0 0.0
        %5650 = vmatpush1.msra.mxu0 %v5246
        %5651 = vmatprep.subr.mxu0 0.0
        %5652 = vmatpush1.msra.mxu0 %v5247
        %5653 = vmatprep.subr.mxu0 0.0
        %5654 = vmatpush1.msra.mxu0 %v5248
        %5655 = vmatprep.subr.mxu0 0.0
        %5656 = vmatpush1.msra.mxu0 %v5249
        %5657 = vmatprep.subr.mxu0 0.0
        %5658 = vmatpush1.msra.mxu0 %v5250
        %5659 = vmatprep.subr.mxu0 0.0
        %5660 = vmatpush1.msra.mxu0 %v5251
        %5661 = vmatprep.subr.mxu0 0.0
        %5662 = vmatpush1.msra.mxu0 %v5252
        %5663 = vmatprep.subr.mxu0 0.0
        %5664 = vmatpush1.msra.mxu0 %v5253
        %5665 = vmatprep.subr.mxu0 0.0
        %5666 = vmatpush1.msra.mxu0 %v5254
        %5667 = vmatprep.subr.mxu0 0.0
        %5668 = vmatpush1.msra.mxu0 %v5255
        %5669 = vmatprep.subr.mxu0 0.0
        %5670 = vmatpush1.msra.mxu0 %v5256
        %5671 = vmatprep.subr.mxu0 0.0
        %5672 = vmatpush1.msra.mxu0 %v5257
        %5673 = vmatprep.subr.mxu0 0.0
        %5674 = vmatpush1.msra.mxu0 %v5258
        %5675 = vmatprep.subr.mxu0 0.0
        %5676 = vmatpush1.msra.mxu0 %v5259
        %5677 = vmatprep.subr.mxu0 0.0
        %5678 = vmatpush1.msra.mxu0 %v5260
        %5679 = vmatprep.subr.mxu0 0.0
        %5680 = vmatpush1.msra.mxu0 %v5261
        %5681 = vmatprep.subr.mxu0 0.0
        %5682 = vmatpush1.msra.mxu0 %v5262
        %5683 = vmatprep.subr.mxu0 0.0
        %5684 = vmatpush1.msra.mxu0 %v5263
        %5685 = vmatprep.subr.mxu0 0.0
        %5686 = vmatpush1.msra.mxu0 %v5264
        %5687 = vmatprep.subr.mxu0 0.0
        %5688 = vmatpush1.msra.mxu0 %v5265
        %5689 = vmatprep.subr.mxu0 0.0
        %5690 = vmatpush1.msra.mxu0 %v5266
        %5691 = vmatprep.mubr.f32.mxu0 %v4858
        %5692 = vmatmul.mubr.f32.gmra.mrb[0].mxu0 %v4857
        %v5693 = vpop.f32.mrb[0].mxu0
        %v5694 = vadd.f32 %v5619, %v5693
        %v5695 = vpop.f32.mrb[0].mxu0
        %5696 = vmatprep.mubr.f32.mxu0 %v4874
        %5697 = vmatmul.mubr.f32.gmra.mrb[0].mxu0 %v4873
        %v5698 = vpop.f32.mrb[0].mxu0
        %v5699 = vadd.f32 %v5624, %v5698
        %v5700 = vpop.f32.mrb[0].mxu0
        %5701 = vdwg.mxu0
        %5702 = vmatprep.subr.mxu0 0.0
        %5703 = vmatpush1.msra.mxu0 %v5267
        %5704 = vmatprep.subr.mxu0 0.0
        %5705 = vmatpush1.msra.mxu0 %v5268
        %5706 = vmatprep.subr.mxu0 0.0
        %5707 = vmatpush1.msra.mxu0 %v5269
        %5708 = vmatprep.subr.mxu0 0.0
        %5709 = vmatpush1.msra.mxu0 %v5270
        %5710 = vmatprep.subr.mxu0 0.0
        %5711 = vmatpush1.msra.mxu0 %v5271
        %5712 = vmatprep.subr.mxu0 0.0
        %5713 = vmatpush1.msra.mxu0 %v5272
        %5714 = vmatprep.subr.mxu0 0.0
        %5715 = vmatpush1.msra.mxu0 %v5273
        %5716 = vmatprep.subr.mxu0 0.0
        %5717 = vmatpush1.msra.mxu0 %v5274
        %5718 = vmatprep.subr.mxu0 0.0
        %5719 = vmatpush1.msra.mxu0 %v5275
        %5720 = vmatprep.subr.mxu0 0.0
        %5721 = vmatpush1.msra.mxu0 %v5276
        %5722 = vmatprep.subr.mxu0 0.0
        %5723 = vmatpush1.msra.mxu0 %v5277
        %5724 = vmatprep.subr.mxu0 0.0
        %5725 = vmatpush1.msra.mxu0 %v5278
        %5726 = vmatprep.subr.mxu0 0.0
        %5727 = vmatpush1.msra.mxu0 %v5279
        %5728 = vmatprep.subr.mxu0 0.0
        %5729 = vmatpush1.msra.mxu0 %v5280
        %5730 = vmatprep.subr.mxu0 0.0
        %5731 = vmatpush1.msra.mxu0 %v5281
        %5732 = vmatprep.subr.mxu0 0.0
        %5733 = vmatpush1.msra.mxu0 %v5282
        %5734 = vmatprep.subr.mxu0 0.0
        %5735 = vmatpush1.msra.mxu0 %v5283
        %5736 = vmatprep.subr.mxu0 0.0
        %5737 = vmatpush1.msra.mxu0 %v5284
        %5738 = vmatprep.subr.mxu0 0.0
        %5739 = vmatpush1.msra.mxu0 %v5285
        %5740 = vmatprep.subr.mxu0 0.0
        %5741 = vmatpush1.msra.mxu0 %v5286
        %5742 = vmatprep.subr.mxu0 0.0
        %5743 = vmatpush1.msra.mxu0 %v5287
        %5744 = vmatprep.subr.mxu0 0.0
        %5745 = vmatpush1.msra.mxu0 %v5288
        %5746 = vmatprep.subr.mxu0 0.0
        %5747 = vmatpush1.msra.mxu0 %v5289
        %5748 = vmatprep.subr.mxu0 0.0
        %5749 = vmatpush1.msra.mxu0 %v5290
        %5750 = vmatprep.subr.mxu0 0.0
        %5751 = vmatpush1.msra.mxu0 %v5291
        %5752 = vmatprep.subr.mxu0 0.0
        %5753 = vmatpush1.msra.mxu0 %v5292
        %5754 = vmatprep.subr.mxu0 0.0
        %5755 = vmatpush1.msra.mxu0 %v5293
        %5756 = vmatprep.subr.mxu0 0.0
        %5757 = vmatpush1.msra.mxu0 %v5294
        %5758 = vmatprep.subr.mxu0 0.0
        %5759 = vmatpush1.msra.mxu0 %v5295
        %5760 = vmatprep.subr.mxu0 0.0
        %5761 = vmatpush1.msra.mxu0 %v5296
        %5762 = vmatprep.subr.mxu0 0.0
        %5763 = vmatpush1.msra.mxu0 %v5297
        %5764 = vmatprep.subr.mxu0 0.0
        %5765 = vmatpush1.msra.mxu0 %v5298
        %5766 = vmatprep.mubr.f32.mxu0 %v4860
        %5767 = vmatmul.mubr.f32.gmra.mrb[0].mxu0 %v4859
        %v5768 = vpop.f32.mrb[0].mxu0
        %v5769 = vadd.f32 %v5694, %v5768
        %v5770 = vpop.f32.mrb[0].mxu0
        %5771 = vmatprep.mubr.f32.mxu0 %v4876
        %5772 = vmatmul.mubr.f32.gmra.mrb[0].mxu0 %v4875
        %v5773 = vpop.f32.mrb[0].mxu0
        %v5774 = vadd.f32 %v5699, %v5773
        %v5775 = vpop.f32.mrb[0].mxu0
        %5776 = vdwg.mxu0
        %5777 = vmatprep.subr.mxu0 0.0
        %5778 = vmatpush1.msra.mxu0 %v5299
        %5779 = vmatprep.subr.mxu0 0.0
        %5780 = vmatpush1.msra.mxu0 %v5300
        %5781 = vmatprep.subr.mxu0 0.0
        %5782 = vmatpush1.msra.mxu0 %v5301
        %5783 = vmatprep.subr.mxu0 0.0
        %5784 = vmatpush1.msra.mxu0 %v5302
        %5785 = vmatprep.subr.mxu0 0.0
        %5786 = vmatpush1.msra.mxu0 %v5303
        %5787 = vmatprep.subr.mxu0 0.0
        %5788 = vmatpush1.msra.mxu0 %v5304
        %5789 = vmatprep.subr.mxu0 0.0
        %5790 = vmatpush1.msra.mxu0 %v5305
        %5791 = vmatprep.subr.mxu0 0.0
        %5792 = vmatpush1.msra.mxu0 %v5306
        %5793 = vmatprep.subr.mxu0 0.0
        %5794 = vmatpush1.msra.mxu0 %v5307
        %5795 = vmatprep.subr.mxu0 0.0
        %5796 = vmatpush1.msra.mxu0 %v5308
        %5797 = vmatprep.subr.mxu0 0.0
        %5798 = vmatpush1.msra.mxu0 %v5309
        %5799 = vmatprep.subr.mxu0 0.0
        %5800 = vmatpush1.msra.mxu0 %v5310
        %5801 = vmatprep.subr.mxu0 0.0
        %5802 = vmatpush1.msra.mxu0 %v5311
        %5803 = vmatprep.subr.mxu0 0.0
        %5804 = vmatpush1.msra.mxu0 %v5312
        %5805 = vmatprep.subr.mxu0 0.0
        %5806 = vmatpush1.msra.mxu0 %v5313
        %5807 = vmatprep.subr.mxu0 0.0
        %5808 = vmatpush1.msra.mxu0 %v5314
        %5809 = vmatprep.subr.mxu0 0.0
        %5810 = vmatpush1.msra.mxu0 %v5315
        %5811 = vmatprep.subr.mxu0 0.0
        %5812 = vmatpush1.msra.mxu0 %v5316
        %5813 = vmatprep.subr.mxu0 0.0
        %5814 = vmatpush1.msra.mxu0 %v5317
        %5815 = vmatprep.subr.mxu0 0.0
        %5816 = vmatpush1.msra.mxu0 %v5318
        %5817 = vmatprep.subr.mxu0 0.0
        %5818 = vmatpush1.msra.mxu0 %v5319
        %5819 = vmatprep.subr.mxu0 0.0
        %5820 = vmatpush1.msra.mxu0 %v5320
        %5821 = vmatprep.subr.mxu0 0.0
        %5822 = vmatpush1.msra.mxu0 %v5321
        %5823 = vmatprep.subr.mxu0 0.0
        %5824 = vmatpush1.msra.mxu0 %v5322
        %5825 = vmatprep.subr.mxu0 0.0
        %5826 = vmatpush1.msra.mxu0 %v5323
        %5827 = vmatprep.subr.mxu0 0.0
        %5828 = vmatpush1.msra.mxu0 %v5324
        %5829 = vmatprep.subr.mxu0 0.0
        %5830 = vmatpush1.msra.mxu0 %v5325
        %5831 = vmatprep.subr.mxu0 0.0
        %5832 = vmatpush1.msra.mxu0 %v5326
        %5833 = vmatprep.subr.mxu0 0.0
        %5834 = vmatpush1.msra.mxu0 %v5327
        %5835 = vmatprep.subr.mxu0 0.0
        %5836 = vmatpush1.msra.mxu0 %v5328
        %5837 = vmatprep.subr.mxu0 0.0
        %5838 = vmatpush1.msra.mxu0 %v5329
        %5839 = vmatprep.subr.mxu0 0.0
        %5840 = vmatpush1.msra.mxu0 %v5330
        %5841 = vmatprep.mubr.f32.mxu0 %v4862
        %5842 = vmatmul.mubr.f32.gmra.mrb[0].mxu0 %v4861
        %v5843 = vpop.f32.mrb[0].mxu0
        %v5844 = vadd.f32 %v5769, %v5843
        %v5845 = vpop.f32.mrb[0].mxu0
        %5846 = vmatprep.mubr.f32.mxu0 %v4878
        %5847 = vmatmul.mubr.f32.gmra.mrb[0].mxu0 %v4877
        %v5848 = vpop.f32.mrb[0].mxu0
        %v5849 = vadd.f32 %v5774, %v5848
        %v5850 = vpop.f32.mrb[0].mxu0
        %5851 = vdwg.mxu0
        %5852 = vmatprep.subr.mxu0 0.0
        %5853 = vmatpush1.msra.mxu0 %v5331
        %5854 = vmatprep.subr.mxu0 0.0
        %5855 = vmatpush1.msra.mxu0 %v5332
        %5856 = vmatprep.subr.mxu0 0.0
        %5857 = vmatpush1.msra.mxu0 %v5333
        %5858 = vmatprep.subr.mxu0 0.0
        %5859 = vmatpush1.msra.mxu0 %v5334
        %5860 = vmatprep.subr.mxu0 0.0
        %5861 = vmatpush1.msra.mxu0 %v5335
        %5862 = vmatprep.subr.mxu0 0.0
        %5863 = vmatpush1.msra.mxu0 %v5336
        %5864 = vmatprep.subr.mxu0 0.0
        %5865 = vmatpush1.msra.mxu0 %v5337
        %5866 = vmatprep.subr.mxu0 0.0
        %5867 = vmatpush1.msra.mxu0 %v5338
        %5868 = vmatprep.subr.mxu0 0.0
        %5869 = vmatpush1.msra.mxu0 %v5339
        %5870 = vmatprep.subr.mxu0 0.0
        %5871 = vmatpush1.msra.mxu0 %v5340
        %5872 = vmatprep.subr.mxu0 0.0
        %5873 = vmatpush1.msra.mxu0 %v5341
        %5874 = vmatprep.subr.mxu0 0.0
        %5875 = vmatpush1.msra.mxu0 %v5342
        %5876 = vmatprep.subr.mxu0 0.0
        %5877 = vmatpush1.msra.mxu0 %v5343
        %5878 = vmatprep.subr.mxu0 0.0
        %5879 = vmatpush1.msra.mxu0 %v5344
        %5880 = vmatprep.subr.mxu0 0.0
        %5881 = vmatpush1.msra.mxu0 %v5345
        %5882 = vmatprep.subr.mxu0 0.0
        %5883 = vmatpush1.msra.mxu0 %v5346
        %5884 = vmatprep.subr.mxu0 0.0
        %5885 = vmatpush1.msra.mxu0 %v5347
        %5886 = vmatprep.subr.mxu0 0.0
        %5887 = vmatpush1.msra.mxu0 %v5348
        %5888 = vmatprep.subr.mxu0 0.0
        %5889 = vmatpush1.msra.mxu0 %v5349
        %5890 = vmatprep.subr.mxu0 0.0
        %5891 = vmatpush1.msra.mxu0 %v5350
        %5892 = vmatprep.subr.mxu0 0.0
        %5893 = vmatpush1.msra.mxu0 %v5351
        %5894 = vmatprep.subr.mxu0 0.0
        %5895 = vmatpush1.msra.mxu0 %v5352
        %5896 = vmatprep.subr.mxu0 0.0
        %5897 = vmatpush1.msra.mxu0 %v5353
        %5898 = vmatprep.subr.mxu0 0.0
        %5899 = vmatpush1.msra.mxu0 %v5354
        %5900 = vmatprep.subr.mxu0 0.0
        %5901 = vmatpush1.msra.mxu0 %v5355
        %5902 = vmatprep.subr.mxu0 0.0
        %5903 = vmatpush1.msra.mxu0 %v5356
        %5904 = vmatprep.subr.mxu0 0.0
        %5905 = vmatpush1.msra.mxu0 %v5357
        %5906 = vmatprep.subr.mxu0 0.0
        %5907 = vmatpush1.msra.mxu0 %v5358
        %5908 = vmatprep.subr.mxu0 0.0
        %5909 = vmatpush1.msra.mxu0 %v5359
        %5910 = vmatprep.subr.mxu0 0.0
        %5911 = vmatpush1.msra.mxu0 %v5360
        %5912 = vmatprep.subr.mxu0 0.0
        %5913 = vmatpush1.msra.mxu0 %v5361
        %5914 = vmatprep.subr.mxu0 0.0
        %5915 = vmatpush1.msra.mxu0 %v5362
        %5916 = vmatprep.mubr.f32.mxu0 %v4864
        %5917 = vmatmul.mubr.f32.gmra.mrb[0].mxu0 %v4863
        %v5918 = vpop.f32.mrb[0].mxu0
        %v5919 = vadd.f32 %v5844, %v5918
        %v5920 = vpop.f32.mrb[0].mxu0
        %5921 = vmatprep.mubr.f32.mxu0 %v4880
        %5922 = vmatmul.mubr.f32.gmra.mrb[0].mxu0 %v4879
        %v5923 = vpop.f32.mrb[0].mxu0
        %v5924 = vadd.f32 %v5849, %v5923
        %v5925 = vpop.f32.mrb[0].mxu0
        %5926 = vdwg.mxu0
        %5927 = vmatprep.subr.mxu0 0.0
        %5928 = vmatpush1.msra.mxu0 %v5363
        %5929 = vmatprep.subr.mxu0 0.0
        %5930 = vmatpush1.msra.mxu0 %v5364
        %5931 = vmatprep.subr.mxu0 0.0
        %5932 = vmatpush1.msra.mxu0 %v5365
        %5933 = vmatprep.subr.mxu0 0.0
        %5934 = vmatpush1.msra.mxu0 %v5366
        %5935 = vmatprep.subr.mxu0 0.0
        %5936 = vmatpush1.msra.mxu0 %v5367
        %5937 = vmatprep.subr.mxu0 0.0
        %5938 = vmatpush1.msra.mxu0 %v5368
        %5939 = vmatprep.subr.mxu0 0.0
        %5940 = vmatpush1.msra.mxu0 %v5369
        %5941 = vmatprep.subr.mxu0 0.0
        %5942 = vmatpush1.msra.mxu0 %v5370
        %5943 = vmatprep.subr.mxu0 0.0
        %5944 = vmatpush1.msra.mxu0 %v5371
        %5945 = vmatprep.subr.mxu0 0.0
        %5946 = vmatpush1.msra.mxu0 %v5372
        %5947 = vmatprep.subr.mxu0 0.0
        %5948 = vmatpush1.msra.mxu0 %v5373
        %5949 = vmatprep.subr.mxu0 0.0
        %5950 = vmatpush1.msra.mxu0 %v5374
        %5951 = vmatprep.subr.mxu0 0.0
        %5952 = vmatpush1.msra.mxu0 %v5375
        %5953 = vmatprep.subr.mxu0 0.0
        %5954 = vmatpush1.msra.mxu0 %v5376
        %5955 = vmatprep.subr.mxu0 0.0
        %5956 = vmatpush1.msra.mxu0 %v5377
        %5957 = vmatprep.subr.mxu0 0.0
        %5958 = vmatpush1.msra.mxu0 %v5378
        %5959 = vmatprep.subr.mxu0 0.0
        %5960 = vmatpush1.msra.mxu0 %v5379
        %5961 = vmatprep.subr.mxu0 0.0
        %5962 = vmatpush1.msra.mxu0 %v5380
        %5963 = vmatprep.subr.mxu0 0.0
        %5964 = vmatpush1.msra.mxu0 %v5381
        %5965 = vmatprep.subr.mxu0 0.0
        %5966 = vmatpush1.msra.mxu0 %v5382
        %5967 = vmatprep.subr.mxu0 0.0
        %5968 = vmatpush1.msra.mxu0 %v5383
        %5969 = vmatprep.subr.mxu0 0.0
        %5970 = vmatpush1.msra.mxu0 %v5384
        %5971 = vmatprep.subr.mxu0 0.0
        %5972 = vmatpush1.msra.mxu0 %v5385
        %5973 = vmatprep.subr.mxu0 0.0
        %5974 = vmatpush1.msra.mxu0 %v5386
        %5975 = vmatprep.subr.mxu0 0.0
        %5976 = vmatpush1.msra.mxu0 %v5387
        %5977 = vmatprep.subr.mxu0 0.0
        %5978 = vmatpush1.msra.mxu0 %v5388
        %5979 = vmatprep.subr.mxu0 0.0
        %5980 = vmatpush1.msra.mxu0 %v5389
        %5981 = vmatprep.subr.mxu0 0.0
        %5982 = vmatpush1.msra.mxu0 %v5390
        %5983 = vmatprep.subr.mxu0 0.0
        %5984 = vmatpush1.msra.mxu0 %v5391
        %5985 = vmatprep.subr.mxu0 0.0
        %5986 = vmatpush1.msra.mxu0 %v5392
        %5987 = vmatprep.subr.mxu0 0.0
        %5988 = vmatpush1.msra.mxu0 %v5393
        %5989 = vmatprep.subr.mxu0 0.0
        %5990 = vmatpush1.msra.mxu0 %v5394
        %5991 = vmatprep.mubr.f32.mxu0 %v4866
        %5992 = vmatmul.mubr.f32.gmra.mrb[0].mxu0 %v4865
        %v5993 = vpop.f32.mrb[0].mxu0
        %v5994 = vadd.f32 %v5919, %v5993
        %v5995 = vpop.f32.mrb[0].mxu0
        %5996 = vmatprep.mubr.f32.mxu0 %v4882
        %5997 = vmatmul.mubr.f32.gmra.mrb[0].mxu0 %v4881
        %v5998 = vpop.f32.mrb[0].mxu0
        %v5999 = vadd.f32 %v5924, %v5998
        %v6000 = vpop.f32.mrb[0].mxu0
        %6001 = vdwg.mxu0
        %v6002 = vadd.f32 %v3765, %v5994
        %v6003 = vadd.f32 %v3766, %v5999
        %v6004 = vld [vmem:[%s925] sm:$0x1]
        %v6005 = vld [vmem:[%s933] sm:$0x1]
        %6006 = vadd.xlane.f32.xlu0 %v6002
        %v6007 = vpop.xlane.xlu0 %6006
        %6008 = vadd.xlane.f32.xlu0 %v6003
        %v6009 = vpop.xlane.xlu0 %6008
        %v6010 = vmul.f32 %v6007, %v3732
        %v6011 = vmul.f32 %v6009, %v3732
        %v6012 = vsub.f32 %v6002, %v6010
        %v6013 = vsub.f32 %v6003, %v6011
        %v6014 = vmul.f32 %v6012, %v6012
        %v6015 = vmul.f32 %v6013, %v6013
        %6016 = vadd.xlane.f32.xlu0 %v6014
        %v6017 = vpop.xlane.xlu0 %6016
        %6018 = vadd.xlane.f32.xlu0 %v6015
        %v6019 = vpop.xlane.xlu0 %6018
        %v6020 = vmul.f32 %v6017, %v3732
        %v6021 = vmul.f32 %v6019, %v3732
        %v6022 = vadd.f32 %v6020, 1e-05
        %v6023 = vadd.f32 %v6021, 1e-05
        %v6024 = vrsqrt.pop %v6022
        %v6025 = vrsqrt.pop %v6023
        %v6026 = vmul.f32 %v6012, %v6024
        %v6027 = vmul.f32 %v6013, %v6025
        %v6029 = vlaneseq
        %v6030 = vshrl.u32 %v6029, 7
        %v6031 = vsub.s32 0, %v6030
        %v6032 = vrot.slane %v6004, %v6031
        %v6034 = vmul.f32 %v6026, %v6032
        %v6035 = vmul.f32 %v6027, %v6032
        %v6037 = vlaneseq
        %v6038 = vshrl.u32 %v6037, 7
        %v6039 = vsub.s32 0, %v6038
        %v6040 = vrot.slane %v6005, %v6039
        %v6042 = vadd.f32 %v6034, %v6040
        %v6043 = vadd.f32 %v6035, %v6040
        %6044 = vst [vmem:[#allocation2] sm:$0xff] %v6042
        %6045 = vst [vmem:[#allocation2 + $0x8] sm:$0xff] %v6043
        %p6046 = scmp.eq.s32.totalorder %s34, 3
        // Predicated region
        $region169: #{tpu_custom_call.1} parent=91 // pred_check
          %p6047 = pneg %p6046
        $region170: #{tpu_custom_call.1} parent=91 // pred_check_branch
          %6049 = sbr.rel (%p6047) target = $region172
        $region171: #{tpu_custom_call.1} parent=91 // pred_region
          %v6050 = vld [vmem:[#allocation11] sm:$0xf]
          %v6051 = vld [vmem:[#allocation11 + $0x4] sm:$0xf]
          %v6052 = vld [vmem:[#allocation11 + $0x8] sm:$0xf]
          %v6053 = vld [vmem:[#allocation11 + $0xc] sm:$0xf]
          %v6054 = vld [vmem:[#allocation11 + $0x10] sm:$0xf]
          %v6055 = vld [vmem:[#allocation11 + $0x14] sm:$0xf]
          %v6056 = vld [vmem:[#allocation11 + $0x18] sm:$0xf]
          %v6057 = vld [vmem:[#allocation11 + $0x1c] sm:$0xf]
          %v6058 = vld [vmem:[#allocation11 + $0x20] sm:$0xf]
          %v6059 = vld [vmem:[#allocation11 + $0x24] sm:$0xf]
          %v6060 = vld [vmem:[#allocation11 + $0x28] sm:$0xf]
          %v6061 = vld [vmem:[#allocation11 + $0x2c] sm:$0xf]
          %v6062 = vld [vmem:[#allocation11 + $0x30] sm:$0xf]
          %v6063 = vld [vmem:[#allocation11 + $0x34] sm:$0xf]
          %v6064 = vld [vmem:[#allocation11 + $0x38] sm:$0xf]
          %v6065 = vld [vmem:[#allocation11 + $0x3c] sm:$0xf]
          %v6066 = vunpack.c.l.bf16 %v6050
          %v6067 = vunpack.c.l.bf16 %v6051
          %v6068 = vunpack.c.l.bf16 %v6052
          %v6069 = vunpack.c.l.bf16 %v6053
          %v6070 = vunpack.c.l.bf16 %v6054
          %v6071 = vunpack.c.l.bf16 %v6055
          %v6072 = vunpack.c.l.bf16 %v6056
          %v6073 = vunpack.c.l.bf16 %v6057
          %v6074 = vunpack.c.l.bf16 %v6058
          %v6075 = vunpack.c.l.bf16 %v6059
          %v6076 = vunpack.c.l.bf16 %v6060
          %v6077 = vunpack.c.l.bf16 %v6061
          %v6078 = vunpack.c.l.bf16 %v6062
          %v6079 = vunpack.c.l.bf16 %v6063
          %v6080 = vunpack.c.l.bf16 %v6064
          %v6081 = vunpack.c.l.bf16 %v6065
          %v6082 = vld [vmem:[#allocation12] sm:$0x1]
          %v6084 = vlaneseq
          %v6085 = vshrl.u32 %v6084, 7
          %v6086 = vsub.s32 0, %v6085
          %v6087 = vrot.slane %v6082, %v6086
          %6089 = vmatprep.subr.mxu0 0.0
          %6090 = vmatpush1.msra.mxu0 %v6066
          %6091 = vmatprep.subr.mxu0 0.0
          %6092 = vmatpush1.msra.mxu0 %v6067
          %6093 = vmatprep.subr.mxu0 0.0
          %6094 = vmatpush1.msra.mxu0 %v6068
          %6095 = vmatprep.subr.mxu0 0.0
          %6096 = vmatpush1.msra.mxu0 %v6069
          %6097 = vmatprep.subr.mxu0 0.0
          %6098 = vmatpush1.msra.mxu0 %v6070
          %6099 = vmatprep.subr.mxu0 0.0
          %6100 = vmatpush1.msra.mxu0 %v6071
          %6101 = vmatprep.subr.mxu0 0.0
          %6102 = vmatpush1.msra.mxu0 %v6072
          %6103 = vmatprep.subr.mxu0 0.0
          %6104 = vmatpush1.msra.mxu0 %v6073
          %6105 = vmatprep.subr.mxu0 0.0
          %6106 = vmatpush1.msra.mxu0 %v6074
          %6107 = vmatprep.subr.mxu0 0.0
          %6108 = vmatpush1.msra.mxu0 %v6075
          %6109 = vmatprep.subr.mxu0 0.0
          %6110 = vmatpush1.msra.mxu0 %v6076
          %6111 = vmatprep.subr.mxu0 0.0
          %6112 = vmatpush1.msra.mxu0 %v6077
          %6113 = vmatprep.subr.mxu0 0.0
          %6114 = vmatpush1.msra.mxu0 %v6078
          %6115 = vmatprep.subr.mxu0 0.0
          %6116 = vmatpush1.msra.mxu0 %v6079
          %6117 = vmatprep.subr.mxu0 0.0
          %6118 = vmatpush1.msra.mxu0 %v6080
          %6119 = vmatprep.subr.mxu0 0.0
          %6120 = vmatpush1.msra.mxu0 %v6081
          %6121 = vmatprep.subr.mxu0 0.0
          %6122 = vmatpush1.msra.mxu0 0.0
          %6123 = vmatprep.subr.mxu0 0.0
          %6124 = vmatpush1.msra.mxu0 0.0
          %6125 = vmatprep.subr.mxu0 0.0
          %6126 = vmatpush1.msra.mxu0 0.0
          %6127 = vmatprep.subr.mxu0 0.0
          %6128 = vmatpush1.msra.mxu0 0.0
          %6129 = vmatprep.subr.mxu0 0.0
          %6130 = vmatpush1.msra.mxu0 0.0
          %6131 = vmatprep.subr.mxu0 0.0
          %6132 = vmatpush1.msra.mxu0 0.0
          %6133 = vmatprep.subr.mxu0 0.0
          %6134 = vmatpush1.msra.mxu0 0.0
          %6135 = vmatprep.subr.mxu0 0.0
          %6136 = vmatpush1.msra.mxu0 0.0
          %6137 = vmatprep.subr.mxu0 0.0
          %6138 = vmatpush1.msra.mxu0 0.0
          %6139 = vmatprep.subr.mxu0 0.0
          %6140 = vmatpush1.msra.mxu0 0.0
          %6141 = vmatprep.subr.mxu0 0.0
          %6142 = vmatpush1.msra.mxu0 0.0
          %6143 = vmatprep.subr.mxu0 0.0
          %6144 = vmatpush1.msra.mxu0 0.0
          %6145 = vmatprep.subr.mxu0 0.0
          %6146 = vmatpush1.msra.mxu0 0.0
          %6147 = vmatprep.subr.mxu0 0.0
          %6148 = vmatpush1.msra.mxu0 0.0
          %6149 = vmatprep.subr.mxu0 0.0
          %6150 = vmatpush1.msra.mxu0 0.0
          %6151 = vmatprep.subr.mxu0 0.0
          %6152 = vmatpush1.msra.mxu0 0.0
          %6153 = vmatprep.mubr.f32.mxu0 0.0
          %6154 = vmatmul.mubr.f32.gmra.mrb[0].mxu0 %v6042
          %v6155 = vpop.f32.mrb[0].mxu0
          %v6156 = vadd.f32 %v6087, %v6155
          %v6157 = vpop.f32.mrb[0].mxu0
          %6158 = vmatprep.mubr.f32.mxu0 0.0
          %6159 = vmatmul.mubr.f32.gmra.mrb[0].mxu0 %v6043
          %v6160 = vpop.f32.mrb[0].mxu0
          %v6161 = vadd.f32 %v6087, %v6160
          %v6162 = vpop.f32.mrb[0].mxu0
          %6163 = vdwg.mxu0
          %vm6164 = vcmp.lt.s32.totalorder %v1394, 4
          %v6165 = vsel %vm6164, %v6156, -1e+30
          %v6166 = vsel %vm6164, %v6161, -1e+30
          %6167 = vmax.xlane.f32.xlu0 %v6165
          %v6168 = vpop.xlane.xlu0 %6167
          %6169 = vmax.xlane.f32.xlu0 %v6166
          %v6170 = vpop.xlane.xlu0 %6169
          %v6171 = vsub.f32 %v6165, %v6168
          %v6172 = vsub.f32 %v6166, %v6170
          %v6173 = vmul.f32 %v6171, 1.442695
          %v6174 = vpow.pop %v6173
          %v6175 = vmul.f32 %v6172, 1.442695
          %v6176 = vpow.pop %v6175
          %6177 = vadd.xlane.f32.xlu0 %v6174
          %v6178 = vpop.xlane.xlu0 %6177
          %6179 = vadd.xlane.f32.xlu0 %v6176
          %v6180 = vpop.xlane.xlu0 %6179
          %v6181 = vrcp.pop %v6178
          %v6182 = vmul.f32 %v6174, %v6181
          %v6183 = vrcp.pop %v6180
          %v6184 = vmul.f32 %v6176, %v6183
          %6185 = vst [vmem:[#allocation26] sm:$0xff] %v6182
          %6186 = vst [vmem:[#allocation26 + $0x8] sm:$0xff] %v6184
        $region172: #{tpu_custom_call.1} parent=91 // pred_fallthru
          _
        // Predicated region
        $region173: #{tpu_custom_call.1} parent=91 // pred_check
          %p6187 = pneg %p485
        $region174: #{tpu_custom_call.1} parent=91 // pred_check_branch
          %6189 = sbr.rel (%p6187) target = $region176
        $region175: #{tpu_custom_call.1} parent=91 // pred_region
          %s6191 = ssub.s32 256, 256
          %6192 = vsyncadd [#allocation5], %s6191
          %s6193 = sshll.u32 [#allocation26], 4
          %s6194 = int_to_ptr.vmem [resolvable:$true] %s6193
          %6199 = dma.vmem_to_hbm [thread:$0]  %s6194, 256, %s18, [#allocation5], 128, 128, 8
        $region176: #{tpu_custom_call.1} parent=91 // pred_fallthru
          _
        // Predicated region
        $region177: #{tpu_custom_call.1} parent=91 // pred_check
          %p6200 = pneg %p485
        $region178: #{tpu_custom_call.1} parent=91 // pred_check_branch
          %6202 = sbr.rel (%p6200) target = $region180
        $region179: #{tpu_custom_call.1} parent=91 // pred_region
          %6203 = dma.done [#allocation5], 256
        $region180: #{tpu_custom_call.1} parent=91 // pred_fallthru
          _
      $region92: #{tpu_custom_call.1} parent=5 // pred_fallthru
        _
      %p6204 = scmp.le.s32.totalorder 2, %s29
      // Predicated region
      $region181: #{tpu_custom_call.1} parent=5 // pred_check
        %p6205 = pneg %p6204
      $region182: #{tpu_custom_call.1} parent=5 // pred_check_branch
        %6207 = sbr.rel (%p6205) target = $region184
      $region183: #{tpu_custom_call.1} parent=5 // pred_region
        %s6208 = ssub.s32 %s29, 2
      $region184: #{tpu_custom_call.1} parent=5 // pred_fallthru
        _
    $region6: #{tpu_custom_call.1} parent=1 // loop_footer
      %s33 = sadd.s32 1, %s29
    $region7: #{tpu_custom_call.1} parent=1 // loop_footer_branch
      %28 = sbr.rel target = $region3
    $region8: #{tpu_custom_call.1} parent=1 // loop_exit
      _
    %6209 = vsyncpa [#allocation4], 1
    %s6210 = scalar_lea.sflag [#allocation4], 1
    %6211 = vsyncpa %s6210, 1
    %6212 = vsyncpa [#allocation7], 1
    %6213 = vsyncpa [#allocation10], 1
    %6214 = vsyncpa [#allocation13], 1
    %6215 = vsyncpa [#allocation5], 1
    %s6216 = scalar_lea.sflag [#allocation5], 1
    %6217 = vsyncpa %s6216, 1

</llo_original>
